<compile_context>
chip_gen: v7x
topology: tpu7x:2x2x1
jax: 0.10.0
libtpu: 0.0.40
codegen_flags: <defaults>
</compile_context>

<pallas_src>
import jax
import jax.numpy as jnp
from jax.experimental import pallas as pl
from jax.experimental.pallas import tpu as pltpu

EPS = 1e-5                      # PyTorch GroupNorm default eps


def _round_up(x, m):
    return (x + m - 1) // m * m


def _pick_tile(c, candidates=(512, 256, 128)):
    for t in candidates:
        if c % t == 0:
            return t
    return c


def _vmem_limit(block_bytes):
    # double-buffered streams + headroom, capped below v7x's 64 MiB physical.
    return int(min(max(2 * block_bytes + (8 << 20), 32 << 20), 56 << 20))


# ------------------- direct KxK conv (no im2col in HBM) ----------------------

def _make_conv_kernel(tap_offsets, l_out):
    def kernel(x_ref, w_ref, o_ref, acc_ref):
        acc_ref[...] = jnp.zeros_like(acc_ref)
        for t, off in enumerate(tap_offsets):      # static unroll over taps
            a = x_ref[0, pl.ds(off, l_out), :]     # contiguous row slice
            acc_ref[...] += jnp.dot(a, w_ref[t],
                                    preferred_element_type=jnp.float32)
        o_ref[0] = acc_ref[...].astype(o_ref.dtype)
    return kernel


def conv2d_kxk_nhwc(x, w_oihw, stride, padding, cout_pad=128,
                    out_dtype=jnp.bfloat16):
    """Direct KxK conv (bias-free).  Returns (y, Wo): y is (N, Ho, Wq, Coutp)
    where only columns < Wo are valid (right tail is scratch from the
    fenced-row matmul trick) and Coutp = round_up(Cout, cout_pad)."""
    N, H, W, Cin = x.shape
    Cout, wCin, KH, KW = w_oihw.shape
    assert Cin >= wCin
    s = stride
    Ho = (H + 2 * padding - KH) // s + 1
    Wo = (W + 2 * padding - KW) // s + 1
    Hq = -(-(H + 2 * padding) // s)                # ceil
    Wq = -(-(W + 2 * padding) // s)

    Cinp = _round_up(Cin, 8)
    xb = jnp.pad(x.astype(jnp.bfloat16),
                 ((0, 0), (padding, Hq * s - H - padding),
                  (padding, Wq * s - W - padding), (0, Cinp - Cin)))
    # stride-phase decomposition, flattened per phase, so each (kh, kw) tap is
    # a contiguous slice of the per-sample block at a static offset.
    ph = xb.reshape(N, Hq, s, Wq, s, Cinp).transpose(0, 2, 4, 1, 3, 5)
    ph = ph.reshape(N, s * s * Hq * Wq, Cinp)
    l_tot = s * s * Hq * Wq
    l_pad = _round_up(l_tot + KW, 8)
    ph = jnp.pad(ph, ((0, 0), (0, l_pad - l_tot), (0, 0)))

    Coutp = _round_up(Cout, cout_pad)
    wt = jnp.transpose(w_oihw, (2, 3, 1, 0)).reshape(KH * KW, wCin, Cout)
    wt = jnp.pad(wt.astype(jnp.bfloat16),
                 ((0, 0), (0, Cinp - wCin), (0, Coutp - Cout)))

    tap_offsets = []
    for kh in range(KH):
        for kw in range(KW):
            p = (kh % s) * s + (kw % s)
            tap_offsets.append(p * Hq * Wq + (kh // s) * Wq + (kw // s))

    l_out = Ho * Wq
    tco = _pick_tile(Coutp)
    block_bytes = (l_pad * Cinp * 2 + KH * KW * Cinp * tco * 2
                   + l_out * tco * (jnp.dtype(out_dtype).itemsize + 4))

    y = pl.pallas_call(
        _make_conv_kernel(tuple(tap_offsets), l_out),
        out_shape=jax.ShapeDtypeStruct((N, l_out, Coutp), out_dtype),
        grid_spec=pltpu.PrefetchScalarGridSpec(
            num_scalar_prefetch=0,
            grid=(N, Coutp // tco),                 # batch axis gives >=2
            in_specs=[pl.BlockSpec((1, l_pad, Cinp), lambda n, j: (n, 0, 0)),
                      pl.BlockSpec((KH * KW, Cinp, tco),
                                   lambda n, j: (0, 0, j))],
            out_specs=pl.BlockSpec((1, l_out, tco), lambda n, j: (n, 0, j)),
            scratch_shapes=[pltpu.VMEM((l_out, tco), jnp.float32)]),
        compiler_params=pltpu.CompilerParams(
            dimension_semantics=("parallel", "parallel"),
            vmem_limit_bytes=_vmem_limit(block_bytes)),
    )(ph, wt)
    return y.reshape(N, Ho, Wq, Coutp), Wo


# ----------------------------- tiled MXU matmul ------------------------------

def _matmul_kernel_1k(a_ref, b_ref, o_ref):
    o_ref[...] = jnp.dot(a_ref[...], b_ref[...],
                         preferred_element_type=jnp.float32).astype(o_ref.dtype)


def _matmul_kernel_mk(a_ref, b_ref, o_ref, acc_ref):
    @pl.when(pl.program_id(2) == 0)
    def _():
        acc_ref[...] = jnp.zeros_like(acc_ref)
    acc_ref[...] += jnp.dot(a_ref[...], b_ref[...],
                            preferred_element_type=jnp.float32)
    @pl.when(pl.program_id(2) == pl.num_programs(2) - 1)
    def _():
        o_ref[...] = acc_ref[...].astype(o_ref.dtype)


def pallas_matmul(a, b, out_dtype=jnp.bfloat16):
    """A (M,K) @ B (K,N): bf16 MXU operands, f32 accumulation."""
    M, K = a.shape
    K2, Nc = b.shape
    assert K == K2
    tm = min(512, _round_up(M, 128))          # 128-aligned (bf16 packing, MXU)
    Np = _round_up(Nc, 128)
    tn = _pick_tile(Np)                       # up to 512-wide output tiles
    Kp = _round_up(K, 128)                    # pad K only to the next 128
    Mp = _round_up(M, tm)

    a_p = jnp.pad(a.astype(jnp.bfloat16), ((0, Mp - M), (0, Kp - K)))
    b_p = jnp.pad(b.astype(jnp.bfloat16), ((0, Kp - K), (0, Np - Nc)))
    osize = jnp.dtype(out_dtype).itemsize

    if Kp <= 2048:
        # single K step: no reduction axis, no accumulator scratch, no pl.when
        block_bytes = (tm * Kp + Kp * tn) * 2 + tm * tn * osize
        out = pl.pallas_call(
            _matmul_kernel_1k,
            out_shape=jax.ShapeDtypeStruct((Mp, Np), out_dtype),
            grid_spec=pltpu.PrefetchScalarGridSpec(
                num_scalar_prefetch=0,
                grid=(Mp // tm, Np // tn),
                in_specs=[pl.BlockSpec((tm, Kp), lambda i, j: (i, 0)),
                          pl.BlockSpec((Kp, tn), lambda i, j: (0, j))],
                out_specs=pl.BlockSpec((tm, tn), lambda i, j: (i, j))),
            compiler_params=pltpu.CompilerParams(
                dimension_semantics=("parallel", "parallel"),
                vmem_limit_bytes=_vmem_limit(block_bytes)),
        )(a_p, b_p)
    else:
        tk = _pick_tile(Kp, (2048, 1024, 512, 256, 128))
        block_bytes = (tm * tk + tk * tn) * 2 + tm * tn * (4 + osize)
        out = pl.pallas_call(
            _matmul_kernel_mk,
            out_shape=jax.ShapeDtypeStruct((Mp, Np), out_dtype),
            grid_spec=pltpu.PrefetchScalarGridSpec(
                num_scalar_prefetch=0,
                grid=(Mp // tm, Np // tn, Kp // tk),
                in_specs=[pl.BlockSpec((tm, tk), lambda i, j, k: (i, k)),
                          pl.BlockSpec((tk, tn), lambda i, j, k: (k, j))],
                out_specs=pl.BlockSpec((tm, tn), lambda i, j, k: (i, j)),
                scratch_shapes=[pltpu.VMEM((tm, tn), jnp.float32)]),
            compiler_params=pltpu.CompilerParams(
                dimension_semantics=("parallel", "parallel", "arbitrary"),
                vmem_limit_bytes=_vmem_limit(block_bytes)),
        )(a_p, b_p)
    return out[:M, :Nc]


def conv2d_1x1_nhwc(x, w_oihw, stride, cout_pad=128, out_dtype=jnp.bfloat16):
    """1x1 conv (shortcut): strided subsample + direct matmul, no im2col."""
    N, H, W, Cin = x.shape
    Cout, wCin, KH, KW = w_oihw.shape
    assert KH == 1 and KW == 1 and wCin == Cin
    xs = x[:, ::stride, ::stride, :]
    _, Ho, Wo, _ = xs.shape
    Coutp = _round_up(Cout, cout_pad)
    w_mat = jnp.pad(w_oihw.reshape(Cout, Cin).T.astype(jnp.bfloat16),
                    ((0, 0), (0, Coutp - Cout)))
    y = pallas_matmul(xs.reshape(N * Ho * Wo, Cin), w_mat, out_dtype=out_dtype)
    return y.reshape(N, Ho, Wo, Coutp)


# --------------------- fused instance norm (+res, +relu) ---------------------

def _make_instnorm_kernel(apply_relu, has_residual, valid_w):
    def kernel(x_ref, g_ref, b_ref, *rest):
        if has_residual:
            res_ref, o_ref = rest
        else:
            (o_ref,) = rest
        x = x_ref[0].astype(jnp.float32)                  # (Hh, W_in, tc)
        if x.shape[1] != valid_w:                         # drop scratch columns
            x = x[:, :valid_w, :]
        cnt = x.shape[0] * valid_w
        # single-pass statistics: var = E[x^2] - mean^2 (f32)
        ssum = jnp.sum(jnp.sum(x, axis=1, keepdims=True), axis=0, keepdims=True)
        ssq = jnp.sum(jnp.sum(x * x, axis=1, keepdims=True), axis=0,
                      keepdims=True)
        mean = ssum / cnt
        var = jnp.maximum(ssq / cnt - mean * mean, 0.0)   # biased var (GN)
        y = (x - mean) * jax.lax.rsqrt(var + EPS)
        y = y * g_ref[0] + b_ref[0]
        if has_residual:
            y = y + res_ref[0].astype(jnp.float32)
        if apply_relu:
            y = jnp.maximum(y, 0.0)
        o_ref[0] = y.astype(o_ref.dtype)
    return kernel


def pallas_instance_norm(x, gamma_p, beta_p, *, valid_w, relu=False,
                         residual=None, out_dtype=jnp.bfloat16):
    """x: (N, Hh, W_in, Cp) with Cp % 128 == 0; statistics and output use only
    columns < valid_w.  residual (optional): (N, Hh, valid_w, Cp)."""
    N, Hh, W_in, Cp = x.shape
    tc = _pick_tile(Cp)                                   # adaptive 128/256/512
    g4 = gamma_p.astype(jnp.float32).reshape(1, 1, 1, Cp)
    b4 = beta_p.astype(jnp.float32).reshape(1, 1, 1, Cp)

    args = [x, g4, b4]
    in_specs = [pl.BlockSpec((1, Hh, W_in, tc), lambda n, c: (n, 0, 0, c)),
                pl.BlockSpec((1, 1, 1, tc), lambda n, c: (0, 0, 0, c)),
                pl.BlockSpec((1, 1, 1, tc), lambda n, c: (0, 0, 0, c))]
    has_res = residual is not None
    if has_res:
        args.append(residual.astype(jnp.bfloat16))        # bf16 residual stream
        in_specs.append(pl.BlockSpec((1, Hh, valid_w, tc),
                                     lambda n, c: (n, 0, 0, c)))

    block_bytes = Hh * tc * (W_in * 2 + valid_w * 2
                             + valid_w * jnp.dtype(out_dtype).itemsize)
    out = pl.pallas_call(
        _make_instnorm_kernel(relu, has_res, valid_w),
        out_shape=jax.ShapeDtypeStruct((N, Hh, valid_w, Cp), out_dtype),
        grid_spec=pltpu.PrefetchScalarGridSpec(
            num_scalar_prefetch=0,
            grid=(N, Cp // tc),
            in_specs=in_specs,
            out_specs=pl.BlockSpec((1, Hh, valid_w, tc),
                                   lambda n, c: (n, 0, 0, c))),
        compiler_params=pltpu.CompilerParams(
            dimension_semantics=("parallel", "parallel"),
            vmem_limit_bytes=_vmem_limit(block_bytes)),
    )(*args)
    return out


# --------------------------- BasicBlock forward ------------------------------

def init_basic_block_params(key, in_planes, planes, stride):
    k1, k2, k3 = jax.random.split(key, 3)

    def conv_init(k, shape):  # deterministic kaiming-uniform-like init
        fan_in = shape[1] * shape[2] * shape[3]
        bound = 1.0 / jnp.sqrt(jnp.float32(fan_in))
        return jax.random.uniform(k, shape, jnp.float32, -bound, bound)

    params = {
        "conv1_w": conv_init(k1, (planes, in_planes, 3, 3)),
        "bn1_g": jnp.ones((planes,), jnp.float32),
        "bn1_b": jnp.zeros((planes,), jnp.float32),
        "conv2_w": conv_init(k2, (planes, planes, 3, 3)),
        "bn2_g": jnp.ones((planes,), jnp.float32),
        "bn2_b": jnp.zeros((planes,), jnp.float32),
    }
    if stride != 1 or in_planes != planes:
        params["sc_w"] = conv_init(k3, (planes, in_planes, 1, 1))
        params["sc_g"] = jnp.ones((planes,), jnp.float32)
        params["sc_b"] = jnp.zeros((planes,), jnp.float32)
    return params


def basic_block_forward(params, x_nchw, stride):
    x = jnp.transpose(x_nchw, (0, 2, 3, 1))                  # NCHW -> NHWC
    planes = params["conv1_w"].shape[0]
    Pp = _round_up(planes, 128)

    def padc(v):
        return jnp.pad(v, (0, Pp - planes))

    y1, wo = conv2d_kxk_nhwc(x, params["conv1_w"], stride, 1, cout_pad=128)
    h1 = pallas_instance_norm(y1, padc(params["bn1_g"]), padc(params["bn1_b"]),
                              valid_w=wo, relu=True, out_dtype=jnp.bfloat16)

    y2, wo2 = conv2d_kxk_nhwc(h1, params["conv2_w"], 1, 1, cout_pad=128)

    if "sc_w" in params:
        sc_y = conv2d_1x1_nhwc(x, params["sc_w"], stride, cout_pad=128)
        sc = pallas_instance_norm(sc_y, padc(params["sc_g"]),
                                  padc(params["sc_b"]), valid_w=wo,
                                  relu=False, out_dtype=jnp.bfloat16)
    else:
        # identity shortcut (stride==1, in_planes==planes): pad channels, bf16
        sc = jnp.pad(x.astype(jnp.bfloat16),
                     ((0, 0), (0, 0), (0, 0), (0, Pp - planes)))

    out = pallas_instance_norm(y2, padc(params["bn2_g"]), padc(params["bn2_b"]),
                               valid_w=wo2, relu=True, residual=sc,
                               out_dtype=jnp.float32)         # bn2 + add + relu
    out = out[..., :planes]                                   # single un-pad
    return jnp.transpose(out, (0, 3, 1, 2))                   # NHWC -> NCHW


# ------------------------------ pure-JAX reference ---------------------------

def _ref_conv(x_nchw, w, stride, padding):
    return jax.lax.conv_general_dilated(
        x_nchw, w, (stride, stride),
        [(padding, padding), (padding, padding)],
        dimension_numbers=("NCHW", "OIHW", "NCHW"))


def _ref_instnorm(x, g, b):
    mean = jnp.mean(x, axis=(2, 3), keepdims=True)
    var = jnp.mean((x - mean) ** 2, axis=(2, 3), keepdims=True)
    y = (x - mean) * jax.lax.rsqrt(var + EPS)
    return y * g.reshape(1, -1, 1, 1) + b.reshape(1, -1, 1, 1)


def _ref_forward(params, x, stride):
    out = jax.nn.relu(_ref_instnorm(_ref_conv(x, params["conv1_w"], stride, 1),
                                    params["bn1_g"], params["bn1_b"]))
    out = _ref_instnorm(_ref_conv(out, params["conv2_w"], 1, 1),
                        params["bn2_g"], params["bn2_b"])
    if "sc_w" in params:
        sc = _ref_instnorm(_ref_conv(x, params["sc_w"], stride, 0),
                           params["sc_g"], params["sc_b"])
    else:
        sc = x
    return jax.nn.relu(out + sc)


# ----------------------------------- main ------------------------------------

if __name__ == "__main__":
    key = jax.random.PRNGKey(0)
    kx, kp = jax.random.split(key)
    N, in_planes, planes, H, W, stride = 2, 4, 8, 16, 16, 2

    x = jax.random.normal(kx, (N, in_planes, H, W), jnp.float32)
    params = init_basic_block_params(kp, in_planes, planes, stride)

    fwd = jax.jit(lambda p, xx: basic_block_forward(p, xx, stride))
    out = jax.block_until_ready(fwd(params, x))

    ref = _ref_forward(params, x, stride)
    assert out.shape == ref.shape == (N, planes, H // stride, W // stride)
    # bf16 MXU operands / bf16 intermediates -> mixed rel/abs tolerance.
    err = float(jnp.max(jnp.abs(out - ref) / (1.0 + jnp.abs(ref))))
    if err > 3e-2:
        raise AssertionError(f"mismatch vs reference: max scaled err {err}")
    print("KERNEL_OK")
</pallas_src>

<mosaic_0001>
module attributes {stable_mosaic.version = 11 : i64} {
  func.func @kernel(%arg0: i32, %arg1: i32, %arg2: memref<1x328x8xbf16, #tpu.memory_space<vmem>>, %arg3: memref<9x8x128xbf16, #tpu.memory_space<vmem>>, %arg4: memref<1x72x128xbf16, #tpu.memory_space<vmem>>, %arg5: memref<72x128xf32, #tpu.memory_space<vmem>>) attributes {dimension_semantics = [#tpu.dimension_semantics<parallel>, #tpu.dimension_semantics<parallel>], iteration_bounds = array<i64: 2, 1>, scalar_prefetch = 0 : i64, scratch_operands = 1 : i64, tpu.core_type = #tpu.core_type<tc>, window_params = [{transform_indices = @transform_0, window_bounds = array<i64: 1, 328, 8>}, {transform_indices = @transform_1, window_bounds = array<i64: 9, 8, 128>}, {transform_indices = @transform_2, window_bounds = array<i64: 1, 72, 128>}]} {
    %cst = arith.constant 0.000000e+00 : f32
    %0 = vector.broadcast %cst : f32 to vector<72x128xf32>
    %c0 = arith.constant 0 : index
    %c0_0 = arith.constant 0 : index
    %1 = vector.load %arg5[%c0, %c0_0] : memref<72x128xf32, #tpu.memory_space<vmem>>, vector<72x128xf32>
    tpu.vector_store %arg5[%c0, %c0_0], %0 {strides = array<i32>} : memref<72x128xf32, #tpu.memory_space<vmem>>, vector<72x128xf32>,
    %c0_1 = arith.constant 0 : index
    %c0_2 = arith.constant 0 : index
    %c0_3 = arith.constant 0 : index
    %2 = vector.load %arg2[%c0_1, %c0_2, %c0_3] : memref<1x328x8xbf16, #tpu.memory_space<vmem>>, vector<1x72x8xbf16>
    %3 = vector.shape_cast %2 : vector<1x72x8xbf16> to vector<72x8xbf16>
    %c0_4 = arith.constant 0 : index
    %c0_5 = arith.constant 0 : index
    %4 = vector.load %arg5[%c0_4, %c0_5] : memref<72x128xf32, #tpu.memory_space<vmem>>, vector<72x128xf32>
    %c0_6 = arith.constant 0 : index
    %c0_7 = arith.constant 0 : index
    %c0_8 = arith.constant 0 : index
    %5 = vector.load %arg3[%c0_6, %c0_7, %c0_8] : memref<9x8x128xbf16, #tpu.memory_space<vmem>>, vector<1x8x128xbf16>
    %6 = vector.shape_cast %5 : vector<1x8x128xbf16> to vector<8x128xbf16>
    %cst_9 = arith.constant dense<0.000000e+00> : vector<72x128xf32>
    %7 = tpu.matmul %3, %6, %cst_9 {dimension_numbers = #tpu.dot_dimension_numbers<[1], [0], [0], [1], [0, 0, 1, 1], [], []>} : vector<72x8xbf16>, vector<8x128xbf16>, vector<72x128xf32> -> vector<72x128xf32>
    %8 = arith.addf %4, %7 : vector<72x128xf32>
    %c0_10 = arith.constant 0 : index
    %c0_11 = arith.constant 0 : index
    %9 = vector.load %arg5[%c0_10, %c0_11] : memref<72x128xf32, #tpu.memory_space<vmem>>, vector<72x128xf32>
    tpu.vector_store %arg5[%c0_10, %c0_11], %8 {strides = array<i32>} : memref<72x128xf32, #tpu.memory_space<vmem>>, vector<72x128xf32>,
    %c0_12 = arith.constant 0 : index
    %c81 = arith.constant 81 : index
    %c0_13 = arith.constant 0 : index
    %10 = vector.load %arg2[%c0_12, %c81, %c0_13] : memref<1x328x8xbf16, #tpu.memory_space<vmem>>, vector<1x72x8xbf16>
    %11 = vector.shape_cast %10 : vector<1x72x8xbf16> to vector<72x8xbf16>
    %c0_14 = arith.constant 0 : index
    %c0_15 = arith.constant 0 : index
    %12 = vector.load %arg5[%c0_14, %c0_15] : memref<72x128xf32, #tpu.memory_space<vmem>>, vector<72x128xf32>
    %c1 = arith.constant 1 : index
    %c0_16 = arith.constant 0 : index
    %c0_17 = arith.constant 0 : index
    %13 = vector.load %arg3[%c1, %c0_16, %c0_17] : memref<9x8x128xbf16, #tpu.memory_space<vmem>>, vector<1x8x128xbf16>
    %14 = vector.shape_cast %13 : vector<1x8x128xbf16> to vector<8x128xbf16>
    %cst_18 = arith.constant dense<0.000000e+00> : vector<72x128xf32>
    %15 = tpu.matmul %11, %14, %cst_18 {dimension_numbers = #tpu.dot_dimension_numbers<[1], [0], [0], [1], [0, 0, 1, 1], [], []>} : vector<72x8xbf16>, vector<8x128xbf16>, vector<72x128xf32> -> vector<72x128xf32>
    %16 = arith.addf %12, %15 : vector<72x128xf32>
    %c0_19 = arith.constant 0 : index
    %c0_20 = arith.constant 0 : index
    %17 = vector.load %arg5[%c0_19, %c0_20] : memref<72x128xf32, #tpu.memory_space<vmem>>, vector<72x128xf32>
    tpu.vector_store %arg5[%c0_19, %c0_20], %16 {strides = array<i32>} : memref<72x128xf32, #tpu.memory_space<vmem>>, vector<72x128xf32>,
    %c0_21 = arith.constant 0 : index
    %c1_22 = arith.constant 1 : index
    %c0_23 = arith.constant 0 : index
    %18 = vector.load %arg2[%c0_21, %c1_22, %c0_23] : memref<1x328x8xbf16, #tpu.memory_space<vmem>>, vector<1x72x8xbf16>
    %19 = vector.shape_cast %18 : vector<1x72x8xbf16> to vector<72x8xbf16>
    %c0_24 = arith.constant 0 : index
    %c0_25 = arith.constant 0 : index
    %20 = vector.load %arg5[%c0_24, %c0_25] : memref<72x128xf32, #tpu.memory_space<vmem>>, vector<72x128xf32>
    %c2 = arith.constant 2 : index
    %c0_26 = arith.constant 0 : index
    %c0_27 = arith.constant 0 : index
    %21 = vector.load %arg3[%c2, %c0_26, %c0_27] : memref<9x8x128xbf16, #tpu.memory_space<vmem>>, vector<1x8x128xbf16>
    %22 = vector.shape_cast %21 : vector<1x8x128xbf16> to vector<8x128xbf16>
    %cst_28 = arith.constant dense<0.000000e+00> : vector<72x128xf32>
    %23 = tpu.matmul %19, %22, %cst_28 {dimension_numbers = #tpu.dot_dimension_numbers<[1], [0], [0], [1], [0, 0, 1, 1], [], []>} : vector<72x8xbf16>, vector<8x128xbf16>, vector<72x128xf32> -> vector<72x128xf32>
    %24 = arith.addf %20, %23 : vector<72x128xf32>
    %c0_29 = arith.constant 0 : index
    %c0_30 = arith.constant 0 : index
    %25 = vector.load %arg5[%c0_29, %c0_30] : memref<72x128xf32, #tpu.memory_space<vmem>>, vector<72x128xf32>
    tpu.vector_store %arg5[%c0_29, %c0_30], %24 {strides = array<i32>} : memref<72x128xf32, #tpu.memory_space<vmem>>, vector<72x128xf32>,
    %c0_31 = arith.constant 0 : index
    %c162 = arith.constant 162 : index
    %c0_32 = arith.constant 0 : index
    %26 = vector.load %arg2[%c0_31, %c162, %c0_32] : memref<1x328x8xbf16, #tpu.memory_space<vmem>>, vector<1x72x8xbf16>
    %27 = vector.shape_cast %26 : vector<1x72x8xbf16> to vector<72x8xbf16>
    %c0_33 = arith.constant 0 : index
    %c0_34 = arith.constant 0 : index
    %28 = vector.load %arg5[%c0_33, %c0_34] : memref<72x128xf32, #tpu.memory_space<vmem>>, vector<72x128xf32>
    %c3 = arith.constant 3 : index
    %c0_35 = arith.constant 0 : index
    %c0_36 = arith.constant 0 : index
    %29 = vector.load %arg3[%c3, %c0_35, %c0_36] : memref<9x8x128xbf16, #tpu.memory_space<vmem>>, vector<1x8x128xbf16>
    %30 = vector.shape_cast %29 : vector<1x8x128xbf16> to vector<8x128xbf16>
    %cst_37 = arith.constant dense<0.000000e+00> : vector<72x128xf32>
    %31 = tpu.matmul %27, %30, %cst_37 {dimension_numbers = #tpu.dot_dimension_numbers<[1], [0], [0], [1], [0, 0, 1, 1], [], []>} : vector<72x8xbf16>, vector<8x128xbf16>, vector<72x128xf32> -> vector<72x128xf32>
    %32 = arith.addf %28, %31 : vector<72x128xf32>
    %c0_38 = arith.constant 0 : index
    %c0_39 = arith.constant 0 : index
    %33 = vector.load %arg5[%c0_38, %c0_39] : memref<72x128xf32, #tpu.memory_space<vmem>>, vector<72x128xf32>
    tpu.vector_store %arg5[%c0_38, %c0_39], %32 {strides = array<i32>} : memref<72x128xf32, #tpu.memory_space<vmem>>, vector<72x128xf32>,
    %c0_40 = arith.constant 0 : index
    %c243 = arith.constant 243 : index
    %c0_41 = arith.constant 0 : index
    %34 = vector.load %arg2[%c0_40, %c243, %c0_41] : memref<1x328x8xbf16, #tpu.memory_space<vmem>>, vector<1x72x8xbf16>
    %35 = vector.shape_cast %34 : vector<1x72x8xbf16> to vector<72x8xbf16>
    %c0_42 = arith.constant 0 : index
    %c0_43 = arith.constant 0 : index
    %36 = vector.load %arg5[%c0_42, %c0_43] : memref<72x128xf32, #tpu.memory_space<vmem>>, vector<72x128xf32>
    %c4 = arith.constant 4 : index
    %c0_44 = arith.constant 0 : index
    %c0_45 = arith.constant 0 : index
    %37 = vector.load %arg3[%c4, %c0_44, %c0_45] : memref<9x8x128xbf16, #tpu.memory_space<vmem>>, vector<1x8x128xbf16>
    %38 = vector.shape_cast %37 : vector<1x8x128xbf16> to vector<8x128xbf16>
    %cst_46 = arith.constant dense<0.000000e+00> : vector<72x128xf32>
    %39 = tpu.matmul %35, %38, %cst_46 {dimension_numbers = #tpu.dot_dimension_numbers<[1], [0], [0], [1], [0, 0, 1, 1], [], []>} : vector<72x8xbf16>, vector<8x128xbf16>, vector<72x128xf32> -> vector<72x128xf32>
    %40 = arith.addf %36, %39 : vector<72x128xf32>
    %c0_47 = arith.constant 0 : index
    %c0_48 = arith.constant 0 : index
    %41 = vector.load %arg5[%c0_47, %c0_48] : memref<72x128xf32, #tpu.memory_space<vmem>>, vector<72x128xf32>
    tpu.vector_store %arg5[%c0_47, %c0_48], %40 {strides = array<i32>} : memref<72x128xf32, #tpu.memory_space<vmem>>, vector<72x128xf32>,
    %c0_49 = arith.constant 0 : index
    %c163 = arith.constant 163 : index
    %c0_50 = arith.constant 0 : index
    %42 = vector.load %arg2[%c0_49, %c163, %c0_50] : memref<1x328x8xbf16, #tpu.memory_space<vmem>>, vector<1x72x8xbf16>
    %43 = vector.shape_cast %42 : vector<1x72x8xbf16> to vector<72x8xbf16>
    %c0_51 = arith.constant 0 : index
    %c0_52 = arith.constant 0 : index
    %44 = vector.load %arg5[%c0_51, %c0_52] : memref<72x128xf32, #tpu.memory_space<vmem>>, vector<72x128xf32>
    %c5 = arith.constant 5 : index
    %c0_53 = arith.constant 0 : index
    %c0_54 = arith.constant 0 : index
    %45 = vector.load %arg3[%c5, %c0_53, %c0_54] : memref<9x8x128xbf16, #tpu.memory_space<vmem>>, vector<1x8x128xbf16>
    %46 = vector.shape_cast %45 : vector<1x8x128xbf16> to vector<8x128xbf16>
    %cst_55 = arith.constant dense<0.000000e+00> : vector<72x128xf32>
    %47 = tpu.matmul %43, %46, %cst_55 {dimension_numbers = #tpu.dot_dimension_numbers<[1], [0], [0], [1], [0, 0, 1, 1], [], []>} : vector<72x8xbf16>, vector<8x128xbf16>, vector<72x128xf32> -> vector<72x128xf32>
    %48 = arith.addf %44, %47 : vector<72x128xf32>
    %c0_56 = arith.constant 0 : index
    %c0_57 = arith.constant 0 : index
    %49 = vector.load %arg5[%c0_56, %c0_57] : memref<72x128xf32, #tpu.memory_space<vmem>>, vector<72x128xf32>
    tpu.vector_store %arg5[%c0_56, %c0_57], %48 {strides = array<i32>} : memref<72x128xf32, #tpu.memory_space<vmem>>, vector<72x128xf32>,
    %c0_58 = arith.constant 0 : index
    %c9 = arith.constant 9 : index
    %c0_59 = arith.constant 0 : index
    %50 = vector.load %arg2[%c0_58, %c9, %c0_59] : memref<1x328x8xbf16, #tpu.memory_space<vmem>>, vector<1x72x8xbf16>
    %51 = vector.shape_cast %50 : vector<1x72x8xbf16> to vector<72x8xbf16>
    %c0_60 = arith.constant 0 : index
    %c0_61 = arith.constant 0 : index
    %52 = vector.load %arg5[%c0_60, %c0_61] : memref<72x128xf32, #tpu.memory_space<vmem>>, vector<72x128xf32>
    %c6 = arith.constant 6 : index
    %c0_62 = arith.constant 0 : index
    %c0_63 = arith.constant 0 : index
    %53 = vector.load %arg3[%c6, %c0_62, %c0_63] : memref<9x8x128xbf16, #tpu.memory_space<vmem>>, vector<1x8x128xbf16>
    %54 = vector.shape_cast %53 : vector<1x8x128xbf16> to vector<8x128xbf16>
    %cst_64 = arith.constant dense<0.000000e+00> : vector<72x128xf32>
    %55 = tpu.matmul %51, %54, %cst_64 {dimension_numbers = #tpu.dot_dimension_numbers<[1], [0], [0], [1], [0, 0, 1, 1], [], []>} : vector<72x8xbf16>, vector<8x128xbf16>, vector<72x128xf32> -> vector<72x128xf32>
    %56 = arith.addf %52, %55 : vector<72x128xf32>
    %c0_65 = arith.constant 0 : index
    %c0_66 = arith.constant 0 : index
    %57 = vector.load %arg5[%c0_65, %c0_66] : memref<72x128xf32, #tpu.memory_space<vmem>>, vector<72x128xf32>
    tpu.vector_store %arg5[%c0_65, %c0_66], %56 {strides = array<i32>} : memref<72x128xf32, #tpu.memory_space<vmem>>, vector<72x128xf32>,
    %c0_67 = arith.constant 0 : index
    %c90 = arith.constant 90 : index
    %c0_68 = arith.constant 0 : index
    %58 = vector.load %arg2[%c0_67, %c90, %c0_68] : memref<1x328x8xbf16, #tpu.memory_space<vmem>>, vector<1x72x8xbf16>
    %59 = vector.shape_cast %58 : vector<1x72x8xbf16> to vector<72x8xbf16>
    %c0_69 = arith.constant 0 : index
    %c0_70 = arith.constant 0 : index
    %60 = vector.load %arg5[%c0_69, %c0_70] : memref<72x128xf32, #tpu.memory_space<vmem>>, vector<72x128xf32>
    %c7 = arith.constant 7 : index
    %c0_71 = arith.constant 0 : index
    %c0_72 = arith.constant 0 : index
    %61 = vector.load %arg3[%c7, %c0_71, %c0_72] : memref<9x8x128xbf16, #tpu.memory_space<vmem>>, vector<1x8x128xbf16>
    %62 = vector.shape_cast %61 : vector<1x8x128xbf16> to vector<8x128xbf16>
    %cst_73 = arith.constant dense<0.000000e+00> : vector<72x128xf32>
    %63 = tpu.matmul %59, %62, %cst_73 {dimension_numbers = #tpu.dot_dimension_numbers<[1], [0], [0], [1], [0, 0, 1, 1], [], []>} : vector<72x8xbf16>, vector<8x128xbf16>, vector<72x128xf32> -> vector<72x128xf32>
    %64 = arith.addf %60, %63 : vector<72x128xf32>
    %c0_74 = arith.constant 0 : index
    %c0_75 = arith.constant 0 : index
    %65 = vector.load %arg5[%c0_74, %c0_75] : memref<72x128xf32, #tpu.memory_space<vmem>>, vector<72x128xf32>
    tpu.vector_store %arg5[%c0_74, %c0_75], %64 {strides = array<i32>} : memref<72x128xf32, #tpu.memory_space<vmem>>, vector<72x128xf32>,
    %c0_76 = arith.constant 0 : index
    %c10 = arith.constant 10 : index
    %c0_77 = arith.constant 0 : index
    %66 = vector.load %arg2[%c0_76, %c10, %c0_77] : memref<1x328x8xbf16, #tpu.memory_space<vmem>>, vector<1x72x8xbf16>
    %67 = vector.shape_cast %66 : vector<1x72x8xbf16> to vector<72x8xbf16>
    %c0_78 = arith.constant 0 : index
    %c0_79 = arith.constant 0 : index
    %68 = vector.load %arg5[%c0_78, %c0_79] : memref<72x128xf32, #tpu.memory_space<vmem>>, vector<72x128xf32>
    %c8 = arith.constant 8 : index
    %c0_80 = arith.constant 0 : index
    %c0_81 = arith.constant 0 : index
    %69 = vector.load %arg3[%c8, %c0_80, %c0_81] : memref<9x8x128xbf16, #tpu.memory_space<vmem>>, vector<1x8x128xbf16>
    %70 = vector.shape_cast %69 : vector<1x8x128xbf16> to vector<8x128xbf16>
    %cst_82 = arith.constant dense<0.000000e+00> : vector<72x128xf32>
    %71 = tpu.matmul %67, %70, %cst_82 {dimension_numbers = #tpu.dot_dimension_numbers<[1], [0], [0], [1], [0, 0, 1, 1], [], []>} : vector<72x8xbf16>, vector<8x128xbf16>, vector<72x128xf32> -> vector<72x128xf32>
    %72 = arith.addf %68, %71 : vector<72x128xf32>
    %c0_83 = arith.constant 0 : index
    %c0_84 = arith.constant 0 : index
    %73 = vector.load %arg5[%c0_83, %c0_84] : memref<72x128xf32, #tpu.memory_space<vmem>>, vector<72x128xf32>
    tpu.vector_store %arg5[%c0_83, %c0_84], %72 {strides = array<i32>} : memref<72x128xf32, #tpu.memory_space<vmem>>, vector<72x128xf32>,
    %c0_85 = arith.constant 0 : index
    %c0_86 = arith.constant 0 : index
    %74 = vector.load %arg5[%c0_85, %c0_86] : memref<72x128xf32, #tpu.memory_space<vmem>>, vector<72x128xf32>
    %75 = arith.truncf %74 : vector<72x128xf32> to vector<72x128xbf16>
    %c0_87 = arith.constant 0 : index
    %c0_88 = arith.constant 0 : index
    %c0_89 = arith.constant 0 : index
    %76 = vector.load %arg4[%c0_87, %c0_88, %c0_89] : memref<1x72x128xbf16, #tpu.memory_space<vmem>>, vector<1x72x128xbf16>
    %77 = vector.shape_cast %76 : vector<1x72x128xbf16> to vector<72x128xbf16>
    %78 = vector.shape_cast %75 : vector<72x128xbf16> to vector<1x72x128xbf16>
    tpu.vector_store %arg4[%c0_87, %c0_88, %c0_89], %78 {strides = array<i32>} : memref<1x72x128xbf16, #tpu.memory_space<vmem>>, vector<1x72x128xbf16>,
    return
  }
  func.func @transform_0(%arg0: i32, %arg1: i32) -> (i32, i32, i32) {
    %c0_i32 = arith.constant 0 : i32
    %c0_i32_0 = arith.constant 0 : i32
    %c0_i32_1 = arith.constant 0 : i32
    return %arg0, %c0_i32, %c0_i32_0 : i32, i32, i32
  }
  func.func @transform_1(%arg0: i32, %arg1: i32) -> (i32, i32, i32) {
    %c0_i32 = arith.constant 0 : i32
    %c0_i32_0 = arith.constant 0 : i32
    %c0_i32_1 = arith.constant 0 : i32
    return %c0_i32, %c0_i32_0, %arg1 : i32, i32, i32
  }
  func.func @transform_2(%arg0: i32, %arg1: i32) -> (i32, i32, i32) {
    %c0_i32 = arith.constant 0 : i32
    %c0_i32_0 = arith.constant 0 : i32
    return %arg0, %c0_i32, %arg1 : i32, i32, i32
  }
}

module attributes {stable_mosaic.version = 11 : i64} {
  func.func @kernel(%arg0: i32, %arg1: i32, %arg2: memref<1x8x9x128xbf16, #tpu.memory_space<vmem>>, %arg3: memref<1x1x1x128xf32, #tpu.memory_space<vmem>>, %arg4: memref<1x1x1x128xf32, #tpu.memory_space<vmem>>, %arg5: memref<1x8x8x128xbf16, #tpu.memory_space<vmem>>) attributes {dimension_semantics = [#tpu.dimension_semantics<parallel>, #tpu.dimension_semantics<parallel>], iteration_bounds = array<i64: 2, 1>, scalar_prefetch = 0 : i64, scratch_operands = 0 : i64, tpu.core_type = #tpu.core_type<tc>, window_params = [{transform_indices = @transform_0, window_bounds = array<i64: 1, 8, 9, 128>}, {transform_indices = @transform_1, window_bounds = array<i64: 1, 1, 1, 128>}, {transform_indices = @transform_2, window_bounds = array<i64: 1, 1, 1, 128>}, {transform_indices = @transform_3, window_bounds = array<i64: 1, 8, 8, 128>}]} {
    %c0 = arith.constant 0 : index
    %c0_0 = arith.constant 0 : index
    %c0_1 = arith.constant 0 : index
    %c0_2 = arith.constant 0 : index
    %0 = vector.load %arg2[%c0, %c0_0, %c0_1, %c0_2] : memref<1x8x9x128xbf16, #tpu.memory_space<vmem>>, vector<1x8x9x128xbf16>
    %1 = vector.shape_cast %0 : vector<1x8x9x128xbf16> to vector<8x9x128xbf16>
    %2 = arith.extf %1 : vector<8x9x128xbf16> to vector<8x9x128xf32>
    %3 = vector.extract_strided_slice %2 {offsets = [0, 0, 0], sizes = [8, 8, 128], strides = [1, 1, 1]} : vector<8x9x128xf32> to vector<8x8x128xf32>
    %cst = arith.constant dense<0.000000e+00> : vector<8x128xf32>
    %4 = vector.multi_reduction <add>, %3, %cst [1] : vector<8x8x128xf32> to vector<8x128xf32>
    %5 = vector.shape_cast %4 : vector<8x128xf32> to vector<8x1x128xf32>
    %cst_3 = arith.constant dense<0.000000e+00> : vector<1x128xf32>
    %6 = vector.multi_reduction <add>, %5, %cst_3 [0] : vector<8x1x128xf32> to vector<1x128xf32>
    %7 = vector.shape_cast %6 : vector<1x128xf32> to vector<1x1x128xf32>
    %8 = arith.mulf %3, %3 : vector<8x8x128xf32>
    %cst_4 = arith.constant dense<0.000000e+00> : vector<8x128xf32>
    %9 = vector.multi_reduction <add>, %8, %cst_4 [1] : vector<8x8x128xf32> to vector<8x128xf32>
    %10 = vector.shape_cast %9 : vector<8x128xf32> to vector<8x1x128xf32>
    %cst_5 = arith.constant dense<0.000000e+00> : vector<1x128xf32>
    %11 = vector.multi_reduction <add>, %10, %cst_5 [0] : vector<8x1x128xf32> to vector<1x128xf32>
    %12 = vector.shape_cast %11 : vector<1x128xf32> to vector<1x1x128xf32>
    %cst_6 = arith.constant 6.400000e+01 : f32
    %13 = vector.broadcast %cst_6 : f32 to vector<1x1x128xf32>
    %14 = arith.divf %7, %13 : vector<1x1x128xf32>
    %cst_7 = arith.constant 6.400000e+01 : f32
    %15 = vector.broadcast %cst_7 : f32 to vector<1x1x128xf32>
    %16 = arith.divf %12, %15 : vector<1x1x128xf32>
    %17 = arith.mulf %14, %14 : vector<1x1x128xf32>
    %18 = arith.subf %16, %17 : vector<1x1x128xf32>
    %cst_8 = arith.constant 0.000000e+00 : f32
    %19 = vector.broadcast %cst_8 : f32 to vector<1x1x128xf32>
    %20 = arith.maximumf %18, %19 : vector<1x1x128xf32>
    %21 = vector.broadcast %14 : vector<1x1x128xf32> to vector<8x8x128xf32>
    %22 = arith.subf %3, %21 : vector<8x8x128xf32>
    %cst_9 = arith.constant 9.99999974E-6 : f32
    %23 = vector.broadcast %cst_9 : f32 to vector<1x1x128xf32>
    %24 = arith.addf %20, %23 : vector<1x1x128xf32>
    %25 = math.rsqrt %24 : vector<1x1x128xf32>
    %26 = vector.broadcast %25 : vector<1x1x128xf32> to vector<8x8x128xf32>
    %27 = arith.mulf %22, %26 : vector<8x8x128xf32>
    %c0_10 = arith.constant 0 : index
    %c0_11 = arith.constant 0 : index
    %c0_12 = arith.constant 0 : index
    %c0_13 = arith.constant 0 : index
    %28 = vector.load %arg3[%c0_10, %c0_11, %c0_12, %c0_13] : memref<1x1x1x128xf32, #tpu.memory_space<vmem>>, vector<1x1x1x128xf32>
    %29 = vector.shape_cast %28 : vector<1x1x1x128xf32> to vector<1x1x128xf32>
    %30 = vector.broadcast %29 : vector<1x1x128xf32> to vector<8x8x128xf32>
    %31 = arith.mulf %27, %30 : vector<8x8x128xf32>
    %c0_14 = arith.constant 0 : index
    %c0_15 = arith.constant 0 : index
    %c0_16 = arith.constant 0 : index
    %c0_17 = arith.constant 0 : index
    %32 = vector.load %arg4[%c0_14, %c0_15, %c0_16, %c0_17] : memref<1x1x1x128xf32, #tpu.memory_space<vmem>>, vector<1x1x1x128xf32>
    %33 = vector.shape_cast %32 : vector<1x1x1x128xf32> to vector<1x1x128xf32>
    %34 = vector.broadcast %33 : vector<1x1x128xf32> to vector<8x8x128xf32>
    %35 = arith.addf %31, %34 : vector<8x8x128xf32>
    %cst_18 = arith.constant 0.000000e+00 : f32
    %36 = vector.broadcast %cst_18 : f32 to vector<8x8x128xf32>
    %37 = arith.maximumf %35, %36 : vector<8x8x128xf32>
    %38 = arith.truncf %37 : vector<8x8x128xf32> to vector<8x8x128xbf16>
    %c0_19 = arith.constant 0 : index
    %c0_20 = arith.constant 0 : index
    %c0_21 = arith.constant 0 : index
    %c0_22 = arith.constant 0 : index
    %39 = vector.load %arg5[%c0_19, %c0_20, %c0_21, %c0_22] : memref<1x8x8x128xbf16, #tpu.memory_space<vmem>>, vector<1x8x8x128xbf16>
    %40 = vector.shape_cast %39 : vector<1x8x8x128xbf16> to vector<8x8x128xbf16>
    %41 = vector.shape_cast %38 : vector<8x8x128xbf16> to vector<1x8x8x128xbf16>
    tpu.vector_store %arg5[%c0_19, %c0_20, %c0_21, %c0_22], %41 {strides = array<i32>} : memref<1x8x8x128xbf16, #tpu.memory_space<vmem>>, vector<1x8x8x128xbf16>,
    return
  }
  func.func @transform_0(%arg0: i32, %arg1: i32) -> (i32, i32, i32, i32) {
    %c0_i32 = arith.constant 0 : i32
    %c0_i32_0 = arith.constant 0 : i32
    %c0_i32_1 = arith.constant 0 : i32
    return %arg0, %c0_i32, %c0_i32_0, %arg1 : i32, i32, i32, i32
  }
  func.func @transform_1(%arg0: i32, %arg1: i32) -> (i32, i32, i32, i32) {
    %c0_i32 = arith.constant 0 : i32
    %c0_i32_0 = arith.constant 0 : i32
    %c0_i32_1 = arith.constant 0 : i32
    %c0_i32_2 = arith.constant 0 : i32
    return %c0_i32, %c0_i32_0, %c0_i32_1, %arg1 : i32, i32, i32, i32
  }
  func.func @transform_2(%arg0: i32, %arg1: i32) -> (i32, i32, i32, i32) {
    %c0_i32 = arith.constant 0 : i32
    %c0_i32_0 = arith.constant 0 : i32
    %c0_i32_1 = arith.constant 0 : i32
    %c0_i32_2 = arith.constant 0 : i32
    return %c0_i32, %c0_i32_0, %c0_i32_1, %arg1 : i32, i32, i32, i32
  }
  func.func @transform_3(%arg0: i32, %arg1: i32) -> (i32, i32, i32, i32) {
    %c0_i32 = arith.constant 0 : i32
    %c0_i32_0 = arith.constant 0 : i32
    %c0_i32_1 = arith.constant 0 : i32
    return %arg0, %c0_i32, %c0_i32_0, %arg1 : i32, i32, i32, i32
  }
}

module attributes {stable_mosaic.version = 11 : i64} {
  func.func @kernel(%arg0: i32, %arg1: i32, %arg2: memref<1x104x128xbf16, #tpu.memory_space<vmem>>, %arg3: memref<9x128x128xbf16, #tpu.memory_space<vmem>>, %arg4: memref<1x80x128xbf16, #tpu.memory_space<vmem>>, %arg5: memref<80x128xf32, #tpu.memory_space<vmem>>) attributes {dimension_semantics = [#tpu.dimension_semantics<parallel>, #tpu.dimension_semantics<parallel>], iteration_bounds = array<i64: 2, 1>, scalar_prefetch = 0 : i64, scratch_operands = 1 : i64, tpu.core_type = #tpu.core_type<tc>, window_params = [{transform_indices = @transform_0, window_bounds = array<i64: 1, 104, 128>}, {transform_indices = @transform_1, window_bounds = array<i64: 9, 128, 128>}, {transform_indices = @transform_2, window_bounds = array<i64: 1, 80, 128>}]} {
    %cst = arith.constant 0.000000e+00 : f32
    %0 = vector.broadcast %cst : f32 to vector<80x128xf32>
    %c0 = arith.constant 0 : index
    %c0_0 = arith.constant 0 : index
    %1 = vector.load %arg5[%c0, %c0_0] : memref<80x128xf32, #tpu.memory_space<vmem>>, vector<80x128xf32>
    tpu.vector_store %arg5[%c0, %c0_0], %0 {strides = array<i32>} : memref<80x128xf32, #tpu.memory_space<vmem>>, vector<80x128xf32>,
    %c0_1 = arith.constant 0 : index
    %c0_2 = arith.constant 0 : index
    %c0_3 = arith.constant 0 : index
    %2 = vector.load %arg2[%c0_1, %c0_2, %c0_3] : memref<1x104x128xbf16, #tpu.memory_space<vmem>>, vector<1x80x128xbf16>
    %3 = vector.shape_cast %2 : vector<1x80x128xbf16> to vector<80x128xbf16>
    %c0_4 = arith.constant 0 : index
    %c0_5 = arith.constant 0 : index
    %4 = vector.load %arg5[%c0_4, %c0_5] : memref<80x128xf32, #tpu.memory_space<vmem>>, vector<80x128xf32>
    %c0_6 = arith.constant 0 : index
    %c0_7 = arith.constant 0 : index
    %c0_8 = arith.constant 0 : index
    %5 = vector.load %arg3[%c0_6, %c0_7, %c0_8] : memref<9x128x128xbf16, #tpu.memory_space<vmem>>, vector<1x128x128xbf16>
    %6 = vector.shape_cast %5 : vector<1x128x128xbf16> to vector<128x128xbf16>
    %cst_9 = arith.constant dense<0.000000e+00> : vector<80x128xf32>
    %7 = tpu.matmul %3, %6, %cst_9 {dimension_numbers = #tpu.dot_dimension_numbers<[1], [0], [0], [1], [0, 0, 1, 1], [], []>} : vector<80x128xbf16>, vector<128x128xbf16>, vector<80x128xf32> -> vector<80x128xf32>
    %8 = arith.addf %4, %7 : vector<80x128xf32>
    %c0_10 = arith.constant 0 : index
    %c0_11 = arith.constant 0 : index
    %9 = vector.load %arg5[%c0_10, %c0_11] : memref<80x128xf32, #tpu.memory_space<vmem>>, vector<80x128xf32>
    tpu.vector_store %arg5[%c0_10, %c0_11], %8 {strides = array<i32>} : memref<80x128xf32, #tpu.memory_space<vmem>>, vector<80x128xf32>,
    %c0_12 = arith.constant 0 : index
    %c1 = arith.constant 1 : index
    %c0_13 = arith.constant 0 : index
    %10 = vector.load %arg2[%c0_12, %c1, %c0_13] : memref<1x104x128xbf16, #tpu.memory_space<vmem>>, vector<1x80x128xbf16>
    %11 = vector.shape_cast %10 : vector<1x80x128xbf16> to vector<80x128xbf16>
    %c0_14 = arith.constant 0 : index
    %c0_15 = arith.constant 0 : index
    %12 = vector.load %arg5[%c0_14, %c0_15] : memref<80x128xf32, #tpu.memory_space<vmem>>, vector<80x128xf32>
    %c1_16 = arith.constant 1 : index
    %c0_17 = arith.constant 0 : index
    %c0_18 = arith.constant 0 : index
    %13 = vector.load %arg3[%c1_16, %c0_17, %c0_18] : memref<9x128x128xbf16, #tpu.memory_space<vmem>>, vector<1x128x128xbf16>
    %14 = vector.shape_cast %13 : vector<1x128x128xbf16> to vector<128x128xbf16>
    %cst_19 = arith.constant dense<0.000000e+00> : vector<80x128xf32>
    %15 = tpu.matmul %11, %14, %cst_19 {dimension_numbers = #tpu.dot_dimension_numbers<[1], [0], [0], [1], [0, 0, 1, 1], [], []>} : vector<80x128xbf16>, vector<128x128xbf16>, vector<80x128xf32> -> vector<80x128xf32>
    %16 = arith.addf %12, %15 : vector<80x128xf32>
    %c0_20 = arith.constant 0 : index
    %c0_21 = arith.constant 0 : index
    %17 = vector.load %arg5[%c0_20, %c0_21] : memref<80x128xf32, #tpu.memory_space<vmem>>, vector<80x128xf32>
    tpu.vector_store %arg5[%c0_20, %c0_21], %16 {strides = array<i32>} : memref<80x128xf32, #tpu.memory_space<vmem>>, vector<80x128xf32>,
    %c0_22 = arith.constant 0 : index
    %c2 = arith.constant 2 : index
    %c0_23 = arith.constant 0 : index
    %18 = vector.load %arg2[%c0_22, %c2, %c0_23] : memref<1x104x128xbf16, #tpu.memory_space<vmem>>, vector<1x80x128xbf16>
    %19 = vector.shape_cast %18 : vector<1x80x128xbf16> to vector<80x128xbf16>
    %c0_24 = arith.constant 0 : index
    %c0_25 = arith.constant 0 : index
    %20 = vector.load %arg5[%c0_24, %c0_25] : memref<80x128xf32, #tpu.memory_space<vmem>>, vector<80x128xf32>
    %c2_26 = arith.constant 2 : index
    %c0_27 = arith.constant 0 : index
    %c0_28 = arith.constant 0 : index
    %21 = vector.load %arg3[%c2_26, %c0_27, %c0_28] : memref<9x128x128xbf16, #tpu.memory_space<vmem>>, vector<1x128x128xbf16>
    %22 = vector.shape_cast %21 : vector<1x128x128xbf16> to vector<128x128xbf16>
    %cst_29 = arith.constant dense<0.000000e+00> : vector<80x128xf32>
    %23 = tpu.matmul %19, %22, %cst_29 {dimension_numbers = #tpu.dot_dimension_numbers<[1], [0], [0], [1], [0, 0, 1, 1], [], []>} : vector<80x128xbf16>, vector<128x128xbf16>, vector<80x128xf32> -> vector<80x128xf32>
    %24 = arith.addf %20, %23 : vector<80x128xf32>
    %c0_30 = arith.constant 0 : index
    %c0_31 = arith.constant 0 : index
    %25 = vector.load %arg5[%c0_30, %c0_31] : memref<80x128xf32, #tpu.memory_space<vmem>>, vector<80x128xf32>
    tpu.vector_store %arg5[%c0_30, %c0_31], %24 {strides = array<i32>} : memref<80x128xf32, #tpu.memory_space<vmem>>, vector<80x128xf32>,
    %c0_32 = arith.constant 0 : index
    %c10 = arith.constant 10 : index
    %c0_33 = arith.constant 0 : index
    %26 = vector.load %arg2[%c0_32, %c10, %c0_33] : memref<1x104x128xbf16, #tpu.memory_space<vmem>>, vector<1x80x128xbf16>
    %27 = vector.shape_cast %26 : vector<1x80x128xbf16> to vector<80x128xbf16>
    %c0_34 = arith.constant 0 : index
    %c0_35 = arith.constant 0 : index
    %28 = vector.load %arg5[%c0_34, %c0_35] : memref<80x128xf32, #tpu.memory_space<vmem>>, vector<80x128xf32>
    %c3 = arith.constant 3 : index
    %c0_36 = arith.constant 0 : index
    %c0_37 = arith.constant 0 : index
    %29 = vector.load %arg3[%c3, %c0_36, %c0_37] : memref<9x128x128xbf16, #tpu.memory_space<vmem>>, vector<1x128x128xbf16>
    %30 = vector.shape_cast %29 : vector<1x128x128xbf16> to vector<128x128xbf16>
    %cst_38 = arith.constant dense<0.000000e+00> : vector<80x128xf32>
    %31 = tpu.matmul %27, %30, %cst_38 {dimension_numbers = #tpu.dot_dimension_numbers<[1], [0], [0], [1], [0, 0, 1, 1], [], []>} : vector<80x128xbf16>, vector<128x128xbf16>, vector<80x128xf32> -> vector<80x128xf32>
    %32 = arith.addf %28, %31 : vector<80x128xf32>
    %c0_39 = arith.constant 0 : index
    %c0_40 = arith.constant 0 : index
    %33 = vector.load %arg5[%c0_39, %c0_40] : memref<80x128xf32, #tpu.memory_space<vmem>>, vector<80x128xf32>
    tpu.vector_store %arg5[%c0_39, %c0_40], %32 {strides = array<i32>} : memref<80x128xf32, #tpu.memory_space<vmem>>, vector<80x128xf32>,
    %c0_41 = arith.constant 0 : index
    %c11 = arith.constant 11 : index
    %c0_42 = arith.constant 0 : index
    %34 = vector.load %arg2[%c0_41, %c11, %c0_42] : memref<1x104x128xbf16, #tpu.memory_space<vmem>>, vector<1x80x128xbf16>
    %35 = vector.shape_cast %34 : vector<1x80x128xbf16> to vector<80x128xbf16>
    %c0_43 = arith.constant 0 : index
    %c0_44 = arith.constant 0 : index
    %36 = vector.load %arg5[%c0_43, %c0_44] : memref<80x128xf32, #tpu.memory_space<vmem>>, vector<80x128xf32>
    %c4 = arith.constant 4 : index
    %c0_45 = arith.constant 0 : index
    %c0_46 = arith.constant 0 : index
    %37 = vector.load %arg3[%c4, %c0_45, %c0_46] : memref<9x128x128xbf16, #tpu.memory_space<vmem>>, vector<1x128x128xbf16>
    %38 = vector.shape_cast %37 : vector<1x128x128xbf16> to vector<128x128xbf16>
    %cst_47 = arith.constant dense<0.000000e+00> : vector<80x128xf32>
    %39 = tpu.matmul %35, %38, %cst_47 {dimension_numbers = #tpu.dot_dimension_numbers<[1], [0], [0], [1], [0, 0, 1, 1], [], []>} : vector<80x128xbf16>, vector<128x128xbf16>, vector<80x128xf32> -> vector<80x128xf32>
    %40 = arith.addf %36, %39 : vector<80x128xf32>
    %c0_48 = arith.constant 0 : index
    %c0_49 = arith.constant 0 : index
    %41 = vector.load %arg5[%c0_48, %c0_49] : memref<80x128xf32, #tpu.memory_space<vmem>>, vector<80x128xf32>
    tpu.vector_store %arg5[%c0_48, %c0_49], %40 {strides = array<i32>} : memref<80x128xf32, #tpu.memory_space<vmem>>, vector<80x128xf32>,
    %c0_50 = arith.constant 0 : index
    %c12 = arith.constant 12 : index
    %c0_51 = arith.constant 0 : index
    %42 = vector.load %arg2[%c0_50, %c12, %c0_51] : memref<1x104x128xbf16, #tpu.memory_space<vmem>>, vector<1x80x128xbf16>
    %43 = vector.shape_cast %42 : vector<1x80x128xbf16> to vector<80x128xbf16>
    %c0_52 = arith.constant 0 : index
    %c0_53 = arith.constant 0 : index
    %44 = vector.load %arg5[%c0_52, %c0_53] : memref<80x128xf32, #tpu.memory_space<vmem>>, vector<80x128xf32>
    %c5 = arith.constant 5 : index
    %c0_54 = arith.constant 0 : index
    %c0_55 = arith.constant 0 : index
    %45 = vector.load %arg3[%c5, %c0_54, %c0_55] : memref<9x128x128xbf16, #tpu.memory_space<vmem>>, vector<1x128x128xbf16>
    %46 = vector.shape_cast %45 : vector<1x128x128xbf16> to vector<128x128xbf16>
    %cst_56 = arith.constant dense<0.000000e+00> : vector<80x128xf32>
    %47 = tpu.matmul %43, %46, %cst_56 {dimension_numbers = #tpu.dot_dimension_numbers<[1], [0], [0], [1], [0, 0, 1, 1], [], []>} : vector<80x128xbf16>, vector<128x128xbf16>, vector<80x128xf32> -> vector<80x128xf32>
    %48 = arith.addf %44, %47 : vector<80x128xf32>
    %c0_57 = arith.constant 0 : index
    %c0_58 = arith.constant 0 : index
    %49 = vector.load %arg5[%c0_57, %c0_58] : memref<80x128xf32, #tpu.memory_space<vmem>>, vector<80x128xf32>
    tpu.vector_store %arg5[%c0_57, %c0_58], %48 {strides = array<i32>} : memref<80x128xf32, #tpu.memory_space<vmem>>, vector<80x128xf32>,
    %c0_59 = arith.constant 0 : index
    %c20 = arith.constant 20 : index
    %c0_60 = arith.constant 0 : index
    %50 = vector.load %arg2[%c0_59, %c20, %c0_60] : memref<1x104x128xbf16, #tpu.memory_space<vmem>>, vector<1x80x128xbf16>
    %51 = vector.shape_cast %50 : vector<1x80x128xbf16> to vector<80x128xbf16>
    %c0_61 = arith.constant 0 : index
    %c0_62 = arith.constant 0 : index
    %52 = vector.load %arg5[%c0_61, %c0_62] : memref<80x128xf32, #tpu.memory_space<vmem>>, vector<80x128xf32>
    %c6 = arith.constant 6 : index
    %c0_63 = arith.constant 0 : index
    %c0_64 = arith.constant 0 : index
    %53 = vector.load %arg3[%c6, %c0_63, %c0_64] : memref<9x128x128xbf16, #tpu.memory_space<vmem>>, vector<1x128x128xbf16>
    %54 = vector.shape_cast %53 : vector<1x128x128xbf16> to vector<128x128xbf16>
    %cst_65 = arith.constant dense<0.000000e+00> : vector<80x128xf32>
    %55 = tpu.matmul %51, %54, %cst_65 {dimension_numbers = #tpu.dot_dimension_numbers<[1], [0], [0], [1], [0, 0, 1, 1], [], []>} : vector<80x128xbf16>, vector<128x128xbf16>, vector<80x128xf32> -> vector<80x128xf32>
    %56 = arith.addf %52, %55 : vector<80x128xf32>
    %c0_66 = arith.constant 0 : index
    %c0_67 = arith.constant 0 : index
    %57 = vector.load %arg5[%c0_66, %c0_67] : memref<80x128xf32, #tpu.memory_space<vmem>>, vector<80x128xf32>
    tpu.vector_store %arg5[%c0_66, %c0_67], %56 {strides = array<i32>} : memref<80x128xf32, #tpu.memory_space<vmem>>, vector<80x128xf32>,
    %c0_68 = arith.constant 0 : index
    %c21 = arith.constant 21 : index
    %c0_69 = arith.constant 0 : index
    %58 = vector.load %arg2[%c0_68, %c21, %c0_69] : memref<1x104x128xbf16, #tpu.memory_space<vmem>>, vector<1x80x128xbf16>
    %59 = vector.shape_cast %58 : vector<1x80x128xbf16> to vector<80x128xbf16>
    %c0_70 = arith.constant 0 : index
    %c0_71 = arith.constant 0 : index
    %60 = vector.load %arg5[%c0_70, %c0_71] : memref<80x128xf32, #tpu.memory_space<vmem>>, vector<80x128xf32>
    %c7 = arith.constant 7 : index
    %c0_72 = arith.constant 0 : index
    %c0_73 = arith.constant 0 : index
    %61 = vector.load %arg3[%c7, %c0_72, %c0_73] : memref<9x128x128xbf16, #tpu.memory_space<vmem>>, vector<1x128x128xbf16>
    %62 = vector.shape_cast %61 : vector<1x128x128xbf16> to vector<128x128xbf16>
    %cst_74 = arith.constant dense<0.000000e+00> : vector<80x128xf32>
    %63 = tpu.matmul %59, %62, %cst_74 {dimension_numbers = #tpu.dot_dimension_numbers<[1], [0], [0], [1], [0, 0, 1, 1], [], []>} : vector<80x128xbf16>, vector<128x128xbf16>, vector<80x128xf32> -> vector<80x128xf32>
    %64 = arith.addf %60, %63 : vector<80x128xf32>
    %c0_75 = arith.constant 0 : index
    %c0_76 = arith.constant 0 : index
    %65 = vector.load %arg5[%c0_75, %c0_76] : memref<80x128xf32, #tpu.memory_space<vmem>>, vector<80x128xf32>
    tpu.vector_store %arg5[%c0_75, %c0_76], %64 {strides = array<i32>} : memref<80x128xf32, #tpu.memory_space<vmem>>, vector<80x128xf32>,
    %c0_77 = arith.constant 0 : index
    %c22 = arith.constant 22 : index
    %c0_78 = arith.constant 0 : index
    %66 = vector.load %arg2[%c0_77, %c22, %c0_78] : memref<1x104x128xbf16, #tpu.memory_space<vmem>>, vector<1x80x128xbf16>
    %67 = vector.shape_cast %66 : vector<1x80x128xbf16> to vector<80x128xbf16>
    %c0_79 = arith.constant 0 : index
    %c0_80 = arith.constant 0 : index
    %68 = vector.load %arg5[%c0_79, %c0_80] : memref<80x128xf32, #tpu.memory_space<vmem>>, vector<80x128xf32>
    %c8 = arith.constant 8 : index
    %c0_81 = arith.constant 0 : index
    %c0_82 = arith.constant 0 : index
    %69 = vector.load %arg3[%c8, %c0_81, %c0_82] : memref<9x128x128xbf16, #tpu.memory_space<vmem>>, vector<1x128x128xbf16>
    %70 = vector.shape_cast %69 : vector<1x128x128xbf16> to vector<128x128xbf16>
    %cst_83 = arith.constant dense<0.000000e+00> : vector<80x128xf32>
    %71 = tpu.matmul %67, %70, %cst_83 {dimension_numbers = #tpu.dot_dimension_numbers<[1], [0], [0], [1], [0, 0, 1, 1], [], []>} : vector<80x128xbf16>, vector<128x128xbf16>, vector<80x128xf32> -> vector<80x128xf32>
    %72 = arith.addf %68, %71 : vector<80x128xf32>
    %c0_84 = arith.constant 0 : index
    %c0_85 = arith.constant 0 : index
    %73 = vector.load %arg5[%c0_84, %c0_85] : memref<80x128xf32, #tpu.memory_space<vmem>>, vector<80x128xf32>
    tpu.vector_store %arg5[%c0_84, %c0_85], %72 {strides = array<i32>} : memref<80x128xf32, #tpu.memory_space<vmem>>, vector<80x128xf32>,
    %c0_86 = arith.constant 0 : index
    %c0_87 = arith.constant 0 : index
    %74 = vector.load %arg5[%c0_86, %c0_87] : memref<80x128xf32, #tpu.memory_space<vmem>>, vector<80x128xf32>
    %75 = arith.truncf %74 : vector<80x128xf32> to vector<80x128xbf16>
    %c0_88 = arith.constant 0 : index
    %c0_89 = arith.constant 0 : index
    %c0_90 = arith.constant 0 : index
    %76 = vector.load %arg4[%c0_88, %c0_89, %c0_90] : memref<1x80x128xbf16, #tpu.memory_space<vmem>>, vector<1x80x128xbf16>
    %77 = vector.shape_cast %76 : vector<1x80x128xbf16> to vector<80x128xbf16>
    %78 = vector.shape_cast %75 : vector<80x128xbf16> to vector<1x80x128xbf16>
    tpu.vector_store %arg4[%c0_88, %c0_89, %c0_90], %78 {strides = array<i32>} : memref<1x80x128xbf16, #tpu.memory_space<vmem>>, vector<1x80x128xbf16>,
    return
  }
  func.func @transform_0(%arg0: i32, %arg1: i32) -> (i32, i32, i32) {
    %c0_i32 = arith.constant 0 : i32
    %c0_i32_0 = arith.constant 0 : i32
    %c0_i32_1 = arith.constant 0 : i32
    return %arg0, %c0_i32, %c0_i32_0 : i32, i32, i32
  }
  func.func @transform_1(%arg0: i32, %arg1: i32) -> (i32, i32, i32) {
    %c0_i32 = arith.constant 0 : i32
    %c0_i32_0 = arith.constant 0 : i32
    %c0_i32_1 = arith.constant 0 : i32
    return %c0_i32, %c0_i32_0, %arg1 : i32, i32, i32
  }
  func.func @transform_2(%arg0: i32, %arg1: i32) -> (i32, i32, i32) {
    %c0_i32 = arith.constant 0 : i32
    %c0_i32_0 = arith.constant 0 : i32
    return %arg0, %c0_i32, %arg1 : i32, i32, i32
  }
}

module attributes {stable_mosaic.version = 11 : i64} {
  func.func @_matmul_kernel_1k(%arg0: i32, %arg1: i32, %arg2: memref<128x128xbf16, #tpu.memory_space<vmem>>, %arg3: memref<128x128xbf16, #tpu.memory_space<vmem>>, %arg4: memref<128x128xbf16, #tpu.memory_space<vmem>>) attributes {dimension_semantics = [#tpu.dimension_semantics<parallel>, #tpu.dimension_semantics<parallel>], iteration_bounds = array<i64: 1, 1>, scalar_prefetch = 0 : i64, scratch_operands = 0 : i64, tpu.core_type = #tpu.core_type<tc>, window_params = [{transform_indices = @transform_0, window_bounds = array<i64: 128, 128>}, {transform_indices = @transform_1, window_bounds = array<i64: 128, 128>}, {transform_indices = @transform_2, window_bounds = array<i64: 128, 128>}]} {
    %c0 = arith.constant 0 : index
    %c0_0 = arith.constant 0 : index
    %0 = vector.load %arg2[%c0, %c0_0] : memref<128x128xbf16, #tpu.memory_space<vmem>>, vector<128x128xbf16>
    %c0_1 = arith.constant 0 : index
    %c0_2 = arith.constant 0 : index
    %1 = vector.load %arg3[%c0_1, %c0_2] : memref<128x128xbf16, #tpu.memory_space<vmem>>, vector<128x128xbf16>
    %cst = arith.constant dense<0.000000e+00> : vector<128x128xf32>
    %2 = tpu.matmul %0, %1, %cst {dimension_numbers = #tpu.dot_dimension_numbers<[1], [0], [0], [1], [0, 0, 1, 1], [], []>} : vector<128x128xbf16>, vector<128x128xbf16>, vector<128x128xf32> -> vector<128x128xf32>
    %3 = arith.truncf %2 : vector<128x128xf32> to vector<128x128xbf16>
    %c0_3 = arith.constant 0 : index
    %c0_4 = arith.constant 0 : index
    %4 = vector.load %arg4[%c0_3, %c0_4] : memref<128x128xbf16, #tpu.memory_space<vmem>>, vector<128x128xbf16>
    tpu.vector_store %arg4[%c0_3, %c0_4], %3 {strides = array<i32>} : memref<128x128xbf16, #tpu.memory_space<vmem>>, vector<128x128xbf16>,
    return
  }
  func.func @transform_0(%arg0: i32, %arg1: i32) -> (i32, i32) {
    %c0_i32 = arith.constant 0 : i32
    %c0_i32_0 = arith.constant 0 : i32
    return %arg0, %c0_i32 : i32, i32
  }
  func.func @transform_1(%arg0: i32, %arg1: i32) -> (i32, i32) {
    %c0_i32 = arith.constant 0 : i32
    %c0_i32_0 = arith.constant 0 : i32
    return %c0_i32, %arg1 : i32, i32
  }
  func.func @transform_2(%arg0: i32, %arg1: i32) -> (i32, i32) {
    %c0_i32 = arith.constant 0 : i32
    return %arg0, %arg1 : i32, i32
  }
}

module attributes {stable_mosaic.version = 11 : i64} {
  func.func @kernel(%arg0: i32, %arg1: i32, %arg2: memref<1x8x8x128xbf16, #tpu.memory_space<vmem>>, %arg3: memref<1x1x1x128xf32, #tpu.memory_space<vmem>>, %arg4: memref<1x1x1x128xf32, #tpu.memory_space<vmem>>, %arg5: memref<1x8x8x128xbf16, #tpu.memory_space<vmem>>) attributes {dimension_semantics = [#tpu.dimension_semantics<parallel>, #tpu.dimension_semantics<parallel>], iteration_bounds = array<i64: 2, 1>, scalar_prefetch = 0 : i64, scratch_operands = 0 : i64, tpu.core_type = #tpu.core_type<tc>, window_params = [{transform_indices = @transform_0, window_bounds = array<i64: 1, 8, 8, 128>}, {transform_indices = @transform_1, window_bounds = array<i64: 1, 1, 1, 128>}, {transform_indices = @transform_2, window_bounds = array<i64: 1, 1, 1, 128>}, {transform_indices = @transform_3, window_bounds = array<i64: 1, 8, 8, 128>}]} {
    %c0 = arith.constant 0 : index
    %c0_0 = arith.constant 0 : index
    %c0_1 = arith.constant 0 : index
    %c0_2 = arith.constant 0 : index
    %0 = vector.load %arg2[%c0, %c0_0, %c0_1, %c0_2] : memref<1x8x8x128xbf16, #tpu.memory_space<vmem>>, vector<1x8x8x128xbf16>
    %1 = vector.shape_cast %0 : vector<1x8x8x128xbf16> to vector<8x8x128xbf16>
    %2 = arith.extf %1 : vector<8x8x128xbf16> to vector<8x8x128xf32>
    %cst = arith.constant dense<0.000000e+00> : vector<8x128xf32>
    %3 = vector.multi_reduction <add>, %2, %cst [1] : vector<8x8x128xf32> to vector<8x128xf32>
    %4 = vector.shape_cast %3 : vector<8x128xf32> to vector<8x1x128xf32>
    %cst_3 = arith.constant dense<0.000000e+00> : vector<1x128xf32>
    %5 = vector.multi_reduction <add>, %4, %cst_3 [0] : vector<8x1x128xf32> to vector<1x128xf32>
    %6 = vector.shape_cast %5 : vector<1x128xf32> to vector<1x1x128xf32>
    %7 = arith.mulf %2, %2 : vector<8x8x128xf32>
    %cst_4 = arith.constant dense<0.000000e+00> : vector<8x128xf32>
    %8 = vector.multi_reduction <add>, %7, %cst_4 [1] : vector<8x8x128xf32> to vector<8x128xf32>
    %9 = vector.shape_cast %8 : vector<8x128xf32> to vector<8x1x128xf32>
    %cst_5 = arith.constant dense<0.000000e+00> : vector<1x128xf32>
    %10 = vector.multi_reduction <add>, %9, %cst_5 [0] : vector<8x1x128xf32> to vector<1x128xf32>
    %11 = vector.shape_cast %10 : vector<1x128xf32> to vector<1x1x128xf32>
    %cst_6 = arith.constant 6.400000e+01 : f32
    %12 = vector.broadcast %cst_6 : f32 to vector<1x1x128xf32>
    %13 = arith.divf %6, %12 : vector<1x1x128xf32>
    %cst_7 = arith.constant 6.400000e+01 : f32
    %14 = vector.broadcast %cst_7 : f32 to vector<1x1x128xf32>
    %15 = arith.divf %11, %14 : vector<1x1x128xf32>
    %16 = arith.mulf %13, %13 : vector<1x1x128xf32>
    %17 = arith.subf %15, %16 : vector<1x1x128xf32>
    %cst_8 = arith.constant 0.000000e+00 : f32
    %18 = vector.broadcast %cst_8 : f32 to vector<1x1x128xf32>
    %19 = arith.maximumf %17, %18 : vector<1x1x128xf32>
    %20 = vector.broadcast %13 : vector<1x1x128xf32> to vector<8x8x128xf32>
    %21 = arith.subf %2, %20 : vector<8x8x128xf32>
    %cst_9 = arith.constant 9.99999974E-6 : f32
    %22 = vector.broadcast %cst_9 : f32 to vector<1x1x128xf32>
    %23 = arith.addf %19, %22 : vector<1x1x128xf32>
    %24 = math.rsqrt %23 : vector<1x1x128xf32>
    %25 = vector.broadcast %24 : vector<1x1x128xf32> to vector<8x8x128xf32>
    %26 = arith.mulf %21, %25 : vector<8x8x128xf32>
    %c0_10 = arith.constant 0 : index
    %c0_11 = arith.constant 0 : index
    %c0_12 = arith.constant 0 : index
    %c0_13 = arith.constant 0 : index
    %27 = vector.load %arg3[%c0_10, %c0_11, %c0_12, %c0_13] : memref<1x1x1x128xf32, #tpu.memory_space<vmem>>, vector<1x1x1x128xf32>
    %28 = vector.shape_cast %27 : vector<1x1x1x128xf32> to vector<1x1x128xf32>
    %29 = vector.broadcast %28 : vector<1x1x128xf32> to vector<8x8x128xf32>
    %30 = arith.mulf %26, %29 : vector<8x8x128xf32>
    %c0_14 = arith.constant 0 : index
    %c0_15 = arith.constant 0 : index
    %c0_16 = arith.constant 0 : index
    %c0_17 = arith.constant 0 : index
    %31 = vector.load %arg4[%c0_14, %c0_15, %c0_16, %c0_17] : memref<1x1x1x128xf32, #tpu.memory_space<vmem>>, vector<1x1x1x128xf32>
    %32 = vector.shape_cast %31 : vector<1x1x1x128xf32> to vector<1x1x128xf32>
    %33 = vector.broadcast %32 : vector<1x1x128xf32> to vector<8x8x128xf32>
    %34 = arith.addf %30, %33 : vector<8x8x128xf32>
    %35 = arith.truncf %34 : vector<8x8x128xf32> to vector<8x8x128xbf16>
    %c0_18 = arith.constant 0 : index
    %c0_19 = arith.constant 0 : index
    %c0_20 = arith.constant 0 : index
    %c0_21 = arith.constant 0 : index
    %36 = vector.load %arg5[%c0_18, %c0_19, %c0_20, %c0_21] : memref<1x8x8x128xbf16, #tpu.memory_space<vmem>>, vector<1x8x8x128xbf16>
    %37 = vector.shape_cast %36 : vector<1x8x8x128xbf16> to vector<8x8x128xbf16>
    %38 = vector.shape_cast %35 : vector<8x8x128xbf16> to vector<1x8x8x128xbf16>
    tpu.vector_store %arg5[%c0_18, %c0_19, %c0_20, %c0_21], %38 {strides = array<i32>} : memref<1x8x8x128xbf16, #tpu.memory_space<vmem>>, vector<1x8x8x128xbf16>,
    return
  }
  func.func @transform_0(%arg0: i32, %arg1: i32) -> (i32, i32, i32, i32) {
    %c0_i32 = arith.constant 0 : i32
    %c0_i32_0 = arith.constant 0 : i32
    %c0_i32_1 = arith.constant 0 : i32
    return %arg0, %c0_i32, %c0_i32_0, %arg1 : i32, i32, i32, i32
  }
  func.func @transform_1(%arg0: i32, %arg1: i32) -> (i32, i32, i32, i32) {
    %c0_i32 = arith.constant 0 : i32
    %c0_i32_0 = arith.constant 0 : i32
    %c0_i32_1 = arith.constant 0 : i32
    %c0_i32_2 = arith.constant 0 : i32
    return %c0_i32, %c0_i32_0, %c0_i32_1, %arg1 : i32, i32, i32, i32
  }
  func.func @transform_2(%arg0: i32, %arg1: i32) -> (i32, i32, i32, i32) {
    %c0_i32 = arith.constant 0 : i32
    %c0_i32_0 = arith.constant 0 : i32
    %c0_i32_1 = arith.constant 0 : i32
    %c0_i32_2 = arith.constant 0 : i32
    return %c0_i32, %c0_i32_0, %c0_i32_1, %arg1 : i32, i32, i32, i32
  }
  func.func @transform_3(%arg0: i32, %arg1: i32) -> (i32, i32, i32, i32) {
    %c0_i32 = arith.constant 0 : i32
    %c0_i32_0 = arith.constant 0 : i32
    %c0_i32_1 = arith.constant 0 : i32
    return %arg0, %c0_i32, %c0_i32_0, %arg1 : i32, i32, i32, i32
  }
}

module attributes {stable_mosaic.version = 11 : i64} {
  func.func @kernel(%arg0: i32, %arg1: i32, %arg2: memref<1x8x10x128xbf16, #tpu.memory_space<vmem>>, %arg3: memref<1x1x1x128xf32, #tpu.memory_space<vmem>>, %arg4: memref<1x1x1x128xf32, #tpu.memory_space<vmem>>, %arg5: memref<1x8x8x128xbf16, #tpu.memory_space<vmem>>, %arg6: memref<1x8x8x128xf32, #tpu.memory_space<vmem>>) attributes {dimension_semantics = [#tpu.dimension_semantics<parallel>, #tpu.dimension_semantics<parallel>], iteration_bounds = array<i64: 2, 1>, scalar_prefetch = 0 : i64, scratch_operands = 0 : i64, tpu.core_type = #tpu.core_type<tc>, window_params = [{transform_indices = @transform_0, window_bounds = array<i64: 1, 8, 10, 128>}, {transform_indices = @transform_1, window_bounds = array<i64: 1, 1, 1, 128>}, {transform_indices = @transform_2, window_bounds = array<i64: 1, 1, 1, 128>}, {transform_indices = @transform_3, window_bounds = array<i64: 1, 8, 8, 128>}, {transform_indices = @transform_4, window_bounds = array<i64: 1, 8, 8, 128>}]} {
    %c0 = arith.constant 0 : index
    %c0_0 = arith.constant 0 : index
    %c0_1 = arith.constant 0 : index
    %c0_2 = arith.constant 0 : index
    %0 = vector.load %arg2[%c0, %c0_0, %c0_1, %c0_2] : memref<1x8x10x128xbf16, #tpu.memory_space<vmem>>, vector<1x8x10x128xbf16>
    %1 = vector.shape_cast %0 : vector<1x8x10x128xbf16> to vector<8x10x128xbf16>
    %2 = arith.extf %1 : vector<8x10x128xbf16> to vector<8x10x128xf32>
    %3 = vector.extract_strided_slice %2 {offsets = [0, 0, 0], sizes = [8, 8, 128], strides = [1, 1, 1]} : vector<8x10x128xf32> to vector<8x8x128xf32>
    %cst = arith.constant dense<0.000000e+00> : vector<8x128xf32>
    %4 = vector.multi_reduction <add>, %3, %cst [1] : vector<8x8x128xf32> to vector<8x128xf32>
    %5 = vector.shape_cast %4 : vector<8x128xf32> to vector<8x1x128xf32>
    %cst_3 = arith.constant dense<0.000000e+00> : vector<1x128xf32>
    %6 = vector.multi_reduction <add>, %5, %cst_3 [0] : vector<8x1x128xf32> to vector<1x128xf32>
    %7 = vector.shape_cast %6 : vector<1x128xf32> to vector<1x1x128xf32>
    %8 = arith.mulf %3, %3 : vector<8x8x128xf32>
    %cst_4 = arith.constant dense<0.000000e+00> : vector<8x128xf32>
    %9 = vector.multi_reduction <add>, %8, %cst_4 [1] : vector<8x8x128xf32> to vector<8x128xf32>
    %10 = vector.shape_cast %9 : vector<8x128xf32> to vector<8x1x128xf32>
    %cst_5 = arith.constant dense<0.000000e+00> : vector<1x128xf32>
    %11 = vector.multi_reduction <add>, %10, %cst_5 [0] : vector<8x1x128xf32> to vector<1x128xf32>
    %12 = vector.shape_cast %11 : vector<1x128xf32> to vector<1x1x128xf32>
    %cst_6 = arith.constant 6.400000e+01 : f32
    %13 = vector.broadcast %cst_6 : f32 to vector<1x1x128xf32>
    %14 = arith.divf %7, %13 : vector<1x1x128xf32>
    %cst_7 = arith.constant 6.400000e+01 : f32
    %15 = vector.broadcast %cst_7 : f32 to vector<1x1x128xf32>
    %16 = arith.divf %12, %15 : vector<1x1x128xf32>
    %17 = arith.mulf %14, %14 : vector<1x1x128xf32>
    %18 = arith.subf %16, %17 : vector<1x1x128xf32>
    %cst_8 = arith.constant 0.000000e+00 : f32
    %19 = vector.broadcast %cst_8 : f32 to vector<1x1x128xf32>
    %20 = arith.maximumf %18, %19 : vector<1x1x128xf32>
    %21 = vector.broadcast %14 : vector<1x1x128xf32> to vector<8x8x128xf32>
    %22 = arith.subf %3, %21 : vector<8x8x128xf32>
    %cst_9 = arith.constant 9.99999974E-6 : f32
    %23 = vector.broadcast %cst_9 : f32 to vector<1x1x128xf32>
    %24 = arith.addf %20, %23 : vector<1x1x128xf32>
    %25 = math.rsqrt %24 : vector<1x1x128xf32>
    %26 = vector.broadcast %25 : vector<1x1x128xf32> to vector<8x8x128xf32>
    %27 = arith.mulf %22, %26 : vector<8x8x128xf32>
    %c0_10 = arith.constant 0 : index
    %c0_11 = arith.constant 0 : index
    %c0_12 = arith.constant 0 : index
    %c0_13 = arith.constant 0 : index
    %28 = vector.load %arg3[%c0_10, %c0_11, %c0_12, %c0_13] : memref<1x1x1x128xf32, #tpu.memory_space<vmem>>, vector<1x1x1x128xf32>
    %29 = vector.shape_cast %28 : vector<1x1x1x128xf32> to vector<1x1x128xf32>
    %30 = vector.broadcast %29 : vector<1x1x128xf32> to vector<8x8x128xf32>
    %31 = arith.mulf %27, %30 : vector<8x8x128xf32>
    %c0_14 = arith.constant 0 : index
    %c0_15 = arith.constant 0 : index
    %c0_16 = arith.constant 0 : index
    %c0_17 = arith.constant 0 : index
    %32 = vector.load %arg4[%c0_14, %c0_15, %c0_16, %c0_17] : memref<1x1x1x128xf32, #tpu.memory_space<vmem>>, vector<1x1x1x128xf32>
    %33 = vector.shape_cast %32 : vector<1x1x1x128xf32> to vector<1x1x128xf32>
    %34 = vector.broadcast %33 : vector<1x1x128xf32> to vector<8x8x128xf32>
    %35 = arith.addf %31, %34 : vector<8x8x128xf32>
    %c0_18 = arith.constant 0 : index
    %c0_19 = arith.constant 0 : index
    %c0_20 = arith.constant 0 : index
    %c0_21 = arith.constant 0 : index
    %36 = vector.load %arg5[%c0_18, %c0_19, %c0_20, %c0_21] : memref<1x8x8x128xbf16, #tpu.memory_space<vmem>>, vector<1x8x8x128xbf16>
    %37 = vector.shape_cast %36 : vector<1x8x8x128xbf16> to vector<8x8x128xbf16>
    %38 = arith.extf %37 : vector<8x8x128xbf16> to vector<8x8x128xf32>
    %39 = arith.addf %35, %38 : vector<8x8x128xf32>
    %cst_22 = arith.constant 0.000000e+00 : f32
    %40 = vector.broadcast %cst_22 : f32 to vector<8x8x128xf32>
    %41 = arith.maximumf %39, %40 : vector<8x8x128xf32>
    %c0_23 = arith.constant 0 : index
    %c0_24 = arith.constant 0 : index
    %c0_25 = arith.constant 0 : index
    %c0_26 = arith.constant 0 : index
    %42 = vector.load %arg6[%c0_23, %c0_24, %c0_25, %c0_26] : memref<1x8x8x128xf32, #tpu.memory_space<vmem>>, vector<1x8x8x128xf32>
    %43 = vector.shape_cast %42 : vector<1x8x8x128xf32> to vector<8x8x128xf32>
    %44 = vector.shape_cast %41 : vector<8x8x128xf32> to vector<1x8x8x128xf32>
    tpu.vector_store %arg6[%c0_23, %c0_24, %c0_25, %c0_26], %44 {strides = array<i32>} : memref<1x8x8x128xf32, #tpu.memory_space<vmem>>, vector<1x8x8x128xf32>,
    return
  }
  func.func @transform_0(%arg0: i32, %arg1: i32) -> (i32, i32, i32, i32) {
    %c0_i32 = arith.constant 0 : i32
    %c0_i32_0 = arith.constant 0 : i32
    %c0_i32_1 = arith.constant 0 : i32
    return %arg0, %c0_i32, %c0_i32_0, %arg1 : i32, i32, i32, i32
  }
  func.func @transform_1(%arg0: i32, %arg1: i32) -> (i32, i32, i32, i32) {
    %c0_i32 = arith.constant 0 : i32
    %c0_i32_0 = arith.constant 0 : i32
    %c0_i32_1 = arith.constant 0 : i32
    %c0_i32_2 = arith.constant 0 : i32
    return %c0_i32, %c0_i32_0, %c0_i32_1, %arg1 : i32, i32, i32, i32
  }
  func.func @transform_2(%arg0: i32, %arg1: i32) -> (i32, i32, i32, i32) {
    %c0_i32 = arith.constant 0 : i32
    %c0_i32_0 = arith.constant 0 : i32
    %c0_i32_1 = arith.constant 0 : i32
    %c0_i32_2 = arith.constant 0 : i32
    return %c0_i32, %c0_i32_0, %c0_i32_1, %arg1 : i32, i32, i32, i32
  }
  func.func @transform_3(%arg0: i32, %arg1: i32) -> (i32, i32, i32, i32) {
    %c0_i32 = arith.constant 0 : i32
    %c0_i32_0 = arith.constant 0 : i32
    %c0_i32_1 = arith.constant 0 : i32
    return %arg0, %c0_i32, %c0_i32_0, %arg1 : i32, i32, i32, i32
  }
  func.func @transform_4(%arg0: i32, %arg1: i32) -> (i32, i32, i32, i32) {
    %c0_i32 = arith.constant 0 : i32
    %c0_i32_0 = arith.constant 0 : i32
    %c0_i32_1 = arith.constant 0 : i32
    return %arg0, %c0_i32, %c0_i32_0, %arg1 : i32, i32, i32, i32
  }
}

</mosaic_0001>

<llo_original>
// kernel: _lambda_.7
$region0: #{_lambda_.7}
  #allocation0 [shape = 'u32[]', space=smem, size = 0x4, offset = 0x4, fixed_abs, tag = 'smem constant byte address 0x4 - core index']
  #allocation1 [shape = 'u32[144,128]{1,0:T(1,128)}', space=vmem, size = 0x12000, scoped, tag = 'internal scratch']
  %s0 = inlined_call_operand.vmem [shape: bf16[2,8,9,128], index: 0, kind: input, shape index: {}]
  %s1 = inlined_call_operand.vmem [shape: f32[1,1,1,128], index: 1, kind: input, shape index: {}]
  %s2 = inlined_call_operand.vmem [shape: f32[1,1,1,128], index: 2, kind: input, shape index: {}]
  %s3 = inlined_call_operand.vmem [shape: bf16[2,8,8,128], index: 3, kind: output, shape index: {}]
  %s4 = sld [smem:[#allocation0]]
  $region45: #{_lambda_.7} parent=0
    _
  %s6 = ssub.s32 1, %s4
  %s7 = scalar_select 0, %s6, %s4
  loop: start=0, step=1, limit=4
  $region2: #{_lambda_.7} parent=0 // loop_pre_header
    _
  $region3: #{_lambda_.7} parent=0 // loop_header
    %s9 = sphi 0, %s13
    %p10 = scmp.ge.s32.totalorder %s9, 4
    %s16 = sphi 0, %s28
    %s17 = sphi 0, %s24
    %s18 = sphi 0, %s16
    %s19 = sphi 0, %s17
    %s20 = sphi 0, %s18
    %s21 = sphi 0, %s19
    %s33 = sphi 0, %s35
    %s36 = sphi 0, %s33
    %s37 = sphi 0, %s36
    %s53 = sphi 0, %s37
    %s59 = sphi 0, %s61
    %s62 = sphi 0, %s59
    %s63 = sphi 0, %s62
    %s79 = sphi 0, %s63
    %s85 = sphi 0, %s87
    %s88 = sphi 0, %s85
    %s89 = sphi 0, %s88
    %s105 = sphi 0, %s89
    %s113 = sphi 0, %s115
    %s116 = sphi 0, %s113
    %s117 = sphi 0, %s116
    %s133 = sphi 0, %s117
  $region4: #{_lambda_.7} parent=0 // loop_header_branch
    %12 = sbr.rel (%p10) target = $region8
  $region5: #{_lambda_.7} parent=0 // loop_body
    %s14 = ssub.s32 %s9, 1
    %s15 = ssub.s32 %s9, 2
    %s22 = sadd.s32 1, %s17
    %p23 = scmp.ge.s32.totalorder %s22, 1
    %s24 = scalar_select %p23, 0, %s22
    %s25 = sadd.s32 1, %s16
    %s26 = scalar_select %p23, %s25, %s16
    %p27 = scmp.ge.s32.totalorder %s26, 2
    %s28 = scalar_select %p27, 0, %s26
    %s29 = ssub.s32 %s16, %s28
    %s30 = ssub.s32 %s17, %s24
    %s31 = sor.u32 %s29, %s30
    %p32 = scmp.eq.s32.totalorder %s31, 0
    %s34 = sadd.s32 %s33, 1
    %s35 = scalar_select %p32, %s33, %s34
    %p38 = pneg %p32
    %p39 = scmp.eq.s32.totalorder %s9, 1
    %p40 = por %p38, %p39
    %p41 = scmp.ne.s32.totalorder %s33, %s36
    %p42 = scmp.eq.s32.totalorder %s9, 0
    %p43 = por %p41, %p42
    %p44 = scmp.ne.s32.totalorder %s33, %s36
    %p45 = scmp.eq.s32.totalorder %s14, 1
    %p46 = por %p44, %p45
    %p47 = scmp.ne.s32.totalorder %s36, %s37
    %p48 = scmp.eq.s32.totalorder %s14, 0
    %p49 = por %p47, %p48
    %p50 = scmp.ne.s32.totalorder %s36, %s37
    %p51 = scmp.eq.s32.totalorder %s15, 1
    %p52 = por %p50, %p51
    %p54 = scmp.ne.s32.totalorder %s37, %s53
    %p55 = scmp.eq.s32.totalorder %s15, 0
    %p56 = por %p54, %p55
    %s57 = ssub.s32 %s17, %s24
    %p58 = scmp.eq.s32.totalorder %s57, 0
    %s60 = sadd.s32 %s59, 1
    %s61 = scalar_select %p58, %s59, %s60
    %p64 = pneg %p58
    %p65 = scmp.eq.s32.totalorder %s9, 1
    %p66 = por %p64, %p65
    %p67 = scmp.ne.s32.totalorder %s59, %s62
    %p68 = scmp.eq.s32.totalorder %s9, 0
    %p69 = por %p67, %p68
    %p70 = scmp.ne.s32.totalorder %s59, %s62
    %p71 = scmp.eq.s32.totalorder %s14, 1
    %p72 = por %p70, %p71
    %p73 = scmp.ne.s32.totalorder %s62, %s63
    %p74 = scmp.eq.s32.totalorder %s14, 0
    %p75 = por %p73, %p74
    %p76 = scmp.ne.s32.totalorder %s62, %s63
    %p77 = scmp.eq.s32.totalorder %s15, 1
    %p78 = por %p76, %p77
    %p80 = scmp.ne.s32.totalorder %s63, %s79
    %p81 = scmp.eq.s32.totalorder %s15, 0
    %p82 = por %p80, %p81
    %s83 = ssub.s32 %s17, %s24
    %p84 = scmp.eq.s32.totalorder %s83, 0
    %s86 = sadd.s32 %s85, 1
    %s87 = scalar_select %p84, %s85, %s86
    %p90 = pneg %p84
    %p91 = scmp.eq.s32.totalorder %s9, 1
    %p92 = por %p90, %p91
    %p93 = scmp.ne.s32.totalorder %s85, %s88
    %p94 = scmp.eq.s32.totalorder %s9, 0
    %p95 = por %p93, %p94
    %p96 = scmp.ne.s32.totalorder %s85, %s88
    %p97 = scmp.eq.s32.totalorder %s14, 1
    %p98 = por %p96, %p97
    %p99 = scmp.ne.s32.totalorder %s88, %s89
    %p100 = scmp.eq.s32.totalorder %s14, 0
    %p101 = por %p99, %p100
    %p102 = scmp.ne.s32.totalorder %s88, %s89
    %p103 = scmp.eq.s32.totalorder %s15, 1
    %p104 = por %p102, %p103
    %p106 = scmp.ne.s32.totalorder %s89, %s105
    %p107 = scmp.eq.s32.totalorder %s15, 0
    %p108 = por %p106, %p107
    %s109 = ssub.s32 %s16, %s28
    %s110 = ssub.s32 %s17, %s24
    %s111 = sor.u32 %s109, %s110
    %p112 = scmp.eq.s32.totalorder %s111, 0
    %s114 = sadd.s32 %s113, 1
    %s115 = scalar_select %p112, %s113, %s114
    %p118 = pneg %p112
    %p119 = scmp.eq.s32.totalorder %s9, 1
    %p120 = por %p118, %p119
    %p121 = scmp.ne.s32.totalorder %s113, %s116
    %p122 = scmp.eq.s32.totalorder %s9, 0
    %p123 = por %p121, %p122
    %p124 = scmp.ne.s32.totalorder %s113, %s116
    %p125 = scmp.eq.s32.totalorder %s14, 1
    %p126 = por %p124, %p125
    %p127 = scmp.ne.s32.totalorder %s116, %s117
    %p128 = scmp.eq.s32.totalorder %s14, 0
    %p129 = por %p127, %p128
    %p130 = scmp.ne.s32.totalorder %s116, %s117
    %p131 = scmp.eq.s32.totalorder %s15, 1
    %p132 = por %p130, %p131
    %p134 = scmp.ne.s32.totalorder %s117, %s133
    %p135 = scmp.eq.s32.totalorder %s15, 0
    %p136 = por %p134, %p135
    %p137 = scmp.le.s32.totalorder 1, %s9
    %p138 = scmp.lt.s32.totalorder %s9, 3
    %p139 = pnand %p137, %p138
    %p140 = pneg %p139
    // Predicated region
    $region9: #{_lambda_.7} parent=5 // pred_check
      _
    $region10: #{_lambda_.7} parent=5 // pred_check_branch
      %142 = sbr.rel (%p139) target = $region12
    $region11: #{_lambda_.7} parent=5 // pred_region
      %s143 = ssub.s32 %s9, 1
      // Predicated region
      $region13: #{_lambda_.7} parent=11 // pred_check
        %p144 = pneg %p75
      $region14: #{_lambda_.7} parent=11 // pred_check_branch
        %146 = sbr.rel (%p144) target = $region16
      $region15: #{_lambda_.7} parent=11 // pred_region
        %p147 = scmp.lt.s32.totalorder %s19, 0
        %s148 = scalar_select %p147, %s19, 0
        %s149 = scalar_lea.vmem %s1, %s148
      $region16: #{_lambda_.7} parent=11 // pred_fallthru
        _
      // Predicated region
      $region17: #{_lambda_.7} parent=11 // pred_check
        %p150 = pneg %p101
      $region18: #{_lambda_.7} parent=11 // pred_check_branch
        %152 = sbr.rel (%p150) target = $region20
      $region19: #{_lambda_.7} parent=11 // pred_region
        %p153 = scmp.lt.s32.totalorder %s19, 0
        %s154 = scalar_select %p153, %s19, 0
        %s155 = scalar_lea.vmem %s2, %s154
      $region20: #{_lambda_.7} parent=11 // pred_fallthru
        _
    $region12: #{_lambda_.7} parent=5 // pred_fallthru
      _
    %p156 = scmp.lt.s32.totalorder %s9, 2
    // Predicated region
    $region21: #{_lambda_.7} parent=5 // pred_check
      %p157 = pneg %p156
    $region22: #{_lambda_.7} parent=5 // pred_check_branch
      %159 = sbr.rel (%p157) target = $region24
    $region23: #{_lambda_.7} parent=5 // pred_region
      // Predicated region
      $region25: #{_lambda_.7} parent=23 // pred_check
        %p160 = pneg %p43
      $region26: #{_lambda_.7} parent=23 // pred_check_branch
        %162 = sbr.rel (%p160) target = $region28
      $region27: #{_lambda_.7} parent=23 // pred_region
        %p163 = scmp.lt.s32.totalorder %s16, 1
        %s164 = scalar_select %p163, %s16, 1
        %p165 = scmp.lt.s32.totalorder %s17, 0
        %s166 = scalar_select %p165, %s17, 0
        %s167 = smul.addr %s164, 16
        %s168 = sadd.s32 %s166, %s167
        %s169 = smul.addr %s168, 4
        %s170 = scalar_lea.vmem %s0, %s169
      $region28: #{_lambda_.7} parent=23 // pred_fallthru
        _
    $region24: #{_lambda_.7} parent=5 // pred_fallthru
      _
    %p171 = scmp.le.s32.totalorder 1, %s9
    %p172 = scmp.lt.s32.totalorder %s9, 3
    %p173 = pnand %p171, %p172
    %p174 = pneg %p173
    // Predicated region
    $region29: #{_lambda_.7} parent=5 // pred_check
      _
    $region30: #{_lambda_.7} parent=5 // pred_check_branch
      %176 = sbr.rel (%p173) target = $region32
    $region31: #{_lambda_.7} parent=5 // pred_region
      %s177 = ssub.s32 %s9, 1
      %p178 = scmp.lt.s32.totalorder %s18, 1
      %s179 = scalar_select %p178, %s18, 1
      %p180 = scmp.lt.s32.totalorder %s19, 0
      %s181 = scalar_select %p180, %s19, 0
      %s182 = smul.addr %s179, 16
      %s183 = sadd.s32 %s181, %s182
      %s184 = smul.addr %s183, 4
      %s185 = scalar_lea.vmem %s0, %s184
      %p186 = pneg %p49
      %p187 = pneg %p46
      %p188 = scmp.lt.s32.totalorder %s19, 0
      %s189 = scalar_select %p188, %s19, 0
      %s190 = scalar_lea.vmem %s1, %s189
      %p191 = pneg %p75
      %p192 = pneg %p72
      %p193 = scmp.lt.s32.totalorder %s19, 0
      %s194 = scalar_select %p193, %s19, 0
      %s195 = scalar_lea.vmem %s2, %s194
      %p196 = pneg %p101
      %p197 = pneg %p98
      %p198 = pneg %p129
      %p199 = pneg %p126
      %p200 = scmp.lt.s32.totalorder %s18, 1
      %s201 = scalar_select %p200, %s18, 1
      %p202 = scmp.lt.s32.totalorder %s19, 0
      %s203 = scalar_select %p202, %s19, 0
      %s204 = smul.addr %s201, 8
      %s205 = sadd.s32 %s203, %s204
      %s206 = smul.addr %s205, 4
      %s207 = scalar_lea.vmem %s3, %s206
      %p208 = scmp.lt.s32.totalorder %s18, 1
      %s209 = scalar_select %p208, %s18, 1
      %p210 = scmp.lt.s32.totalorder %s19, 0
      %s211 = scalar_select %p210, %s19, 0
      %s212 = smul.addr %s209, 16
      %s213 = sadd.s32 %s211, %s212
      %s214 = smul.addr %s213, 4
      %s215 = scalar_lea.vmem %s0, %s214
      %p216 = scmp.lt.s32.totalorder %s19, 0
      %s217 = scalar_select %p216, %s19, 0
      %s218 = scalar_lea.vmem %s1, %s217
      %p219 = scmp.lt.s32.totalorder %s19, 0
      %s220 = scalar_select %p219, %s19, 0
      %s221 = scalar_lea.vmem %s2, %s220
      %p222 = scmp.lt.s32.totalorder %s18, 1
      %s223 = scalar_select %p222, %s18, 1
      %p224 = scmp.lt.s32.totalorder %s19, 0
      %s225 = scalar_select %p224, %s19, 0
      %s226 = smul.addr %s223, 8
      %s227 = sadd.s32 %s225, %s226
      %s228 = smul.addr %s227, 4
      %s229 = scalar_lea.vmem %s3, %s228
      %v230 = vld [vmem:[%s215] sm:$0xf]
      %v231 = vld [vmem:[%s215 + $0x8] sm:$0xf]
      %v232 = vld [vmem:[%s215 + $0x10] sm:$0xf]
      %v233 = vld [vmem:[%s215 + $0x18] sm:$0xf]
      %v234 = vld [vmem:[%s215 + $0x20] sm:$0xf]
      %v235 = vld [vmem:[%s215 + $0x28] sm:$0xf]
      %v236 = vld [vmem:[%s215 + $0x30] sm:$0xf]
      %v237 = vld [vmem:[%s215 + $0x38] sm:$0xf]
      %v238 = vunpack.c.l.bf16 %v230
      %v239 = vunpack.c.l.bf16 %v231
      %v240 = vunpack.c.l.bf16 %v232
      %v241 = vunpack.c.l.bf16 %v233
      %v242 = vunpack.c.l.bf16 %v234
      %v243 = vunpack.c.l.bf16 %v235
      %v244 = vunpack.c.l.bf16 %v236
      %v245 = vunpack.c.l.bf16 %v237
      %v246 = vrot.slane %v238, 4
      %v247 = vadd.f32 %v238, %v246
      %v248 = vrot.slane %v247, 2
      %v249 = vadd.f32 %v247, %v248
      %v250 = vrot.slane %v249, 1
      %v251 = vadd.f32 %v249, %v250
      %v252 = vrot.slane %v239, 4
      %v253 = vadd.f32 %v239, %v252
      %v254 = vrot.slane %v253, 2
      %v255 = vadd.f32 %v253, %v254
      %v256 = vrot.slane %v255, 1
      %v257 = vadd.f32 %v255, %v256
      %v258 = vrot.slane %v240, 4
      %v259 = vadd.f32 %v240, %v258
      %v260 = vrot.slane %v259, 2
      %v261 = vadd.f32 %v259, %v260
      %v262 = vrot.slane %v261, 1
      %v263 = vadd.f32 %v261, %v262
      %v264 = vrot.slane %v241, 4
      %v265 = vadd.f32 %v241, %v264
      %v266 = vrot.slane %v265, 2
      %v267 = vadd.f32 %v265, %v266
      %v268 = vrot.slane %v267, 1
      %v269 = vadd.f32 %v267, %v268
      %v270 = vrot.slane %v242, 4
      %v271 = vadd.f32 %v242, %v270
      %v272 = vrot.slane %v271, 2
      %v273 = vadd.f32 %v271, %v272
      %v274 = vrot.slane %v273, 1
      %v275 = vadd.f32 %v273, %v274
      %v276 = vrot.slane %v243, 4
      %v277 = vadd.f32 %v243, %v276
      %v278 = vrot.slane %v277, 2
      %v279 = vadd.f32 %v277, %v278
      %v280 = vrot.slane %v279, 1
      %v281 = vadd.f32 %v279, %v280
      %v282 = vrot.slane %v244, 4
      %v283 = vadd.f32 %v244, %v282
      %v284 = vrot.slane %v283, 2
      %v285 = vadd.f32 %v283, %v284
      %v286 = vrot.slane %v285, 1
      %v287 = vadd.f32 %v285, %v286
      %v288 = vrot.slane %v245, 4
      %v289 = vadd.f32 %v245, %v288
      %v290 = vrot.slane %v289, 2
      %v291 = vadd.f32 %v289, %v290
      %v292 = vrot.slane %v291, 1
      %v293 = vadd.f32 %v291, %v292
      %v294 = vadd.f32 %v251, %v257
      %v295 = vadd.f32 %v294, %v263
      %v296 = vadd.f32 %v295, %v269
      %v297 = vadd.f32 %v296, %v275
      %v298 = vadd.f32 %v297, %v281
      %v299 = vadd.f32 %v298, %v287
      %v300 = vadd.f32 %v299, %v293
      %v301 = vmul.f32 %v238, %v238
      %v302 = vmul.f32 %v239, %v239
      %v303 = vmul.f32 %v240, %v240
      %v304 = vmul.f32 %v241, %v241
      %v305 = vmul.f32 %v242, %v242
      %v306 = vmul.f32 %v243, %v243
      %v307 = vmul.f32 %v244, %v244
      %v308 = vmul.f32 %v245, %v245
      %v309 = vrot.slane %v301, 4
      %v310 = vadd.f32 %v301, %v309
      %v311 = vrot.slane %v310, 2
      %v312 = vadd.f32 %v310, %v311
      %v313 = vrot.slane %v312, 1
      %v314 = vadd.f32 %v312, %v313
      %v315 = vrot.slane %v302, 4
      %v316 = vadd.f32 %v302, %v315
      %v317 = vrot.slane %v316, 2
      %v318 = vadd.f32 %v316, %v317
      %v319 = vrot.slane %v318, 1
      %v320 = vadd.f32 %v318, %v319
      %v321 = vrot.slane %v303, 4
      %v322 = vadd.f32 %v303, %v321
      %v323 = vrot.slane %v322, 2
      %v324 = vadd.f32 %v322, %v323
      %v325 = vrot.slane %v324, 1
      %v326 = vadd.f32 %v324, %v325
      %v327 = vrot.slane %v304, 4
      %v328 = vadd.f32 %v304, %v327
      %v329 = vrot.slane %v328, 2
      %v330 = vadd.f32 %v328, %v329
      %v331 = vrot.slane %v330, 1
      %v332 = vadd.f32 %v330, %v331
      %v333 = vrot.slane %v305, 4
      %v334 = vadd.f32 %v305, %v333
      %v335 = vrot.slane %v334, 2
      %v336 = vadd.f32 %v334, %v335
      %v337 = vrot.slane %v336, 1
      %v338 = vadd.f32 %v336, %v337
      %v339 = vrot.slane %v306, 4
      %v340 = vadd.f32 %v306, %v339
      %v341 = vrot.slane %v340, 2
      %v342 = vadd.f32 %v340, %v341
      %v343 = vrot.slane %v342, 1
      %v344 = vadd.f32 %v342, %v343
      %v345 = vrot.slane %v307, 4
      %v346 = vadd.f32 %v307, %v345
      %v347 = vrot.slane %v346, 2
      %v348 = vadd.f32 %v346, %v347
      %v349 = vrot.slane %v348, 1
      %v350 = vadd.f32 %v348, %v349
      %v351 = vrot.slane %v308, 4
      %v352 = vadd.f32 %v308, %v351
      %v353 = vrot.slane %v352, 2
      %v354 = vadd.f32 %v352, %v353
      %v355 = vrot.slane %v354, 1
      %v356 = vadd.f32 %v354, %v355
      %v357 = vadd.f32 %v314, %v320
      %v358 = vadd.f32 %v357, %v326
      %v359 = vadd.f32 %v358, %v332
      %v360 = vadd.f32 %v359, %v338
      %v361 = vadd.f32 %v360, %v344
      %v362 = vadd.f32 %v361, %v350
      %v363 = vadd.f32 %v362, %v356
      %v364 = vrcp.pop 64.0
      %v365 = vmul.f32 %v300, %v364
      %v366 = vmul.f32 %v363, %v364
      %v367 = vmul.f32 %v365, %v365
      %v368 = vsub.f32 %v366, %v367
      %v369 = vmax.f32 %v368, 0.0
      %v370 = vsub.f32 %v238, %v365
      %v371 = vsub.f32 %v239, %v365
      %v372 = vsub.f32 %v240, %v365
      %v373 = vsub.f32 %v241, %v365
      %v374 = vsub.f32 %v242, %v365
      %v375 = vsub.f32 %v243, %v365
      %v376 = vsub.f32 %v244, %v365
      %v377 = vsub.f32 %v245, %v365
      %v378 = vadd.f32 %v369, 1e-05
      %v379 = vrsqrt.pop %v378
      %v380 = vmul.f32 %v370, %v379
      %v381 = vmul.f32 %v371, %v379
      %v382 = vmul.f32 %v372, %v379
      %v383 = vmul.f32 %v373, %v379
      %v384 = vmul.f32 %v374, %v379
      %v385 = vmul.f32 %v375, %v379
      %v386 = vmul.f32 %v376, %v379
      %v387 = vmul.f32 %v377, %v379
      %v388 = vld [vmem:[%s218] sm:$0x1]
      %v390 = vlaneseq
      %v391 = vshrl.u32 %v390, 7
      %v392 = vsub.s32 0, %v391
      %v393 = vrot.slane %v388, %v392
      %v395 = vmul.f32 %v380, %v393
      %v396 = vmul.f32 %v381, %v393
      %v397 = vmul.f32 %v382, %v393
      %v398 = vmul.f32 %v383, %v393
      %v399 = vmul.f32 %v384, %v393
      %v400 = vmul.f32 %v385, %v393
      %v401 = vmul.f32 %v386, %v393
      %v402 = vmul.f32 %v387, %v393
      %v403 = vld [vmem:[%s221] sm:$0x1]
      %v405 = vlaneseq
      %v406 = vshrl.u32 %v405, 7
      %v407 = vsub.s32 0, %v406
      %v408 = vrot.slane %v403, %v407
      %v410 = vadd.f32 %v395, %v408
      %v411 = vadd.f32 %v396, %v408
      %v412 = vadd.f32 %v397, %v408
      %v413 = vadd.f32 %v398, %v408
      %v414 = vadd.f32 %v399, %v408
      %v415 = vadd.f32 %v400, %v408
      %v416 = vadd.f32 %v401, %v408
      %v417 = vadd.f32 %v402, %v408
      %v418 = vmax.f32 %v410, 0.0
      %v419 = vmax.f32 %v411, 0.0
      %v420 = vmax.f32 %v412, 0.0
      %v421 = vmax.f32 %v413, 0.0
      %v422 = vmax.f32 %v414, 0.0
      %v423 = vmax.f32 %v415, 0.0
      %v424 = vmax.f32 %v416, 0.0
      %v425 = vmax.f32 %v417, 0.0
      %v426 = vpack.c.bf16 %v418, %v418
      %v427 = vpack.c.bf16 %v419, %v419
      %v428 = vpack.c.bf16 %v420, %v420
      %v429 = vpack.c.bf16 %v421, %v421
      %v430 = vpack.c.bf16 %v422, %v422
      %v431 = vpack.c.bf16 %v423, %v423
      %v432 = vpack.c.bf16 %v424, %v424
      %v433 = vpack.c.bf16 %v425, %v425
      %434 = vst [vmem:[%s229] sm:$0xf] %v426
      %435 = vst [vmem:[%s229 + $0x4] sm:$0xf] %v427
      %436 = vst [vmem:[%s229 + $0x8] sm:$0xf] %v428
      %437 = vst [vmem:[%s229 + $0xc] sm:$0xf] %v429
      %438 = vst [vmem:[%s229 + $0x10] sm:$0xf] %v430
      %439 = vst [vmem:[%s229 + $0x14] sm:$0xf] %v431
      %440 = vst [vmem:[%s229 + $0x18] sm:$0xf] %v432
      %441 = vst [vmem:[%s229 + $0x1c] sm:$0xf] %v433
      %p442 = scmp.lt.s32.totalorder %s18, 1
      %s443 = scalar_select %p442, %s18, 1
      %p444 = scmp.lt.s32.totalorder %s19, 0
      %s445 = scalar_select %p444, %s19, 0
      %s446 = smul.addr %s443, 8
      %s447 = sadd.s32 %s445, %s446
      %s448 = smul.addr %s447, 4
      %s449 = scalar_lea.vmem %s3, %s448
      // Predicated region
      $region33: #{_lambda_.7} parent=31 // pred_check
        %p450 = pneg %p126
      $region34: #{_lambda_.7} parent=31 // pred_check_branch
        %452 = sbr.rel (%p450) target = $region36
      $region35: #{_lambda_.7} parent=31 // pred_region
        _
      $region36: #{_lambda_.7} parent=31 // pred_fallthru
        _
    $region32: #{_lambda_.7} parent=5 // pred_fallthru
      _
    %p453 = scmp.le.s32.totalorder 2, %s9
    // Predicated region
    $region37: #{_lambda_.7} parent=5 // pred_check
      %p454 = pneg %p453
    $region38: #{_lambda_.7} parent=5 // pred_check_branch
      %456 = sbr.rel (%p454) target = $region40
    $region39: #{_lambda_.7} parent=5 // pred_region
      %s457 = ssub.s32 %s9, 2
      // Predicated region
      $region41: #{_lambda_.7} parent=39 // pred_check
        %p458 = pneg %p132
      $region42: #{_lambda_.7} parent=39 // pred_check_branch
        %460 = sbr.rel (%p458) target = $region44
      $region43: #{_lambda_.7} parent=39 // pred_region
        %p461 = scmp.lt.s32.totalorder %s20, 1
        %s462 = scalar_select %p461, %s20, 1
        %p463 = scmp.lt.s32.totalorder %s21, 0
        %s464 = scalar_select %p463, %s21, 0
        %s465 = smul.addr %s462, 8
        %s466 = sadd.s32 %s464, %s465
        %s467 = smul.addr %s466, 4
        %s468 = scalar_lea.vmem %s3, %s467
      $region44: #{_lambda_.7} parent=39 // pred_fallthru
        _
    $region40: #{_lambda_.7} parent=5 // pred_fallthru
      _
  $region6: #{_lambda_.7} parent=0 // loop_footer
    %s13 = sadd.s32 1, %s9
  $region7: #{_lambda_.7} parent=0 // loop_footer_branch
    %8 = sbr.rel target = $region3
  $region8: #{_lambda_.7} parent=0 // loop_exit
    _

// kernel: _lambda_.6
$region0: #{_lambda_.6}
  #allocation0 [shape = 'u32[]', space=smem, size = 0x4, offset = 0x4, fixed_abs, tag = 'smem constant byte address 0x4 - core index']
  #allocation1 [shape = 'u32[144,128]{1,0:T(1,128)}', space=vmem, size = 0x12000, scoped, tag = 'internal scratch']
  #allocation2 [shape = 'f32[72,128]{1,0:T(8,128)}', space=vmem, size = 0x9000, scoped, tag = 'scratch operand']
  %s0 = inlined_call_operand.vmem [shape: bf16[2,328,8], index: 0, kind: input, shape index: {}]
  %s1 = inlined_call_operand.vmem [shape: bf16[9,8,128], index: 1, kind: input, shape index: {}]
  %s2 = inlined_call_operand.vmem [shape: bf16[2,72,128], index: 2, kind: output, shape index: {}]
  %s3 = sld [smem:[#allocation0]]
  $region41: #{_lambda_.6} parent=0
    _
  %s5 = ssub.s32 1, %s3
  %s6 = scalar_select 0, %s5, %s3
  loop: start=0, step=1, limit=4
  $region2: #{_lambda_.6} parent=0 // loop_pre_header
    _
  $region3: #{_lambda_.6} parent=0 // loop_header
    %s8 = sphi 0, %s12
    %p9 = scmp.ge.s32.totalorder %s8, 4
    %s15 = sphi 0, %s27
    %s16 = sphi 0, %s23
    %s17 = sphi 0, %s15
    %s18 = sphi 0, %s16
    %s19 = sphi 0, %s17
    %s20 = sphi 0, %s18
    %s30 = sphi 0, %s32
    %s33 = sphi 0, %s30
    %s34 = sphi 0, %s33
    %s50 = sphi 0, %s34
    %s56 = sphi 0, %s58
    %s59 = sphi 0, %s56
    %s60 = sphi 0, %s59
    %s76 = sphi 0, %s60
    %s84 = sphi 0, %s86
    %s87 = sphi 0, %s84
    %s88 = sphi 0, %s87
    %s104 = sphi 0, %s88
  $region4: #{_lambda_.6} parent=0 // loop_header_branch
    %11 = sbr.rel (%p9) target = $region8
  $region5: #{_lambda_.6} parent=0 // loop_body
    %s13 = ssub.s32 %s8, 1
    %s14 = ssub.s32 %s8, 2
    %s21 = sadd.s32 1, %s16
    %p22 = scmp.ge.s32.totalorder %s21, 1
    %s23 = scalar_select %p22, 0, %s21
    %s24 = sadd.s32 1, %s15
    %s25 = scalar_select %p22, %s24, %s15
    %p26 = scmp.ge.s32.totalorder %s25, 2
    %s27 = scalar_select %p26, 0, %s25
    %s28 = ssub.s32 %s15, %s27
    %p29 = scmp.eq.s32.totalorder %s28, 0
    %s31 = sadd.s32 %s30, 1
    %s32 = scalar_select %p29, %s30, %s31
    %p35 = pneg %p29
    %p36 = scmp.eq.s32.totalorder %s8, 1
    %p37 = por %p35, %p36
    %p38 = scmp.ne.s32.totalorder %s30, %s33
    %p39 = scmp.eq.s32.totalorder %s8, 0
    %p40 = por %p38, %p39
    %p41 = scmp.ne.s32.totalorder %s30, %s33
    %p42 = scmp.eq.s32.totalorder %s13, 1
    %p43 = por %p41, %p42
    %p44 = scmp.ne.s32.totalorder %s33, %s34
    %p45 = scmp.eq.s32.totalorder %s13, 0
    %p46 = por %p44, %p45
    %p47 = scmp.ne.s32.totalorder %s33, %s34
    %p48 = scmp.eq.s32.totalorder %s14, 1
    %p49 = por %p47, %p48
    %p51 = scmp.ne.s32.totalorder %s34, %s50
    %p52 = scmp.eq.s32.totalorder %s14, 0
    %p53 = por %p51, %p52
    %s54 = ssub.s32 %s16, %s23
    %p55 = scmp.eq.s32.totalorder %s54, 0
    %s57 = sadd.s32 %s56, 1
    %s58 = scalar_select %p55, %s56, %s57
    %p61 = pneg %p55
    %p62 = scmp.eq.s32.totalorder %s8, 1
    %p63 = por %p61, %p62
    %p64 = scmp.ne.s32.totalorder %s56, %s59
    %p65 = scmp.eq.s32.totalorder %s8, 0
    %p66 = por %p64, %p65
    %p67 = scmp.ne.s32.totalorder %s56, %s59
    %p68 = scmp.eq.s32.totalorder %s13, 1
    %p69 = por %p67, %p68
    %p70 = scmp.ne.s32.totalorder %s59, %s60
    %p71 = scmp.eq.s32.totalorder %s13, 0
    %p72 = por %p70, %p71
    %p73 = scmp.ne.s32.totalorder %s59, %s60
    %p74 = scmp.eq.s32.totalorder %s14, 1
    %p75 = por %p73, %p74
    %p77 = scmp.ne.s32.totalorder %s60, %s76
    %p78 = scmp.eq.s32.totalorder %s14, 0
    %p79 = por %p77, %p78
    %s80 = ssub.s32 %s15, %s27
    %s81 = ssub.s32 %s16, %s23
    %s82 = sor.u32 %s80, %s81
    %p83 = scmp.eq.s32.totalorder %s82, 0
    %s85 = sadd.s32 %s84, 1
    %s86 = scalar_select %p83, %s84, %s85
    %p89 = pneg %p83
    %p90 = scmp.eq.s32.totalorder %s8, 1
    %p91 = por %p89, %p90
    %p92 = scmp.ne.s32.totalorder %s84, %s87
    %p93 = scmp.eq.s32.totalorder %s8, 0
    %p94 = por %p92, %p93
    %p95 = scmp.ne.s32.totalorder %s84, %s87
    %p96 = scmp.eq.s32.totalorder %s13, 1
    %p97 = por %p95, %p96
    %p98 = scmp.ne.s32.totalorder %s87, %s88
    %p99 = scmp.eq.s32.totalorder %s13, 0
    %p100 = por %p98, %p99
    %p101 = scmp.ne.s32.totalorder %s87, %s88
    %p102 = scmp.eq.s32.totalorder %s14, 1
    %p103 = por %p101, %p102
    %p105 = scmp.ne.s32.totalorder %s88, %s104
    %p106 = scmp.eq.s32.totalorder %s14, 0
    %p107 = por %p105, %p106
    %p108 = scmp.le.s32.totalorder 1, %s8
    %p109 = scmp.lt.s32.totalorder %s8, 3
    %p110 = pnand %p108, %p109
    %p111 = pneg %p110
    // Predicated region
    $region9: #{_lambda_.6} parent=5 // pred_check
      _
    $region10: #{_lambda_.6} parent=5 // pred_check_branch
      %113 = sbr.rel (%p110) target = $region12
    $region11: #{_lambda_.6} parent=5 // pred_region
      %s114 = ssub.s32 %s8, 1
      // Predicated region
      $region13: #{_lambda_.6} parent=11 // pred_check
        %p115 = pneg %p72
      $region14: #{_lambda_.6} parent=11 // pred_check_branch
        %117 = sbr.rel (%p115) target = $region16
      $region15: #{_lambda_.6} parent=11 // pred_region
        %p118 = scmp.lt.s32.totalorder %s18, 0
        %s119 = scalar_select %p118, %s18, 0
        %s120 = smul.addr %s119, 4
        %s121 = scalar_lea.vmem %s1, %s120
      $region16: #{_lambda_.6} parent=11 // pred_fallthru
        _
    $region12: #{_lambda_.6} parent=5 // pred_fallthru
      _
    %p122 = scmp.lt.s32.totalorder %s8, 2
    // Predicated region
    $region17: #{_lambda_.6} parent=5 // pred_check
      %p123 = pneg %p122
    $region18: #{_lambda_.6} parent=5 // pred_check_branch
      %125 = sbr.rel (%p123) target = $region20
    $region19: #{_lambda_.6} parent=5 // pred_region
      // Predicated region
      $region21: #{_lambda_.6} parent=19 // pred_check
        %p126 = pneg %p40
      $region22: #{_lambda_.6} parent=19 // pred_check_branch
        %128 = sbr.rel (%p126) target = $region24
      $region23: #{_lambda_.6} parent=19 // pred_region
        %p129 = scmp.lt.s32.totalorder %s15, 1
        %s130 = scalar_select %p129, %s15, 1
        %s131 = smul.addr %s130, 41
        %s132 = smul.addr %s131, 4
        %s133 = scalar_lea.vmem %s0, %s132
      $region24: #{_lambda_.6} parent=19 // pred_fallthru
        _
    $region20: #{_lambda_.6} parent=5 // pred_fallthru
      _
    %p134 = scmp.le.s32.totalorder 1, %s8
    %p135 = scmp.lt.s32.totalorder %s8, 3
    %p136 = pnand %p134, %p135
    %p137 = pneg %p136
    // Predicated region
    $region25: #{_lambda_.6} parent=5 // pred_check
      _
    $region26: #{_lambda_.6} parent=5 // pred_check_branch
      %139 = sbr.rel (%p136) target = $region28
    $region27: #{_lambda_.6} parent=5 // pred_region
      %s140 = ssub.s32 %s8, 1
      %p141 = scmp.lt.s32.totalorder %s17, 1
      %s142 = scalar_select %p141, %s17, 1
      %s143 = smul.addr %s142, 41
      %s144 = smul.addr %s143, 4
      %s145 = scalar_lea.vmem %s0, %s144
      %p146 = pneg %p46
      %p147 = pneg %p43
      %p148 = scmp.lt.s32.totalorder %s18, 0
      %s149 = scalar_select %p148, %s18, 0
      %s150 = smul.addr %s149, 4
      %s151 = scalar_lea.vmem %s1, %s150
      %p152 = pneg %p72
      %p153 = pneg %p69
      %p154 = pneg %p100
      %p155 = pneg %p97
      %p156 = scmp.lt.s32.totalorder %s17, 1
      %s157 = scalar_select %p156, %s17, 1
      %p158 = scmp.lt.s32.totalorder %s18, 0
      %s159 = scalar_select %p158, %s18, 0
      %s160 = smul.addr %s157, 9
      %s161 = sadd.s32 %s159, %s160
      %s162 = smul.addr %s161, 4
      %s163 = scalar_lea.vmem %s2, %s162
      %p164 = scmp.lt.s32.totalorder %s17, 1
      %s165 = scalar_select %p164, %s17, 1
      %s166 = smul.addr %s165, 41
      %s167 = smul.addr %s166, 4
      %s168 = scalar_lea.vmem %s0, %s167
      %p169 = scmp.lt.s32.totalorder %s18, 0
      %s170 = scalar_select %p169, %s18, 0
      %s171 = smul.addr %s170, 4
      %s172 = scalar_lea.vmem %s1, %s171
      %p173 = scmp.lt.s32.totalorder %s17, 1
      %s174 = scalar_select %p173, %s17, 1
      %p175 = scmp.lt.s32.totalorder %s18, 0
      %s176 = scalar_select %p175, %s18, 0
      %s177 = smul.addr %s174, 9
      %s178 = sadd.s32 %s176, %s177
      %s179 = smul.addr %s178, 4
      %s180 = scalar_lea.vmem %s2, %s179
      %182 = vst [vmem:[#allocation2] sm:$0xff] 0.0
      %183 = vst [vmem:[#allocation2 + $0x8] sm:$0xff] 0.0
      %184 = vst [vmem:[#allocation2 + $0x10] sm:$0xff] 0.0
      %185 = vst [vmem:[#allocation2 + $0x18] sm:$0xff] 0.0
      %186 = vst [vmem:[#allocation2 + $0x20] sm:$0xff] 0.0
      %187 = vst [vmem:[#allocation2 + $0x28] sm:$0xff] 0.0
      %188 = vst [vmem:[#allocation2 + $0x30] sm:$0xff] 0.0
      %189 = vst [vmem:[#allocation2 + $0x38] sm:$0xff] 0.0
      %190 = vst [vmem:[#allocation2 + $0x40] sm:$0xff] 0.0
      %v191 = vld [vmem:[%s168] sm:$0xf]
      %v192 = vld [vmem:[%s168 + $0x4] sm:$0xf]
      %v193 = vld [vmem:[%s168 + $0x8] sm:$0xf]
      %v194 = vld [vmem:[%s168 + $0xc] sm:$0xf]
      %v195 = vld [vmem:[%s168 + $0x10] sm:$0xf]
      %v196 = vld [vmem:[%s168 + $0x14] sm:$0xf]
      %v197 = vld [vmem:[%s168 + $0x18] sm:$0xf]
      %v198 = vld [vmem:[%s168 + $0x1c] sm:$0xf]
      %v199 = vld [vmem:[%s168 + $0x20] sm:$0xf]
      %v200 = vld [vmem:[#allocation2] sm:$0xff]
      %v201 = vld [vmem:[#allocation2 + $0x8] sm:$0xff]
      %v202 = vld [vmem:[#allocation2 + $0x10] sm:$0xff]
      %v203 = vld [vmem:[#allocation2 + $0x18] sm:$0xff]
      %v204 = vld [vmem:[#allocation2 + $0x20] sm:$0xff]
      %v205 = vld [vmem:[#allocation2 + $0x28] sm:$0xff]
      %v206 = vld [vmem:[#allocation2 + $0x30] sm:$0xff]
      %v207 = vld [vmem:[#allocation2 + $0x38] sm:$0xff]
      %v208 = vld [vmem:[#allocation2 + $0x40] sm:$0xff]
      %v209 = vld [vmem:[%s172] sm:$0xf]
      %v219 = vunpack.c.l.b16 %v191
      %v220 = vunpack.c.l.b16 %v192
      %v221 = vunpack.c.l.b16 %v193
      %v222 = vunpack.c.l.b16 %v194
      %v223 = vunpack.c.l.b16 %v195
      %v224 = vunpack.c.l.b16 %v196
      %v225 = vunpack.c.l.b16 %v197
      %v226 = vunpack.c.l.b16 %v198
      %v227 = vunpack.c.l.b16 %v199
      %v228 = vpack.c.b16 %v220, %v219
      %v229 = vpack.c.b16 %v222, %v221
      %v230 = vpack.c.b16 %v224, %v223
      %v231 = vpack.c.b16 %v226, %v225
      %v232 = vpack.c.b16 %v227, %v227
      %vm233 = vcmask 64512
      %v235 = vsel %vm233, %v228, 0
      %v238 = vsel %vm233, %v229, 0
      %v241 = vsel %vm233, %v230, 0
      %v244 = vsel %vm233, %v231, 0
      %v247 = vsel %vm233, %v232, 0
      %vm249 = vcmask 1043456
      %v251 = vsel %vm249, %v209, 0
      %253 = vmatprep.subr.bf16.mxu0 0
      %254 = vmatpush1.bf16.msra.mxu0 %v251
      %255 = vmatprep.subr.bf16.mxu0 0
      %256 = vmatpush1.bf16.msra.mxu0 0
      %257 = vmatprep.subr.bf16.mxu0 0
      %258 = vmatpush1.bf16.msra.mxu0 0
      %259 = vmatprep.subr.bf16.mxu0 0
      %260 = vmatpush1.bf16.msra.mxu0 0
      %261 = vmatprep.subr.bf16.mxu0 0
      %262 = vmatpush1.bf16.msra.mxu0 0
      %263 = vmatprep.subr.bf16.mxu0 0
      %264 = vmatpush1.bf16.msra.mxu0 0
      %265 = vmatprep.subr.bf16.mxu0 0
      %266 = vmatpush1.bf16.msra.mxu0 0
      %267 = vmatprep.subr.bf16.mxu0 0
      %268 = vmatpush1.bf16.msra.mxu0 0
      %269 = vmatprep.subr.bf16.mxu0 0
      %270 = vmatpush1.bf16.msra.mxu0 0
      %271 = vmatprep.subr.bf16.mxu0 0
      %272 = vmatpush1.bf16.msra.mxu0 0
      %273 = vmatprep.subr.bf16.mxu0 0
      %274 = vmatpush1.bf16.msra.mxu0 0
      %275 = vmatprep.subr.bf16.mxu0 0
      %276 = vmatpush1.bf16.msra.mxu0 0
      %277 = vmatprep.subr.bf16.mxu0 0
      %278 = vmatpush1.bf16.msra.mxu0 0
      %279 = vmatprep.subr.bf16.mxu0 0
      %280 = vmatpush1.bf16.msra.mxu0 0
      %281 = vmatprep.subr.bf16.mxu0 0
      %282 = vmatpush1.bf16.msra.mxu0 0
      %283 = vmatprep.subr.bf16.mxu0 0
      %284 = vmatpush1.bf16.msra.mxu0 0
      %285 = vmatprep.mubr.bf16.mxu0 0
      %286 = vmatmul.mubr.bf16.gmra.mrb[0].mxu0 %v235
      %v287 = vpop.f32.mrb[0].mxu0
      %v288 = vadd.f32 0.0, %v287
      %v289 = vpop.f32.mrb[0].mxu0
      %v290 = vpop.f32.mrb[0].mxu0
      %v291 = vadd.f32 0.0, %v290
      %v292 = vpop.f32.mrb[0].mxu0
      %293 = vmatprep.mubr.bf16.mxu0 0
      %294 = vmatmul.mubr.bf16.gmra.mrb[0].mxu0 %v238
      %v295 = vpop.f32.mrb[0].mxu0
      %v296 = vadd.f32 0.0, %v295
      %v297 = vpop.f32.mrb[0].mxu0
      %v298 = vpop.f32.mrb[0].mxu0
      %v299 = vadd.f32 0.0, %v298
      %v300 = vpop.f32.mrb[0].mxu0
      %301 = vmatprep.mubr.bf16.mxu0 0
      %302 = vmatmul.mubr.bf16.gmra.mrb[0].mxu0 %v241
      %v303 = vpop.f32.mrb[0].mxu0
      %v304 = vadd.f32 0.0, %v303
      %v305 = vpop.f32.mrb[0].mxu0
      %v306 = vpop.f32.mrb[0].mxu0
      %v307 = vadd.f32 0.0, %v306
      %v308 = vpop.f32.mrb[0].mxu0
      %309 = vmatprep.mubr.bf16.mxu0 0
      %310 = vmatmul.mubr.bf16.gmra.mrb[0].mxu0 %v244
      %v311 = vpop.f32.mrb[0].mxu0
      %v312 = vadd.f32 0.0, %v311
      %v313 = vpop.f32.mrb[0].mxu0
      %v314 = vpop.f32.mrb[0].mxu0
      %v315 = vadd.f32 0.0, %v314
      %v316 = vpop.f32.mrb[0].mxu0
      %317 = vmatprep.mubr.bf16.mxu0 0
      %318 = vmatmul.mubr.bf16.gmra.mrb[0].mxu0 %v247
      %v319 = vpop.f32.mrb[0].mxu0
      %v320 = vadd.f32 0.0, %v319
      %v321 = vpop.f32.mrb[0].mxu0
      %v322 = vpop.f32.mrb[0].mxu0
      %v323 = vpop.f32.mrb[0].mxu0
      %324 = vdwg.mxu0
      %v325 = vadd.f32 %v200, %v288
      %v326 = vadd.f32 %v201, %v291
      %v327 = vadd.f32 %v202, %v296
      %v328 = vadd.f32 %v203, %v299
      %v329 = vadd.f32 %v204, %v304
      %v330 = vadd.f32 %v205, %v307
      %v331 = vadd.f32 %v206, %v312
      %v332 = vadd.f32 %v207, %v315
      %v333 = vadd.f32 %v208, %v320
      %334 = vst [vmem:[#allocation2] sm:$0xff] %v325
      %335 = vst [vmem:[#allocation2 + $0x8] sm:$0xff] %v326
      %336 = vst [vmem:[#allocation2 + $0x10] sm:$0xff] %v327
      %337 = vst [vmem:[#allocation2 + $0x18] sm:$0xff] %v328
      %338 = vst [vmem:[#allocation2 + $0x20] sm:$0xff] %v329
      %339 = vst [vmem:[#allocation2 + $0x28] sm:$0xff] %v330
      %340 = vst [vmem:[#allocation2 + $0x30] sm:$0xff] %v331
      %341 = vst [vmem:[#allocation2 + $0x38] sm:$0xff] %v332
      %342 = vst [vmem:[#allocation2 + $0x40] sm:$0xff] %v333
      %v343 = vld [vmem:[%s168 + $0x28] sm:$0xf]
      %v344 = vld [vmem:[%s168 + $0x2c] sm:$0xf]
      %v345 = vld [vmem:[%s168 + $0x30] sm:$0xf]
      %v346 = vld [vmem:[%s168 + $0x34] sm:$0xf]
      %v347 = vld [vmem:[%s168 + $0x38] sm:$0xf]
      %v348 = vld [vmem:[%s168 + $0x3c] sm:$0xf]
      %v349 = vld [vmem:[%s168 + $0x40] sm:$0xf]
      %v350 = vld [vmem:[%s168 + $0x44] sm:$0xf]
      %v351 = vld [vmem:[%s168 + $0x48] sm:$0xf]
      %v352 = vld [vmem:[%s168 + $0x4c] sm:$0x1]
      %v353 = vld [vmem:[#allocation2] sm:$0xff]
      %v354 = vld [vmem:[#allocation2 + $0x8] sm:$0xff]
      %v355 = vld [vmem:[#allocation2 + $0x10] sm:$0xff]
      %v356 = vld [vmem:[#allocation2 + $0x18] sm:$0xff]
      %v357 = vld [vmem:[#allocation2 + $0x20] sm:$0xff]
      %v358 = vld [vmem:[#allocation2 + $0x28] sm:$0xff]
      %v359 = vld [vmem:[#allocation2 + $0x30] sm:$0xff]
      %v360 = vld [vmem:[#allocation2 + $0x38] sm:$0xff]
      %v361 = vld [vmem:[#allocation2 + $0x40] sm:$0xff]
      %s362 = scalar_lea.vmem %s172, 4
      %v363 = vld [vmem:[%s362] sm:$0xf]
      %v374 = vunpack.c.l.b16 %v343
      %v375 = vunpack.c.l.b16 %v344
      %v376 = vunpack.c.l.b16 %v345
      %v377 = vunpack.c.l.b16 %v346
      %v378 = vunpack.c.l.b16 %v347
      %v379 = vunpack.c.l.b16 %v348
      %v380 = vunpack.c.l.b16 %v349
      %v381 = vunpack.c.l.b16 %v350
      %v382 = vunpack.c.l.b16 %v351
      %v383 = vunpack.c.l.b16 %v352
      %v384 = vpack.c.b16 %v375, %v374
      %v385 = vpack.c.b16 %v377, %v376
      %v386 = vpack.c.b16 %v379, %v378
      %v387 = vpack.c.b16 %v381, %v380
      %v388 = vpack.c.b16 %v383, %v382
      %vm389 = vsmask.f32 7424
      %v391 = vshrl.u32 %v384, 16
      %v393 = vshll.u32 %v384, 16
      %v395 = vrot.slane %v393, 1
      %v396 = vor.u32 %v391, %v395
      %v398 = vshll.u32 %v385, 16
      %v400 = vrot.slane %v398, 1
      %v401 = vsel %vm389, %v396, %v400
      %v402 = vshrl.u32 %v385, 16
      %v404 = vor.u32 %v402, %v400
      %v406 = vshll.u32 %v386, 16
      %v408 = vrot.slane %v406, 1
      %v409 = vsel %vm389, %v404, %v408
      %v410 = vshrl.u32 %v386, 16
      %v412 = vor.u32 %v410, %v408
      %v414 = vshll.u32 %v387, 16
      %v416 = vrot.slane %v414, 1
      %v417 = vsel %vm389, %v412, %v416
      %v418 = vshrl.u32 %v387, 16
      %v420 = vor.u32 %v418, %v416
      %v422 = vshll.u32 %v388, 16
      %v424 = vrot.slane %v422, 1
      %v425 = vsel %vm389, %v420, %v424
      %v426 = vshrl.u32 %v388, 16
      %v428 = vor.u32 %v426, %v424
      %v430 = vsel %vm233, %v401, 0
      %v433 = vsel %vm233, %v409, 0
      %v436 = vsel %vm233, %v417, 0
      %v439 = vsel %vm233, %v425, 0
      %v442 = vsel %vm233, %v428, 0
      %v445 = vsel %vm249, %v363, 0
      %447 = vmatprep.subr.bf16.mxu0 0
      %448 = vmatpush1.bf16.msra.mxu0 %v445
      %449 = vmatprep.subr.bf16.mxu0 0
      %450 = vmatpush1.bf16.msra.mxu0 0
      %451 = vmatprep.subr.bf16.mxu0 0
      %452 = vmatpush1.bf16.msra.mxu0 0
      %453 = vmatprep.subr.bf16.mxu0 0
      %454 = vmatpush1.bf16.msra.mxu0 0
      %455 = vmatprep.subr.bf16.mxu0 0
      %456 = vmatpush1.bf16.msra.mxu0 0
      %457 = vmatprep.subr.bf16.mxu0 0
      %458 = vmatpush1.bf16.msra.mxu0 0
      %459 = vmatprep.subr.bf16.mxu0 0
      %460 = vmatpush1.bf16.msra.mxu0 0
      %461 = vmatprep.subr.bf16.mxu0 0
      %462 = vmatpush1.bf16.msra.mxu0 0
      %463 = vmatprep.subr.bf16.mxu0 0
      %464 = vmatpush1.bf16.msra.mxu0 0
      %465 = vmatprep.subr.bf16.mxu0 0
      %466 = vmatpush1.bf16.msra.mxu0 0
      %467 = vmatprep.subr.bf16.mxu0 0
      %468 = vmatpush1.bf16.msra.mxu0 0
      %469 = vmatprep.subr.bf16.mxu0 0
      %470 = vmatpush1.bf16.msra.mxu0 0
      %471 = vmatprep.subr.bf16.mxu0 0
      %472 = vmatpush1.bf16.msra.mxu0 0
      %473 = vmatprep.subr.bf16.mxu0 0
      %474 = vmatpush1.bf16.msra.mxu0 0
      %475 = vmatprep.subr.bf16.mxu0 0
      %476 = vmatpush1.bf16.msra.mxu0 0
      %477 = vmatprep.subr.bf16.mxu0 0
      %478 = vmatpush1.bf16.msra.mxu0 0
      %479 = vmatprep.mubr.bf16.mxu0 0
      %480 = vmatmul.mubr.bf16.gmra.mrb[0].mxu0 %v430
      %v481 = vpop.f32.mrb[0].mxu0
      %v482 = vadd.f32 0.0, %v481
      %v483 = vpop.f32.mrb[0].mxu0
      %v484 = vpop.f32.mrb[0].mxu0
      %v485 = vadd.f32 0.0, %v484
      %v486 = vpop.f32.mrb[0].mxu0
      %487 = vmatprep.mubr.bf16.mxu0 0
      %488 = vmatmul.mubr.bf16.gmra.mrb[0].mxu0 %v433
      %v489 = vpop.f32.mrb[0].mxu0
      %v490 = vadd.f32 0.0, %v489
      %v491 = vpop.f32.mrb[0].mxu0
      %v492 = vpop.f32.mrb[0].mxu0
      %v493 = vadd.f32 0.0, %v492
      %v494 = vpop.f32.mrb[0].mxu0
      %495 = vmatprep.mubr.bf16.mxu0 0
      %496 = vmatmul.mubr.bf16.gmra.mrb[0].mxu0 %v436
      %v497 = vpop.f32.mrb[0].mxu0
      %v498 = vadd.f32 0.0, %v497
      %v499 = vpop.f32.mrb[0].mxu0
      %v500 = vpop.f32.mrb[0].mxu0
      %v501 = vadd.f32 0.0, %v500
      %v502 = vpop.f32.mrb[0].mxu0
      %503 = vmatprep.mubr.bf16.mxu0 0
      %504 = vmatmul.mubr.bf16.gmra.mrb[0].mxu0 %v439
      %v505 = vpop.f32.mrb[0].mxu0
      %v506 = vadd.f32 0.0, %v505
      %v507 = vpop.f32.mrb[0].mxu0
      %v508 = vpop.f32.mrb[0].mxu0
      %v509 = vadd.f32 0.0, %v508
      %v510 = vpop.f32.mrb[0].mxu0
      %511 = vmatprep.mubr.bf16.mxu0 0
      %512 = vmatmul.mubr.bf16.gmra.mrb[0].mxu0 %v442
      %v513 = vpop.f32.mrb[0].mxu0
      %v514 = vadd.f32 0.0, %v513
      %v515 = vpop.f32.mrb[0].mxu0
      %v516 = vpop.f32.mrb[0].mxu0
      %v517 = vpop.f32.mrb[0].mxu0
      %518 = vdwg.mxu0
      %v519 = vadd.f32 %v353, %v482
      %v520 = vadd.f32 %v354, %v485
      %v521 = vadd.f32 %v355, %v490
      %v522 = vadd.f32 %v356, %v493
      %v523 = vadd.f32 %v357, %v498
      %v524 = vadd.f32 %v358, %v501
      %v525 = vadd.f32 %v359, %v506
      %v526 = vadd.f32 %v360, %v509
      %v527 = vadd.f32 %v361, %v514
      %528 = vst [vmem:[#allocation2] sm:$0xff] %v519
      %529 = vst [vmem:[#allocation2 + $0x8] sm:$0xff] %v520
      %530 = vst [vmem:[#allocation2 + $0x10] sm:$0xff] %v521
      %531 = vst [vmem:[#allocation2 + $0x18] sm:$0xff] %v522
      %532 = vst [vmem:[#allocation2 + $0x20] sm:$0xff] %v523
      %533 = vst [vmem:[#allocation2 + $0x28] sm:$0xff] %v524
      %534 = vst [vmem:[#allocation2 + $0x30] sm:$0xff] %v525
      %535 = vst [vmem:[#allocation2 + $0x38] sm:$0xff] %v526
      %536 = vst [vmem:[#allocation2 + $0x40] sm:$0xff] %v527
      %v537 = vld [vmem:[%s168] sm:$0xf]
      %v538 = vld [vmem:[%s168 + $0x4] sm:$0xf]
      %v539 = vld [vmem:[%s168 + $0x8] sm:$0xf]
      %v540 = vld [vmem:[%s168 + $0xc] sm:$0xf]
      %v541 = vld [vmem:[%s168 + $0x10] sm:$0xf]
      %v542 = vld [vmem:[%s168 + $0x14] sm:$0xf]
      %v543 = vld [vmem:[%s168 + $0x18] sm:$0xf]
      %v544 = vld [vmem:[%s168 + $0x1c] sm:$0xf]
      %v545 = vld [vmem:[%s168 + $0x20] sm:$0xf]
      %v546 = vld [vmem:[%s168 + $0x24] sm:$0x1]
      %v547 = vld [vmem:[#allocation2] sm:$0xff]
      %v548 = vld [vmem:[#allocation2 + $0x8] sm:$0xff]
      %v549 = vld [vmem:[#allocation2 + $0x10] sm:$0xff]
      %v550 = vld [vmem:[#allocation2 + $0x18] sm:$0xff]
      %v551 = vld [vmem:[#allocation2 + $0x20] sm:$0xff]
      %v552 = vld [vmem:[#allocation2 + $0x28] sm:$0xff]
      %v553 = vld [vmem:[#allocation2 + $0x30] sm:$0xff]
      %v554 = vld [vmem:[#allocation2 + $0x38] sm:$0xff]
      %v555 = vld [vmem:[#allocation2 + $0x40] sm:$0xff]
      %s556 = scalar_lea.vmem %s172, 8
      %v557 = vld [vmem:[%s556] sm:$0xf]
      %v568 = vunpack.c.l.b16 %v537
      %v569 = vunpack.c.l.b16 %v538
      %v570 = vunpack.c.l.b16 %v539
      %v571 = vunpack.c.l.b16 %v540
      %v572 = vunpack.c.l.b16 %v541
      %v573 = vunpack.c.l.b16 %v542
      %v574 = vunpack.c.l.b16 %v543
      %v575 = vunpack.c.l.b16 %v544
      %v576 = vunpack.c.l.b16 %v545
      %v577 = vunpack.c.l.b16 %v546
      %v578 = vpack.c.b16 %v569, %v568
      %v579 = vpack.c.b16 %v571, %v570
      %v580 = vpack.c.b16 %v573, %v572
      %v581 = vpack.c.b16 %v575, %v574
      %v582 = vpack.c.b16 %v577, %v576
      %v584 = vshrl.u32 %v578, 16
      %v586 = vshll.u32 %v578, 16
      %v588 = vrot.slane %v586, 1
      %v589 = vor.u32 %v584, %v588
      %v591 = vshll.u32 %v579, 16
      %v593 = vrot.slane %v591, 1
      %v594 = vsel %vm389, %v589, %v593
      %v595 = vshrl.u32 %v579, 16
      %v597 = vor.u32 %v595, %v593
      %v599 = vshll.u32 %v580, 16
      %v601 = vrot.slane %v599, 1
      %v602 = vsel %vm389, %v597, %v601
      %v603 = vshrl.u32 %v580, 16
      %v605 = vor.u32 %v603, %v601
      %v607 = vshll.u32 %v581, 16
      %v609 = vrot.slane %v607, 1
      %v610 = vsel %vm389, %v605, %v609
      %v611 = vshrl.u32 %v581, 16
      %v613 = vor.u32 %v611, %v609
      %v615 = vshll.u32 %v582, 16
      %v617 = vrot.slane %v615, 1
      %v618 = vsel %vm389, %v613, %v617
      %v619 = vshrl.u32 %v582, 16
      %v621 = vor.u32 %v619, %v617
      %v623 = vsel %vm233, %v594, 0
      %v626 = vsel %vm233, %v602, 0
      %v629 = vsel %vm233, %v610, 0
      %v632 = vsel %vm233, %v618, 0
      %v635 = vsel %vm233, %v621, 0
      %v638 = vsel %vm249, %v557, 0
      %640 = vmatprep.subr.bf16.mxu0 0
      %641 = vmatpush1.bf16.msra.mxu0 %v638
      %642 = vmatprep.subr.bf16.mxu0 0
      %643 = vmatpush1.bf16.msra.mxu0 0
      %644 = vmatprep.subr.bf16.mxu0 0
      %645 = vmatpush1.bf16.msra.mxu0 0
      %646 = vmatprep.subr.bf16.mxu0 0
      %647 = vmatpush1.bf16.msra.mxu0 0
      %648 = vmatprep.subr.bf16.mxu0 0
      %649 = vmatpush1.bf16.msra.mxu0 0
      %650 = vmatprep.subr.bf16.mxu0 0
      %651 = vmatpush1.bf16.msra.mxu0 0
      %652 = vmatprep.subr.bf16.mxu0 0
      %653 = vmatpush1.bf16.msra.mxu0 0
      %654 = vmatprep.subr.bf16.mxu0 0
      %655 = vmatpush1.bf16.msra.mxu0 0
      %656 = vmatprep.subr.bf16.mxu0 0
      %657 = vmatpush1.bf16.msra.mxu0 0
      %658 = vmatprep.subr.bf16.mxu0 0
      %659 = vmatpush1.bf16.msra.mxu0 0
      %660 = vmatprep.subr.bf16.mxu0 0
      %661 = vmatpush1.bf16.msra.mxu0 0
      %662 = vmatprep.subr.bf16.mxu0 0
      %663 = vmatpush1.bf16.msra.mxu0 0
      %664 = vmatprep.subr.bf16.mxu0 0
      %665 = vmatpush1.bf16.msra.mxu0 0
      %666 = vmatprep.subr.bf16.mxu0 0
      %667 = vmatpush1.bf16.msra.mxu0 0
      %668 = vmatprep.subr.bf16.mxu0 0
      %669 = vmatpush1.bf16.msra.mxu0 0
      %670 = vmatprep.subr.bf16.mxu0 0
      %671 = vmatpush1.bf16.msra.mxu0 0
      %672 = vmatprep.mubr.bf16.mxu0 0
      %673 = vmatmul.mubr.bf16.gmra.mrb[0].mxu0 %v623
      %v674 = vpop.f32.mrb[0].mxu0
      %v675 = vadd.f32 0.0, %v674
      %v676 = vpop.f32.mrb[0].mxu0
      %v677 = vpop.f32.mrb[0].mxu0
      %v678 = vadd.f32 0.0, %v677
      %v679 = vpop.f32.mrb[0].mxu0
      %680 = vmatprep.mubr.bf16.mxu0 0
      %681 = vmatmul.mubr.bf16.gmra.mrb[0].mxu0 %v626
      %v682 = vpop.f32.mrb[0].mxu0
      %v683 = vadd.f32 0.0, %v682
      %v684 = vpop.f32.mrb[0].mxu0
      %v685 = vpop.f32.mrb[0].mxu0
      %v686 = vadd.f32 0.0, %v685
      %v687 = vpop.f32.mrb[0].mxu0
      %688 = vmatprep.mubr.bf16.mxu0 0
      %689 = vmatmul.mubr.bf16.gmra.mrb[0].mxu0 %v629
      %v690 = vpop.f32.mrb[0].mxu0
      %v691 = vadd.f32 0.0, %v690
      %v692 = vpop.f32.mrb[0].mxu0
      %v693 = vpop.f32.mrb[0].mxu0
      %v694 = vadd.f32 0.0, %v693
      %v695 = vpop.f32.mrb[0].mxu0
      %696 = vmatprep.mubr.bf16.mxu0 0
      %697 = vmatmul.mubr.bf16.gmra.mrb[0].mxu0 %v632
      %v698 = vpop.f32.mrb[0].mxu0
      %v699 = vadd.f32 0.0, %v698
      %v700 = vpop.f32.mrb[0].mxu0
      %v701 = vpop.f32.mrb[0].mxu0
      %v702 = vadd.f32 0.0, %v701
      %v703 = vpop.f32.mrb[0].mxu0
      %704 = vmatprep.mubr.bf16.mxu0 0
      %705 = vmatmul.mubr.bf16.gmra.mrb[0].mxu0 %v635
      %v706 = vpop.f32.mrb[0].mxu0
      %v707 = vadd.f32 0.0, %v706
      %v708 = vpop.f32.mrb[0].mxu0
      %v709 = vpop.f32.mrb[0].mxu0
      %v710 = vpop.f32.mrb[0].mxu0
      %711 = vdwg.mxu0
      %v712 = vadd.f32 %v547, %v675
      %v713 = vadd.f32 %v548, %v678
      %v714 = vadd.f32 %v549, %v683
      %v715 = vadd.f32 %v550, %v686
      %v716 = vadd.f32 %v551, %v691
      %v717 = vadd.f32 %v552, %v694
      %v718 = vadd.f32 %v553, %v699
      %v719 = vadd.f32 %v554, %v702
      %v720 = vadd.f32 %v555, %v707
      %721 = vst [vmem:[#allocation2] sm:$0xff] %v712
      %722 = vst [vmem:[#allocation2 + $0x8] sm:$0xff] %v713
      %723 = vst [vmem:[#allocation2 + $0x10] sm:$0xff] %v714
      %724 = vst [vmem:[#allocation2 + $0x18] sm:$0xff] %v715
      %725 = vst [vmem:[#allocation2 + $0x20] sm:$0xff] %v716
      %726 = vst [vmem:[#allocation2 + $0x28] sm:$0xff] %v717
      %727 = vst [vmem:[#allocation2 + $0x30] sm:$0xff] %v718
      %728 = vst [vmem:[#allocation2 + $0x38] sm:$0xff] %v719
      %729 = vst [vmem:[#allocation2 + $0x40] sm:$0xff] %v720
      %v730 = vld [vmem:[%s168 + $0x50] sm:$0xe]
      %v731 = vld [vmem:[%s168 + $0x54] sm:$0xf]
      %v732 = vld [vmem:[%s168 + $0x58] sm:$0xf]
      %v733 = vld [vmem:[%s168 + $0x5c] sm:$0xf]
      %v734 = vld [vmem:[%s168 + $0x60] sm:$0xf]
      %v735 = vld [vmem:[%s168 + $0x64] sm:$0xf]
      %v736 = vld [vmem:[%s168 + $0x68] sm:$0xf]
      %v737 = vld [vmem:[%s168 + $0x6c] sm:$0xf]
      %v738 = vld [vmem:[%s168 + $0x70] sm:$0xf]
      %v739 = vld [vmem:[%s168 + $0x74] sm:$0x1]
      %v740 = vld [vmem:[#allocation2] sm:$0xff]
      %v741 = vld [vmem:[#allocation2 + $0x8] sm:$0xff]
      %v742 = vld [vmem:[#allocation2 + $0x10] sm:$0xff]
      %v743 = vld [vmem:[#allocation2 + $0x18] sm:$0xff]
      %v744 = vld [vmem:[#allocation2 + $0x20] sm:$0xff]
      %v745 = vld [vmem:[#allocation2 + $0x28] sm:$0xff]
      %v746 = vld [vmem:[#allocation2 + $0x30] sm:$0xff]
      %v747 = vld [vmem:[#allocation2 + $0x38] sm:$0xff]
      %v748 = vld [vmem:[#allocation2 + $0x40] sm:$0xff]
      %s749 = scalar_lea.vmem %s172, 12
      %v750 = vld [vmem:[%s749] sm:$0xf]
      %v761 = vunpack.c.l.b16 %v730
      %v762 = vunpack.c.l.b16 %v731
      %v763 = vunpack.c.l.b16 %v732
      %v764 = vunpack.c.l.b16 %v733
      %v765 = vunpack.c.l.b16 %v734
      %v766 = vunpack.c.l.b16 %v735
      %v767 = vunpack.c.l.b16 %v736
      %v768 = vunpack.c.l.b16 %v737
      %v769 = vunpack.c.l.b16 %v738
      %v770 = vunpack.c.l.b16 %v739
      %v771 = vpack.c.b16 %v762, %v761
      %v772 = vpack.c.b16 %v764, %v763
      %v773 = vpack.c.b16 %v766, %v765
      %v774 = vpack.c.b16 %v768, %v767
      %v775 = vpack.c.b16 %v770, %v769
      %vm776 = vcmask 1046528
      %v777 = vrot.slane %v771, 1
      %v778 = vrot.slane %v772, 1
      %v779 = vsel %vm776, %v777, %v778
      %v780 = vrot.slane %v773, 1
      %v781 = vsel %vm776, %v778, %v780
      %v782 = vrot.slane %v774, 1
      %v783 = vsel %vm776, %v780, %v782
      %v784 = vrot.slane %v775, 1
      %v785 = vsel %vm776, %v782, %v784
      %v787 = vsel %vm233, %v779, 0
      %v790 = vsel %vm233, %v781, 0
      %v793 = vsel %vm233, %v783, 0
      %v796 = vsel %vm233, %v785, 0
      %v799 = vsel %vm233, %v784, 0
      %v802 = vsel %vm249, %v750, 0
      %804 = vmatprep.subr.bf16.mxu0 0
      %805 = vmatpush1.bf16.msra.mxu0 %v802
      %806 = vmatprep.subr.bf16.mxu0 0
      %807 = vmatpush1.bf16.msra.mxu0 0
      %808 = vmatprep.subr.bf16.mxu0 0
      %809 = vmatpush1.bf16.msra.mxu0 0
      %810 = vmatprep.subr.bf16.mxu0 0
      %811 = vmatpush1.bf16.msra.mxu0 0
      %812 = vmatprep.subr.bf16.mxu0 0
      %813 = vmatpush1.bf16.msra.mxu0 0
      %814 = vmatprep.subr.bf16.mxu0 0
      %815 = vmatpush1.bf16.msra.mxu0 0
      %816 = vmatprep.subr.bf16.mxu0 0
      %817 = vmatpush1.bf16.msra.mxu0 0
      %818 = vmatprep.subr.bf16.mxu0 0
      %819 = vmatpush1.bf16.msra.mxu0 0
      %820 = vmatprep.subr.bf16.mxu0 0
      %821 = vmatpush1.bf16.msra.mxu0 0
      %822 = vmatprep.subr.bf16.mxu0 0
      %823 = vmatpush1.bf16.msra.mxu0 0
      %824 = vmatprep.subr.bf16.mxu0 0
      %825 = vmatpush1.bf16.msra.mxu0 0
      %826 = vmatprep.subr.bf16.mxu0 0
      %827 = vmatpush1.bf16.msra.mxu0 0
      %828 = vmatprep.subr.bf16.mxu0 0
      %829 = vmatpush1.bf16.msra.mxu0 0
      %830 = vmatprep.subr.bf16.mxu0 0
      %831 = vmatpush1.bf16.msra.mxu0 0
      %832 = vmatprep.subr.bf16.mxu0 0
      %833 = vmatpush1.bf16.msra.mxu0 0
      %834 = vmatprep.subr.bf16.mxu0 0
      %835 = vmatpush1.bf16.msra.mxu0 0
      %836 = vmatprep.mubr.bf16.mxu0 0
      %837 = vmatmul.mubr.bf16.gmra.mrb[0].mxu0 %v787
      %v838 = vpop.f32.mrb[0].mxu0
      %v839 = vadd.f32 0.0, %v838
      %v840 = vpop.f32.mrb[0].mxu0
      %v841 = vpop.f32.mrb[0].mxu0
      %v842 = vadd.f32 0.0, %v841
      %v843 = vpop.f32.mrb[0].mxu0
      %844 = vmatprep.mubr.bf16.mxu0 0
      %845 = vmatmul.mubr.bf16.gmra.mrb[0].mxu0 %v790
      %v846 = vpop.f32.mrb[0].mxu0
      %v847 = vadd.f32 0.0, %v846
      %v848 = vpop.f32.mrb[0].mxu0
      %v849 = vpop.f32.mrb[0].mxu0
      %v850 = vadd.f32 0.0, %v849
      %v851 = vpop.f32.mrb[0].mxu0
      %852 = vmatprep.mubr.bf16.mxu0 0
      %853 = vmatmul.mubr.bf16.gmra.mrb[0].mxu0 %v793
      %v854 = vpop.f32.mrb[0].mxu0
      %v855 = vadd.f32 0.0, %v854
      %v856 = vpop.f32.mrb[0].mxu0
      %v857 = vpop.f32.mrb[0].mxu0
      %v858 = vadd.f32 0.0, %v857
      %v859 = vpop.f32.mrb[0].mxu0
      %860 = vmatprep.mubr.bf16.mxu0 0
      %861 = vmatmul.mubr.bf16.gmra.mrb[0].mxu0 %v796
      %v862 = vpop.f32.mrb[0].mxu0
      %v863 = vadd.f32 0.0, %v862
      %v864 = vpop.f32.mrb[0].mxu0
      %v865 = vpop.f32.mrb[0].mxu0
      %v866 = vadd.f32 0.0, %v865
      %v867 = vpop.f32.mrb[0].mxu0
      %868 = vmatprep.mubr.bf16.mxu0 0
      %869 = vmatmul.mubr.bf16.gmra.mrb[0].mxu0 %v799
      %v870 = vpop.f32.mrb[0].mxu0
      %v871 = vadd.f32 0.0, %v870
      %v872 = vpop.f32.mrb[0].mxu0
      %v873 = vpop.f32.mrb[0].mxu0
      %v874 = vpop.f32.mrb[0].mxu0
      %875 = vdwg.mxu0
      %v876 = vadd.f32 %v740, %v839
      %v877 = vadd.f32 %v741, %v842
      %v878 = vadd.f32 %v742, %v847
      %v879 = vadd.f32 %v743, %v850
      %v880 = vadd.f32 %v744, %v855
      %v881 = vadd.f32 %v745, %v858
      %v882 = vadd.f32 %v746, %v863
      %v883 = vadd.f32 %v747, %v866
      %v884 = vadd.f32 %v748, %v871
      %885 = vst [vmem:[#allocation2] sm:$0xff] %v876
      %886 = vst [vmem:[#allocation2 + $0x8] sm:$0xff] %v877
      %887 = vst [vmem:[#allocation2 + $0x10] sm:$0xff] %v878
      %888 = vst [vmem:[#allocation2 + $0x18] sm:$0xff] %v879
      %889 = vst [vmem:[#allocation2 + $0x20] sm:$0xff] %v880
      %890 = vst [vmem:[#allocation2 + $0x28] sm:$0xff] %v881
      %891 = vst [vmem:[#allocation2 + $0x30] sm:$0xff] %v882
      %892 = vst [vmem:[#allocation2 + $0x38] sm:$0xff] %v883
      %893 = vst [vmem:[#allocation2 + $0x40] sm:$0xff] %v884
      %v894 = vld [vmem:[%s168 + $0x78] sm:$0xe]
      %v895 = vld [vmem:[%s168 + $0x7c] sm:$0xf]
      %v896 = vld [vmem:[%s168 + $0x80] sm:$0xf]
      %v897 = vld [vmem:[%s168 + $0x84] sm:$0xf]
      %v898 = vld [vmem:[%s168 + $0x88] sm:$0xf]
      %v899 = vld [vmem:[%s168 + $0x8c] sm:$0xf]
      %v900 = vld [vmem:[%s168 + $0x90] sm:$0xf]
      %v901 = vld [vmem:[%s168 + $0x94] sm:$0xf]
      %v902 = vld [vmem:[%s168 + $0x98] sm:$0xf]
      %v903 = vld [vmem:[%s168 + $0x9c] sm:$0x3]
      %v904 = vld [vmem:[#allocation2] sm:$0xff]
      %v905 = vld [vmem:[#allocation2 + $0x8] sm:$0xff]
      %v906 = vld [vmem:[#allocation2 + $0x10] sm:$0xff]
      %v907 = vld [vmem:[#allocation2 + $0x18] sm:$0xff]
      %v908 = vld [vmem:[#allocation2 + $0x20] sm:$0xff]
      %v909 = vld [vmem:[#allocation2 + $0x28] sm:$0xff]
      %v910 = vld [vmem:[#allocation2 + $0x30] sm:$0xff]
      %v911 = vld [vmem:[#allocation2 + $0x38] sm:$0xff]
      %v912 = vld [vmem:[#allocation2 + $0x40] sm:$0xff]
      %s913 = scalar_lea.vmem %s172, 16
      %v914 = vld [vmem:[%s913] sm:$0xf]
      %v925 = vunpack.c.l.b16 %v894
      %v926 = vunpack.c.l.b16 %v895
      %v927 = vunpack.c.l.b16 %v896
      %v928 = vunpack.c.l.b16 %v897
      %v929 = vunpack.c.l.b16 %v898
      %v930 = vunpack.c.l.b16 %v899
      %v931 = vunpack.c.l.b16 %v900
      %v932 = vunpack.c.l.b16 %v901
      %v933 = vunpack.c.l.b16 %v902
      %v934 = vunpack.c.l.b16 %v903
      %v935 = vpack.c.b16 %v926, %v925
      %v936 = vpack.c.b16 %v928, %v927
      %v937 = vpack.c.b16 %v930, %v929
      %v938 = vpack.c.b16 %v932, %v931
      %v939 = vpack.c.b16 %v934, %v933
      %vm940 = vsmask.f32 6400
      %v942 = vshrl.u32 %v935, 16
      %v944 = vrot.slane %v942, 1
      %v945 = vshll.u32 %v935, 16
      %v947 = vrot.slane %v945, 2
      %v948 = vor.u32 %v944, %v947
      %v950 = vshrl.u32 %v936, 16
      %v952 = vrot.slane %v950, 1
      %v953 = vshll.u32 %v936, 16
      %v955 = vrot.slane %v953, 2
      %v956 = vor.u32 %v952, %v955
      %v957 = vsel %vm940, %v948, %v956
      %v959 = vshrl.u32 %v937, 16
      %v961 = vrot.slane %v959, 1
      %v962 = vshll.u32 %v937, 16
      %v964 = vrot.slane %v962, 2
      %v965 = vor.u32 %v961, %v964
      %v966 = vsel %vm940, %v956, %v965
      %v968 = vshrl.u32 %v938, 16
      %v970 = vrot.slane %v968, 1
      %v971 = vshll.u32 %v938, 16
      %v973 = vrot.slane %v971, 2
      %v974 = vor.u32 %v970, %v973
      %v975 = vsel %vm940, %v965, %v974
      %v977 = vshrl.u32 %v939, 16
      %v979 = vrot.slane %v977, 1
      %v980 = vshll.u32 %v939, 16
      %v982 = vrot.slane %v980, 2
      %v983 = vor.u32 %v979, %v982
      %v984 = vsel %vm940, %v974, %v983
      %v986 = vsel %vm233, %v957, 0
      %v989 = vsel %vm233, %v966, 0
      %v992 = vsel %vm233, %v975, 0
      %v995 = vsel %vm233, %v984, 0
      %v998 = vsel %vm233, %v983, 0
      %v1001 = vsel %vm249, %v914, 0
      %1003 = vmatprep.subr.bf16.mxu0 0
      %1004 = vmatpush1.bf16.msra.mxu0 %v1001
      %1005 = vmatprep.subr.bf16.mxu0 0
      %1006 = vmatpush1.bf16.msra.mxu0 0
      %1007 = vmatprep.subr.bf16.mxu0 0
      %1008 = vmatpush1.bf16.msra.mxu0 0
      %1009 = vmatprep.subr.bf16.mxu0 0
      %1010 = vmatpush1.bf16.msra.mxu0 0
      %1011 = vmatprep.subr.bf16.mxu0 0
      %1012 = vmatpush1.bf16.msra.mxu0 0
      %1013 = vmatprep.subr.bf16.mxu0 0
      %1014 = vmatpush1.bf16.msra.mxu0 0
      %1015 = vmatprep.subr.bf16.mxu0 0
      %1016 = vmatpush1.bf16.msra.mxu0 0
      %1017 = vmatprep.subr.bf16.mxu0 0
      %1018 = vmatpush1.bf16.msra.mxu0 0
      %1019 = vmatprep.subr.bf16.mxu0 0
      %1020 = vmatpush1.bf16.msra.mxu0 0
      %1021 = vmatprep.subr.bf16.mxu0 0
      %1022 = vmatpush1.bf16.msra.mxu0 0
      %1023 = vmatprep.subr.bf16.mxu0 0
      %1024 = vmatpush1.bf16.msra.mxu0 0
      %1025 = vmatprep.subr.bf16.mxu0 0
      %1026 = vmatpush1.bf16.msra.mxu0 0
      %1027 = vmatprep.subr.bf16.mxu0 0
      %1028 = vmatpush1.bf16.msra.mxu0 0
      %1029 = vmatprep.subr.bf16.mxu0 0
      %1030 = vmatpush1.bf16.msra.mxu0 0
      %1031 = vmatprep.subr.bf16.mxu0 0
      %1032 = vmatpush1.bf16.msra.mxu0 0
      %1033 = vmatprep.subr.bf16.mxu0 0
      %1034 = vmatpush1.bf16.msra.mxu0 0
      %1035 = vmatprep.mubr.bf16.mxu0 0
      %1036 = vmatmul.mubr.bf16.gmra.mrb[0].mxu0 %v986
      %v1037 = vpop.f32.mrb[0].mxu0
      %v1038 = vadd.f32 0.0, %v1037
      %v1039 = vpop.f32.mrb[0].mxu0
      %v1040 = vpop.f32.mrb[0].mxu0
      %v1041 = vadd.f32 0.0, %v1040
      %v1042 = vpop.f32.mrb[0].mxu0
      %1043 = vmatprep.mubr.bf16.mxu0 0
      %1044 = vmatmul.mubr.bf16.gmra.mrb[0].mxu0 %v989
      %v1045 = vpop.f32.mrb[0].mxu0
      %v1046 = vadd.f32 0.0, %v1045
      %v1047 = vpop.f32.mrb[0].mxu0
      %v1048 = vpop.f32.mrb[0].mxu0
      %v1049 = vadd.f32 0.0, %v1048
      %v1050 = vpop.f32.mrb[0].mxu0
      %1051 = vmatprep.mubr.bf16.mxu0 0
      %1052 = vmatmul.mubr.bf16.gmra.mrb[0].mxu0 %v992
      %v1053 = vpop.f32.mrb[0].mxu0
      %v1054 = vadd.f32 0.0, %v1053
      %v1055 = vpop.f32.mrb[0].mxu0
      %v1056 = vpop.f32.mrb[0].mxu0
      %v1057 = vadd.f32 0.0, %v1056
      %v1058 = vpop.f32.mrb[0].mxu0
      %1059 = vmatprep.mubr.bf16.mxu0 0
      %1060 = vmatmul.mubr.bf16.gmra.mrb[0].mxu0 %v995
      %v1061 = vpop.f32.mrb[0].mxu0
      %v1062 = vadd.f32 0.0, %v1061
      %v1063 = vpop.f32.mrb[0].mxu0
      %v1064 = vpop.f32.mrb[0].mxu0
      %v1065 = vadd.f32 0.0, %v1064
      %v1066 = vpop.f32.mrb[0].mxu0
      %1067 = vmatprep.mubr.bf16.mxu0 0
      %1068 = vmatmul.mubr.bf16.gmra.mrb[0].mxu0 %v998
      %v1069 = vpop.f32.mrb[0].mxu0
      %v1070 = vadd.f32 0.0, %v1069
      %v1071 = vpop.f32.mrb[0].mxu0
      %v1072 = vpop.f32.mrb[0].mxu0
      %v1073 = vpop.f32.mrb[0].mxu0
      %1074 = vdwg.mxu0
      %v1075 = vadd.f32 %v904, %v1038
      %v1076 = vadd.f32 %v905, %v1041
      %v1077 = vadd.f32 %v906, %v1046
      %v1078 = vadd.f32 %v907, %v1049
      %v1079 = vadd.f32 %v908, %v1054
      %v1080 = vadd.f32 %v909, %v1057
      %v1081 = vadd.f32 %v910, %v1062
      %v1082 = vadd.f32 %v911, %v1065
      %v1083 = vadd.f32 %v912, %v1070
      %1084 = vst [vmem:[#allocation2] sm:$0xff] %v1075
      %1085 = vst [vmem:[#allocation2 + $0x8] sm:$0xff] %v1076
      %1086 = vst [vmem:[#allocation2 + $0x10] sm:$0xff] %v1077
      %1087 = vst [vmem:[#allocation2 + $0x18] sm:$0xff] %v1078
      %1088 = vst [vmem:[#allocation2 + $0x20] sm:$0xff] %v1079
      %1089 = vst [vmem:[#allocation2 + $0x28] sm:$0xff] %v1080
      %1090 = vst [vmem:[#allocation2 + $0x30] sm:$0xff] %v1081
      %1091 = vst [vmem:[#allocation2 + $0x38] sm:$0xff] %v1082
      %1092 = vst [vmem:[#allocation2 + $0x40] sm:$0xff] %v1083
      %v1093 = vld [vmem:[%s168 + $0x50] sm:$0xe]
      %v1094 = vld [vmem:[%s168 + $0x54] sm:$0xf]
      %v1095 = vld [vmem:[%s168 + $0x58] sm:$0xf]
      %v1096 = vld [vmem:[%s168 + $0x5c] sm:$0xf]
      %v1097 = vld [vmem:[%s168 + $0x60] sm:$0xf]
      %v1098 = vld [vmem:[%s168 + $0x64] sm:$0xf]
      %v1099 = vld [vmem:[%s168 + $0x68] sm:$0xf]
      %v1100 = vld [vmem:[%s168 + $0x6c] sm:$0xf]
      %v1101 = vld [vmem:[%s168 + $0x70] sm:$0xf]
      %v1102 = vld [vmem:[%s168 + $0x74] sm:$0x3]
      %v1103 = vld [vmem:[#allocation2] sm:$0xff]
      %v1104 = vld [vmem:[#allocation2 + $0x8] sm:$0xff]
      %v1105 = vld [vmem:[#allocation2 + $0x10] sm:$0xff]
      %v1106 = vld [vmem:[#allocation2 + $0x18] sm:$0xff]
      %v1107 = vld [vmem:[#allocation2 + $0x20] sm:$0xff]
      %v1108 = vld [vmem:[#allocation2 + $0x28] sm:$0xff]
      %v1109 = vld [vmem:[#allocation2 + $0x30] sm:$0xff]
      %v1110 = vld [vmem:[#allocation2 + $0x38] sm:$0xff]
      %v1111 = vld [vmem:[#allocation2 + $0x40] sm:$0xff]
      %s1112 = scalar_lea.vmem %s172, 20
      %v1113 = vld [vmem:[%s1112] sm:$0xf]
      %v1124 = vunpack.c.l.b16 %v1093
      %v1125 = vunpack.c.l.b16 %v1094
      %v1126 = vunpack.c.l.b16 %v1095
      %v1127 = vunpack.c.l.b16 %v1096
      %v1128 = vunpack.c.l.b16 %v1097
      %v1129 = vunpack.c.l.b16 %v1098
      %v1130 = vunpack.c.l.b16 %v1099
      %v1131 = vunpack.c.l.b16 %v1100
      %v1132 = vunpack.c.l.b16 %v1101
      %v1133 = vunpack.c.l.b16 %v1102
      %v1134 = vpack.c.b16 %v1125, %v1124
      %v1135 = vpack.c.b16 %v1127, %v1126
      %v1136 = vpack.c.b16 %v1129, %v1128
      %v1137 = vpack.c.b16 %v1131, %v1130
      %v1138 = vpack.c.b16 %v1133, %v1132
      %v1140 = vshrl.u32 %v1134, 16
      %v1142 = vrot.slane %v1140, 1
      %v1143 = vshll.u32 %v1134, 16
      %v1145 = vrot.slane %v1143, 2
      %v1146 = vor.u32 %v1142, %v1145
      %v1148 = vshrl.u32 %v1135, 16
      %v1150 = vrot.slane %v1148, 1
      %v1151 = vshll.u32 %v1135, 16
      %v1153 = vrot.slane %v1151, 2
      %v1154 = vor.u32 %v1150, %v1153
      %v1155 = vsel %vm940, %v1146, %v1154
      %v1157 = vshrl.u32 %v1136, 16
      %v1159 = vrot.slane %v1157, 1
      %v1160 = vshll.u32 %v1136, 16
      %v1162 = vrot.slane %v1160, 2
      %v1163 = vor.u32 %v1159, %v1162
      %v1164 = vsel %vm940, %v1154, %v1163
      %v1166 = vshrl.u32 %v1137, 16
      %v1168 = vrot.slane %v1166, 1
      %v1169 = vshll.u32 %v1137, 16
      %v1171 = vrot.slane %v1169, 2
      %v1172 = vor.u32 %v1168, %v1171
      %v1173 = vsel %vm940, %v1163, %v1172
      %v1175 = vshrl.u32 %v1138, 16
      %v1177 = vrot.slane %v1175, 1
      %v1178 = vshll.u32 %v1138, 16
      %v1180 = vrot.slane %v1178, 2
      %v1181 = vor.u32 %v1177, %v1180
      %v1182 = vsel %vm940, %v1172, %v1181
      %v1184 = vsel %vm233, %v1155, 0
      %v1187 = vsel %vm233, %v1164, 0
      %v1190 = vsel %vm233, %v1173, 0
      %v1193 = vsel %vm233, %v1182, 0
      %v1196 = vsel %vm233, %v1181, 0
      %v1199 = vsel %vm249, %v1113, 0
      %1201 = vmatprep.subr.bf16.mxu0 0
      %1202 = vmatpush1.bf16.msra.mxu0 %v1199
      %1203 = vmatprep.subr.bf16.mxu0 0
      %1204 = vmatpush1.bf16.msra.mxu0 0
      %1205 = vmatprep.subr.bf16.mxu0 0
      %1206 = vmatpush1.bf16.msra.mxu0 0
      %1207 = vmatprep.subr.bf16.mxu0 0
      %1208 = vmatpush1.bf16.msra.mxu0 0
      %1209 = vmatprep.subr.bf16.mxu0 0
      %1210 = vmatpush1.bf16.msra.mxu0 0
      %1211 = vmatprep.subr.bf16.mxu0 0
      %1212 = vmatpush1.bf16.msra.mxu0 0
      %1213 = vmatprep.subr.bf16.mxu0 0
      %1214 = vmatpush1.bf16.msra.mxu0 0
      %1215 = vmatprep.subr.bf16.mxu0 0
      %1216 = vmatpush1.bf16.msra.mxu0 0
      %1217 = vmatprep.subr.bf16.mxu0 0
      %1218 = vmatpush1.bf16.msra.mxu0 0
      %1219 = vmatprep.subr.bf16.mxu0 0
      %1220 = vmatpush1.bf16.msra.mxu0 0
      %1221 = vmatprep.subr.bf16.mxu0 0
      %1222 = vmatpush1.bf16.msra.mxu0 0
      %1223 = vmatprep.subr.bf16.mxu0 0
      %1224 = vmatpush1.bf16.msra.mxu0 0
      %1225 = vmatprep.subr.bf16.mxu0 0
      %1226 = vmatpush1.bf16.msra.mxu0 0
      %1227 = vmatprep.subr.bf16.mxu0 0
      %1228 = vmatpush1.bf16.msra.mxu0 0
      %1229 = vmatprep.subr.bf16.mxu0 0
      %1230 = vmatpush1.bf16.msra.mxu0 0
      %1231 = vmatprep.subr.bf16.mxu0 0
      %1232 = vmatpush1.bf16.msra.mxu0 0
      %1233 = vmatprep.mubr.bf16.mxu0 0
      %1234 = vmatmul.mubr.bf16.gmra.mrb[0].mxu0 %v1184
      %v1235 = vpop.f32.mrb[0].mxu0
      %v1236 = vadd.f32 0.0, %v1235
      %v1237 = vpop.f32.mrb[0].mxu0
      %v1238 = vpop.f32.mrb[0].mxu0
      %v1239 = vadd.f32 0.0, %v1238
      %v1240 = vpop.f32.mrb[0].mxu0
      %1241 = vmatprep.mubr.bf16.mxu0 0
      %1242 = vmatmul.mubr.bf16.gmra.mrb[0].mxu0 %v1187
      %v1243 = vpop.f32.mrb[0].mxu0
      %v1244 = vadd.f32 0.0, %v1243
      %v1245 = vpop.f32.mrb[0].mxu0
      %v1246 = vpop.f32.mrb[0].mxu0
      %v1247 = vadd.f32 0.0, %v1246
      %v1248 = vpop.f32.mrb[0].mxu0
      %1249 = vmatprep.mubr.bf16.mxu0 0
      %1250 = vmatmul.mubr.bf16.gmra.mrb[0].mxu0 %v1190
      %v1251 = vpop.f32.mrb[0].mxu0
      %v1252 = vadd.f32 0.0, %v1251
      %v1253 = vpop.f32.mrb[0].mxu0
      %v1254 = vpop.f32.mrb[0].mxu0
      %v1255 = vadd.f32 0.0, %v1254
      %v1256 = vpop.f32.mrb[0].mxu0
      %1257 = vmatprep.mubr.bf16.mxu0 0
      %1258 = vmatmul.mubr.bf16.gmra.mrb[0].mxu0 %v1193
      %v1259 = vpop.f32.mrb[0].mxu0
      %v1260 = vadd.f32 0.0, %v1259
      %v1261 = vpop.f32.mrb[0].mxu0
      %v1262 = vpop.f32.mrb[0].mxu0
      %v1263 = vadd.f32 0.0, %v1262
      %v1264 = vpop.f32.mrb[0].mxu0
      %1265 = vmatprep.mubr.bf16.mxu0 0
      %1266 = vmatmul.mubr.bf16.gmra.mrb[0].mxu0 %v1196
      %v1267 = vpop.f32.mrb[0].mxu0
      %v1268 = vadd.f32 0.0, %v1267
      %v1269 = vpop.f32.mrb[0].mxu0
      %v1270 = vpop.f32.mrb[0].mxu0
      %v1271 = vpop.f32.mrb[0].mxu0
      %1272 = vdwg.mxu0
      %v1273 = vadd.f32 %v1103, %v1236
      %v1274 = vadd.f32 %v1104, %v1239
      %v1275 = vadd.f32 %v1105, %v1244
      %v1276 = vadd.f32 %v1106, %v1247
      %v1277 = vadd.f32 %v1107, %v1252
      %v1278 = vadd.f32 %v1108, %v1255
      %v1279 = vadd.f32 %v1109, %v1260
      %v1280 = vadd.f32 %v1110, %v1263
      %v1281 = vadd.f32 %v1111, %v1268
      %1282 = vst [vmem:[#allocation2] sm:$0xff] %v1273
      %1283 = vst [vmem:[#allocation2 + $0x8] sm:$0xff] %v1274
      %1284 = vst [vmem:[#allocation2 + $0x10] sm:$0xff] %v1275
      %1285 = vst [vmem:[#allocation2 + $0x18] sm:$0xff] %v1276
      %1286 = vst [vmem:[#allocation2 + $0x20] sm:$0xff] %v1277
      %1287 = vst [vmem:[#allocation2 + $0x28] sm:$0xff] %v1278
      %1288 = vst [vmem:[#allocation2 + $0x30] sm:$0xff] %v1279
      %1289 = vst [vmem:[#allocation2 + $0x38] sm:$0xff] %v1280
      %1290 = vst [vmem:[#allocation2 + $0x40] sm:$0xff] %v1281
      %v1291 = vld [vmem:[%s168 + $0x4] sm:$0xf]
      %v1292 = vld [vmem:[%s168 + $0x8] sm:$0xf]
      %v1293 = vld [vmem:[%s168 + $0xc] sm:$0xf]
      %v1294 = vld [vmem:[%s168 + $0x10] sm:$0xf]
      %v1295 = vld [vmem:[%s168 + $0x14] sm:$0xf]
      %v1296 = vld [vmem:[%s168 + $0x18] sm:$0xf]
      %v1297 = vld [vmem:[%s168 + $0x1c] sm:$0xf]
      %v1298 = vld [vmem:[%s168 + $0x20] sm:$0xf]
      %v1299 = vld [vmem:[%s168 + $0x24] sm:$0xf]
      %v1300 = vld [vmem:[%s168 + $0x28] sm:$0x1]
      %v1301 = vld [vmem:[#allocation2] sm:$0xff]
      %v1302 = vld [vmem:[#allocation2 + $0x8] sm:$0xff]
      %v1303 = vld [vmem:[#allocation2 + $0x10] sm:$0xff]
      %v1304 = vld [vmem:[#allocation2 + $0x18] sm:$0xff]
      %v1305 = vld [vmem:[#allocation2 + $0x20] sm:$0xff]
      %v1306 = vld [vmem:[#allocation2 + $0x28] sm:$0xff]
      %v1307 = vld [vmem:[#allocation2 + $0x30] sm:$0xff]
      %v1308 = vld [vmem:[#allocation2 + $0x38] sm:$0xff]
      %v1309 = vld [vmem:[#allocation2 + $0x40] sm:$0xff]
      %s1310 = scalar_lea.vmem %s172, 24
      %v1311 = vld [vmem:[%s1310] sm:$0xf]
      %v1322 = vunpack.c.l.b16 %v1291
      %v1323 = vunpack.c.l.b16 %v1292
      %v1324 = vunpack.c.l.b16 %v1293
      %v1325 = vunpack.c.l.b16 %v1294
      %v1326 = vunpack.c.l.b16 %v1295
      %v1327 = vunpack.c.l.b16 %v1296
      %v1328 = vunpack.c.l.b16 %v1297
      %v1329 = vunpack.c.l.b16 %v1298
      %v1330 = vunpack.c.l.b16 %v1299
      %v1331 = vunpack.c.l.b16 %v1300
      %v1332 = vpack.c.b16 %v1323, %v1322
      %v1333 = vpack.c.b16 %v1325, %v1324
      %v1334 = vpack.c.b16 %v1327, %v1326
      %v1335 = vpack.c.b16 %v1329, %v1328
      %v1336 = vpack.c.b16 %v1331, %v1330
      %v1338 = vshrl.u32 %v1332, 16
      %v1340 = vshll.u32 %v1332, 16
      %v1342 = vrot.slane %v1340, 1
      %v1343 = vor.u32 %v1338, %v1342
      %v1345 = vshll.u32 %v1333, 16
      %v1347 = vrot.slane %v1345, 1
      %v1348 = vsel %vm389, %v1343, %v1347
      %v1349 = vshrl.u32 %v1333, 16
      %v1351 = vor.u32 %v1349, %v1347
      %v1353 = vshll.u32 %v1334, 16
      %v1355 = vrot.slane %v1353, 1
      %v1356 = vsel %vm389, %v1351, %v1355
      %v1357 = vshrl.u32 %v1334, 16
      %v1359 = vor.u32 %v1357, %v1355
      %v1361 = vshll.u32 %v1335, 16
      %v1363 = vrot.slane %v1361, 1
      %v1364 = vsel %vm389, %v1359, %v1363
      %v1365 = vshrl.u32 %v1335, 16
      %v1367 = vor.u32 %v1365, %v1363
      %v1369 = vshll.u32 %v1336, 16
      %v1371 = vrot.slane %v1369, 1
      %v1372 = vsel %vm389, %v1367, %v1371
      %v1373 = vshrl.u32 %v1336, 16
      %v1375 = vor.u32 %v1373, %v1371
      %v1377 = vsel %vm233, %v1348, 0
      %v1380 = vsel %vm233, %v1356, 0
      %v1383 = vsel %vm233, %v1364, 0
      %v1386 = vsel %vm233, %v1372, 0
      %v1389 = vsel %vm233, %v1375, 0
      %v1392 = vsel %vm249, %v1311, 0
      %1394 = vmatprep.subr.bf16.mxu0 0
      %1395 = vmatpush1.bf16.msra.mxu0 %v1392
      %1396 = vmatprep.subr.bf16.mxu0 0
      %1397 = vmatpush1.bf16.msra.mxu0 0
      %1398 = vmatprep.subr.bf16.mxu0 0
      %1399 = vmatpush1.bf16.msra.mxu0 0
      %1400 = vmatprep.subr.bf16.mxu0 0
      %1401 = vmatpush1.bf16.msra.mxu0 0
      %1402 = vmatprep.subr.bf16.mxu0 0
      %1403 = vmatpush1.bf16.msra.mxu0 0
      %1404 = vmatprep.subr.bf16.mxu0 0
      %1405 = vmatpush1.bf16.msra.mxu0 0
      %1406 = vmatprep.subr.bf16.mxu0 0
      %1407 = vmatpush1.bf16.msra.mxu0 0
      %1408 = vmatprep.subr.bf16.mxu0 0
      %1409 = vmatpush1.bf16.msra.mxu0 0
      %1410 = vmatprep.subr.bf16.mxu0 0
      %1411 = vmatpush1.bf16.msra.mxu0 0
      %1412 = vmatprep.subr.bf16.mxu0 0
      %1413 = vmatpush1.bf16.msra.mxu0 0
      %1414 = vmatprep.subr.bf16.mxu0 0
      %1415 = vmatpush1.bf16.msra.mxu0 0
      %1416 = vmatprep.subr.bf16.mxu0 0
      %1417 = vmatpush1.bf16.msra.mxu0 0
      %1418 = vmatprep.subr.bf16.mxu0 0
      %1419 = vmatpush1.bf16.msra.mxu0 0
      %1420 = vmatprep.subr.bf16.mxu0 0
      %1421 = vmatpush1.bf16.msra.mxu0 0
      %1422 = vmatprep.subr.bf16.mxu0 0
      %1423 = vmatpush1.bf16.msra.mxu0 0
      %1424 = vmatprep.subr.bf16.mxu0 0
      %1425 = vmatpush1.bf16.msra.mxu0 0
      %1426 = vmatprep.mubr.bf16.mxu0 0
      %1427 = vmatmul.mubr.bf16.gmra.mrb[0].mxu0 %v1377
      %v1428 = vpop.f32.mrb[0].mxu0
      %v1429 = vadd.f32 0.0, %v1428
      %v1430 = vpop.f32.mrb[0].mxu0
      %v1431 = vpop.f32.mrb[0].mxu0
      %v1432 = vadd.f32 0.0, %v1431
      %v1433 = vpop.f32.mrb[0].mxu0
      %1434 = vmatprep.mubr.bf16.mxu0 0
      %1435 = vmatmul.mubr.bf16.gmra.mrb[0].mxu0 %v1380
      %v1436 = vpop.f32.mrb[0].mxu0
      %v1437 = vadd.f32 0.0, %v1436
      %v1438 = vpop.f32.mrb[0].mxu0
      %v1439 = vpop.f32.mrb[0].mxu0
      %v1440 = vadd.f32 0.0, %v1439
      %v1441 = vpop.f32.mrb[0].mxu0
      %1442 = vmatprep.mubr.bf16.mxu0 0
      %1443 = vmatmul.mubr.bf16.gmra.mrb[0].mxu0 %v1383
      %v1444 = vpop.f32.mrb[0].mxu0
      %v1445 = vadd.f32 0.0, %v1444
      %v1446 = vpop.f32.mrb[0].mxu0
      %v1447 = vpop.f32.mrb[0].mxu0
      %v1448 = vadd.f32 0.0, %v1447
      %v1449 = vpop.f32.mrb[0].mxu0
      %1450 = vmatprep.mubr.bf16.mxu0 0
      %1451 = vmatmul.mubr.bf16.gmra.mrb[0].mxu0 %v1386
      %v1452 = vpop.f32.mrb[0].mxu0
      %v1453 = vadd.f32 0.0, %v1452
      %v1454 = vpop.f32.mrb[0].mxu0
      %v1455 = vpop.f32.mrb[0].mxu0
      %v1456 = vadd.f32 0.0, %v1455
      %v1457 = vpop.f32.mrb[0].mxu0
      %1458 = vmatprep.mubr.bf16.mxu0 0
      %1459 = vmatmul.mubr.bf16.gmra.mrb[0].mxu0 %v1389
      %v1460 = vpop.f32.mrb[0].mxu0
      %v1461 = vadd.f32 0.0, %v1460
      %v1462 = vpop.f32.mrb[0].mxu0
      %v1463 = vpop.f32.mrb[0].mxu0
      %v1464 = vpop.f32.mrb[0].mxu0
      %1465 = vdwg.mxu0
      %v1466 = vadd.f32 %v1301, %v1429
      %v1467 = vadd.f32 %v1302, %v1432
      %v1468 = vadd.f32 %v1303, %v1437
      %v1469 = vadd.f32 %v1304, %v1440
      %v1470 = vadd.f32 %v1305, %v1445
      %v1471 = vadd.f32 %v1306, %v1448
      %v1472 = vadd.f32 %v1307, %v1453
      %v1473 = vadd.f32 %v1308, %v1456
      %v1474 = vadd.f32 %v1309, %v1461
      %1475 = vst [vmem:[#allocation2] sm:$0xff] %v1466
      %1476 = vst [vmem:[#allocation2 + $0x8] sm:$0xff] %v1467
      %1477 = vst [vmem:[#allocation2 + $0x10] sm:$0xff] %v1468
      %1478 = vst [vmem:[#allocation2 + $0x18] sm:$0xff] %v1469
      %1479 = vst [vmem:[#allocation2 + $0x20] sm:$0xff] %v1470
      %1480 = vst [vmem:[#allocation2 + $0x28] sm:$0xff] %v1471
      %1481 = vst [vmem:[#allocation2 + $0x30] sm:$0xff] %v1472
      %1482 = vst [vmem:[#allocation2 + $0x38] sm:$0xff] %v1473
      %1483 = vst [vmem:[#allocation2 + $0x40] sm:$0xff] %v1474
      %v1484 = vld [vmem:[%s168 + $0x2c] sm:$0xe]
      %v1485 = vld [vmem:[%s168 + $0x30] sm:$0xf]
      %v1486 = vld [vmem:[%s168 + $0x34] sm:$0xf]
      %v1487 = vld [vmem:[%s168 + $0x38] sm:$0xf]
      %v1488 = vld [vmem:[%s168 + $0x3c] sm:$0xf]
      %v1489 = vld [vmem:[%s168 + $0x40] sm:$0xf]
      %v1490 = vld [vmem:[%s168 + $0x44] sm:$0xf]
      %v1491 = vld [vmem:[%s168 + $0x48] sm:$0xf]
      %v1492 = vld [vmem:[%s168 + $0x4c] sm:$0xf]
      %v1493 = vld [vmem:[%s168 + $0x50] sm:$0x1]
      %v1494 = vld [vmem:[#allocation2] sm:$0xff]
      %v1495 = vld [vmem:[#allocation2 + $0x8] sm:$0xff]
      %v1496 = vld [vmem:[#allocation2 + $0x10] sm:$0xff]
      %v1497 = vld [vmem:[#allocation2 + $0x18] sm:$0xff]
      %v1498 = vld [vmem:[#allocation2 + $0x20] sm:$0xff]
      %v1499 = vld [vmem:[#allocation2 + $0x28] sm:$0xff]
      %v1500 = vld [vmem:[#allocation2 + $0x30] sm:$0xff]
      %v1501 = vld [vmem:[#allocation2 + $0x38] sm:$0xff]
      %v1502 = vld [vmem:[#allocation2 + $0x40] sm:$0xff]
      %s1503 = scalar_lea.vmem %s172, 28
      %v1504 = vld [vmem:[%s1503] sm:$0xf]
      %v1515 = vunpack.c.l.b16 %v1484
      %v1516 = vunpack.c.l.b16 %v1485
      %v1517 = vunpack.c.l.b16 %v1486
      %v1518 = vunpack.c.l.b16 %v1487
      %v1519 = vunpack.c.l.b16 %v1488
      %v1520 = vunpack.c.l.b16 %v1489
      %v1521 = vunpack.c.l.b16 %v1490
      %v1522 = vunpack.c.l.b16 %v1491
      %v1523 = vunpack.c.l.b16 %v1492
      %v1524 = vunpack.c.l.b16 %v1493
      %v1525 = vpack.c.b16 %v1516, %v1515
      %v1526 = vpack.c.b16 %v1518, %v1517
      %v1527 = vpack.c.b16 %v1520, %v1519
      %v1528 = vpack.c.b16 %v1522, %v1521
      %v1529 = vpack.c.b16 %v1524, %v1523
      %v1530 = vrot.slane %v1525, 1
      %v1531 = vrot.slane %v1526, 1
      %v1532 = vsel %vm776, %v1530, %v1531
      %v1533 = vrot.slane %v1527, 1
      %v1534 = vsel %vm776, %v1531, %v1533
      %v1535 = vrot.slane %v1528, 1
      %v1536 = vsel %vm776, %v1533, %v1535
      %v1537 = vrot.slane %v1529, 1
      %v1538 = vsel %vm776, %v1535, %v1537
      %v1540 = vsel %vm233, %v1532, 0
      %v1543 = vsel %vm233, %v1534, 0
      %v1546 = vsel %vm233, %v1536, 0
      %v1549 = vsel %vm233, %v1538, 0
      %v1552 = vsel %vm233, %v1537, 0
      %v1555 = vsel %vm249, %v1504, 0
      %1557 = vmatprep.subr.bf16.mxu0 0
      %1558 = vmatpush1.bf16.msra.mxu0 %v1555
      %1559 = vmatprep.subr.bf16.mxu0 0
      %1560 = vmatpush1.bf16.msra.mxu0 0
      %1561 = vmatprep.subr.bf16.mxu0 0
      %1562 = vmatpush1.bf16.msra.mxu0 0
      %1563 = vmatprep.subr.bf16.mxu0 0
      %1564 = vmatpush1.bf16.msra.mxu0 0
      %1565 = vmatprep.subr.bf16.mxu0 0
      %1566 = vmatpush1.bf16.msra.mxu0 0
      %1567 = vmatprep.subr.bf16.mxu0 0
      %1568 = vmatpush1.bf16.msra.mxu0 0
      %1569 = vmatprep.subr.bf16.mxu0 0
      %1570 = vmatpush1.bf16.msra.mxu0 0
      %1571 = vmatprep.subr.bf16.mxu0 0
      %1572 = vmatpush1.bf16.msra.mxu0 0
      %1573 = vmatprep.subr.bf16.mxu0 0
      %1574 = vmatpush1.bf16.msra.mxu0 0
      %1575 = vmatprep.subr.bf16.mxu0 0
      %1576 = vmatpush1.bf16.msra.mxu0 0
      %1577 = vmatprep.subr.bf16.mxu0 0
      %1578 = vmatpush1.bf16.msra.mxu0 0
      %1579 = vmatprep.subr.bf16.mxu0 0
      %1580 = vmatpush1.bf16.msra.mxu0 0
      %1581 = vmatprep.subr.bf16.mxu0 0
      %1582 = vmatpush1.bf16.msra.mxu0 0
      %1583 = vmatprep.subr.bf16.mxu0 0
      %1584 = vmatpush1.bf16.msra.mxu0 0
      %1585 = vmatprep.subr.bf16.mxu0 0
      %1586 = vmatpush1.bf16.msra.mxu0 0
      %1587 = vmatprep.subr.bf16.mxu0 0
      %1588 = vmatpush1.bf16.msra.mxu0 0
      %1589 = vmatprep.mubr.bf16.mxu0 0
      %1590 = vmatmul.mubr.bf16.gmra.mrb[0].mxu0 %v1540
      %v1591 = vpop.f32.mrb[0].mxu0
      %v1592 = vadd.f32 0.0, %v1591
      %v1593 = vpop.f32.mrb[0].mxu0
      %v1594 = vpop.f32.mrb[0].mxu0
      %v1595 = vadd.f32 0.0, %v1594
      %v1596 = vpop.f32.mrb[0].mxu0
      %1597 = vmatprep.mubr.bf16.mxu0 0
      %1598 = vmatmul.mubr.bf16.gmra.mrb[0].mxu0 %v1543
      %v1599 = vpop.f32.mrb[0].mxu0
      %v1600 = vadd.f32 0.0, %v1599
      %v1601 = vpop.f32.mrb[0].mxu0
      %v1602 = vpop.f32.mrb[0].mxu0
      %v1603 = vadd.f32 0.0, %v1602
      %v1604 = vpop.f32.mrb[0].mxu0
      %1605 = vmatprep.mubr.bf16.mxu0 0
      %1606 = vmatmul.mubr.bf16.gmra.mrb[0].mxu0 %v1546
      %v1607 = vpop.f32.mrb[0].mxu0
      %v1608 = vadd.f32 0.0, %v1607
      %v1609 = vpop.f32.mrb[0].mxu0
      %v1610 = vpop.f32.mrb[0].mxu0
      %v1611 = vadd.f32 0.0, %v1610
      %v1612 = vpop.f32.mrb[0].mxu0
      %1613 = vmatprep.mubr.bf16.mxu0 0
      %1614 = vmatmul.mubr.bf16.gmra.mrb[0].mxu0 %v1549
      %v1615 = vpop.f32.mrb[0].mxu0
      %v1616 = vadd.f32 0.0, %v1615
      %v1617 = vpop.f32.mrb[0].mxu0
      %v1618 = vpop.f32.mrb[0].mxu0
      %v1619 = vadd.f32 0.0, %v1618
      %v1620 = vpop.f32.mrb[0].mxu0
      %1621 = vmatprep.mubr.bf16.mxu0 0
      %1622 = vmatmul.mubr.bf16.gmra.mrb[0].mxu0 %v1552
      %v1623 = vpop.f32.mrb[0].mxu0
      %v1624 = vadd.f32 0.0, %v1623
      %v1625 = vpop.f32.mrb[0].mxu0
      %v1626 = vpop.f32.mrb[0].mxu0
      %v1627 = vpop.f32.mrb[0].mxu0
      %1628 = vdwg.mxu0
      %v1629 = vadd.f32 %v1494, %v1592
      %v1630 = vadd.f32 %v1495, %v1595
      %v1631 = vadd.f32 %v1496, %v1600
      %v1632 = vadd.f32 %v1497, %v1603
      %v1633 = vadd.f32 %v1498, %v1608
      %v1634 = vadd.f32 %v1499, %v1611
      %v1635 = vadd.f32 %v1500, %v1616
      %v1636 = vadd.f32 %v1501, %v1619
      %v1637 = vadd.f32 %v1502, %v1624
      %1638 = vst [vmem:[#allocation2] sm:$0xff] %v1629
      %1639 = vst [vmem:[#allocation2 + $0x8] sm:$0xff] %v1630
      %1640 = vst [vmem:[#allocation2 + $0x10] sm:$0xff] %v1631
      %1641 = vst [vmem:[#allocation2 + $0x18] sm:$0xff] %v1632
      %1642 = vst [vmem:[#allocation2 + $0x20] sm:$0xff] %v1633
      %1643 = vst [vmem:[#allocation2 + $0x28] sm:$0xff] %v1634
      %1644 = vst [vmem:[#allocation2 + $0x30] sm:$0xff] %v1635
      %1645 = vst [vmem:[#allocation2 + $0x38] sm:$0xff] %v1636
      %1646 = vst [vmem:[#allocation2 + $0x40] sm:$0xff] %v1637
      %v1647 = vld [vmem:[%s168 + $0x4] sm:$0xe]
      %v1648 = vld [vmem:[%s168 + $0x8] sm:$0xf]
      %v1649 = vld [vmem:[%s168 + $0xc] sm:$0xf]
      %v1650 = vld [vmem:[%s168 + $0x10] sm:$0xf]
      %v1651 = vld [vmem:[%s168 + $0x14] sm:$0xf]
      %v1652 = vld [vmem:[%s168 + $0x18] sm:$0xf]
      %v1653 = vld [vmem:[%s168 + $0x1c] sm:$0xf]
      %v1654 = vld [vmem:[%s168 + $0x20] sm:$0xf]
      %v1655 = vld [vmem:[%s168 + $0x24] sm:$0xf]
      %v1656 = vld [vmem:[%s168 + $0x28] sm:$0x1]
      %v1657 = vld [vmem:[#allocation2] sm:$0xff]
      %v1658 = vld [vmem:[#allocation2 + $0x8] sm:$0xff]
      %v1659 = vld [vmem:[#allocation2 + $0x10] sm:$0xff]
      %v1660 = vld [vmem:[#allocation2 + $0x18] sm:$0xff]
      %v1661 = vld [vmem:[#allocation2 + $0x20] sm:$0xff]
      %v1662 = vld [vmem:[#allocation2 + $0x28] sm:$0xff]
      %v1663 = vld [vmem:[#allocation2 + $0x30] sm:$0xff]
      %v1664 = vld [vmem:[#allocation2 + $0x38] sm:$0xff]
      %v1665 = vld [vmem:[#allocation2 + $0x40] sm:$0xff]
      %s1666 = scalar_lea.vmem %s172, 32
      %v1667 = vld [vmem:[%s1666] sm:$0xf]
      %v1678 = vunpack.c.l.b16 %v1647
      %v1679 = vunpack.c.l.b16 %v1648
      %v1680 = vunpack.c.l.b16 %v1649
      %v1681 = vunpack.c.l.b16 %v1650
      %v1682 = vunpack.c.l.b16 %v1651
      %v1683 = vunpack.c.l.b16 %v1652
      %v1684 = vunpack.c.l.b16 %v1653
      %v1685 = vunpack.c.l.b16 %v1654
      %v1686 = vunpack.c.l.b16 %v1655
      %v1687 = vunpack.c.l.b16 %v1656
      %v1688 = vpack.c.b16 %v1679, %v1678
      %v1689 = vpack.c.b16 %v1681, %v1680
      %v1690 = vpack.c.b16 %v1683, %v1682
      %v1691 = vpack.c.b16 %v1685, %v1684
      %v1692 = vpack.c.b16 %v1687, %v1686
      %v1693 = vrot.slane %v1688, 1
      %v1694 = vrot.slane %v1689, 1
      %v1695 = vsel %vm776, %v1693, %v1694
      %v1696 = vrot.slane %v1690, 1
      %v1697 = vsel %vm776, %v1694, %v1696
      %v1698 = vrot.slane %v1691, 1
      %v1699 = vsel %vm776, %v1696, %v1698
      %v1700 = vrot.slane %v1692, 1
      %v1701 = vsel %vm776, %v1698, %v1700
      %v1703 = vsel %vm233, %v1695, 0
      %v1706 = vsel %vm233, %v1697, 0
      %v1709 = vsel %vm233, %v1699, 0
      %v1712 = vsel %vm233, %v1701, 0
      %v1715 = vsel %vm233, %v1700, 0
      %v1718 = vsel %vm249, %v1667, 0
      %1720 = vmatprep.subr.bf16.mxu0 0
      %1721 = vmatpush1.bf16.msra.mxu0 %v1718
      %1722 = vmatprep.subr.bf16.mxu0 0
      %1723 = vmatpush1.bf16.msra.mxu0 0
      %1724 = vmatprep.subr.bf16.mxu0 0
      %1725 = vmatpush1.bf16.msra.mxu0 0
      %1726 = vmatprep.subr.bf16.mxu0 0
      %1727 = vmatpush1.bf16.msra.mxu0 0
      %1728 = vmatprep.subr.bf16.mxu0 0
      %1729 = vmatpush1.bf16.msra.mxu0 0
      %1730 = vmatprep.subr.bf16.mxu0 0
      %1731 = vmatpush1.bf16.msra.mxu0 0
      %1732 = vmatprep.subr.bf16.mxu0 0
      %1733 = vmatpush1.bf16.msra.mxu0 0
      %1734 = vmatprep.subr.bf16.mxu0 0
      %1735 = vmatpush1.bf16.msra.mxu0 0
      %1736 = vmatprep.subr.bf16.mxu0 0
      %1737 = vmatpush1.bf16.msra.mxu0 0
      %1738 = vmatprep.subr.bf16.mxu0 0
      %1739 = vmatpush1.bf16.msra.mxu0 0
      %1740 = vmatprep.subr.bf16.mxu0 0
      %1741 = vmatpush1.bf16.msra.mxu0 0
      %1742 = vmatprep.subr.bf16.mxu0 0
      %1743 = vmatpush1.bf16.msra.mxu0 0
      %1744 = vmatprep.subr.bf16.mxu0 0
      %1745 = vmatpush1.bf16.msra.mxu0 0
      %1746 = vmatprep.subr.bf16.mxu0 0
      %1747 = vmatpush1.bf16.msra.mxu0 0
      %1748 = vmatprep.subr.bf16.mxu0 0
      %1749 = vmatpush1.bf16.msra.mxu0 0
      %1750 = vmatprep.subr.bf16.mxu0 0
      %1751 = vmatpush1.bf16.msra.mxu0 0
      %1752 = vmatprep.mubr.bf16.mxu0 0
      %1753 = vmatmul.mubr.bf16.gmra.mrb[0].mxu0 %v1703
      %v1754 = vpop.f32.mrb[0].mxu0
      %v1755 = vadd.f32 0.0, %v1754
      %v1756 = vpop.f32.mrb[0].mxu0
      %v1757 = vpop.f32.mrb[0].mxu0
      %v1758 = vadd.f32 0.0, %v1757
      %v1759 = vpop.f32.mrb[0].mxu0
      %1760 = vmatprep.mubr.bf16.mxu0 0
      %1761 = vmatmul.mubr.bf16.gmra.mrb[0].mxu0 %v1706
      %v1762 = vpop.f32.mrb[0].mxu0
      %v1763 = vadd.f32 0.0, %v1762
      %v1764 = vpop.f32.mrb[0].mxu0
      %v1765 = vpop.f32.mrb[0].mxu0
      %v1766 = vadd.f32 0.0, %v1765
      %v1767 = vpop.f32.mrb[0].mxu0
      %1768 = vmatprep.mubr.bf16.mxu0 0
      %1769 = vmatmul.mubr.bf16.gmra.mrb[0].mxu0 %v1709
      %v1770 = vpop.f32.mrb[0].mxu0
      %v1771 = vadd.f32 0.0, %v1770
      %v1772 = vpop.f32.mrb[0].mxu0
      %v1773 = vpop.f32.mrb[0].mxu0
      %v1774 = vadd.f32 0.0, %v1773
      %v1775 = vpop.f32.mrb[0].mxu0
      %1776 = vmatprep.mubr.bf16.mxu0 0
      %1777 = vmatmul.mubr.bf16.gmra.mrb[0].mxu0 %v1712
      %v1778 = vpop.f32.mrb[0].mxu0
      %v1779 = vadd.f32 0.0, %v1778
      %v1780 = vpop.f32.mrb[0].mxu0
      %v1781 = vpop.f32.mrb[0].mxu0
      %v1782 = vadd.f32 0.0, %v1781
      %v1783 = vpop.f32.mrb[0].mxu0
      %1784 = vmatprep.mubr.bf16.mxu0 0
      %1785 = vmatmul.mubr.bf16.gmra.mrb[0].mxu0 %v1715
      %v1786 = vpop.f32.mrb[0].mxu0
      %v1787 = vadd.f32 0.0, %v1786
      %v1788 = vpop.f32.mrb[0].mxu0
      %v1789 = vpop.f32.mrb[0].mxu0
      %v1790 = vpop.f32.mrb[0].mxu0
      %1791 = vdwg.mxu0
      %v1792 = vadd.f32 %v1657, %v1755
      %v1793 = vadd.f32 %v1658, %v1758
      %v1794 = vadd.f32 %v1659, %v1763
      %v1795 = vadd.f32 %v1660, %v1766
      %v1796 = vadd.f32 %v1661, %v1771
      %v1797 = vadd.f32 %v1662, %v1774
      %v1798 = vadd.f32 %v1663, %v1779
      %v1799 = vadd.f32 %v1664, %v1782
      %v1800 = vadd.f32 %v1665, %v1787
      %1801 = vst [vmem:[#allocation2] sm:$0xff] %v1792
      %1802 = vst [vmem:[#allocation2 + $0x8] sm:$0xff] %v1793
      %1803 = vst [vmem:[#allocation2 + $0x10] sm:$0xff] %v1794
      %1804 = vst [vmem:[#allocation2 + $0x18] sm:$0xff] %v1795
      %1805 = vst [vmem:[#allocation2 + $0x20] sm:$0xff] %v1796
      %1806 = vst [vmem:[#allocation2 + $0x28] sm:$0xff] %v1797
      %1807 = vst [vmem:[#allocation2 + $0x30] sm:$0xff] %v1798
      %1808 = vst [vmem:[#allocation2 + $0x38] sm:$0xff] %v1799
      %1809 = vst [vmem:[#allocation2 + $0x40] sm:$0xff] %v1800
      %v1810 = vld [vmem:[#allocation2] sm:$0xff]
      %v1811 = vld [vmem:[#allocation2 + $0x8] sm:$0xff]
      %v1812 = vld [vmem:[#allocation2 + $0x10] sm:$0xff]
      %v1813 = vld [vmem:[#allocation2 + $0x18] sm:$0xff]
      %v1814 = vld [vmem:[#allocation2 + $0x20] sm:$0xff]
      %v1815 = vld [vmem:[#allocation2 + $0x28] sm:$0xff]
      %v1816 = vld [vmem:[#allocation2 + $0x30] sm:$0xff]
      %v1817 = vld [vmem:[#allocation2 + $0x38] sm:$0xff]
      %v1818 = vld [vmem:[#allocation2 + $0x40] sm:$0xff]
      %v1819 = vpack.c.bf16 %v1811, %v1810
      %v1820 = vpack.c.bf16 %v1813, %v1812
      %v1821 = vpack.c.bf16 %v1815, %v1814
      %v1822 = vpack.c.bf16 %v1817, %v1816
      %v1823 = vpack.c.bf16 %v1818, %v1818
      %v1829 = vunpack.c.l.b16 %v1819
      %v1830 = vunpack.c.h.b16 %v1819
      %v1831 = vunpack.c.l.b16 %v1820
      %v1832 = vunpack.c.h.b16 %v1820
      %v1833 = vunpack.c.l.b16 %v1821
      %v1834 = vunpack.c.h.b16 %v1821
      %v1835 = vunpack.c.l.b16 %v1822
      %v1836 = vunpack.c.h.b16 %v1822
      %v1837 = vunpack.c.l.b16 %v1823
      %v1838 = vpack.c.b16 %v1829, %v1829
      %v1839 = vpack.c.b16 %v1830, %v1830
      %v1840 = vpack.c.b16 %v1831, %v1831
      %v1841 = vpack.c.b16 %v1832, %v1832
      %v1842 = vpack.c.b16 %v1833, %v1833
      %v1843 = vpack.c.b16 %v1834, %v1834
      %v1844 = vpack.c.b16 %v1835, %v1835
      %v1845 = vpack.c.b16 %v1836, %v1836
      %v1846 = vpack.c.b16 %v1837, %v1837
      %1856 = vst [vmem:[%s180] sm:$0xf] %v1838
      %1857 = vst [vmem:[%s180 + $0x4] sm:$0xf] %v1839
      %1858 = vst [vmem:[%s180 + $0x8] sm:$0xf] %v1840
      %1859 = vst [vmem:[%s180 + $0xc] sm:$0xf] %v1841
      %1860 = vst [vmem:[%s180 + $0x10] sm:$0xf] %v1842
      %1861 = vst [vmem:[%s180 + $0x14] sm:$0xf] %v1843
      %1862 = vst [vmem:[%s180 + $0x18] sm:$0xf] %v1844
      %1863 = vst [vmem:[%s180 + $0x1c] sm:$0xf] %v1845
      %1864 = vst [vmem:[%s180 + $0x20] sm:$0xf] %v1846
      %p1865 = scmp.lt.s32.totalorder %s17, 1
      %s1866 = scalar_select %p1865, %s17, 1
      %p1867 = scmp.lt.s32.totalorder %s18, 0
      %s1868 = scalar_select %p1867, %s18, 0
      %s1869 = smul.addr %s1866, 9
      %s1870 = sadd.s32 %s1868, %s1869
      %s1871 = smul.addr %s1870, 4
      %s1872 = scalar_lea.vmem %s2, %s1871
      // Predicated region
      $region29: #{_lambda_.6} parent=27 // pred_check
        %p1873 = pneg %p97
      $region30: #{_lambda_.6} parent=27 // pred_check_branch
        %1875 = sbr.rel (%p1873) target = $region32
      $region31: #{_lambda_.6} parent=27 // pred_region
        _
      $region32: #{_lambda_.6} parent=27 // pred_fallthru
        _
    $region28: #{_lambda_.6} parent=5 // pred_fallthru
      _
    %p1876 = scmp.le.s32.totalorder 2, %s8
    // Predicated region
    $region33: #{_lambda_.6} parent=5 // pred_check
      %p1877 = pneg %p1876
    $region34: #{_lambda_.6} parent=5 // pred_check_branch
      %1879 = sbr.rel (%p1877) target = $region36
    $region35: #{_lambda_.6} parent=5 // pred_region
      %s1880 = ssub.s32 %s8, 2
      // Predicated region
      $region37: #{_lambda_.6} parent=35 // pred_check
        %p1881 = pneg %p103
      $region38: #{_lambda_.6} parent=35 // pred_check_branch
        %1883 = sbr.rel (%p1881) target = $region40
      $region39: #{_lambda_.6} parent=35 // pred_region
        %p1884 = scmp.lt.s32.totalorder %s19, 1
        %s1885 = scalar_select %p1884, %s19, 1
        %p1886 = scmp.lt.s32.totalorder %s20, 0
        %s1887 = scalar_select %p1886, %s20, 0
        %s1888 = smul.addr %s1885, 9
        %s1889 = sadd.s32 %s1887, %s1888
        %s1890 = smul.addr %s1889, 4
        %s1891 = scalar_lea.vmem %s2, %s1890
      $region40: #{_lambda_.6} parent=35 // pred_fallthru
        _
    $region36: #{_lambda_.6} parent=5 // pred_fallthru
      _
  $region6: #{_lambda_.6} parent=0 // loop_footer
    %s12 = sadd.s32 1, %s8
  $region7: #{_lambda_.6} parent=0 // loop_footer_branch
    %7 = sbr.rel target = $region3
  $region8: #{_lambda_.6} parent=0 // loop_exit
    _

// kernel: _lambda_.10
$region0: #{_lambda_.10}
  #allocation0 [shape = 'u32[]', space=smem, size = 0x4, offset = 0x4, fixed_abs, tag = 'smem constant byte address 0x4 - core index']
  #allocation1 [shape = 'u32[144,128]{1,0:T(1,128)}', space=vmem, size = 0x12000, scoped, tag = 'internal scratch']
  %s0 = inlined_call_operand.vmem [shape: bf16[2,8,8,128], index: 0, kind: input, shape index: {}]
  %s1 = inlined_call_operand.vmem [shape: f32[1,1,1,128], index: 1, kind: input, shape index: {}]
  %s2 = inlined_call_operand.vmem [shape: f32[1,1,1,128], index: 2, kind: input, shape index: {}]
  %s3 = inlined_call_operand.vmem [shape: bf16[2,8,8,128], index: 3, kind: output, shape index: {}]
  %s4 = sld [smem:[#allocation0]]
  $region45: #{_lambda_.10} parent=0
    _
  %s6 = ssub.s32 1, %s4
  %s7 = scalar_select 0, %s6, %s4
  loop: start=0, step=1, limit=4
  $region2: #{_lambda_.10} parent=0 // loop_pre_header
    _
  $region3: #{_lambda_.10} parent=0 // loop_header
    %s9 = sphi 0, %s13
    %p10 = scmp.ge.s32.totalorder %s9, 4
    %s16 = sphi 0, %s28
    %s17 = sphi 0, %s24
    %s18 = sphi 0, %s16
    %s19 = sphi 0, %s17
    %s20 = sphi 0, %s18
    %s21 = sphi 0, %s19
    %s33 = sphi 0, %s35
    %s36 = sphi 0, %s33
    %s37 = sphi 0, %s36
    %s53 = sphi 0, %s37
    %s59 = sphi 0, %s61
    %s62 = sphi 0, %s59
    %s63 = sphi 0, %s62
    %s79 = sphi 0, %s63
    %s85 = sphi 0, %s87
    %s88 = sphi 0, %s85
    %s89 = sphi 0, %s88
    %s105 = sphi 0, %s89
    %s113 = sphi 0, %s115
    %s116 = sphi 0, %s113
    %s117 = sphi 0, %s116
    %s133 = sphi 0, %s117
  $region4: #{_lambda_.10} parent=0 // loop_header_branch
    %12 = sbr.rel (%p10) target = $region8
  $region5: #{_lambda_.10} parent=0 // loop_body
    %s14 = ssub.s32 %s9, 1
    %s15 = ssub.s32 %s9, 2
    %s22 = sadd.s32 1, %s17
    %p23 = scmp.ge.s32.totalorder %s22, 1
    %s24 = scalar_select %p23, 0, %s22
    %s25 = sadd.s32 1, %s16
    %s26 = scalar_select %p23, %s25, %s16
    %p27 = scmp.ge.s32.totalorder %s26, 2
    %s28 = scalar_select %p27, 0, %s26
    %s29 = ssub.s32 %s16, %s28
    %s30 = ssub.s32 %s17, %s24
    %s31 = sor.u32 %s29, %s30
    %p32 = scmp.eq.s32.totalorder %s31, 0
    %s34 = sadd.s32 %s33, 1
    %s35 = scalar_select %p32, %s33, %s34
    %p38 = pneg %p32
    %p39 = scmp.eq.s32.totalorder %s9, 1
    %p40 = por %p38, %p39
    %p41 = scmp.ne.s32.totalorder %s33, %s36
    %p42 = scmp.eq.s32.totalorder %s9, 0
    %p43 = por %p41, %p42
    %p44 = scmp.ne.s32.totalorder %s33, %s36
    %p45 = scmp.eq.s32.totalorder %s14, 1
    %p46 = por %p44, %p45
    %p47 = scmp.ne.s32.totalorder %s36, %s37
    %p48 = scmp.eq.s32.totalorder %s14, 0
    %p49 = por %p47, %p48
    %p50 = scmp.ne.s32.totalorder %s36, %s37
    %p51 = scmp.eq.s32.totalorder %s15, 1
    %p52 = por %p50, %p51
    %p54 = scmp.ne.s32.totalorder %s37, %s53
    %p55 = scmp.eq.s32.totalorder %s15, 0
    %p56 = por %p54, %p55
    %s57 = ssub.s32 %s17, %s24
    %p58 = scmp.eq.s32.totalorder %s57, 0
    %s60 = sadd.s32 %s59, 1
    %s61 = scalar_select %p58, %s59, %s60
    %p64 = pneg %p58
    %p65 = scmp.eq.s32.totalorder %s9, 1
    %p66 = por %p64, %p65
    %p67 = scmp.ne.s32.totalorder %s59, %s62
    %p68 = scmp.eq.s32.totalorder %s9, 0
    %p69 = por %p67, %p68
    %p70 = scmp.ne.s32.totalorder %s59, %s62
    %p71 = scmp.eq.s32.totalorder %s14, 1
    %p72 = por %p70, %p71
    %p73 = scmp.ne.s32.totalorder %s62, %s63
    %p74 = scmp.eq.s32.totalorder %s14, 0
    %p75 = por %p73, %p74
    %p76 = scmp.ne.s32.totalorder %s62, %s63
    %p77 = scmp.eq.s32.totalorder %s15, 1
    %p78 = por %p76, %p77
    %p80 = scmp.ne.s32.totalorder %s63, %s79
    %p81 = scmp.eq.s32.totalorder %s15, 0
    %p82 = por %p80, %p81
    %s83 = ssub.s32 %s17, %s24
    %p84 = scmp.eq.s32.totalorder %s83, 0
    %s86 = sadd.s32 %s85, 1
    %s87 = scalar_select %p84, %s85, %s86
    %p90 = pneg %p84
    %p91 = scmp.eq.s32.totalorder %s9, 1
    %p92 = por %p90, %p91
    %p93 = scmp.ne.s32.totalorder %s85, %s88
    %p94 = scmp.eq.s32.totalorder %s9, 0
    %p95 = por %p93, %p94
    %p96 = scmp.ne.s32.totalorder %s85, %s88
    %p97 = scmp.eq.s32.totalorder %s14, 1
    %p98 = por %p96, %p97
    %p99 = scmp.ne.s32.totalorder %s88, %s89
    %p100 = scmp.eq.s32.totalorder %s14, 0
    %p101 = por %p99, %p100
    %p102 = scmp.ne.s32.totalorder %s88, %s89
    %p103 = scmp.eq.s32.totalorder %s15, 1
    %p104 = por %p102, %p103
    %p106 = scmp.ne.s32.totalorder %s89, %s105
    %p107 = scmp.eq.s32.totalorder %s15, 0
    %p108 = por %p106, %p107
    %s109 = ssub.s32 %s16, %s28
    %s110 = ssub.s32 %s17, %s24
    %s111 = sor.u32 %s109, %s110
    %p112 = scmp.eq.s32.totalorder %s111, 0
    %s114 = sadd.s32 %s113, 1
    %s115 = scalar_select %p112, %s113, %s114
    %p118 = pneg %p112
    %p119 = scmp.eq.s32.totalorder %s9, 1
    %p120 = por %p118, %p119
    %p121 = scmp.ne.s32.totalorder %s113, %s116
    %p122 = scmp.eq.s32.totalorder %s9, 0
    %p123 = por %p121, %p122
    %p124 = scmp.ne.s32.totalorder %s113, %s116
    %p125 = scmp.eq.s32.totalorder %s14, 1
    %p126 = por %p124, %p125
    %p127 = scmp.ne.s32.totalorder %s116, %s117
    %p128 = scmp.eq.s32.totalorder %s14, 0
    %p129 = por %p127, %p128
    %p130 = scmp.ne.s32.totalorder %s116, %s117
    %p131 = scmp.eq.s32.totalorder %s15, 1
    %p132 = por %p130, %p131
    %p134 = scmp.ne.s32.totalorder %s117, %s133
    %p135 = scmp.eq.s32.totalorder %s15, 0
    %p136 = por %p134, %p135
    %p137 = scmp.le.s32.totalorder 1, %s9
    %p138 = scmp.lt.s32.totalorder %s9, 3
    %p139 = pnand %p137, %p138
    %p140 = pneg %p139
    // Predicated region
    $region9: #{_lambda_.10} parent=5 // pred_check
      _
    $region10: #{_lambda_.10} parent=5 // pred_check_branch
      %142 = sbr.rel (%p139) target = $region12
    $region11: #{_lambda_.10} parent=5 // pred_region
      %s143 = ssub.s32 %s9, 1
      // Predicated region
      $region13: #{_lambda_.10} parent=11 // pred_check
        %p144 = pneg %p75
      $region14: #{_lambda_.10} parent=11 // pred_check_branch
        %146 = sbr.rel (%p144) target = $region16
      $region15: #{_lambda_.10} parent=11 // pred_region
        %p147 = scmp.lt.s32.totalorder %s19, 0
        %s148 = scalar_select %p147, %s19, 0
        %s149 = scalar_lea.vmem %s1, %s148
      $region16: #{_lambda_.10} parent=11 // pred_fallthru
        _
      // Predicated region
      $region17: #{_lambda_.10} parent=11 // pred_check
        %p150 = pneg %p101
      $region18: #{_lambda_.10} parent=11 // pred_check_branch
        %152 = sbr.rel (%p150) target = $region20
      $region19: #{_lambda_.10} parent=11 // pred_region
        %p153 = scmp.lt.s32.totalorder %s19, 0
        %s154 = scalar_select %p153, %s19, 0
        %s155 = scalar_lea.vmem %s2, %s154
      $region20: #{_lambda_.10} parent=11 // pred_fallthru
        _
    $region12: #{_lambda_.10} parent=5 // pred_fallthru
      _
    %p156 = scmp.lt.s32.totalorder %s9, 2
    // Predicated region
    $region21: #{_lambda_.10} parent=5 // pred_check
      %p157 = pneg %p156
    $region22: #{_lambda_.10} parent=5 // pred_check_branch
      %159 = sbr.rel (%p157) target = $region24
    $region23: #{_lambda_.10} parent=5 // pred_region
      // Predicated region
      $region25: #{_lambda_.10} parent=23 // pred_check
        %p160 = pneg %p43
      $region26: #{_lambda_.10} parent=23 // pred_check_branch
        %162 = sbr.rel (%p160) target = $region28
      $region27: #{_lambda_.10} parent=23 // pred_region
        %p163 = scmp.lt.s32.totalorder %s16, 1
        %s164 = scalar_select %p163, %s16, 1
        %p165 = scmp.lt.s32.totalorder %s17, 0
        %s166 = scalar_select %p165, %s17, 0
        %s167 = smul.addr %s164, 8
        %s168 = sadd.s32 %s166, %s167
        %s169 = smul.addr %s168, 4
        %s170 = scalar_lea.vmem %s0, %s169
      $region28: #{_lambda_.10} parent=23 // pred_fallthru
        _
    $region24: #{_lambda_.10} parent=5 // pred_fallthru
      _
    %p171 = scmp.le.s32.totalorder 1, %s9
    %p172 = scmp.lt.s32.totalorder %s9, 3
    %p173 = pnand %p171, %p172
    %p174 = pneg %p173
    // Predicated region
    $region29: #{_lambda_.10} parent=5 // pred_check
      _
    $region30: #{_lambda_.10} parent=5 // pred_check_branch
      %176 = sbr.rel (%p173) target = $region32
    $region31: #{_lambda_.10} parent=5 // pred_region
      %s177 = ssub.s32 %s9, 1
      %p178 = scmp.lt.s32.totalorder %s18, 1
      %s179 = scalar_select %p178, %s18, 1
      %p180 = scmp.lt.s32.totalorder %s19, 0
      %s181 = scalar_select %p180, %s19, 0
      %s182 = smul.addr %s179, 8
      %s183 = sadd.s32 %s181, %s182
      %s184 = smul.addr %s183, 4
      %s185 = scalar_lea.vmem %s0, %s184
      %p186 = pneg %p49
      %p187 = pneg %p46
      %p188 = scmp.lt.s32.totalorder %s19, 0
      %s189 = scalar_select %p188, %s19, 0
      %s190 = scalar_lea.vmem %s1, %s189
      %p191 = pneg %p75
      %p192 = pneg %p72
      %p193 = scmp.lt.s32.totalorder %s19, 0
      %s194 = scalar_select %p193, %s19, 0
      %s195 = scalar_lea.vmem %s2, %s194
      %p196 = pneg %p101
      %p197 = pneg %p98
      %p198 = pneg %p129
      %p199 = pneg %p126
      %p200 = scmp.lt.s32.totalorder %s18, 1
      %s201 = scalar_select %p200, %s18, 1
      %p202 = scmp.lt.s32.totalorder %s19, 0
      %s203 = scalar_select %p202, %s19, 0
      %s204 = smul.addr %s201, 8
      %s205 = sadd.s32 %s203, %s204
      %s206 = smul.addr %s205, 4
      %s207 = scalar_lea.vmem %s3, %s206
      %p208 = scmp.lt.s32.totalorder %s18, 1
      %s209 = scalar_select %p208, %s18, 1
      %p210 = scmp.lt.s32.totalorder %s19, 0
      %s211 = scalar_select %p210, %s19, 0
      %s212 = smul.addr %s209, 8
      %s213 = sadd.s32 %s211, %s212
      %s214 = smul.addr %s213, 4
      %s215 = scalar_lea.vmem %s0, %s214
      %p216 = scmp.lt.s32.totalorder %s19, 0
      %s217 = scalar_select %p216, %s19, 0
      %s218 = scalar_lea.vmem %s1, %s217
      %p219 = scmp.lt.s32.totalorder %s19, 0
      %s220 = scalar_select %p219, %s19, 0
      %s221 = scalar_lea.vmem %s2, %s220
      %p222 = scmp.lt.s32.totalorder %s18, 1
      %s223 = scalar_select %p222, %s18, 1
      %p224 = scmp.lt.s32.totalorder %s19, 0
      %s225 = scalar_select %p224, %s19, 0
      %s226 = smul.addr %s223, 8
      %s227 = sadd.s32 %s225, %s226
      %s228 = smul.addr %s227, 4
      %s229 = scalar_lea.vmem %s3, %s228
      %v230 = vld [vmem:[%s215] sm:$0xf]
      %v231 = vld [vmem:[%s215 + $0x4] sm:$0xf]
      %v232 = vld [vmem:[%s215 + $0x8] sm:$0xf]
      %v233 = vld [vmem:[%s215 + $0xc] sm:$0xf]
      %v234 = vld [vmem:[%s215 + $0x10] sm:$0xf]
      %v235 = vld [vmem:[%s215 + $0x14] sm:$0xf]
      %v236 = vld [vmem:[%s215 + $0x18] sm:$0xf]
      %v237 = vld [vmem:[%s215 + $0x1c] sm:$0xf]
      %v238 = vunpack.c.l.bf16 %v230
      %v239 = vunpack.c.l.bf16 %v231
      %v240 = vunpack.c.l.bf16 %v232
      %v241 = vunpack.c.l.bf16 %v233
      %v242 = vunpack.c.l.bf16 %v234
      %v243 = vunpack.c.l.bf16 %v235
      %v244 = vunpack.c.l.bf16 %v236
      %v245 = vunpack.c.l.bf16 %v237
      %v246 = vrot.slane %v238, 4
      %v247 = vadd.f32 %v238, %v246
      %v248 = vrot.slane %v247, 2
      %v249 = vadd.f32 %v247, %v248
      %v250 = vrot.slane %v249, 1
      %v251 = vadd.f32 %v249, %v250
      %v252 = vrot.slane %v239, 4
      %v253 = vadd.f32 %v239, %v252
      %v254 = vrot.slane %v253, 2
      %v255 = vadd.f32 %v253, %v254
      %v256 = vrot.slane %v255, 1
      %v257 = vadd.f32 %v255, %v256
      %v258 = vrot.slane %v240, 4
      %v259 = vadd.f32 %v240, %v258
      %v260 = vrot.slane %v259, 2
      %v261 = vadd.f32 %v259, %v260
      %v262 = vrot.slane %v261, 1
      %v263 = vadd.f32 %v261, %v262
      %v264 = vrot.slane %v241, 4
      %v265 = vadd.f32 %v241, %v264
      %v266 = vrot.slane %v265, 2
      %v267 = vadd.f32 %v265, %v266
      %v268 = vrot.slane %v267, 1
      %v269 = vadd.f32 %v267, %v268
      %v270 = vrot.slane %v242, 4
      %v271 = vadd.f32 %v242, %v270
      %v272 = vrot.slane %v271, 2
      %v273 = vadd.f32 %v271, %v272
      %v274 = vrot.slane %v273, 1
      %v275 = vadd.f32 %v273, %v274
      %v276 = vrot.slane %v243, 4
      %v277 = vadd.f32 %v243, %v276
      %v278 = vrot.slane %v277, 2
      %v279 = vadd.f32 %v277, %v278
      %v280 = vrot.slane %v279, 1
      %v281 = vadd.f32 %v279, %v280
      %v282 = vrot.slane %v244, 4
      %v283 = vadd.f32 %v244, %v282
      %v284 = vrot.slane %v283, 2
      %v285 = vadd.f32 %v283, %v284
      %v286 = vrot.slane %v285, 1
      %v287 = vadd.f32 %v285, %v286
      %v288 = vrot.slane %v245, 4
      %v289 = vadd.f32 %v245, %v288
      %v290 = vrot.slane %v289, 2
      %v291 = vadd.f32 %v289, %v290
      %v292 = vrot.slane %v291, 1
      %v293 = vadd.f32 %v291, %v292
      %v294 = vadd.f32 %v251, %v257
      %v295 = vadd.f32 %v294, %v263
      %v296 = vadd.f32 %v295, %v269
      %v297 = vadd.f32 %v296, %v275
      %v298 = vadd.f32 %v297, %v281
      %v299 = vadd.f32 %v298, %v287
      %v300 = vadd.f32 %v299, %v293
      %v301 = vmul.f32 %v238, %v238
      %v302 = vmul.f32 %v239, %v239
      %v303 = vmul.f32 %v240, %v240
      %v304 = vmul.f32 %v241, %v241
      %v305 = vmul.f32 %v242, %v242
      %v306 = vmul.f32 %v243, %v243
      %v307 = vmul.f32 %v244, %v244
      %v308 = vmul.f32 %v245, %v245
      %v309 = vrot.slane %v301, 4
      %v310 = vadd.f32 %v301, %v309
      %v311 = vrot.slane %v310, 2
      %v312 = vadd.f32 %v310, %v311
      %v313 = vrot.slane %v312, 1
      %v314 = vadd.f32 %v312, %v313
      %v315 = vrot.slane %v302, 4
      %v316 = vadd.f32 %v302, %v315
      %v317 = vrot.slane %v316, 2
      %v318 = vadd.f32 %v316, %v317
      %v319 = vrot.slane %v318, 1
      %v320 = vadd.f32 %v318, %v319
      %v321 = vrot.slane %v303, 4
      %v322 = vadd.f32 %v303, %v321
      %v323 = vrot.slane %v322, 2
      %v324 = vadd.f32 %v322, %v323
      %v325 = vrot.slane %v324, 1
      %v326 = vadd.f32 %v324, %v325
      %v327 = vrot.slane %v304, 4
      %v328 = vadd.f32 %v304, %v327
      %v329 = vrot.slane %v328, 2
      %v330 = vadd.f32 %v328, %v329
      %v331 = vrot.slane %v330, 1
      %v332 = vadd.f32 %v330, %v331
      %v333 = vrot.slane %v305, 4
      %v334 = vadd.f32 %v305, %v333
      %v335 = vrot.slane %v334, 2
      %v336 = vadd.f32 %v334, %v335
      %v337 = vrot.slane %v336, 1
      %v338 = vadd.f32 %v336, %v337
      %v339 = vrot.slane %v306, 4
      %v340 = vadd.f32 %v306, %v339
      %v341 = vrot.slane %v340, 2
      %v342 = vadd.f32 %v340, %v341
      %v343 = vrot.slane %v342, 1
      %v344 = vadd.f32 %v342, %v343
      %v345 = vrot.slane %v307, 4
      %v346 = vadd.f32 %v307, %v345
      %v347 = vrot.slane %v346, 2
      %v348 = vadd.f32 %v346, %v347
      %v349 = vrot.slane %v348, 1
      %v350 = vadd.f32 %v348, %v349
      %v351 = vrot.slane %v308, 4
      %v352 = vadd.f32 %v308, %v351
      %v353 = vrot.slane %v352, 2
      %v354 = vadd.f32 %v352, %v353
      %v355 = vrot.slane %v354, 1
      %v356 = vadd.f32 %v354, %v355
      %v357 = vadd.f32 %v314, %v320
      %v358 = vadd.f32 %v357, %v326
      %v359 = vadd.f32 %v358, %v332
      %v360 = vadd.f32 %v359, %v338
      %v361 = vadd.f32 %v360, %v344
      %v362 = vadd.f32 %v361, %v350
      %v363 = vadd.f32 %v362, %v356
      %v364 = vrcp.pop 64.0
      %v365 = vmul.f32 %v300, %v364
      %v366 = vmul.f32 %v363, %v364
      %v367 = vmul.f32 %v365, %v365
      %v368 = vsub.f32 %v366, %v367
      %v369 = vmax.f32 %v368, 0.0
      %v370 = vsub.f32 %v238, %v365
      %v371 = vsub.f32 %v239, %v365
      %v372 = vsub.f32 %v240, %v365
      %v373 = vsub.f32 %v241, %v365
      %v374 = vsub.f32 %v242, %v365
      %v375 = vsub.f32 %v243, %v365
      %v376 = vsub.f32 %v244, %v365
      %v377 = vsub.f32 %v245, %v365
      %v378 = vadd.f32 %v369, 1e-05
      %v379 = vrsqrt.pop %v378
      %v380 = vmul.f32 %v370, %v379
      %v381 = vmul.f32 %v371, %v379
      %v382 = vmul.f32 %v372, %v379
      %v383 = vmul.f32 %v373, %v379
      %v384 = vmul.f32 %v374, %v379
      %v385 = vmul.f32 %v375, %v379
      %v386 = vmul.f32 %v376, %v379
      %v387 = vmul.f32 %v377, %v379
      %v388 = vld [vmem:[%s218] sm:$0x1]
      %v390 = vlaneseq
      %v391 = vshrl.u32 %v390, 7
      %v392 = vsub.s32 0, %v391
      %v393 = vrot.slane %v388, %v392
      %v395 = vmul.f32 %v380, %v393
      %v396 = vmul.f32 %v381, %v393
      %v397 = vmul.f32 %v382, %v393
      %v398 = vmul.f32 %v383, %v393
      %v399 = vmul.f32 %v384, %v393
      %v400 = vmul.f32 %v385, %v393
      %v401 = vmul.f32 %v386, %v393
      %v402 = vmul.f32 %v387, %v393
      %v403 = vld [vmem:[%s221] sm:$0x1]
      %v405 = vlaneseq
      %v406 = vshrl.u32 %v405, 7
      %v407 = vsub.s32 0, %v406
      %v408 = vrot.slane %v403, %v407
      %v410 = vadd.f32 %v395, %v408
      %v411 = vadd.f32 %v396, %v408
      %v412 = vadd.f32 %v397, %v408
      %v413 = vadd.f32 %v398, %v408
      %v414 = vadd.f32 %v399, %v408
      %v415 = vadd.f32 %v400, %v408
      %v416 = vadd.f32 %v401, %v408
      %v417 = vadd.f32 %v402, %v408
      %v418 = vpack.c.bf16 %v410, %v410
      %v419 = vpack.c.bf16 %v411, %v411
      %v420 = vpack.c.bf16 %v412, %v412
      %v421 = vpack.c.bf16 %v413, %v413
      %v422 = vpack.c.bf16 %v414, %v414
      %v423 = vpack.c.bf16 %v415, %v415
      %v424 = vpack.c.bf16 %v416, %v416
      %v425 = vpack.c.bf16 %v417, %v417
      %426 = vst [vmem:[%s229] sm:$0xf] %v418
      %427 = vst [vmem:[%s229 + $0x4] sm:$0xf] %v419
      %428 = vst [vmem:[%s229 + $0x8] sm:$0xf] %v420
      %429 = vst [vmem:[%s229 + $0xc] sm:$0xf] %v421
      %430 = vst [vmem:[%s229 + $0x10] sm:$0xf] %v422
      %431 = vst [vmem:[%s229 + $0x14] sm:$0xf] %v423
      %432 = vst [vmem:[%s229 + $0x18] sm:$0xf] %v424
      %433 = vst [vmem:[%s229 + $0x1c] sm:$0xf] %v425
      %p434 = scmp.lt.s32.totalorder %s18, 1
      %s435 = scalar_select %p434, %s18, 1
      %p436 = scmp.lt.s32.totalorder %s19, 0
      %s437 = scalar_select %p436, %s19, 0
      %s438 = smul.addr %s435, 8
      %s439 = sadd.s32 %s437, %s438
      %s440 = smul.addr %s439, 4
      %s441 = scalar_lea.vmem %s3, %s440
      // Predicated region
      $region33: #{_lambda_.10} parent=31 // pred_check
        %p442 = pneg %p126
      $region34: #{_lambda_.10} parent=31 // pred_check_branch
        %444 = sbr.rel (%p442) target = $region36
      $region35: #{_lambda_.10} parent=31 // pred_region
        _
      $region36: #{_lambda_.10} parent=31 // pred_fallthru
        _
    $region32: #{_lambda_.10} parent=5 // pred_fallthru
      _
    %p445 = scmp.le.s32.totalorder 2, %s9
    // Predicated region
    $region37: #{_lambda_.10} parent=5 // pred_check
      %p446 = pneg %p445
    $region38: #{_lambda_.10} parent=5 // pred_check_branch
      %448 = sbr.rel (%p446) target = $region40
    $region39: #{_lambda_.10} parent=5 // pred_region
      %s449 = ssub.s32 %s9, 2
      // Predicated region
      $region41: #{_lambda_.10} parent=39 // pred_check
        %p450 = pneg %p132
      $region42: #{_lambda_.10} parent=39 // pred_check_branch
        %452 = sbr.rel (%p450) target = $region44
      $region43: #{_lambda_.10} parent=39 // pred_region
        %p453 = scmp.lt.s32.totalorder %s20, 1
        %s454 = scalar_select %p453, %s20, 1
        %p455 = scmp.lt.s32.totalorder %s21, 0
        %s456 = scalar_select %p455, %s21, 0
        %s457 = smul.addr %s454, 8
        %s458 = sadd.s32 %s456, %s457
        %s459 = smul.addr %s458, 4
        %s460 = scalar_lea.vmem %s3, %s459
      $region44: #{_lambda_.10} parent=39 // pred_fallthru
        _
    $region40: #{_lambda_.10} parent=5 // pred_fallthru
      _
  $region6: #{_lambda_.10} parent=0 // loop_footer
    %s13 = sadd.s32 1, %s9
  $region7: #{_lambda_.10} parent=0 // loop_footer_branch
    %8 = sbr.rel target = $region3
  $region8: #{_lambda_.10} parent=0 // loop_exit
    _

// kernel: _lambda_.9
$region0: #{_lambda_.9}
  #allocation0 [shape = 'u32[]', space=smem, size = 0x4, offset = 0x4, fixed_abs, tag = 'smem constant byte address 0x4 - core index']
  #allocation1 [shape = 'u32[144,128]{1,0:T(1,128)}', space=vmem, size = 0x12000, scoped, tag = 'internal scratch']
  %s0 = inlined_call_operand.vmem [shape: bf16[128,128], index: 0, kind: input, shape index: {}]
  %s1 = inlined_call_operand.vmem [shape: bf16[128,128], index: 1, kind: input, shape index: {}]
  %s2 = inlined_call_operand.vmem [shape: bf16[128,128], index: 2, kind: output, shape index: {}]
  %s3 = sld [smem:[#allocation0]]
  $region18: #{_lambda_.9} parent=0
    _
  %s5 = ssub.s32 1, %s3
  %s6 = scalar_select 0, %s5, %s3
  // Predicated region
  $region2: #{_lambda_.9} parent=0 // pred_check
    _
  $region3: #{_lambda_.9} parent=0 // pred_check_branch
    %8 = sbr.rel (0) target = $region5
  $region4: #{_lambda_.9} parent=0 // pred_region
    _
  $region5: #{_lambda_.9} parent=0 // pred_fallthru
    _
  // Predicated region
  $region6: #{_lambda_.9} parent=0 // pred_check
    _
  $region7: #{_lambda_.9} parent=0 // pred_check_branch
    %10 = sbr.rel (0) target = $region9
  $region8: #{_lambda_.9} parent=0 // pred_region
    _
  $region9: #{_lambda_.9} parent=0 // pred_fallthru
    _
  %v12 = vld [vmem:[%s0] sm:$0xf]
  %v13 = vld [vmem:[%s0 + $0x4] sm:$0xf]
  %v14 = vld [vmem:[%s0 + $0x8] sm:$0xf]
  %v15 = vld [vmem:[%s0 + $0xc] sm:$0xf]
  %v16 = vld [vmem:[%s0 + $0x10] sm:$0xf]
  %v17 = vld [vmem:[%s0 + $0x14] sm:$0xf]
  %v18 = vld [vmem:[%s0 + $0x18] sm:$0xf]
  %v19 = vld [vmem:[%s0 + $0x1c] sm:$0xf]
  %v20 = vld [vmem:[%s0 + $0x20] sm:$0xf]
  %v21 = vld [vmem:[%s0 + $0x24] sm:$0xf]
  %v22 = vld [vmem:[%s0 + $0x28] sm:$0xf]
  %v23 = vld [vmem:[%s0 + $0x2c] sm:$0xf]
  %v24 = vld [vmem:[%s0 + $0x30] sm:$0xf]
  %v25 = vld [vmem:[%s0 + $0x34] sm:$0xf]
  %v26 = vld [vmem:[%s0 + $0x38] sm:$0xf]
  %v27 = vld [vmem:[%s0 + $0x3c] sm:$0xf]
  %v28 = vld [vmem:[%s1] sm:$0xf]
  %v29 = vld [vmem:[%s1 + $0x4] sm:$0xf]
  %v30 = vld [vmem:[%s1 + $0x8] sm:$0xf]
  %v31 = vld [vmem:[%s1 + $0xc] sm:$0xf]
  %v32 = vld [vmem:[%s1 + $0x10] sm:$0xf]
  %v33 = vld [vmem:[%s1 + $0x14] sm:$0xf]
  %v34 = vld [vmem:[%s1 + $0x18] sm:$0xf]
  %v35 = vld [vmem:[%s1 + $0x1c] sm:$0xf]
  %v36 = vld [vmem:[%s1 + $0x20] sm:$0xf]
  %v37 = vld [vmem:[%s1 + $0x24] sm:$0xf]
  %v38 = vld [vmem:[%s1 + $0x28] sm:$0xf]
  %v39 = vld [vmem:[%s1 + $0x2c] sm:$0xf]
  %v40 = vld [vmem:[%s1 + $0x30] sm:$0xf]
  %v41 = vld [vmem:[%s1 + $0x34] sm:$0xf]
  %v42 = vld [vmem:[%s1 + $0x38] sm:$0xf]
  %v43 = vld [vmem:[%s1 + $0x3c] sm:$0xf]
  %v60 = vunpack.c.l.b16 %v12
  %v61 = vunpack.c.l.b16 %v13
  %v62 = vunpack.c.l.b16 %v14
  %v63 = vunpack.c.l.b16 %v15
  %v64 = vunpack.c.l.b16 %v16
  %v65 = vunpack.c.l.b16 %v17
  %v66 = vunpack.c.l.b16 %v18
  %v67 = vunpack.c.l.b16 %v19
  %v68 = vunpack.c.l.b16 %v20
  %v69 = vunpack.c.l.b16 %v21
  %v70 = vunpack.c.l.b16 %v22
  %v71 = vunpack.c.l.b16 %v23
  %v72 = vunpack.c.l.b16 %v24
  %v73 = vunpack.c.l.b16 %v25
  %v74 = vunpack.c.l.b16 %v26
  %v75 = vunpack.c.l.b16 %v27
  %v76 = vpack.c.b16 %v61, %v60
  %v77 = vpack.c.b16 %v63, %v62
  %v78 = vpack.c.b16 %v65, %v64
  %v79 = vpack.c.b16 %v67, %v66
  %v80 = vpack.c.b16 %v69, %v68
  %v81 = vpack.c.b16 %v71, %v70
  %v82 = vpack.c.b16 %v73, %v72
  %v83 = vpack.c.b16 %v75, %v74
  %v108 = vunpack.c.l.b16 %v28
  %v109 = vunpack.c.l.b16 %v29
  %v110 = vunpack.c.l.b16 %v30
  %v111 = vunpack.c.l.b16 %v31
  %v112 = vunpack.c.l.b16 %v32
  %v113 = vunpack.c.l.b16 %v33
  %v114 = vunpack.c.l.b16 %v34
  %v115 = vunpack.c.l.b16 %v35
  %v116 = vunpack.c.l.b16 %v36
  %v117 = vunpack.c.l.b16 %v37
  %v118 = vunpack.c.l.b16 %v38
  %v119 = vunpack.c.l.b16 %v39
  %v120 = vunpack.c.l.b16 %v40
  %v121 = vunpack.c.l.b16 %v41
  %v122 = vunpack.c.l.b16 %v42
  %v123 = vunpack.c.l.b16 %v43
  %v124 = vpack.c.b16 %v109, %v108
  %v125 = vpack.c.b16 %v111, %v110
  %v126 = vpack.c.b16 %v113, %v112
  %v127 = vpack.c.b16 %v115, %v114
  %v128 = vpack.c.b16 %v117, %v116
  %v129 = vpack.c.b16 %v119, %v118
  %v130 = vpack.c.b16 %v121, %v120
  %v131 = vpack.c.b16 %v123, %v122
  %140 = vmatprep.subr.bf16.mxu0 0
  %141 = vmatpush1.bf16.msra.mxu0 %v124
  %142 = vmatprep.subr.bf16.mxu0 0
  %143 = vmatpush1.bf16.msra.mxu0 %v125
  %144 = vmatprep.subr.bf16.mxu0 0
  %145 = vmatpush1.bf16.msra.mxu0 %v126
  %146 = vmatprep.subr.bf16.mxu0 0
  %147 = vmatpush1.bf16.msra.mxu0 %v127
  %148 = vmatprep.subr.bf16.mxu0 0
  %149 = vmatpush1.bf16.msra.mxu0 %v128
  %150 = vmatprep.subr.bf16.mxu0 0
  %151 = vmatpush1.bf16.msra.mxu0 %v129
  %152 = vmatprep.subr.bf16.mxu0 0
  %153 = vmatpush1.bf16.msra.mxu0 %v130
  %154 = vmatprep.subr.bf16.mxu0 0
  %155 = vmatpush1.bf16.msra.mxu0 %v131
  %156 = vmatprep.subr.bf16.mxu0 0
  %157 = vmatpush1.bf16.msra.mxu0 0
  %158 = vmatprep.subr.bf16.mxu0 0
  %159 = vmatpush1.bf16.msra.mxu0 0
  %160 = vmatprep.subr.bf16.mxu0 0
  %161 = vmatpush1.bf16.msra.mxu0 0
  %162 = vmatprep.subr.bf16.mxu0 0
  %163 = vmatpush1.bf16.msra.mxu0 0
  %164 = vmatprep.subr.bf16.mxu0 0
  %165 = vmatpush1.bf16.msra.mxu0 0
  %166 = vmatprep.subr.bf16.mxu0 0
  %167 = vmatpush1.bf16.msra.mxu0 0
  %168 = vmatprep.subr.bf16.mxu0 0
  %169 = vmatpush1.bf16.msra.mxu0 0
  %170 = vmatprep.subr.bf16.mxu0 0
  %171 = vmatpush1.bf16.msra.mxu0 0
  %172 = vmatprep.mubr.bf16.mxu0 0
  %173 = vmatmul.mubr.bf16.gmra.mrb[0].mxu0 %v76
  %v174 = vpop.f32.mrb[0].mxu0
  %v175 = vadd.f32 0.0, %v174
  %v176 = vpop.f32.mrb[0].mxu0
  %v177 = vpop.f32.mrb[0].mxu0
  %v178 = vadd.f32 0.0, %v177
  %v179 = vpop.f32.mrb[0].mxu0
  %180 = vmatprep.mubr.bf16.mxu0 0
  %181 = vmatmul.mubr.bf16.gmra.mrb[0].mxu0 %v77
  %v182 = vpop.f32.mrb[0].mxu0
  %v183 = vadd.f32 0.0, %v182
  %v184 = vpop.f32.mrb[0].mxu0
  %v185 = vpop.f32.mrb[0].mxu0
  %v186 = vadd.f32 0.0, %v185
  %v187 = vpop.f32.mrb[0].mxu0
  %188 = vmatprep.mubr.bf16.mxu0 0
  %189 = vmatmul.mubr.bf16.gmra.mrb[0].mxu0 %v78
  %v190 = vpop.f32.mrb[0].mxu0
  %v191 = vadd.f32 0.0, %v190
  %v192 = vpop.f32.mrb[0].mxu0
  %v193 = vpop.f32.mrb[0].mxu0
  %v194 = vadd.f32 0.0, %v193
  %v195 = vpop.f32.mrb[0].mxu0
  %196 = vmatprep.mubr.bf16.mxu0 0
  %197 = vmatmul.mubr.bf16.gmra.mrb[0].mxu0 %v79
  %v198 = vpop.f32.mrb[0].mxu0
  %v199 = vadd.f32 0.0, %v198
  %v200 = vpop.f32.mrb[0].mxu0
  %v201 = vpop.f32.mrb[0].mxu0
  %v202 = vadd.f32 0.0, %v201
  %v203 = vpop.f32.mrb[0].mxu0
  %204 = vmatprep.mubr.bf16.mxu0 0
  %205 = vmatmul.mubr.bf16.gmra.mrb[0].mxu0 %v80
  %v206 = vpop.f32.mrb[0].mxu0
  %v207 = vadd.f32 0.0, %v206
  %v208 = vpop.f32.mrb[0].mxu0
  %v209 = vpop.f32.mrb[0].mxu0
  %v210 = vadd.f32 0.0, %v209
  %v211 = vpop.f32.mrb[0].mxu0
  %212 = vmatprep.mubr.bf16.mxu0 0
  %213 = vmatmul.mubr.bf16.gmra.mrb[0].mxu0 %v81
  %v214 = vpop.f32.mrb[0].mxu0
  %v215 = vadd.f32 0.0, %v214
  %v216 = vpop.f32.mrb[0].mxu0
  %v217 = vpop.f32.mrb[0].mxu0
  %v218 = vadd.f32 0.0, %v217
  %v219 = vpop.f32.mrb[0].mxu0
  %220 = vmatprep.mubr.bf16.mxu0 0
  %221 = vmatmul.mubr.bf16.gmra.mrb[0].mxu0 %v82
  %v222 = vpop.f32.mrb[0].mxu0
  %v223 = vadd.f32 0.0, %v222
  %v224 = vpop.f32.mrb[0].mxu0
  %v225 = vpop.f32.mrb[0].mxu0
  %v226 = vadd.f32 0.0, %v225
  %v227 = vpop.f32.mrb[0].mxu0
  %228 = vmatprep.mubr.bf16.mxu0 0
  %229 = vmatmul.mubr.bf16.gmra.mrb[0].mxu0 %v83
  %v230 = vpop.f32.mrb[0].mxu0
  %v231 = vadd.f32 0.0, %v230
  %v232 = vpop.f32.mrb[0].mxu0
  %v233 = vpop.f32.mrb[0].mxu0
  %v234 = vadd.f32 0.0, %v233
  %v235 = vpop.f32.mrb[0].mxu0
  %236 = vdwg.mxu0
  %v237 = vpack.c.bf16 %v178, %v175
  %v238 = vpack.c.bf16 %v186, %v183
  %v239 = vpack.c.bf16 %v194, %v191
  %v240 = vpack.c.bf16 %v202, %v199
  %v241 = vpack.c.bf16 %v210, %v207
  %v242 = vpack.c.bf16 %v218, %v215
  %v243 = vpack.c.bf16 %v226, %v223
  %v244 = vpack.c.bf16 %v234, %v231
  %v253 = vunpack.c.l.b16 %v237
  %v254 = vunpack.c.h.b16 %v237
  %v255 = vunpack.c.l.b16 %v238
  %v256 = vunpack.c.h.b16 %v238
  %v257 = vunpack.c.l.b16 %v239
  %v258 = vunpack.c.h.b16 %v239
  %v259 = vunpack.c.l.b16 %v240
  %v260 = vunpack.c.h.b16 %v240
  %v261 = vunpack.c.l.b16 %v241
  %v262 = vunpack.c.h.b16 %v241
  %v263 = vunpack.c.l.b16 %v242
  %v264 = vunpack.c.h.b16 %v242
  %v265 = vunpack.c.l.b16 %v243
  %v266 = vunpack.c.h.b16 %v243
  %v267 = vunpack.c.l.b16 %v244
  %v268 = vunpack.c.h.b16 %v244
  %v269 = vpack.c.b16 %v253, %v253
  %v270 = vpack.c.b16 %v254, %v254
  %v271 = vpack.c.b16 %v255, %v255
  %v272 = vpack.c.b16 %v256, %v256
  %v273 = vpack.c.b16 %v257, %v257
  %v274 = vpack.c.b16 %v258, %v258
  %v275 = vpack.c.b16 %v259, %v259
  %v276 = vpack.c.b16 %v260, %v260
  %v277 = vpack.c.b16 %v261, %v261
  %v278 = vpack.c.b16 %v262, %v262
  %v279 = vpack.c.b16 %v263, %v263
  %v280 = vpack.c.b16 %v264, %v264
  %v281 = vpack.c.b16 %v265, %v265
  %v282 = vpack.c.b16 %v266, %v266
  %v283 = vpack.c.b16 %v267, %v267
  %v284 = vpack.c.b16 %v268, %v268
  %301 = vst [vmem:[%s2] sm:$0xf] %v269
  %302 = vst [vmem:[%s2 + $0x4] sm:$0xf] %v270
  %303 = vst [vmem:[%s2 + $0x8] sm:$0xf] %v271
  %304 = vst [vmem:[%s2 + $0xc] sm:$0xf] %v272
  %305 = vst [vmem:[%s2 + $0x10] sm:$0xf] %v273
  %306 = vst [vmem:[%s2 + $0x14] sm:$0xf] %v274
  %307 = vst [vmem:[%s2 + $0x18] sm:$0xf] %v275
  %308 = vst [vmem:[%s2 + $0x1c] sm:$0xf] %v276
  %309 = vst [vmem:[%s2 + $0x20] sm:$0xf] %v277
  %310 = vst [vmem:[%s2 + $0x24] sm:$0xf] %v278
  %311 = vst [vmem:[%s2 + $0x28] sm:$0xf] %v279
  %312 = vst [vmem:[%s2 + $0x2c] sm:$0xf] %v280
  %313 = vst [vmem:[%s2 + $0x30] sm:$0xf] %v281
  %314 = vst [vmem:[%s2 + $0x34] sm:$0xf] %v282
  %315 = vst [vmem:[%s2 + $0x38] sm:$0xf] %v283
  %316 = vst [vmem:[%s2 + $0x3c] sm:$0xf] %v284
  // Predicated region
  $region10: #{_lambda_.9} parent=0 // pred_check
    _
  $region11: #{_lambda_.9} parent=0 // pred_check_branch
    %318 = sbr.rel (0) target = $region13
  $region12: #{_lambda_.9} parent=0 // pred_region
    _
  $region13: #{_lambda_.9} parent=0 // pred_fallthru
    _
  // Predicated region
  $region14: #{_lambda_.9} parent=0 // pred_check
    _
  $region15: #{_lambda_.9} parent=0 // pred_check_branch
    %320 = sbr.rel (0) target = $region17
  $region16: #{_lambda_.9} parent=0 // pred_region
    _
  $region17: #{_lambda_.9} parent=0 // pred_fallthru
    _

// kernel: _lambda_.11
$region0: #{_lambda_.11}
  #allocation0 [shape = 'u32[]', space=smem, size = 0x4, offset = 0x4, fixed_abs, tag = 'smem constant byte address 0x4 - core index']
  #allocation1 [shape = 'u32[144,128]{1,0:T(1,128)}', space=vmem, size = 0x12000, scoped, tag = 'internal scratch']
  %s0 = inlined_call_operand.vmem [shape: bf16[2,8,10,128], index: 0, kind: input, shape index: {}]
  %s1 = inlined_call_operand.vmem [shape: f32[1,1,1,128], index: 1, kind: input, shape index: {}]
  %s2 = inlined_call_operand.vmem [shape: f32[1,1,1,128], index: 2, kind: input, shape index: {}]
  %s3 = inlined_call_operand.vmem [shape: bf16[2,8,8,128], index: 3, kind: input, shape index: {}]
  %s4 = inlined_call_operand.vmem [shape: f32[2,8,8,128], index: 4, kind: output, shape index: {}]
  %s5 = sld [smem:[#allocation0]]
  $region49: #{_lambda_.11} parent=0
    _
  %s7 = ssub.s32 1, %s5
  %s8 = scalar_select 0, %s7, %s5
  loop: start=0, step=1, limit=4
  $region2: #{_lambda_.11} parent=0 // loop_pre_header
    _
  $region3: #{_lambda_.11} parent=0 // loop_header
    %s10 = sphi 0, %s14
    %p11 = scmp.ge.s32.totalorder %s10, 4
    %s17 = sphi 0, %s29
    %s18 = sphi 0, %s25
    %s19 = sphi 0, %s17
    %s20 = sphi 0, %s18
    %s21 = sphi 0, %s19
    %s22 = sphi 0, %s20
    %s34 = sphi 0, %s36
    %s37 = sphi 0, %s34
    %s38 = sphi 0, %s37
    %s54 = sphi 0, %s38
    %s60 = sphi 0, %s62
    %s63 = sphi 0, %s60
    %s64 = sphi 0, %s63
    %s80 = sphi 0, %s64
    %s86 = sphi 0, %s88
    %s89 = sphi 0, %s86
    %s90 = sphi 0, %s89
    %s106 = sphi 0, %s90
    %s114 = sphi 0, %s116
    %s117 = sphi 0, %s114
    %s118 = sphi 0, %s117
    %s134 = sphi 0, %s118
    %s142 = sphi 0, %s144
    %s145 = sphi 0, %s142
    %s146 = sphi 0, %s145
    %s162 = sphi 0, %s146
  $region4: #{_lambda_.11} parent=0 // loop_header_branch
    %13 = sbr.rel (%p11) target = $region8
  $region5: #{_lambda_.11} parent=0 // loop_body
    %s15 = ssub.s32 %s10, 1
    %s16 = ssub.s32 %s10, 2
    %s23 = sadd.s32 1, %s18
    %p24 = scmp.ge.s32.totalorder %s23, 1
    %s25 = scalar_select %p24, 0, %s23
    %s26 = sadd.s32 1, %s17
    %s27 = scalar_select %p24, %s26, %s17
    %p28 = scmp.ge.s32.totalorder %s27, 2
    %s29 = scalar_select %p28, 0, %s27
    %s30 = ssub.s32 %s17, %s29
    %s31 = ssub.s32 %s18, %s25
    %s32 = sor.u32 %s30, %s31
    %p33 = scmp.eq.s32.totalorder %s32, 0
    %s35 = sadd.s32 %s34, 1
    %s36 = scalar_select %p33, %s34, %s35
    %p39 = pneg %p33
    %p40 = scmp.eq.s32.totalorder %s10, 1
    %p41 = por %p39, %p40
    %p42 = scmp.ne.s32.totalorder %s34, %s37
    %p43 = scmp.eq.s32.totalorder %s10, 0
    %p44 = por %p42, %p43
    %p45 = scmp.ne.s32.totalorder %s34, %s37
    %p46 = scmp.eq.s32.totalorder %s15, 1
    %p47 = por %p45, %p46
    %p48 = scmp.ne.s32.totalorder %s37, %s38
    %p49 = scmp.eq.s32.totalorder %s15, 0
    %p50 = por %p48, %p49
    %p51 = scmp.ne.s32.totalorder %s37, %s38
    %p52 = scmp.eq.s32.totalorder %s16, 1
    %p53 = por %p51, %p52
    %p55 = scmp.ne.s32.totalorder %s38, %s54
    %p56 = scmp.eq.s32.totalorder %s16, 0
    %p57 = por %p55, %p56
    %s58 = ssub.s32 %s18, %s25
    %p59 = scmp.eq.s32.totalorder %s58, 0
    %s61 = sadd.s32 %s60, 1
    %s62 = scalar_select %p59, %s60, %s61
    %p65 = pneg %p59
    %p66 = scmp.eq.s32.totalorder %s10, 1
    %p67 = por %p65, %p66
    %p68 = scmp.ne.s32.totalorder %s60, %s63
    %p69 = scmp.eq.s32.totalorder %s10, 0
    %p70 = por %p68, %p69
    %p71 = scmp.ne.s32.totalorder %s60, %s63
    %p72 = scmp.eq.s32.totalorder %s15, 1
    %p73 = por %p71, %p72
    %p74 = scmp.ne.s32.totalorder %s63, %s64
    %p75 = scmp.eq.s32.totalorder %s15, 0
    %p76 = por %p74, %p75
    %p77 = scmp.ne.s32.totalorder %s63, %s64
    %p78 = scmp.eq.s32.totalorder %s16, 1
    %p79 = por %p77, %p78
    %p81 = scmp.ne.s32.totalorder %s64, %s80
    %p82 = scmp.eq.s32.totalorder %s16, 0
    %p83 = por %p81, %p82
    %s84 = ssub.s32 %s18, %s25
    %p85 = scmp.eq.s32.totalorder %s84, 0
    %s87 = sadd.s32 %s86, 1
    %s88 = scalar_select %p85, %s86, %s87
    %p91 = pneg %p85
    %p92 = scmp.eq.s32.totalorder %s10, 1
    %p93 = por %p91, %p92
    %p94 = scmp.ne.s32.totalorder %s86, %s89
    %p95 = scmp.eq.s32.totalorder %s10, 0
    %p96 = por %p94, %p95
    %p97 = scmp.ne.s32.totalorder %s86, %s89
    %p98 = scmp.eq.s32.totalorder %s15, 1
    %p99 = por %p97, %p98
    %p100 = scmp.ne.s32.totalorder %s89, %s90
    %p101 = scmp.eq.s32.totalorder %s15, 0
    %p102 = por %p100, %p101
    %p103 = scmp.ne.s32.totalorder %s89, %s90
    %p104 = scmp.eq.s32.totalorder %s16, 1
    %p105 = por %p103, %p104
    %p107 = scmp.ne.s32.totalorder %s90, %s106
    %p108 = scmp.eq.s32.totalorder %s16, 0
    %p109 = por %p107, %p108
    %s110 = ssub.s32 %s17, %s29
    %s111 = ssub.s32 %s18, %s25
    %s112 = sor.u32 %s110, %s111
    %p113 = scmp.eq.s32.totalorder %s112, 0
    %s115 = sadd.s32 %s114, 1
    %s116 = scalar_select %p113, %s114, %s115
    %p119 = pneg %p113
    %p120 = scmp.eq.s32.totalorder %s10, 1
    %p121 = por %p119, %p120
    %p122 = scmp.ne.s32.totalorder %s114, %s117
    %p123 = scmp.eq.s32.totalorder %s10, 0
    %p124 = por %p122, %p123
    %p125 = scmp.ne.s32.totalorder %s114, %s117
    %p126 = scmp.eq.s32.totalorder %s15, 1
    %p127 = por %p125, %p126
    %p128 = scmp.ne.s32.totalorder %s117, %s118
    %p129 = scmp.eq.s32.totalorder %s15, 0
    %p130 = por %p128, %p129
    %p131 = scmp.ne.s32.totalorder %s117, %s118
    %p132 = scmp.eq.s32.totalorder %s16, 1
    %p133 = por %p131, %p132
    %p135 = scmp.ne.s32.totalorder %s118, %s134
    %p136 = scmp.eq.s32.totalorder %s16, 0
    %p137 = por %p135, %p136
    %s138 = ssub.s32 %s17, %s29
    %s139 = ssub.s32 %s18, %s25
    %s140 = sor.u32 %s138, %s139
    %p141 = scmp.eq.s32.totalorder %s140, 0
    %s143 = sadd.s32 %s142, 1
    %s144 = scalar_select %p141, %s142, %s143
    %p147 = pneg %p141
    %p148 = scmp.eq.s32.totalorder %s10, 1
    %p149 = por %p147, %p148
    %p150 = scmp.ne.s32.totalorder %s142, %s145
    %p151 = scmp.eq.s32.totalorder %s10, 0
    %p152 = por %p150, %p151
    %p153 = scmp.ne.s32.totalorder %s142, %s145
    %p154 = scmp.eq.s32.totalorder %s15, 1
    %p155 = por %p153, %p154
    %p156 = scmp.ne.s32.totalorder %s145, %s146
    %p157 = scmp.eq.s32.totalorder %s15, 0
    %p158 = por %p156, %p157
    %p159 = scmp.ne.s32.totalorder %s145, %s146
    %p160 = scmp.eq.s32.totalorder %s16, 1
    %p161 = por %p159, %p160
    %p163 = scmp.ne.s32.totalorder %s146, %s162
    %p164 = scmp.eq.s32.totalorder %s16, 0
    %p165 = por %p163, %p164
    %p166 = scmp.le.s32.totalorder 1, %s10
    %p167 = scmp.lt.s32.totalorder %s10, 3
    %p168 = pnand %p166, %p167
    %p169 = pneg %p168
    // Predicated region
    $region9: #{_lambda_.11} parent=5 // pred_check
      _
    $region10: #{_lambda_.11} parent=5 // pred_check_branch
      %171 = sbr.rel (%p168) target = $region12
    $region11: #{_lambda_.11} parent=5 // pred_region
      %s172 = ssub.s32 %s10, 1
      // Predicated region
      $region13: #{_lambda_.11} parent=11 // pred_check
        %p173 = pneg %p76
      $region14: #{_lambda_.11} parent=11 // pred_check_branch
        %175 = sbr.rel (%p173) target = $region16
      $region15: #{_lambda_.11} parent=11 // pred_region
        %p176 = scmp.lt.s32.totalorder %s20, 0
        %s177 = scalar_select %p176, %s20, 0
        %s178 = scalar_lea.vmem %s1, %s177
      $region16: #{_lambda_.11} parent=11 // pred_fallthru
        _
      // Predicated region
      $region17: #{_lambda_.11} parent=11 // pred_check
        %p179 = pneg %p102
      $region18: #{_lambda_.11} parent=11 // pred_check_branch
        %181 = sbr.rel (%p179) target = $region20
      $region19: #{_lambda_.11} parent=11 // pred_region
        %p182 = scmp.lt.s32.totalorder %s20, 0
        %s183 = scalar_select %p182, %s20, 0
        %s184 = scalar_lea.vmem %s2, %s183
      $region20: #{_lambda_.11} parent=11 // pred_fallthru
        _
    $region12: #{_lambda_.11} parent=5 // pred_fallthru
      _
    %p185 = scmp.lt.s32.totalorder %s10, 2
    // Predicated region
    $region21: #{_lambda_.11} parent=5 // pred_check
      %p186 = pneg %p185
    $region22: #{_lambda_.11} parent=5 // pred_check_branch
      %188 = sbr.rel (%p186) target = $region24
    $region23: #{_lambda_.11} parent=5 // pred_region
      // Predicated region
      $region25: #{_lambda_.11} parent=23 // pred_check
        %p189 = pneg %p44
      $region26: #{_lambda_.11} parent=23 // pred_check_branch
        %191 = sbr.rel (%p189) target = $region28
      $region27: #{_lambda_.11} parent=23 // pred_region
        %p192 = scmp.lt.s32.totalorder %s17, 1
        %s193 = scalar_select %p192, %s17, 1
        %p194 = scmp.lt.s32.totalorder %s18, 0
        %s195 = scalar_select %p194, %s18, 0
        %s196 = smul.addr %s193, 16
        %s197 = sadd.s32 %s195, %s196
        %s198 = smul.addr %s197, 4
        %s199 = scalar_lea.vmem %s0, %s198
      $region28: #{_lambda_.11} parent=23 // pred_fallthru
        _
      // Predicated region
      $region29: #{_lambda_.11} parent=23 // pred_check
        %p200 = pneg %p124
      $region30: #{_lambda_.11} parent=23 // pred_check_branch
        %202 = sbr.rel (%p200) target = $region32
      $region31: #{_lambda_.11} parent=23 // pred_region
        %p203 = scmp.lt.s32.totalorder %s17, 1
        %s204 = scalar_select %p203, %s17, 1
        %p205 = scmp.lt.s32.totalorder %s18, 0
        %s206 = scalar_select %p205, %s18, 0
        %s207 = smul.addr %s204, 8
        %s208 = sadd.s32 %s206, %s207
        %s209 = smul.addr %s208, 4
        %s210 = scalar_lea.vmem %s3, %s209
      $region32: #{_lambda_.11} parent=23 // pred_fallthru
        _
    $region24: #{_lambda_.11} parent=5 // pred_fallthru
      _
    %p211 = scmp.le.s32.totalorder 1, %s10
    %p212 = scmp.lt.s32.totalorder %s10, 3
    %p213 = pnand %p211, %p212
    %p214 = pneg %p213
    // Predicated region
    $region33: #{_lambda_.11} parent=5 // pred_check
      _
    $region34: #{_lambda_.11} parent=5 // pred_check_branch
      %216 = sbr.rel (%p213) target = $region36
    $region35: #{_lambda_.11} parent=5 // pred_region
      %s217 = ssub.s32 %s10, 1
      %p218 = scmp.lt.s32.totalorder %s19, 1
      %s219 = scalar_select %p218, %s19, 1
      %p220 = scmp.lt.s32.totalorder %s20, 0
      %s221 = scalar_select %p220, %s20, 0
      %s222 = smul.addr %s219, 16
      %s223 = sadd.s32 %s221, %s222
      %s224 = smul.addr %s223, 4
      %s225 = scalar_lea.vmem %s0, %s224
      %p226 = pneg %p50
      %p227 = pneg %p47
      %p228 = scmp.lt.s32.totalorder %s20, 0
      %s229 = scalar_select %p228, %s20, 0
      %s230 = scalar_lea.vmem %s1, %s229
      %p231 = pneg %p76
      %p232 = pneg %p73
      %p233 = scmp.lt.s32.totalorder %s20, 0
      %s234 = scalar_select %p233, %s20, 0
      %s235 = scalar_lea.vmem %s2, %s234
      %p236 = pneg %p102
      %p237 = pneg %p99
      %p238 = scmp.lt.s32.totalorder %s19, 1
      %s239 = scalar_select %p238, %s19, 1
      %p240 = scmp.lt.s32.totalorder %s20, 0
      %s241 = scalar_select %p240, %s20, 0
      %s242 = smul.addr %s239, 8
      %s243 = sadd.s32 %s241, %s242
      %s244 = smul.addr %s243, 4
      %s245 = scalar_lea.vmem %s3, %s244
      %p246 = pneg %p130
      %p247 = pneg %p127
      %p248 = pneg %p158
      %p249 = pneg %p155
      %p250 = scmp.lt.s32.totalorder %s19, 1
      %s251 = scalar_select %p250, %s19, 1
      %p252 = scmp.lt.s32.totalorder %s20, 0
      %s253 = scalar_select %p252, %s20, 0
      %s254 = smul.addr %s251, 8
      %s255 = sadd.s32 %s253, %s254
      %s256 = smul.addr %s255, 8
      %s257 = scalar_lea.vmem %s4, %s256
      %p258 = scmp.lt.s32.totalorder %s19, 1
      %s259 = scalar_select %p258, %s19, 1
      %p260 = scmp.lt.s32.totalorder %s20, 0
      %s261 = scalar_select %p260, %s20, 0
      %s262 = smul.addr %s259, 16
      %s263 = sadd.s32 %s261, %s262
      %s264 = smul.addr %s263, 4
      %s265 = scalar_lea.vmem %s0, %s264
      %p266 = scmp.lt.s32.totalorder %s20, 0
      %s267 = scalar_select %p266, %s20, 0
      %s268 = scalar_lea.vmem %s1, %s267
      %p269 = scmp.lt.s32.totalorder %s20, 0
      %s270 = scalar_select %p269, %s20, 0
      %s271 = scalar_lea.vmem %s2, %s270
      %p272 = scmp.lt.s32.totalorder %s19, 1
      %s273 = scalar_select %p272, %s19, 1
      %p274 = scmp.lt.s32.totalorder %s20, 0
      %s275 = scalar_select %p274, %s20, 0
      %s276 = smul.addr %s273, 8
      %s277 = sadd.s32 %s275, %s276
      %s278 = smul.addr %s277, 4
      %s279 = scalar_lea.vmem %s3, %s278
      %p280 = scmp.lt.s32.totalorder %s19, 1
      %s281 = scalar_select %p280, %s19, 1
      %p282 = scmp.lt.s32.totalorder %s20, 0
      %s283 = scalar_select %p282, %s20, 0
      %s284 = smul.addr %s281, 8
      %s285 = sadd.s32 %s283, %s284
      %s286 = smul.addr %s285, 8
      %s287 = scalar_lea.vmem %s4, %s286
      %v288 = vld [vmem:[%s265] sm:$0xf]
      %v289 = vld [vmem:[%s265 + $0x8] sm:$0xf]
      %v290 = vld [vmem:[%s265 + $0x10] sm:$0xf]
      %v291 = vld [vmem:[%s265 + $0x18] sm:$0xf]
      %v292 = vld [vmem:[%s265 + $0x20] sm:$0xf]
      %v293 = vld [vmem:[%s265 + $0x28] sm:$0xf]
      %v294 = vld [vmem:[%s265 + $0x30] sm:$0xf]
      %v295 = vld [vmem:[%s265 + $0x38] sm:$0xf]
      %v296 = vunpack.c.l.bf16 %v288
      %v297 = vunpack.c.l.bf16 %v289
      %v298 = vunpack.c.l.bf16 %v290
      %v299 = vunpack.c.l.bf16 %v291
      %v300 = vunpack.c.l.bf16 %v292
      %v301 = vunpack.c.l.bf16 %v293
      %v302 = vunpack.c.l.bf16 %v294
      %v303 = vunpack.c.l.bf16 %v295
      %v304 = vrot.slane %v296, 4
      %v305 = vadd.f32 %v296, %v304
      %v306 = vrot.slane %v305, 2
      %v307 = vadd.f32 %v305, %v306
      %v308 = vrot.slane %v307, 1
      %v309 = vadd.f32 %v307, %v308
      %v310 = vrot.slane %v297, 4
      %v311 = vadd.f32 %v297, %v310
      %v312 = vrot.slane %v311, 2
      %v313 = vadd.f32 %v311, %v312
      %v314 = vrot.slane %v313, 1
      %v315 = vadd.f32 %v313, %v314
      %v316 = vrot.slane %v298, 4
      %v317 = vadd.f32 %v298, %v316
      %v318 = vrot.slane %v317, 2
      %v319 = vadd.f32 %v317, %v318
      %v320 = vrot.slane %v319, 1
      %v321 = vadd.f32 %v319, %v320
      %v322 = vrot.slane %v299, 4
      %v323 = vadd.f32 %v299, %v322
      %v324 = vrot.slane %v323, 2
      %v325 = vadd.f32 %v323, %v324
      %v326 = vrot.slane %v325, 1
      %v327 = vadd.f32 %v325, %v326
      %v328 = vrot.slane %v300, 4
      %v329 = vadd.f32 %v300, %v328
      %v330 = vrot.slane %v329, 2
      %v331 = vadd.f32 %v329, %v330
      %v332 = vrot.slane %v331, 1
      %v333 = vadd.f32 %v331, %v332
      %v334 = vrot.slane %v301, 4
      %v335 = vadd.f32 %v301, %v334
      %v336 = vrot.slane %v335, 2
      %v337 = vadd.f32 %v335, %v336
      %v338 = vrot.slane %v337, 1
      %v339 = vadd.f32 %v337, %v338
      %v340 = vrot.slane %v302, 4
      %v341 = vadd.f32 %v302, %v340
      %v342 = vrot.slane %v341, 2
      %v343 = vadd.f32 %v341, %v342
      %v344 = vrot.slane %v343, 1
      %v345 = vadd.f32 %v343, %v344
      %v346 = vrot.slane %v303, 4
      %v347 = vadd.f32 %v303, %v346
      %v348 = vrot.slane %v347, 2
      %v349 = vadd.f32 %v347, %v348
      %v350 = vrot.slane %v349, 1
      %v351 = vadd.f32 %v349, %v350
      %v352 = vadd.f32 %v309, %v315
      %v353 = vadd.f32 %v352, %v321
      %v354 = vadd.f32 %v353, %v327
      %v355 = vadd.f32 %v354, %v333
      %v356 = vadd.f32 %v355, %v339
      %v357 = vadd.f32 %v356, %v345
      %v358 = vadd.f32 %v357, %v351
      %v359 = vmul.f32 %v296, %v296
      %v360 = vmul.f32 %v297, %v297
      %v361 = vmul.f32 %v298, %v298
      %v362 = vmul.f32 %v299, %v299
      %v363 = vmul.f32 %v300, %v300
      %v364 = vmul.f32 %v301, %v301
      %v365 = vmul.f32 %v302, %v302
      %v366 = vmul.f32 %v303, %v303
      %v367 = vrot.slane %v359, 4
      %v368 = vadd.f32 %v359, %v367
      %v369 = vrot.slane %v368, 2
      %v370 = vadd.f32 %v368, %v369
      %v371 = vrot.slane %v370, 1
      %v372 = vadd.f32 %v370, %v371
      %v373 = vrot.slane %v360, 4
      %v374 = vadd.f32 %v360, %v373
      %v375 = vrot.slane %v374, 2
      %v376 = vadd.f32 %v374, %v375
      %v377 = vrot.slane %v376, 1
      %v378 = vadd.f32 %v376, %v377
      %v379 = vrot.slane %v361, 4
      %v380 = vadd.f32 %v361, %v379
      %v381 = vrot.slane %v380, 2
      %v382 = vadd.f32 %v380, %v381
      %v383 = vrot.slane %v382, 1
      %v384 = vadd.f32 %v382, %v383
      %v385 = vrot.slane %v362, 4
      %v386 = vadd.f32 %v362, %v385
      %v387 = vrot.slane %v386, 2
      %v388 = vadd.f32 %v386, %v387
      %v389 = vrot.slane %v388, 1
      %v390 = vadd.f32 %v388, %v389
      %v391 = vrot.slane %v363, 4
      %v392 = vadd.f32 %v363, %v391
      %v393 = vrot.slane %v392, 2
      %v394 = vadd.f32 %v392, %v393
      %v395 = vrot.slane %v394, 1
      %v396 = vadd.f32 %v394, %v395
      %v397 = vrot.slane %v364, 4
      %v398 = vadd.f32 %v364, %v397
      %v399 = vrot.slane %v398, 2
      %v400 = vadd.f32 %v398, %v399
      %v401 = vrot.slane %v400, 1
      %v402 = vadd.f32 %v400, %v401
      %v403 = vrot.slane %v365, 4
      %v404 = vadd.f32 %v365, %v403
      %v405 = vrot.slane %v404, 2
      %v406 = vadd.f32 %v404, %v405
      %v407 = vrot.slane %v406, 1
      %v408 = vadd.f32 %v406, %v407
      %v409 = vrot.slane %v366, 4
      %v410 = vadd.f32 %v366, %v409
      %v411 = vrot.slane %v410, 2
      %v412 = vadd.f32 %v410, %v411
      %v413 = vrot.slane %v412, 1
      %v414 = vadd.f32 %v412, %v413
      %v415 = vadd.f32 %v372, %v378
      %v416 = vadd.f32 %v415, %v384
      %v417 = vadd.f32 %v416, %v390
      %v418 = vadd.f32 %v417, %v396
      %v419 = vadd.f32 %v418, %v402
      %v420 = vadd.f32 %v419, %v408
      %v421 = vadd.f32 %v420, %v414
      %v422 = vrcp.pop 64.0
      %v423 = vmul.f32 %v358, %v422
      %v424 = vmul.f32 %v421, %v422
      %v425 = vmul.f32 %v423, %v423
      %v426 = vsub.f32 %v424, %v425
      %v427 = vmax.f32 %v426, 0.0
      %v428 = vsub.f32 %v296, %v423
      %v429 = vsub.f32 %v297, %v423
      %v430 = vsub.f32 %v298, %v423
      %v431 = vsub.f32 %v299, %v423
      %v432 = vsub.f32 %v300, %v423
      %v433 = vsub.f32 %v301, %v423
      %v434 = vsub.f32 %v302, %v423
      %v435 = vsub.f32 %v303, %v423
      %v436 = vadd.f32 %v427, 1e-05
      %v437 = vrsqrt.pop %v436
      %v438 = vmul.f32 %v428, %v437
      %v439 = vmul.f32 %v429, %v437
      %v440 = vmul.f32 %v430, %v437
      %v441 = vmul.f32 %v431, %v437
      %v442 = vmul.f32 %v432, %v437
      %v443 = vmul.f32 %v433, %v437
      %v444 = vmul.f32 %v434, %v437
      %v445 = vmul.f32 %v435, %v437
      %v446 = vld [vmem:[%s268] sm:$0x1]
      %v448 = vlaneseq
      %v449 = vshrl.u32 %v448, 7
      %v450 = vsub.s32 0, %v449
      %v451 = vrot.slane %v446, %v450
      %v453 = vmul.f32 %v438, %v451
      %v454 = vmul.f32 %v439, %v451
      %v455 = vmul.f32 %v440, %v451
      %v456 = vmul.f32 %v441, %v451
      %v457 = vmul.f32 %v442, %v451
      %v458 = vmul.f32 %v443, %v451
      %v459 = vmul.f32 %v444, %v451
      %v460 = vmul.f32 %v445, %v451
      %v461 = vld [vmem:[%s271] sm:$0x1]
      %v463 = vlaneseq
      %v464 = vshrl.u32 %v463, 7
      %v465 = vsub.s32 0, %v464
      %v466 = vrot.slane %v461, %v465
      %v468 = vadd.f32 %v453, %v466
      %v469 = vadd.f32 %v454, %v466
      %v470 = vadd.f32 %v455, %v466
      %v471 = vadd.f32 %v456, %v466
      %v472 = vadd.f32 %v457, %v466
      %v473 = vadd.f32 %v458, %v466
      %v474 = vadd.f32 %v459, %v466
      %v475 = vadd.f32 %v460, %v466
      %v476 = vld [vmem:[%s279] sm:$0xf]
      %v477 = vld [vmem:[%s279 + $0x4] sm:$0xf]
      %v478 = vld [vmem:[%s279 + $0x8] sm:$0xf]
      %v479 = vld [vmem:[%s279 + $0xc] sm:$0xf]
      %v480 = vld [vmem:[%s279 + $0x10] sm:$0xf]
      %v481 = vld [vmem:[%s279 + $0x14] sm:$0xf]
      %v482 = vld [vmem:[%s279 + $0x18] sm:$0xf]
      %v483 = vld [vmem:[%s279 + $0x1c] sm:$0xf]
      %v484 = vunpack.c.l.bf16 %v476
      %v485 = vunpack.c.l.bf16 %v477
      %v486 = vunpack.c.l.bf16 %v478
      %v487 = vunpack.c.l.bf16 %v479
      %v488 = vunpack.c.l.bf16 %v480
      %v489 = vunpack.c.l.bf16 %v481
      %v490 = vunpack.c.l.bf16 %v482
      %v491 = vunpack.c.l.bf16 %v483
      %v492 = vadd.f32 %v468, %v484
      %v493 = vadd.f32 %v469, %v485
      %v494 = vadd.f32 %v470, %v486
      %v495 = vadd.f32 %v471, %v487
      %v496 = vadd.f32 %v472, %v488
      %v497 = vadd.f32 %v473, %v489
      %v498 = vadd.f32 %v474, %v490
      %v499 = vadd.f32 %v475, %v491
      %v500 = vmax.f32 %v492, 0.0
      %v501 = vmax.f32 %v493, 0.0
      %v502 = vmax.f32 %v494, 0.0
      %v503 = vmax.f32 %v495, 0.0
      %v504 = vmax.f32 %v496, 0.0
      %v505 = vmax.f32 %v497, 0.0
      %v506 = vmax.f32 %v498, 0.0
      %v507 = vmax.f32 %v499, 0.0
      %508 = vst [vmem:[%s287] sm:$0xff] %v500
      %509 = vst [vmem:[%s287 + $0x8] sm:$0xff] %v501
      %510 = vst [vmem:[%s287 + $0x10] sm:$0xff] %v502
      %511 = vst [vmem:[%s287 + $0x18] sm:$0xff] %v503
      %512 = vst [vmem:[%s287 + $0x20] sm:$0xff] %v504
      %513 = vst [vmem:[%s287 + $0x28] sm:$0xff] %v505
      %514 = vst [vmem:[%s287 + $0x30] sm:$0xff] %v506
      %515 = vst [vmem:[%s287 + $0x38] sm:$0xff] %v507
      %p516 = scmp.lt.s32.totalorder %s19, 1
      %s517 = scalar_select %p516, %s19, 1
      %p518 = scmp.lt.s32.totalorder %s20, 0
      %s519 = scalar_select %p518, %s20, 0
      %s520 = smul.addr %s517, 8
      %s521 = sadd.s32 %s519, %s520
      %s522 = smul.addr %s521, 8
      %s523 = scalar_lea.vmem %s4, %s522
      // Predicated region
      $region37: #{_lambda_.11} parent=35 // pred_check
        %p524 = pneg %p155
      $region38: #{_lambda_.11} parent=35 // pred_check_branch
        %526 = sbr.rel (%p524) target = $region40
      $region39: #{_lambda_.11} parent=35 // pred_region
        _
      $region40: #{_lambda_.11} parent=35 // pred_fallthru
        _
    $region36: #{_lambda_.11} parent=5 // pred_fallthru
      _
    %p527 = scmp.le.s32.totalorder 2, %s10
    // Predicated region
    $region41: #{_lambda_.11} parent=5 // pred_check
      %p528 = pneg %p527
    $region42: #{_lambda_.11} parent=5 // pred_check_branch
      %530 = sbr.rel (%p528) target = $region44
    $region43: #{_lambda_.11} parent=5 // pred_region
      %s531 = ssub.s32 %s10, 2
      // Predicated region
      $region45: #{_lambda_.11} parent=43 // pred_check
        %p532 = pneg %p161
      $region46: #{_lambda_.11} parent=43 // pred_check_branch
        %534 = sbr.rel (%p532) target = $region48
      $region47: #{_lambda_.11} parent=43 // pred_region
        %p535 = scmp.lt.s32.totalorder %s21, 1
        %s536 = scalar_select %p535, %s21, 1
        %p537 = scmp.lt.s32.totalorder %s22, 0
        %s538 = scalar_select %p537, %s22, 0
        %s539 = smul.addr %s536, 8
        %s540 = sadd.s32 %s538, %s539
        %s541 = smul.addr %s540, 8
        %s542 = scalar_lea.vmem %s4, %s541
      $region48: #{_lambda_.11} parent=43 // pred_fallthru
        _
    $region44: #{_lambda_.11} parent=5 // pred_fallthru
      _
  $region6: #{_lambda_.11} parent=0 // loop_footer
    %s14 = sadd.s32 1, %s10
  $region7: #{_lambda_.11} parent=0 // loop_footer_branch
    %9 = sbr.rel target = $region3
  $region8: #{_lambda_.11} parent=0 // loop_exit
    _

// kernel: _lambda_.8
$region0: #{_lambda_.8}
  #allocation0 [shape = 'u32[]', space=smem, size = 0x4, offset = 0x4, fixed_abs, tag = 'smem constant byte address 0x4 - core index']
  #allocation1 [shape = 'u32[144,128]{1,0:T(1,128)}', space=vmem, size = 0x12000, scoped, tag = 'internal scratch']
  #allocation2 [shape = 'f32[80,128]{1,0:T(8,128)}', space=vmem, size = 0xa000, scoped, tag = 'scratch operand']
  %s0 = inlined_call_operand.vmem [shape: bf16[2,104,128], index: 0, kind: input, shape index: {}]
  %s1 = inlined_call_operand.vmem [shape: bf16[9,128,128], index: 1, kind: input, shape index: {}]
  %s2 = inlined_call_operand.vmem [shape: bf16[2,80,128], index: 2, kind: output, shape index: {}]
  %s3 = sld [smem:[#allocation0]]
  $region41: #{_lambda_.8} parent=0
    _
  %s5 = ssub.s32 1, %s3
  %s6 = scalar_select 0, %s5, %s3
  loop: start=0, step=1, limit=4
  $region2: #{_lambda_.8} parent=0 // loop_pre_header
    _
  $region3: #{_lambda_.8} parent=0 // loop_header
    %s8 = sphi 0, %s12
    %p9 = scmp.ge.s32.totalorder %s8, 4
    %s15 = sphi 0, %s27
    %s16 = sphi 0, %s23
    %s17 = sphi 0, %s15
    %s18 = sphi 0, %s16
    %s19 = sphi 0, %s17
    %s20 = sphi 0, %s18
    %s30 = sphi 0, %s32
    %s33 = sphi 0, %s30
    %s34 = sphi 0, %s33
    %s50 = sphi 0, %s34
    %s56 = sphi 0, %s58
    %s59 = sphi 0, %s56
    %s60 = sphi 0, %s59
    %s76 = sphi 0, %s60
    %s84 = sphi 0, %s86
    %s87 = sphi 0, %s84
    %s88 = sphi 0, %s87
    %s104 = sphi 0, %s88
  $region4: #{_lambda_.8} parent=0 // loop_header_branch
    %11 = sbr.rel (%p9) target = $region8
  $region5: #{_lambda_.8} parent=0 // loop_body
    %s13 = ssub.s32 %s8, 1
    %s14 = ssub.s32 %s8, 2
    %s21 = sadd.s32 1, %s16
    %p22 = scmp.ge.s32.totalorder %s21, 1
    %s23 = scalar_select %p22, 0, %s21
    %s24 = sadd.s32 1, %s15
    %s25 = scalar_select %p22, %s24, %s15
    %p26 = scmp.ge.s32.totalorder %s25, 2
    %s27 = scalar_select %p26, 0, %s25
    %s28 = ssub.s32 %s15, %s27
    %p29 = scmp.eq.s32.totalorder %s28, 0
    %s31 = sadd.s32 %s30, 1
    %s32 = scalar_select %p29, %s30, %s31
    %p35 = pneg %p29
    %p36 = scmp.eq.s32.totalorder %s8, 1
    %p37 = por %p35, %p36
    %p38 = scmp.ne.s32.totalorder %s30, %s33
    %p39 = scmp.eq.s32.totalorder %s8, 0
    %p40 = por %p38, %p39
    %p41 = scmp.ne.s32.totalorder %s30, %s33
    %p42 = scmp.eq.s32.totalorder %s13, 1
    %p43 = por %p41, %p42
    %p44 = scmp.ne.s32.totalorder %s33, %s34
    %p45 = scmp.eq.s32.totalorder %s13, 0
    %p46 = por %p44, %p45
    %p47 = scmp.ne.s32.totalorder %s33, %s34
    %p48 = scmp.eq.s32.totalorder %s14, 1
    %p49 = por %p47, %p48
    %p51 = scmp.ne.s32.totalorder %s34, %s50
    %p52 = scmp.eq.s32.totalorder %s14, 0
    %p53 = por %p51, %p52
    %s54 = ssub.s32 %s16, %s23
    %p55 = scmp.eq.s32.totalorder %s54, 0
    %s57 = sadd.s32 %s56, 1
    %s58 = scalar_select %p55, %s56, %s57
    %p61 = pneg %p55
    %p62 = scmp.eq.s32.totalorder %s8, 1
    %p63 = por %p61, %p62
    %p64 = scmp.ne.s32.totalorder %s56, %s59
    %p65 = scmp.eq.s32.totalorder %s8, 0
    %p66 = por %p64, %p65
    %p67 = scmp.ne.s32.totalorder %s56, %s59
    %p68 = scmp.eq.s32.totalorder %s13, 1
    %p69 = por %p67, %p68
    %p70 = scmp.ne.s32.totalorder %s59, %s60
    %p71 = scmp.eq.s32.totalorder %s13, 0
    %p72 = por %p70, %p71
    %p73 = scmp.ne.s32.totalorder %s59, %s60
    %p74 = scmp.eq.s32.totalorder %s14, 1
    %p75 = por %p73, %p74
    %p77 = scmp.ne.s32.totalorder %s60, %s76
    %p78 = scmp.eq.s32.totalorder %s14, 0
    %p79 = por %p77, %p78
    %s80 = ssub.s32 %s15, %s27
    %s81 = ssub.s32 %s16, %s23
    %s82 = sor.u32 %s80, %s81
    %p83 = scmp.eq.s32.totalorder %s82, 0
    %s85 = sadd.s32 %s84, 1
    %s86 = scalar_select %p83, %s84, %s85
    %p89 = pneg %p83
    %p90 = scmp.eq.s32.totalorder %s8, 1
    %p91 = por %p89, %p90
    %p92 = scmp.ne.s32.totalorder %s84, %s87
    %p93 = scmp.eq.s32.totalorder %s8, 0
    %p94 = por %p92, %p93
    %p95 = scmp.ne.s32.totalorder %s84, %s87
    %p96 = scmp.eq.s32.totalorder %s13, 1
    %p97 = por %p95, %p96
    %p98 = scmp.ne.s32.totalorder %s87, %s88
    %p99 = scmp.eq.s32.totalorder %s13, 0
    %p100 = por %p98, %p99
    %p101 = scmp.ne.s32.totalorder %s87, %s88
    %p102 = scmp.eq.s32.totalorder %s14, 1
    %p103 = por %p101, %p102
    %p105 = scmp.ne.s32.totalorder %s88, %s104
    %p106 = scmp.eq.s32.totalorder %s14, 0
    %p107 = por %p105, %p106
    %p108 = scmp.le.s32.totalorder 1, %s8
    %p109 = scmp.lt.s32.totalorder %s8, 3
    %p110 = pnand %p108, %p109
    %p111 = pneg %p110
    // Predicated region
    $region9: #{_lambda_.8} parent=5 // pred_check
      _
    $region10: #{_lambda_.8} parent=5 // pred_check_branch
      %113 = sbr.rel (%p110) target = $region12
    $region11: #{_lambda_.8} parent=5 // pred_region
      %s114 = ssub.s32 %s8, 1
      // Predicated region
      $region13: #{_lambda_.8} parent=11 // pred_check
        %p115 = pneg %p72
      $region14: #{_lambda_.8} parent=11 // pred_check_branch
        %117 = sbr.rel (%p115) target = $region16
      $region15: #{_lambda_.8} parent=11 // pred_region
        %p118 = scmp.lt.s32.totalorder %s18, 0
        %s119 = scalar_select %p118, %s18, 0
        %s120 = smul.addr %s119, 4
        %s121 = scalar_lea.vmem %s1, %s120
      $region16: #{_lambda_.8} parent=11 // pred_fallthru
        _
    $region12: #{_lambda_.8} parent=5 // pred_fallthru
      _
    %p122 = scmp.lt.s32.totalorder %s8, 2
    // Predicated region
    $region17: #{_lambda_.8} parent=5 // pred_check
      %p123 = pneg %p122
    $region18: #{_lambda_.8} parent=5 // pred_check_branch
      %125 = sbr.rel (%p123) target = $region20
    $region19: #{_lambda_.8} parent=5 // pred_region
      // Predicated region
      $region21: #{_lambda_.8} parent=19 // pred_check
        %p126 = pneg %p40
      $region22: #{_lambda_.8} parent=19 // pred_check_branch
        %128 = sbr.rel (%p126) target = $region24
      $region23: #{_lambda_.8} parent=19 // pred_region
        %p129 = scmp.lt.s32.totalorder %s15, 1
        %s130 = scalar_select %p129, %s15, 1
        %s131 = smul.addr %s130, 13
        %s132 = smul.addr %s131, 4
        %s133 = scalar_lea.vmem %s0, %s132
      $region24: #{_lambda_.8} parent=19 // pred_fallthru
        _
    $region20: #{_lambda_.8} parent=5 // pred_fallthru
      _
    %p134 = scmp.le.s32.totalorder 1, %s8
    %p135 = scmp.lt.s32.totalorder %s8, 3
    %p136 = pnand %p134, %p135
    %p137 = pneg %p136
    // Predicated region
    $region25: #{_lambda_.8} parent=5 // pred_check
      _
    $region26: #{_lambda_.8} parent=5 // pred_check_branch
      %139 = sbr.rel (%p136) target = $region28
    $region27: #{_lambda_.8} parent=5 // pred_region
      %s140 = ssub.s32 %s8, 1
      %p141 = scmp.lt.s32.totalorder %s17, 1
      %s142 = scalar_select %p141, %s17, 1
      %s143 = smul.addr %s142, 13
      %s144 = smul.addr %s143, 4
      %s145 = scalar_lea.vmem %s0, %s144
      %p146 = pneg %p46
      %p147 = pneg %p43
      %p148 = scmp.lt.s32.totalorder %s18, 0
      %s149 = scalar_select %p148, %s18, 0
      %s150 = smul.addr %s149, 4
      %s151 = scalar_lea.vmem %s1, %s150
      %p152 = pneg %p72
      %p153 = pneg %p69
      %p154 = pneg %p100
      %p155 = pneg %p97
      %p156 = scmp.lt.s32.totalorder %s17, 1
      %s157 = scalar_select %p156, %s17, 1
      %p158 = scmp.lt.s32.totalorder %s18, 0
      %s159 = scalar_select %p158, %s18, 0
      %s160 = smul.addr %s157, 10
      %s161 = sadd.s32 %s159, %s160
      %s162 = smul.addr %s161, 4
      %s163 = scalar_lea.vmem %s2, %s162
      %p164 = scmp.lt.s32.totalorder %s17, 1
      %s165 = scalar_select %p164, %s17, 1
      %s166 = smul.addr %s165, 13
      %s167 = smul.addr %s166, 4
      %s168 = scalar_lea.vmem %s0, %s167
      %p169 = scmp.lt.s32.totalorder %s18, 0
      %s170 = scalar_select %p169, %s18, 0
      %s171 = smul.addr %s170, 4
      %s172 = scalar_lea.vmem %s1, %s171
      %p173 = scmp.lt.s32.totalorder %s17, 1
      %s174 = scalar_select %p173, %s17, 1
      %p175 = scmp.lt.s32.totalorder %s18, 0
      %s176 = scalar_select %p175, %s18, 0
      %s177 = smul.addr %s174, 10
      %s178 = sadd.s32 %s176, %s177
      %s179 = smul.addr %s178, 4
      %s180 = scalar_lea.vmem %s2, %s179
      %182 = vst [vmem:[#allocation2] sm:$0xff] 0.0
      %183 = vst [vmem:[#allocation2 + $0x8] sm:$0xff] 0.0
      %184 = vst [vmem:[#allocation2 + $0x10] sm:$0xff] 0.0
      %185 = vst [vmem:[#allocation2 + $0x18] sm:$0xff] 0.0
      %186 = vst [vmem:[#allocation2 + $0x20] sm:$0xff] 0.0
      %187 = vst [vmem:[#allocation2 + $0x28] sm:$0xff] 0.0
      %188 = vst [vmem:[#allocation2 + $0x30] sm:$0xff] 0.0
      %189 = vst [vmem:[#allocation2 + $0x38] sm:$0xff] 0.0
      %190 = vst [vmem:[#allocation2 + $0x40] sm:$0xff] 0.0
      %191 = vst [vmem:[#allocation2 + $0x48] sm:$0xff] 0.0
      %v192 = vld [vmem:[%s168] sm:$0xf]
      %v193 = vld [vmem:[%s168 + $0x4] sm:$0xf]
      %v194 = vld [vmem:[%s168 + $0x8] sm:$0xf]
      %v195 = vld [vmem:[%s168 + $0xc] sm:$0xf]
      %v196 = vld [vmem:[%s168 + $0x10] sm:$0xf]
      %v197 = vld [vmem:[%s168 + $0x14] sm:$0xf]
      %v198 = vld [vmem:[%s168 + $0x18] sm:$0xf]
      %v199 = vld [vmem:[%s168 + $0x1c] sm:$0xf]
      %v200 = vld [vmem:[%s168 + $0x20] sm:$0xf]
      %v201 = vld [vmem:[%s168 + $0x24] sm:$0xf]
      %v202 = vld [vmem:[#allocation2] sm:$0xff]
      %v203 = vld [vmem:[#allocation2 + $0x8] sm:$0xff]
      %v204 = vld [vmem:[#allocation2 + $0x10] sm:$0xff]
      %v205 = vld [vmem:[#allocation2 + $0x18] sm:$0xff]
      %v206 = vld [vmem:[#allocation2 + $0x20] sm:$0xff]
      %v207 = vld [vmem:[#allocation2 + $0x28] sm:$0xff]
      %v208 = vld [vmem:[#allocation2 + $0x30] sm:$0xff]
      %v209 = vld [vmem:[#allocation2 + $0x38] sm:$0xff]
      %v210 = vld [vmem:[#allocation2 + $0x40] sm:$0xff]
      %v211 = vld [vmem:[#allocation2 + $0x48] sm:$0xff]
      %v212 = vld [vmem:[%s172] sm:$0xf]
      %v213 = vld [vmem:[%s172 + $0x4] sm:$0xf]
      %v214 = vld [vmem:[%s172 + $0x8] sm:$0xf]
      %v215 = vld [vmem:[%s172 + $0xc] sm:$0xf]
      %v216 = vld [vmem:[%s172 + $0x10] sm:$0xf]
      %v217 = vld [vmem:[%s172 + $0x14] sm:$0xf]
      %v218 = vld [vmem:[%s172 + $0x18] sm:$0xf]
      %v219 = vld [vmem:[%s172 + $0x1c] sm:$0xf]
      %v220 = vld [vmem:[%s172 + $0x20] sm:$0xf]
      %v221 = vld [vmem:[%s172 + $0x24] sm:$0xf]
      %v222 = vld [vmem:[%s172 + $0x28] sm:$0xf]
      %v223 = vld [vmem:[%s172 + $0x2c] sm:$0xf]
      %v224 = vld [vmem:[%s172 + $0x30] sm:$0xf]
      %v225 = vld [vmem:[%s172 + $0x34] sm:$0xf]
      %v226 = vld [vmem:[%s172 + $0x38] sm:$0xf]
      %v227 = vld [vmem:[%s172 + $0x3c] sm:$0xf]
      %v238 = vunpack.c.l.b16 %v192
      %v239 = vunpack.c.l.b16 %v193
      %v240 = vunpack.c.l.b16 %v194
      %v241 = vunpack.c.l.b16 %v195
      %v242 = vunpack.c.l.b16 %v196
      %v243 = vunpack.c.l.b16 %v197
      %v244 = vunpack.c.l.b16 %v198
      %v245 = vunpack.c.l.b16 %v199
      %v246 = vunpack.c.l.b16 %v200
      %v247 = vunpack.c.l.b16 %v201
      %v248 = vpack.c.b16 %v239, %v238
      %v249 = vpack.c.b16 %v241, %v240
      %v250 = vpack.c.b16 %v243, %v242
      %v251 = vpack.c.b16 %v245, %v244
      %v252 = vpack.c.b16 %v247, %v246
      %v274 = vunpack.c.l.b16 %v212
      %v275 = vunpack.c.l.b16 %v213
      %v276 = vunpack.c.l.b16 %v214
      %v277 = vunpack.c.l.b16 %v215
      %v278 = vunpack.c.l.b16 %v216
      %v279 = vunpack.c.l.b16 %v217
      %v280 = vunpack.c.l.b16 %v218
      %v281 = vunpack.c.l.b16 %v219
      %v282 = vunpack.c.l.b16 %v220
      %v283 = vunpack.c.l.b16 %v221
      %v284 = vunpack.c.l.b16 %v222
      %v285 = vunpack.c.l.b16 %v223
      %v286 = vunpack.c.l.b16 %v224
      %v287 = vunpack.c.l.b16 %v225
      %v288 = vunpack.c.l.b16 %v226
      %v289 = vunpack.c.l.b16 %v227
      %v290 = vpack.c.b16 %v275, %v274
      %v291 = vpack.c.b16 %v277, %v276
      %v292 = vpack.c.b16 %v279, %v278
      %v293 = vpack.c.b16 %v281, %v280
      %v294 = vpack.c.b16 %v283, %v282
      %v295 = vpack.c.b16 %v285, %v284
      %v296 = vpack.c.b16 %v287, %v286
      %v297 = vpack.c.b16 %v289, %v288
      %306 = vmatprep.subr.bf16.mxu0 0
      %307 = vmatpush1.bf16.msra.mxu0 %v290
      %308 = vmatprep.subr.bf16.mxu0 0
      %309 = vmatpush1.bf16.msra.mxu0 %v291
      %310 = vmatprep.subr.bf16.mxu0 0
      %311 = vmatpush1.bf16.msra.mxu0 %v292
      %312 = vmatprep.subr.bf16.mxu0 0
      %313 = vmatpush1.bf16.msra.mxu0 %v293
      %314 = vmatprep.subr.bf16.mxu0 0
      %315 = vmatpush1.bf16.msra.mxu0 %v294
      %316 = vmatprep.subr.bf16.mxu0 0
      %317 = vmatpush1.bf16.msra.mxu0 %v295
      %318 = vmatprep.subr.bf16.mxu0 0
      %319 = vmatpush1.bf16.msra.mxu0 %v296
      %320 = vmatprep.subr.bf16.mxu0 0
      %321 = vmatpush1.bf16.msra.mxu0 %v297
      %322 = vmatprep.subr.bf16.mxu0 0
      %323 = vmatpush1.bf16.msra.mxu0 0
      %324 = vmatprep.subr.bf16.mxu0 0
      %325 = vmatpush1.bf16.msra.mxu0 0
      %326 = vmatprep.subr.bf16.mxu0 0
      %327 = vmatpush1.bf16.msra.mxu0 0
      %328 = vmatprep.subr.bf16.mxu0 0
      %329 = vmatpush1.bf16.msra.mxu0 0
      %330 = vmatprep.subr.bf16.mxu0 0
      %331 = vmatpush1.bf16.msra.mxu0 0
      %332 = vmatprep.subr.bf16.mxu0 0
      %333 = vmatpush1.bf16.msra.mxu0 0
      %334 = vmatprep.subr.bf16.mxu0 0
      %335 = vmatpush1.bf16.msra.mxu0 0
      %336 = vmatprep.subr.bf16.mxu0 0
      %337 = vmatpush1.bf16.msra.mxu0 0
      %338 = vmatprep.mubr.bf16.mxu0 0
      %339 = vmatmul.mubr.bf16.gmra.mrb[0].mxu0 %v248
      %v340 = vpop.f32.mrb[0].mxu0
      %v341 = vadd.f32 0.0, %v340
      %v342 = vpop.f32.mrb[0].mxu0
      %v343 = vpop.f32.mrb[0].mxu0
      %v344 = vadd.f32 0.0, %v343
      %v345 = vpop.f32.mrb[0].mxu0
      %346 = vmatprep.mubr.bf16.mxu0 0
      %347 = vmatmul.mubr.bf16.gmra.mrb[0].mxu0 %v249
      %v348 = vpop.f32.mrb[0].mxu0
      %v349 = vadd.f32 0.0, %v348
      %v350 = vpop.f32.mrb[0].mxu0
      %v351 = vpop.f32.mrb[0].mxu0
      %v352 = vadd.f32 0.0, %v351
      %v353 = vpop.f32.mrb[0].mxu0
      %354 = vmatprep.mubr.bf16.mxu0 0
      %355 = vmatmul.mubr.bf16.gmra.mrb[0].mxu0 %v250
      %v356 = vpop.f32.mrb[0].mxu0
      %v357 = vadd.f32 0.0, %v356
      %v358 = vpop.f32.mrb[0].mxu0
      %v359 = vpop.f32.mrb[0].mxu0
      %v360 = vadd.f32 0.0, %v359
      %v361 = vpop.f32.mrb[0].mxu0
      %362 = vmatprep.mubr.bf16.mxu0 0
      %363 = vmatmul.mubr.bf16.gmra.mrb[0].mxu0 %v251
      %v364 = vpop.f32.mrb[0].mxu0
      %v365 = vadd.f32 0.0, %v364
      %v366 = vpop.f32.mrb[0].mxu0
      %v367 = vpop.f32.mrb[0].mxu0
      %v368 = vadd.f32 0.0, %v367
      %v369 = vpop.f32.mrb[0].mxu0
      %370 = vmatprep.mubr.bf16.mxu0 0
      %371 = vmatmul.mubr.bf16.gmra.mrb[0].mxu0 %v252
      %v372 = vpop.f32.mrb[0].mxu0
      %v373 = vadd.f32 0.0, %v372
      %v374 = vpop.f32.mrb[0].mxu0
      %v375 = vpop.f32.mrb[0].mxu0
      %v376 = vadd.f32 0.0, %v375
      %v377 = vpop.f32.mrb[0].mxu0
      %378 = vdwg.mxu0
      %v379 = vadd.f32 %v202, %v341
      %v380 = vadd.f32 %v203, %v344
      %v381 = vadd.f32 %v204, %v349
      %v382 = vadd.f32 %v205, %v352
      %v383 = vadd.f32 %v206, %v357
      %v384 = vadd.f32 %v207, %v360
      %v385 = vadd.f32 %v208, %v365
      %v386 = vadd.f32 %v209, %v368
      %v387 = vadd.f32 %v210, %v373
      %v388 = vadd.f32 %v211, %v376
      %389 = vst [vmem:[#allocation2] sm:$0xff] %v379
      %390 = vst [vmem:[#allocation2 + $0x8] sm:$0xff] %v380
      %391 = vst [vmem:[#allocation2 + $0x10] sm:$0xff] %v381
      %392 = vst [vmem:[#allocation2 + $0x18] sm:$0xff] %v382
      %393 = vst [vmem:[#allocation2 + $0x20] sm:$0xff] %v383
      %394 = vst [vmem:[#allocation2 + $0x28] sm:$0xff] %v384
      %395 = vst [vmem:[#allocation2 + $0x30] sm:$0xff] %v385
      %396 = vst [vmem:[#allocation2 + $0x38] sm:$0xff] %v386
      %397 = vst [vmem:[#allocation2 + $0x40] sm:$0xff] %v387
      %398 = vst [vmem:[#allocation2 + $0x48] sm:$0xff] %v388
      %v399 = vld [vmem:[%s168] sm:$0xf]
      %v400 = vld [vmem:[%s168 + $0x4] sm:$0xf]
      %v401 = vld [vmem:[%s168 + $0x8] sm:$0xf]
      %v402 = vld [vmem:[%s168 + $0xc] sm:$0xf]
      %v403 = vld [vmem:[%s168 + $0x10] sm:$0xf]
      %v404 = vld [vmem:[%s168 + $0x14] sm:$0xf]
      %v405 = vld [vmem:[%s168 + $0x18] sm:$0xf]
      %v406 = vld [vmem:[%s168 + $0x1c] sm:$0xf]
      %v407 = vld [vmem:[%s168 + $0x20] sm:$0xf]
      %v408 = vld [vmem:[%s168 + $0x24] sm:$0xf]
      %v409 = vld [vmem:[%s168 + $0x28] sm:$0x1]
      %v410 = vld [vmem:[#allocation2] sm:$0xff]
      %v411 = vld [vmem:[#allocation2 + $0x8] sm:$0xff]
      %v412 = vld [vmem:[#allocation2 + $0x10] sm:$0xff]
      %v413 = vld [vmem:[#allocation2 + $0x18] sm:$0xff]
      %v414 = vld [vmem:[#allocation2 + $0x20] sm:$0xff]
      %v415 = vld [vmem:[#allocation2 + $0x28] sm:$0xff]
      %v416 = vld [vmem:[#allocation2 + $0x30] sm:$0xff]
      %v417 = vld [vmem:[#allocation2 + $0x38] sm:$0xff]
      %v418 = vld [vmem:[#allocation2 + $0x40] sm:$0xff]
      %v419 = vld [vmem:[#allocation2 + $0x48] sm:$0xff]
      %s420 = scalar_lea.vmem %s172, 64
      %v421 = vld [vmem:[%s420] sm:$0xf]
      %v422 = vld [vmem:[%s420 + $0x4] sm:$0xf]
      %v423 = vld [vmem:[%s420 + $0x8] sm:$0xf]
      %v424 = vld [vmem:[%s420 + $0xc] sm:$0xf]
      %v425 = vld [vmem:[%s420 + $0x10] sm:$0xf]
      %v426 = vld [vmem:[%s420 + $0x14] sm:$0xf]
      %v427 = vld [vmem:[%s420 + $0x18] sm:$0xf]
      %v428 = vld [vmem:[%s420 + $0x1c] sm:$0xf]
      %v429 = vld [vmem:[%s420 + $0x20] sm:$0xf]
      %v430 = vld [vmem:[%s420 + $0x24] sm:$0xf]
      %v431 = vld [vmem:[%s420 + $0x28] sm:$0xf]
      %v432 = vld [vmem:[%s420 + $0x2c] sm:$0xf]
      %v433 = vld [vmem:[%s420 + $0x30] sm:$0xf]
      %v434 = vld [vmem:[%s420 + $0x34] sm:$0xf]
      %v435 = vld [vmem:[%s420 + $0x38] sm:$0xf]
      %v436 = vld [vmem:[%s420 + $0x3c] sm:$0xf]
      %v448 = vunpack.c.l.b16 %v399
      %v449 = vunpack.c.l.b16 %v400
      %v450 = vunpack.c.l.b16 %v401
      %v451 = vunpack.c.l.b16 %v402
      %v452 = vunpack.c.l.b16 %v403
      %v453 = vunpack.c.l.b16 %v404
      %v454 = vunpack.c.l.b16 %v405
      %v455 = vunpack.c.l.b16 %v406
      %v456 = vunpack.c.l.b16 %v407
      %v457 = vunpack.c.l.b16 %v408
      %v458 = vunpack.c.l.b16 %v409
      %v459 = vpack.c.b16 %v449, %v448
      %v460 = vpack.c.b16 %v451, %v450
      %v461 = vpack.c.b16 %v453, %v452
      %v462 = vpack.c.b16 %v455, %v454
      %v463 = vpack.c.b16 %v457, %v456
      %v464 = vpack.c.b16 %v458, %v458
      %vm465 = vsmask.f32 7424
      %v467 = vshrl.u32 %v459, 16
      %v469 = vshll.u32 %v459, 16
      %v471 = vrot.slane %v469, 1
      %v472 = vor.u32 %v467, %v471
      %v474 = vshll.u32 %v460, 16
      %v476 = vrot.slane %v474, 1
      %v477 = vsel %vm465, %v472, %v476
      %v478 = vshrl.u32 %v460, 16
      %v480 = vor.u32 %v478, %v476
      %v482 = vshll.u32 %v461, 16
      %v484 = vrot.slane %v482, 1
      %v485 = vsel %vm465, %v480, %v484
      %v486 = vshrl.u32 %v461, 16
      %v488 = vor.u32 %v486, %v484
      %v490 = vshll.u32 %v462, 16
      %v492 = vrot.slane %v490, 1
      %v493 = vsel %vm465, %v488, %v492
      %v494 = vshrl.u32 %v462, 16
      %v496 = vor.u32 %v494, %v492
      %v498 = vshll.u32 %v463, 16
      %v500 = vrot.slane %v498, 1
      %v501 = vsel %vm465, %v496, %v500
      %v502 = vshrl.u32 %v463, 16
      %v504 = vor.u32 %v502, %v500
      %v506 = vshll.u32 %v464, 16
      %v508 = vrot.slane %v506, 1
      %v509 = vsel %vm465, %v504, %v508
      %v531 = vunpack.c.l.b16 %v421
      %v532 = vunpack.c.l.b16 %v422
      %v533 = vunpack.c.l.b16 %v423
      %v534 = vunpack.c.l.b16 %v424
      %v535 = vunpack.c.l.b16 %v425
      %v536 = vunpack.c.l.b16 %v426
      %v537 = vunpack.c.l.b16 %v427
      %v538 = vunpack.c.l.b16 %v428
      %v539 = vunpack.c.l.b16 %v429
      %v540 = vunpack.c.l.b16 %v430
      %v541 = vunpack.c.l.b16 %v431
      %v542 = vunpack.c.l.b16 %v432
      %v543 = vunpack.c.l.b16 %v433
      %v544 = vunpack.c.l.b16 %v434
      %v545 = vunpack.c.l.b16 %v435
      %v546 = vunpack.c.l.b16 %v436
      %v547 = vpack.c.b16 %v532, %v531
      %v548 = vpack.c.b16 %v534, %v533
      %v549 = vpack.c.b16 %v536, %v535
      %v550 = vpack.c.b16 %v538, %v537
      %v551 = vpack.c.b16 %v540, %v539
      %v552 = vpack.c.b16 %v542, %v541
      %v553 = vpack.c.b16 %v544, %v543
      %v554 = vpack.c.b16 %v546, %v545
      %563 = vmatprep.subr.bf16.mxu0 0
      %564 = vmatpush1.bf16.msra.mxu0 %v547
      %565 = vmatprep.subr.bf16.mxu0 0
      %566 = vmatpush1.bf16.msra.mxu0 %v548
      %567 = vmatprep.subr.bf16.mxu0 0
      %568 = vmatpush1.bf16.msra.mxu0 %v549
      %569 = vmatprep.subr.bf16.mxu0 0
      %570 = vmatpush1.bf16.msra.mxu0 %v550
      %571 = vmatprep.subr.bf16.mxu0 0
      %572 = vmatpush1.bf16.msra.mxu0 %v551
      %573 = vmatprep.subr.bf16.mxu0 0
      %574 = vmatpush1.bf16.msra.mxu0 %v552
      %575 = vmatprep.subr.bf16.mxu0 0
      %576 = vmatpush1.bf16.msra.mxu0 %v553
      %577 = vmatprep.subr.bf16.mxu0 0
      %578 = vmatpush1.bf16.msra.mxu0 %v554
      %579 = vmatprep.subr.bf16.mxu0 0
      %580 = vmatpush1.bf16.msra.mxu0 0
      %581 = vmatprep.subr.bf16.mxu0 0
      %582 = vmatpush1.bf16.msra.mxu0 0
      %583 = vmatprep.subr.bf16.mxu0 0
      %584 = vmatpush1.bf16.msra.mxu0 0
      %585 = vmatprep.subr.bf16.mxu0 0
      %586 = vmatpush1.bf16.msra.mxu0 0
      %587 = vmatprep.subr.bf16.mxu0 0
      %588 = vmatpush1.bf16.msra.mxu0 0
      %589 = vmatprep.subr.bf16.mxu0 0
      %590 = vmatpush1.bf16.msra.mxu0 0
      %591 = vmatprep.subr.bf16.mxu0 0
      %592 = vmatpush1.bf16.msra.mxu0 0
      %593 = vmatprep.subr.bf16.mxu0 0
      %594 = vmatpush1.bf16.msra.mxu0 0
      %595 = vmatprep.mubr.bf16.mxu0 0
      %596 = vmatmul.mubr.bf16.gmra.mrb[0].mxu0 %v477
      %v597 = vpop.f32.mrb[0].mxu0
      %v598 = vadd.f32 0.0, %v597
      %v599 = vpop.f32.mrb[0].mxu0
      %v600 = vpop.f32.mrb[0].mxu0
      %v601 = vadd.f32 0.0, %v600
      %v602 = vpop.f32.mrb[0].mxu0
      %603 = vmatprep.mubr.bf16.mxu0 0
      %604 = vmatmul.mubr.bf16.gmra.mrb[0].mxu0 %v485
      %v605 = vpop.f32.mrb[0].mxu0
      %v606 = vadd.f32 0.0, %v605
      %v607 = vpop.f32.mrb[0].mxu0
      %v608 = vpop.f32.mrb[0].mxu0
      %v609 = vadd.f32 0.0, %v608
      %v610 = vpop.f32.mrb[0].mxu0
      %611 = vmatprep.mubr.bf16.mxu0 0
      %612 = vmatmul.mubr.bf16.gmra.mrb[0].mxu0 %v493
      %v613 = vpop.f32.mrb[0].mxu0
      %v614 = vadd.f32 0.0, %v613
      %v615 = vpop.f32.mrb[0].mxu0
      %v616 = vpop.f32.mrb[0].mxu0
      %v617 = vadd.f32 0.0, %v616
      %v618 = vpop.f32.mrb[0].mxu0
      %619 = vmatprep.mubr.bf16.mxu0 0
      %620 = vmatmul.mubr.bf16.gmra.mrb[0].mxu0 %v501
      %v621 = vpop.f32.mrb[0].mxu0
      %v622 = vadd.f32 0.0, %v621
      %v623 = vpop.f32.mrb[0].mxu0
      %v624 = vpop.f32.mrb[0].mxu0
      %v625 = vadd.f32 0.0, %v624
      %v626 = vpop.f32.mrb[0].mxu0
      %627 = vmatprep.mubr.bf16.mxu0 0
      %628 = vmatmul.mubr.bf16.gmra.mrb[0].mxu0 %v509
      %v629 = vpop.f32.mrb[0].mxu0
      %v630 = vadd.f32 0.0, %v629
      %v631 = vpop.f32.mrb[0].mxu0
      %v632 = vpop.f32.mrb[0].mxu0
      %v633 = vadd.f32 0.0, %v632
      %v634 = vpop.f32.mrb[0].mxu0
      %635 = vdwg.mxu0
      %v636 = vadd.f32 %v410, %v598
      %v637 = vadd.f32 %v411, %v601
      %v638 = vadd.f32 %v412, %v606
      %v639 = vadd.f32 %v413, %v609
      %v640 = vadd.f32 %v414, %v614
      %v641 = vadd.f32 %v415, %v617
      %v642 = vadd.f32 %v416, %v622
      %v643 = vadd.f32 %v417, %v625
      %v644 = vadd.f32 %v418, %v630
      %v645 = vadd.f32 %v419, %v633
      %646 = vst [vmem:[#allocation2] sm:$0xff] %v636
      %647 = vst [vmem:[#allocation2 + $0x8] sm:$0xff] %v637
      %648 = vst [vmem:[#allocation2 + $0x10] sm:$0xff] %v638
      %649 = vst [vmem:[#allocation2 + $0x18] sm:$0xff] %v639
      %650 = vst [vmem:[#allocation2 + $0x20] sm:$0xff] %v640
      %651 = vst [vmem:[#allocation2 + $0x28] sm:$0xff] %v641
      %652 = vst [vmem:[#allocation2 + $0x30] sm:$0xff] %v642
      %653 = vst [vmem:[#allocation2 + $0x38] sm:$0xff] %v643
      %654 = vst [vmem:[#allocation2 + $0x40] sm:$0xff] %v644
      %655 = vst [vmem:[#allocation2 + $0x48] sm:$0xff] %v645
      %v656 = vld [vmem:[%s168] sm:$0xe]
      %v657 = vld [vmem:[%s168 + $0x4] sm:$0xf]
      %v658 = vld [vmem:[%s168 + $0x8] sm:$0xf]
      %v659 = vld [vmem:[%s168 + $0xc] sm:$0xf]
      %v660 = vld [vmem:[%s168 + $0x10] sm:$0xf]
      %v661 = vld [vmem:[%s168 + $0x14] sm:$0xf]
      %v662 = vld [vmem:[%s168 + $0x18] sm:$0xf]
      %v663 = vld [vmem:[%s168 + $0x1c] sm:$0xf]
      %v664 = vld [vmem:[%s168 + $0x20] sm:$0xf]
      %v665 = vld [vmem:[%s168 + $0x24] sm:$0xf]
      %v666 = vld [vmem:[%s168 + $0x28] sm:$0x1]
      %v667 = vld [vmem:[#allocation2] sm:$0xff]
      %v668 = vld [vmem:[#allocation2 + $0x8] sm:$0xff]
      %v669 = vld [vmem:[#allocation2 + $0x10] sm:$0xff]
      %v670 = vld [vmem:[#allocation2 + $0x18] sm:$0xff]
      %v671 = vld [vmem:[#allocation2 + $0x20] sm:$0xff]
      %v672 = vld [vmem:[#allocation2 + $0x28] sm:$0xff]
      %v673 = vld [vmem:[#allocation2 + $0x30] sm:$0xff]
      %v674 = vld [vmem:[#allocation2 + $0x38] sm:$0xff]
      %v675 = vld [vmem:[#allocation2 + $0x40] sm:$0xff]
      %v676 = vld [vmem:[#allocation2 + $0x48] sm:$0xff]
      %s677 = scalar_lea.vmem %s172, 128
      %v678 = vld [vmem:[%s677] sm:$0xf]
      %v679 = vld [vmem:[%s677 + $0x4] sm:$0xf]
      %v680 = vld [vmem:[%s677 + $0x8] sm:$0xf]
      %v681 = vld [vmem:[%s677 + $0xc] sm:$0xf]
      %v682 = vld [vmem:[%s677 + $0x10] sm:$0xf]
      %v683 = vld [vmem:[%s677 + $0x14] sm:$0xf]
      %v684 = vld [vmem:[%s677 + $0x18] sm:$0xf]
      %v685 = vld [vmem:[%s677 + $0x1c] sm:$0xf]
      %v686 = vld [vmem:[%s677 + $0x20] sm:$0xf]
      %v687 = vld [vmem:[%s677 + $0x24] sm:$0xf]
      %v688 = vld [vmem:[%s677 + $0x28] sm:$0xf]
      %v689 = vld [vmem:[%s677 + $0x2c] sm:$0xf]
      %v690 = vld [vmem:[%s677 + $0x30] sm:$0xf]
      %v691 = vld [vmem:[%s677 + $0x34] sm:$0xf]
      %v692 = vld [vmem:[%s677 + $0x38] sm:$0xf]
      %v693 = vld [vmem:[%s677 + $0x3c] sm:$0xf]
      %v705 = vunpack.c.l.b16 %v656
      %v706 = vunpack.c.l.b16 %v657
      %v707 = vunpack.c.l.b16 %v658
      %v708 = vunpack.c.l.b16 %v659
      %v709 = vunpack.c.l.b16 %v660
      %v710 = vunpack.c.l.b16 %v661
      %v711 = vunpack.c.l.b16 %v662
      %v712 = vunpack.c.l.b16 %v663
      %v713 = vunpack.c.l.b16 %v664
      %v714 = vunpack.c.l.b16 %v665
      %v715 = vunpack.c.l.b16 %v666
      %v716 = vpack.c.b16 %v706, %v705
      %v717 = vpack.c.b16 %v708, %v707
      %v718 = vpack.c.b16 %v710, %v709
      %v719 = vpack.c.b16 %v712, %v711
      %v720 = vpack.c.b16 %v714, %v713
      %v721 = vpack.c.b16 %v715, %v715
      %vm722 = vcmask 1046528
      %v723 = vrot.slane %v716, 1
      %v724 = vrot.slane %v717, 1
      %v725 = vsel %vm722, %v723, %v724
      %v726 = vrot.slane %v718, 1
      %v727 = vsel %vm722, %v724, %v726
      %v728 = vrot.slane %v719, 1
      %v729 = vsel %vm722, %v726, %v728
      %v730 = vrot.slane %v720, 1
      %v731 = vsel %vm722, %v728, %v730
      %v732 = vrot.slane %v721, 1
      %v733 = vsel %vm722, %v730, %v732
      %v755 = vunpack.c.l.b16 %v678
      %v756 = vunpack.c.l.b16 %v679
      %v757 = vunpack.c.l.b16 %v680
      %v758 = vunpack.c.l.b16 %v681
      %v759 = vunpack.c.l.b16 %v682
      %v760 = vunpack.c.l.b16 %v683
      %v761 = vunpack.c.l.b16 %v684
      %v762 = vunpack.c.l.b16 %v685
      %v763 = vunpack.c.l.b16 %v686
      %v764 = vunpack.c.l.b16 %v687
      %v765 = vunpack.c.l.b16 %v688
      %v766 = vunpack.c.l.b16 %v689
      %v767 = vunpack.c.l.b16 %v690
      %v768 = vunpack.c.l.b16 %v691
      %v769 = vunpack.c.l.b16 %v692
      %v770 = vunpack.c.l.b16 %v693
      %v771 = vpack.c.b16 %v756, %v755
      %v772 = vpack.c.b16 %v758, %v757
      %v773 = vpack.c.b16 %v760, %v759
      %v774 = vpack.c.b16 %v762, %v761
      %v775 = vpack.c.b16 %v764, %v763
      %v776 = vpack.c.b16 %v766, %v765
      %v777 = vpack.c.b16 %v768, %v767
      %v778 = vpack.c.b16 %v770, %v769
      %787 = vmatprep.subr.bf16.mxu0 0
      %788 = vmatpush1.bf16.msra.mxu0 %v771
      %789 = vmatprep.subr.bf16.mxu0 0
      %790 = vmatpush1.bf16.msra.mxu0 %v772
      %791 = vmatprep.subr.bf16.mxu0 0
      %792 = vmatpush1.bf16.msra.mxu0 %v773
      %793 = vmatprep.subr.bf16.mxu0 0
      %794 = vmatpush1.bf16.msra.mxu0 %v774
      %795 = vmatprep.subr.bf16.mxu0 0
      %796 = vmatpush1.bf16.msra.mxu0 %v775
      %797 = vmatprep.subr.bf16.mxu0 0
      %798 = vmatpush1.bf16.msra.mxu0 %v776
      %799 = vmatprep.subr.bf16.mxu0 0
      %800 = vmatpush1.bf16.msra.mxu0 %v777
      %801 = vmatprep.subr.bf16.mxu0 0
      %802 = vmatpush1.bf16.msra.mxu0 %v778
      %803 = vmatprep.subr.bf16.mxu0 0
      %804 = vmatpush1.bf16.msra.mxu0 0
      %805 = vmatprep.subr.bf16.mxu0 0
      %806 = vmatpush1.bf16.msra.mxu0 0
      %807 = vmatprep.subr.bf16.mxu0 0
      %808 = vmatpush1.bf16.msra.mxu0 0
      %809 = vmatprep.subr.bf16.mxu0 0
      %810 = vmatpush1.bf16.msra.mxu0 0
      %811 = vmatprep.subr.bf16.mxu0 0
      %812 = vmatpush1.bf16.msra.mxu0 0
      %813 = vmatprep.subr.bf16.mxu0 0
      %814 = vmatpush1.bf16.msra.mxu0 0
      %815 = vmatprep.subr.bf16.mxu0 0
      %816 = vmatpush1.bf16.msra.mxu0 0
      %817 = vmatprep.subr.bf16.mxu0 0
      %818 = vmatpush1.bf16.msra.mxu0 0
      %819 = vmatprep.mubr.bf16.mxu0 0
      %820 = vmatmul.mubr.bf16.gmra.mrb[0].mxu0 %v725
      %v821 = vpop.f32.mrb[0].mxu0
      %v822 = vadd.f32 0.0, %v821
      %v823 = vpop.f32.mrb[0].mxu0
      %v824 = vpop.f32.mrb[0].mxu0
      %v825 = vadd.f32 0.0, %v824
      %v826 = vpop.f32.mrb[0].mxu0
      %827 = vmatprep.mubr.bf16.mxu0 0
      %828 = vmatmul.mubr.bf16.gmra.mrb[0].mxu0 %v727
      %v829 = vpop.f32.mrb[0].mxu0
      %v830 = vadd.f32 0.0, %v829
      %v831 = vpop.f32.mrb[0].mxu0
      %v832 = vpop.f32.mrb[0].mxu0
      %v833 = vadd.f32 0.0, %v832
      %v834 = vpop.f32.mrb[0].mxu0
      %835 = vmatprep.mubr.bf16.mxu0 0
      %836 = vmatmul.mubr.bf16.gmra.mrb[0].mxu0 %v729
      %v837 = vpop.f32.mrb[0].mxu0
      %v838 = vadd.f32 0.0, %v837
      %v839 = vpop.f32.mrb[0].mxu0
      %v840 = vpop.f32.mrb[0].mxu0
      %v841 = vadd.f32 0.0, %v840
      %v842 = vpop.f32.mrb[0].mxu0
      %843 = vmatprep.mubr.bf16.mxu0 0
      %844 = vmatmul.mubr.bf16.gmra.mrb[0].mxu0 %v731
      %v845 = vpop.f32.mrb[0].mxu0
      %v846 = vadd.f32 0.0, %v845
      %v847 = vpop.f32.mrb[0].mxu0
      %v848 = vpop.f32.mrb[0].mxu0
      %v849 = vadd.f32 0.0, %v848
      %v850 = vpop.f32.mrb[0].mxu0
      %851 = vmatprep.mubr.bf16.mxu0 0
      %852 = vmatmul.mubr.bf16.gmra.mrb[0].mxu0 %v733
      %v853 = vpop.f32.mrb[0].mxu0
      %v854 = vadd.f32 0.0, %v853
      %v855 = vpop.f32.mrb[0].mxu0
      %v856 = vpop.f32.mrb[0].mxu0
      %v857 = vadd.f32 0.0, %v856
      %v858 = vpop.f32.mrb[0].mxu0
      %859 = vdwg.mxu0
      %v860 = vadd.f32 %v667, %v822
      %v861 = vadd.f32 %v668, %v825
      %v862 = vadd.f32 %v669, %v830
      %v863 = vadd.f32 %v670, %v833
      %v864 = vadd.f32 %v671, %v838
      %v865 = vadd.f32 %v672, %v841
      %v866 = vadd.f32 %v673, %v846
      %v867 = vadd.f32 %v674, %v849
      %v868 = vadd.f32 %v675, %v854
      %v869 = vadd.f32 %v676, %v857
      %870 = vst [vmem:[#allocation2] sm:$0xff] %v860
      %871 = vst [vmem:[#allocation2 + $0x8] sm:$0xff] %v861
      %872 = vst [vmem:[#allocation2 + $0x10] sm:$0xff] %v862
      %873 = vst [vmem:[#allocation2 + $0x18] sm:$0xff] %v863
      %874 = vst [vmem:[#allocation2 + $0x20] sm:$0xff] %v864
      %875 = vst [vmem:[#allocation2 + $0x28] sm:$0xff] %v865
      %876 = vst [vmem:[#allocation2 + $0x30] sm:$0xff] %v866
      %877 = vst [vmem:[#allocation2 + $0x38] sm:$0xff] %v867
      %878 = vst [vmem:[#allocation2 + $0x40] sm:$0xff] %v868
      %879 = vst [vmem:[#allocation2 + $0x48] sm:$0xff] %v869
      %v880 = vld [vmem:[%s168 + $0x4] sm:$0xe]
      %v881 = vld [vmem:[%s168 + $0x8] sm:$0xf]
      %v882 = vld [vmem:[%s168 + $0xc] sm:$0xf]
      %v883 = vld [vmem:[%s168 + $0x10] sm:$0xf]
      %v884 = vld [vmem:[%s168 + $0x14] sm:$0xf]
      %v885 = vld [vmem:[%s168 + $0x18] sm:$0xf]
      %v886 = vld [vmem:[%s168 + $0x1c] sm:$0xf]
      %v887 = vld [vmem:[%s168 + $0x20] sm:$0xf]
      %v888 = vld [vmem:[%s168 + $0x24] sm:$0xf]
      %v889 = vld [vmem:[%s168 + $0x28] sm:$0xf]
      %v890 = vld [vmem:[%s168 + $0x2c] sm:$0x1]
      %v891 = vld [vmem:[#allocation2] sm:$0xff]
      %v892 = vld [vmem:[#allocation2 + $0x8] sm:$0xff]
      %v893 = vld [vmem:[#allocation2 + $0x10] sm:$0xff]
      %v894 = vld [vmem:[#allocation2 + $0x18] sm:$0xff]
      %v895 = vld [vmem:[#allocation2 + $0x20] sm:$0xff]
      %v896 = vld [vmem:[#allocation2 + $0x28] sm:$0xff]
      %v897 = vld [vmem:[#allocation2 + $0x30] sm:$0xff]
      %v898 = vld [vmem:[#allocation2 + $0x38] sm:$0xff]
      %v899 = vld [vmem:[#allocation2 + $0x40] sm:$0xff]
      %v900 = vld [vmem:[#allocation2 + $0x48] sm:$0xff]
      %s901 = scalar_lea.vmem %s172, 192
      %v902 = vld [vmem:[%s901] sm:$0xf]
      %v903 = vld [vmem:[%s901 + $0x4] sm:$0xf]
      %v904 = vld [vmem:[%s901 + $0x8] sm:$0xf]
      %v905 = vld [vmem:[%s901 + $0xc] sm:$0xf]
      %v906 = vld [vmem:[%s901 + $0x10] sm:$0xf]
      %v907 = vld [vmem:[%s901 + $0x14] sm:$0xf]
      %v908 = vld [vmem:[%s901 + $0x18] sm:$0xf]
      %v909 = vld [vmem:[%s901 + $0x1c] sm:$0xf]
      %v910 = vld [vmem:[%s901 + $0x20] sm:$0xf]
      %v911 = vld [vmem:[%s901 + $0x24] sm:$0xf]
      %v912 = vld [vmem:[%s901 + $0x28] sm:$0xf]
      %v913 = vld [vmem:[%s901 + $0x2c] sm:$0xf]
      %v914 = vld [vmem:[%s901 + $0x30] sm:$0xf]
      %v915 = vld [vmem:[%s901 + $0x34] sm:$0xf]
      %v916 = vld [vmem:[%s901 + $0x38] sm:$0xf]
      %v917 = vld [vmem:[%s901 + $0x3c] sm:$0xf]
      %v929 = vunpack.c.l.b16 %v880
      %v930 = vunpack.c.l.b16 %v881
      %v931 = vunpack.c.l.b16 %v882
      %v932 = vunpack.c.l.b16 %v883
      %v933 = vunpack.c.l.b16 %v884
      %v934 = vunpack.c.l.b16 %v885
      %v935 = vunpack.c.l.b16 %v886
      %v936 = vunpack.c.l.b16 %v887
      %v937 = vunpack.c.l.b16 %v888
      %v938 = vunpack.c.l.b16 %v889
      %v939 = vunpack.c.l.b16 %v890
      %v940 = vpack.c.b16 %v930, %v929
      %v941 = vpack.c.b16 %v932, %v931
      %v942 = vpack.c.b16 %v934, %v933
      %v943 = vpack.c.b16 %v936, %v935
      %v944 = vpack.c.b16 %v938, %v937
      %v945 = vpack.c.b16 %v939, %v939
      %v946 = vrot.slane %v940, 1
      %v947 = vrot.slane %v941, 1
      %v948 = vsel %vm722, %v946, %v947
      %v949 = vrot.slane %v942, 1
      %v950 = vsel %vm722, %v947, %v949
      %v951 = vrot.slane %v943, 1
      %v952 = vsel %vm722, %v949, %v951
      %v953 = vrot.slane %v944, 1
      %v954 = vsel %vm722, %v951, %v953
      %v955 = vrot.slane %v945, 1
      %v956 = vsel %vm722, %v953, %v955
      %v978 = vunpack.c.l.b16 %v902
      %v979 = vunpack.c.l.b16 %v903
      %v980 = vunpack.c.l.b16 %v904
      %v981 = vunpack.c.l.b16 %v905
      %v982 = vunpack.c.l.b16 %v906
      %v983 = vunpack.c.l.b16 %v907
      %v984 = vunpack.c.l.b16 %v908
      %v985 = vunpack.c.l.b16 %v909
      %v986 = vunpack.c.l.b16 %v910
      %v987 = vunpack.c.l.b16 %v911
      %v988 = vunpack.c.l.b16 %v912
      %v989 = vunpack.c.l.b16 %v913
      %v990 = vunpack.c.l.b16 %v914
      %v991 = vunpack.c.l.b16 %v915
      %v992 = vunpack.c.l.b16 %v916
      %v993 = vunpack.c.l.b16 %v917
      %v994 = vpack.c.b16 %v979, %v978
      %v995 = vpack.c.b16 %v981, %v980
      %v996 = vpack.c.b16 %v983, %v982
      %v997 = vpack.c.b16 %v985, %v984
      %v998 = vpack.c.b16 %v987, %v986
      %v999 = vpack.c.b16 %v989, %v988
      %v1000 = vpack.c.b16 %v991, %v990
      %v1001 = vpack.c.b16 %v993, %v992
      %1010 = vmatprep.subr.bf16.mxu0 0
      %1011 = vmatpush1.bf16.msra.mxu0 %v994
      %1012 = vmatprep.subr.bf16.mxu0 0
      %1013 = vmatpush1.bf16.msra.mxu0 %v995
      %1014 = vmatprep.subr.bf16.mxu0 0
      %1015 = vmatpush1.bf16.msra.mxu0 %v996
      %1016 = vmatprep.subr.bf16.mxu0 0
      %1017 = vmatpush1.bf16.msra.mxu0 %v997
      %1018 = vmatprep.subr.bf16.mxu0 0
      %1019 = vmatpush1.bf16.msra.mxu0 %v998
      %1020 = vmatprep.subr.bf16.mxu0 0
      %1021 = vmatpush1.bf16.msra.mxu0 %v999
      %1022 = vmatprep.subr.bf16.mxu0 0
      %1023 = vmatpush1.bf16.msra.mxu0 %v1000
      %1024 = vmatprep.subr.bf16.mxu0 0
      %1025 = vmatpush1.bf16.msra.mxu0 %v1001
      %1026 = vmatprep.subr.bf16.mxu0 0
      %1027 = vmatpush1.bf16.msra.mxu0 0
      %1028 = vmatprep.subr.bf16.mxu0 0
      %1029 = vmatpush1.bf16.msra.mxu0 0
      %1030 = vmatprep.subr.bf16.mxu0 0
      %1031 = vmatpush1.bf16.msra.mxu0 0
      %1032 = vmatprep.subr.bf16.mxu0 0
      %1033 = vmatpush1.bf16.msra.mxu0 0
      %1034 = vmatprep.subr.bf16.mxu0 0
      %1035 = vmatpush1.bf16.msra.mxu0 0
      %1036 = vmatprep.subr.bf16.mxu0 0
      %1037 = vmatpush1.bf16.msra.mxu0 0
      %1038 = vmatprep.subr.bf16.mxu0 0
      %1039 = vmatpush1.bf16.msra.mxu0 0
      %1040 = vmatprep.subr.bf16.mxu0 0
      %1041 = vmatpush1.bf16.msra.mxu0 0
      %1042 = vmatprep.mubr.bf16.mxu0 0
      %1043 = vmatmul.mubr.bf16.gmra.mrb[0].mxu0 %v948
      %v1044 = vpop.f32.mrb[0].mxu0
      %v1045 = vadd.f32 0.0, %v1044
      %v1046 = vpop.f32.mrb[0].mxu0
      %v1047 = vpop.f32.mrb[0].mxu0
      %v1048 = vadd.f32 0.0, %v1047
      %v1049 = vpop.f32.mrb[0].mxu0
      %1050 = vmatprep.mubr.bf16.mxu0 0
      %1051 = vmatmul.mubr.bf16.gmra.mrb[0].mxu0 %v950
      %v1052 = vpop.f32.mrb[0].mxu0
      %v1053 = vadd.f32 0.0, %v1052
      %v1054 = vpop.f32.mrb[0].mxu0
      %v1055 = vpop.f32.mrb[0].mxu0
      %v1056 = vadd.f32 0.0, %v1055
      %v1057 = vpop.f32.mrb[0].mxu0
      %1058 = vmatprep.mubr.bf16.mxu0 0
      %1059 = vmatmul.mubr.bf16.gmra.mrb[0].mxu0 %v952
      %v1060 = vpop.f32.mrb[0].mxu0
      %v1061 = vadd.f32 0.0, %v1060
      %v1062 = vpop.f32.mrb[0].mxu0
      %v1063 = vpop.f32.mrb[0].mxu0
      %v1064 = vadd.f32 0.0, %v1063
      %v1065 = vpop.f32.mrb[0].mxu0
      %1066 = vmatprep.mubr.bf16.mxu0 0
      %1067 = vmatmul.mubr.bf16.gmra.mrb[0].mxu0 %v954
      %v1068 = vpop.f32.mrb[0].mxu0
      %v1069 = vadd.f32 0.0, %v1068
      %v1070 = vpop.f32.mrb[0].mxu0
      %v1071 = vpop.f32.mrb[0].mxu0
      %v1072 = vadd.f32 0.0, %v1071
      %v1073 = vpop.f32.mrb[0].mxu0
      %1074 = vmatprep.mubr.bf16.mxu0 0
      %1075 = vmatmul.mubr.bf16.gmra.mrb[0].mxu0 %v956
      %v1076 = vpop.f32.mrb[0].mxu0
      %v1077 = vadd.f32 0.0, %v1076
      %v1078 = vpop.f32.mrb[0].mxu0
      %v1079 = vpop.f32.mrb[0].mxu0
      %v1080 = vadd.f32 0.0, %v1079
      %v1081 = vpop.f32.mrb[0].mxu0
      %1082 = vdwg.mxu0
      %v1083 = vadd.f32 %v891, %v1045
      %v1084 = vadd.f32 %v892, %v1048
      %v1085 = vadd.f32 %v893, %v1053
      %v1086 = vadd.f32 %v894, %v1056
      %v1087 = vadd.f32 %v895, %v1061
      %v1088 = vadd.f32 %v896, %v1064
      %v1089 = vadd.f32 %v897, %v1069
      %v1090 = vadd.f32 %v898, %v1072
      %v1091 = vadd.f32 %v899, %v1077
      %v1092 = vadd.f32 %v900, %v1080
      %1093 = vst [vmem:[#allocation2] sm:$0xff] %v1083
      %1094 = vst [vmem:[#allocation2 + $0x8] sm:$0xff] %v1084
      %1095 = vst [vmem:[#allocation2 + $0x10] sm:$0xff] %v1085
      %1096 = vst [vmem:[#allocation2 + $0x18] sm:$0xff] %v1086
      %1097 = vst [vmem:[#allocation2 + $0x20] sm:$0xff] %v1087
      %1098 = vst [vmem:[#allocation2 + $0x28] sm:$0xff] %v1088
      %1099 = vst [vmem:[#allocation2 + $0x30] sm:$0xff] %v1089
      %1100 = vst [vmem:[#allocation2 + $0x38] sm:$0xff] %v1090
      %1101 = vst [vmem:[#allocation2 + $0x40] sm:$0xff] %v1091
      %1102 = vst [vmem:[#allocation2 + $0x48] sm:$0xff] %v1092
      %v1103 = vld [vmem:[%s168 + $0x4] sm:$0xe]
      %v1104 = vld [vmem:[%s168 + $0x8] sm:$0xf]
      %v1105 = vld [vmem:[%s168 + $0xc] sm:$0xf]
      %v1106 = vld [vmem:[%s168 + $0x10] sm:$0xf]
      %v1107 = vld [vmem:[%s168 + $0x14] sm:$0xf]
      %v1108 = vld [vmem:[%s168 + $0x18] sm:$0xf]
      %v1109 = vld [vmem:[%s168 + $0x1c] sm:$0xf]
      %v1110 = vld [vmem:[%s168 + $0x20] sm:$0xf]
      %v1111 = vld [vmem:[%s168 + $0x24] sm:$0xf]
      %v1112 = vld [vmem:[%s168 + $0x28] sm:$0xf]
      %v1113 = vld [vmem:[%s168 + $0x2c] sm:$0x3]
      %v1114 = vld [vmem:[#allocation2] sm:$0xff]
      %v1115 = vld [vmem:[#allocation2 + $0x8] sm:$0xff]
      %v1116 = vld [vmem:[#allocation2 + $0x10] sm:$0xff]
      %v1117 = vld [vmem:[#allocation2 + $0x18] sm:$0xff]
      %v1118 = vld [vmem:[#allocation2 + $0x20] sm:$0xff]
      %v1119 = vld [vmem:[#allocation2 + $0x28] sm:$0xff]
      %v1120 = vld [vmem:[#allocation2 + $0x30] sm:$0xff]
      %v1121 = vld [vmem:[#allocation2 + $0x38] sm:$0xff]
      %v1122 = vld [vmem:[#allocation2 + $0x40] sm:$0xff]
      %v1123 = vld [vmem:[#allocation2 + $0x48] sm:$0xff]
      %s1124 = scalar_lea.vmem %s172, 256
      %v1125 = vld [vmem:[%s1124] sm:$0xf]
      %v1126 = vld [vmem:[%s1124 + $0x4] sm:$0xf]
      %v1127 = vld [vmem:[%s1124 + $0x8] sm:$0xf]
      %v1128 = vld [vmem:[%s1124 + $0xc] sm:$0xf]
      %v1129 = vld [vmem:[%s1124 + $0x10] sm:$0xf]
      %v1130 = vld [vmem:[%s1124 + $0x14] sm:$0xf]
      %v1131 = vld [vmem:[%s1124 + $0x18] sm:$0xf]
      %v1132 = vld [vmem:[%s1124 + $0x1c] sm:$0xf]
      %v1133 = vld [vmem:[%s1124 + $0x20] sm:$0xf]
      %v1134 = vld [vmem:[%s1124 + $0x24] sm:$0xf]
      %v1135 = vld [vmem:[%s1124 + $0x28] sm:$0xf]
      %v1136 = vld [vmem:[%s1124 + $0x2c] sm:$0xf]
      %v1137 = vld [vmem:[%s1124 + $0x30] sm:$0xf]
      %v1138 = vld [vmem:[%s1124 + $0x34] sm:$0xf]
      %v1139 = vld [vmem:[%s1124 + $0x38] sm:$0xf]
      %v1140 = vld [vmem:[%s1124 + $0x3c] sm:$0xf]
      %v1152 = vunpack.c.l.b16 %v1103
      %v1153 = vunpack.c.l.b16 %v1104
      %v1154 = vunpack.c.l.b16 %v1105
      %v1155 = vunpack.c.l.b16 %v1106
      %v1156 = vunpack.c.l.b16 %v1107
      %v1157 = vunpack.c.l.b16 %v1108
      %v1158 = vunpack.c.l.b16 %v1109
      %v1159 = vunpack.c.l.b16 %v1110
      %v1160 = vunpack.c.l.b16 %v1111
      %v1161 = vunpack.c.l.b16 %v1112
      %v1162 = vunpack.c.l.b16 %v1113
      %v1163 = vpack.c.b16 %v1153, %v1152
      %v1164 = vpack.c.b16 %v1155, %v1154
      %v1165 = vpack.c.b16 %v1157, %v1156
      %v1166 = vpack.c.b16 %v1159, %v1158
      %v1167 = vpack.c.b16 %v1161, %v1160
      %v1168 = vpack.c.b16 %v1162, %v1162
      %vm1169 = vsmask.f32 6400
      %v1171 = vshrl.u32 %v1163, 16
      %v1173 = vrot.slane %v1171, 1
      %v1174 = vshll.u32 %v1163, 16
      %v1176 = vrot.slane %v1174, 2
      %v1177 = vor.u32 %v1173, %v1176
      %v1179 = vshrl.u32 %v1164, 16
      %v1181 = vrot.slane %v1179, 1
      %v1182 = vshll.u32 %v1164, 16
      %v1184 = vrot.slane %v1182, 2
      %v1185 = vor.u32 %v1181, %v1184
      %v1186 = vsel %vm1169, %v1177, %v1185
      %v1188 = vshrl.u32 %v1165, 16
      %v1190 = vrot.slane %v1188, 1
      %v1191 = vshll.u32 %v1165, 16
      %v1193 = vrot.slane %v1191, 2
      %v1194 = vor.u32 %v1190, %v1193
      %v1195 = vsel %vm1169, %v1185, %v1194
      %v1197 = vshrl.u32 %v1166, 16
      %v1199 = vrot.slane %v1197, 1
      %v1200 = vshll.u32 %v1166, 16
      %v1202 = vrot.slane %v1200, 2
      %v1203 = vor.u32 %v1199, %v1202
      %v1204 = vsel %vm1169, %v1194, %v1203
      %v1206 = vshrl.u32 %v1167, 16
      %v1208 = vrot.slane %v1206, 1
      %v1209 = vshll.u32 %v1167, 16
      %v1211 = vrot.slane %v1209, 2
      %v1212 = vor.u32 %v1208, %v1211
      %v1213 = vsel %vm1169, %v1203, %v1212
      %v1215 = vshrl.u32 %v1168, 16
      %v1217 = vrot.slane %v1215, 1
      %v1218 = vshll.u32 %v1168, 16
      %v1220 = vrot.slane %v1218, 2
      %v1221 = vor.u32 %v1217, %v1220
      %v1222 = vsel %vm1169, %v1212, %v1221
      %v1244 = vunpack.c.l.b16 %v1125
      %v1245 = vunpack.c.l.b16 %v1126
      %v1246 = vunpack.c.l.b16 %v1127
      %v1247 = vunpack.c.l.b16 %v1128
      %v1248 = vunpack.c.l.b16 %v1129
      %v1249 = vunpack.c.l.b16 %v1130
      %v1250 = vunpack.c.l.b16 %v1131
      %v1251 = vunpack.c.l.b16 %v1132
      %v1252 = vunpack.c.l.b16 %v1133
      %v1253 = vunpack.c.l.b16 %v1134
      %v1254 = vunpack.c.l.b16 %v1135
      %v1255 = vunpack.c.l.b16 %v1136
      %v1256 = vunpack.c.l.b16 %v1137
      %v1257 = vunpack.c.l.b16 %v1138
      %v1258 = vunpack.c.l.b16 %v1139
      %v1259 = vunpack.c.l.b16 %v1140
      %v1260 = vpack.c.b16 %v1245, %v1244
      %v1261 = vpack.c.b16 %v1247, %v1246
      %v1262 = vpack.c.b16 %v1249, %v1248
      %v1263 = vpack.c.b16 %v1251, %v1250
      %v1264 = vpack.c.b16 %v1253, %v1252
      %v1265 = vpack.c.b16 %v1255, %v1254
      %v1266 = vpack.c.b16 %v1257, %v1256
      %v1267 = vpack.c.b16 %v1259, %v1258
      %1276 = vmatprep.subr.bf16.mxu0 0
      %1277 = vmatpush1.bf16.msra.mxu0 %v1260
      %1278 = vmatprep.subr.bf16.mxu0 0
      %1279 = vmatpush1.bf16.msra.mxu0 %v1261
      %1280 = vmatprep.subr.bf16.mxu0 0
      %1281 = vmatpush1.bf16.msra.mxu0 %v1262
      %1282 = vmatprep.subr.bf16.mxu0 0
      %1283 = vmatpush1.bf16.msra.mxu0 %v1263
      %1284 = vmatprep.subr.bf16.mxu0 0
      %1285 = vmatpush1.bf16.msra.mxu0 %v1264
      %1286 = vmatprep.subr.bf16.mxu0 0
      %1287 = vmatpush1.bf16.msra.mxu0 %v1265
      %1288 = vmatprep.subr.bf16.mxu0 0
      %1289 = vmatpush1.bf16.msra.mxu0 %v1266
      %1290 = vmatprep.subr.bf16.mxu0 0
      %1291 = vmatpush1.bf16.msra.mxu0 %v1267
      %1292 = vmatprep.subr.bf16.mxu0 0
      %1293 = vmatpush1.bf16.msra.mxu0 0
      %1294 = vmatprep.subr.bf16.mxu0 0
      %1295 = vmatpush1.bf16.msra.mxu0 0
      %1296 = vmatprep.subr.bf16.mxu0 0
      %1297 = vmatpush1.bf16.msra.mxu0 0
      %1298 = vmatprep.subr.bf16.mxu0 0
      %1299 = vmatpush1.bf16.msra.mxu0 0
      %1300 = vmatprep.subr.bf16.mxu0 0
      %1301 = vmatpush1.bf16.msra.mxu0 0
      %1302 = vmatprep.subr.bf16.mxu0 0
      %1303 = vmatpush1.bf16.msra.mxu0 0
      %1304 = vmatprep.subr.bf16.mxu0 0
      %1305 = vmatpush1.bf16.msra.mxu0 0
      %1306 = vmatprep.subr.bf16.mxu0 0
      %1307 = vmatpush1.bf16.msra.mxu0 0
      %1308 = vmatprep.mubr.bf16.mxu0 0
      %1309 = vmatmul.mubr.bf16.gmra.mrb[0].mxu0 %v1186
      %v1310 = vpop.f32.mrb[0].mxu0
      %v1311 = vadd.f32 0.0, %v1310
      %v1312 = vpop.f32.mrb[0].mxu0
      %v1313 = vpop.f32.mrb[0].mxu0
      %v1314 = vadd.f32 0.0, %v1313
      %v1315 = vpop.f32.mrb[0].mxu0
      %1316 = vmatprep.mubr.bf16.mxu0 0
      %1317 = vmatmul.mubr.bf16.gmra.mrb[0].mxu0 %v1195
      %v1318 = vpop.f32.mrb[0].mxu0
      %v1319 = vadd.f32 0.0, %v1318
      %v1320 = vpop.f32.mrb[0].mxu0
      %v1321 = vpop.f32.mrb[0].mxu0
      %v1322 = vadd.f32 0.0, %v1321
      %v1323 = vpop.f32.mrb[0].mxu0
      %1324 = vmatprep.mubr.bf16.mxu0 0
      %1325 = vmatmul.mubr.bf16.gmra.mrb[0].mxu0 %v1204
      %v1326 = vpop.f32.mrb[0].mxu0
      %v1327 = vadd.f32 0.0, %v1326
      %v1328 = vpop.f32.mrb[0].mxu0
      %v1329 = vpop.f32.mrb[0].mxu0
      %v1330 = vadd.f32 0.0, %v1329
      %v1331 = vpop.f32.mrb[0].mxu0
      %1332 = vmatprep.mubr.bf16.mxu0 0
      %1333 = vmatmul.mubr.bf16.gmra.mrb[0].mxu0 %v1213
      %v1334 = vpop.f32.mrb[0].mxu0
      %v1335 = vadd.f32 0.0, %v1334
      %v1336 = vpop.f32.mrb[0].mxu0
      %v1337 = vpop.f32.mrb[0].mxu0
      %v1338 = vadd.f32 0.0, %v1337
      %v1339 = vpop.f32.mrb[0].mxu0
      %1340 = vmatprep.mubr.bf16.mxu0 0
      %1341 = vmatmul.mubr.bf16.gmra.mrb[0].mxu0 %v1222
      %v1342 = vpop.f32.mrb[0].mxu0
      %v1343 = vadd.f32 0.0, %v1342
      %v1344 = vpop.f32.mrb[0].mxu0
      %v1345 = vpop.f32.mrb[0].mxu0
      %v1346 = vadd.f32 0.0, %v1345
      %v1347 = vpop.f32.mrb[0].mxu0
      %1348 = vdwg.mxu0
      %v1349 = vadd.f32 %v1114, %v1311
      %v1350 = vadd.f32 %v1115, %v1314
      %v1351 = vadd.f32 %v1116, %v1319
      %v1352 = vadd.f32 %v1117, %v1322
      %v1353 = vadd.f32 %v1118, %v1327
      %v1354 = vadd.f32 %v1119, %v1330
      %v1355 = vadd.f32 %v1120, %v1335
      %v1356 = vadd.f32 %v1121, %v1338
      %v1357 = vadd.f32 %v1122, %v1343
      %v1358 = vadd.f32 %v1123, %v1346
      %1359 = vst [vmem:[#allocation2] sm:$0xff] %v1349
      %1360 = vst [vmem:[#allocation2 + $0x8] sm:$0xff] %v1350
      %1361 = vst [vmem:[#allocation2 + $0x10] sm:$0xff] %v1351
      %1362 = vst [vmem:[#allocation2 + $0x18] sm:$0xff] %v1352
      %1363 = vst [vmem:[#allocation2 + $0x20] sm:$0xff] %v1353
      %1364 = vst [vmem:[#allocation2 + $0x28] sm:$0xff] %v1354
      %1365 = vst [vmem:[#allocation2 + $0x30] sm:$0xff] %v1355
      %1366 = vst [vmem:[#allocation2 + $0x38] sm:$0xff] %v1356
      %1367 = vst [vmem:[#allocation2 + $0x40] sm:$0xff] %v1357
      %1368 = vst [vmem:[#allocation2 + $0x48] sm:$0xff] %v1358
      %v1369 = vld [vmem:[%s168 + $0x4] sm:$0xc]
      %v1370 = vld [vmem:[%s168 + $0x8] sm:$0xf]
      %v1371 = vld [vmem:[%s168 + $0xc] sm:$0xf]
      %v1372 = vld [vmem:[%s168 + $0x10] sm:$0xf]
      %v1373 = vld [vmem:[%s168 + $0x14] sm:$0xf]
      %v1374 = vld [vmem:[%s168 + $0x18] sm:$0xf]
      %v1375 = vld [vmem:[%s168 + $0x1c] sm:$0xf]
      %v1376 = vld [vmem:[%s168 + $0x20] sm:$0xf]
      %v1377 = vld [vmem:[%s168 + $0x24] sm:$0xf]
      %v1378 = vld [vmem:[%s168 + $0x28] sm:$0xf]
      %v1379 = vld [vmem:[%s168 + $0x2c] sm:$0x3]
      %v1380 = vld [vmem:[#allocation2] sm:$0xff]
      %v1381 = vld [vmem:[#allocation2 + $0x8] sm:$0xff]
      %v1382 = vld [vmem:[#allocation2 + $0x10] sm:$0xff]
      %v1383 = vld [vmem:[#allocation2 + $0x18] sm:$0xff]
      %v1384 = vld [vmem:[#allocation2 + $0x20] sm:$0xff]
      %v1385 = vld [vmem:[#allocation2 + $0x28] sm:$0xff]
      %v1386 = vld [vmem:[#allocation2 + $0x30] sm:$0xff]
      %v1387 = vld [vmem:[#allocation2 + $0x38] sm:$0xff]
      %v1388 = vld [vmem:[#allocation2 + $0x40] sm:$0xff]
      %v1389 = vld [vmem:[#allocation2 + $0x48] sm:$0xff]
      %s1390 = scalar_lea.vmem %s172, 320
      %v1391 = vld [vmem:[%s1390] sm:$0xf]
      %v1392 = vld [vmem:[%s1390 + $0x4] sm:$0xf]
      %v1393 = vld [vmem:[%s1390 + $0x8] sm:$0xf]
      %v1394 = vld [vmem:[%s1390 + $0xc] sm:$0xf]
      %v1395 = vld [vmem:[%s1390 + $0x10] sm:$0xf]
      %v1396 = vld [vmem:[%s1390 + $0x14] sm:$0xf]
      %v1397 = vld [vmem:[%s1390 + $0x18] sm:$0xf]
      %v1398 = vld [vmem:[%s1390 + $0x1c] sm:$0xf]
      %v1399 = vld [vmem:[%s1390 + $0x20] sm:$0xf]
      %v1400 = vld [vmem:[%s1390 + $0x24] sm:$0xf]
      %v1401 = vld [vmem:[%s1390 + $0x28] sm:$0xf]
      %v1402 = vld [vmem:[%s1390 + $0x2c] sm:$0xf]
      %v1403 = vld [vmem:[%s1390 + $0x30] sm:$0xf]
      %v1404 = vld [vmem:[%s1390 + $0x34] sm:$0xf]
      %v1405 = vld [vmem:[%s1390 + $0x38] sm:$0xf]
      %v1406 = vld [vmem:[%s1390 + $0x3c] sm:$0xf]
      %v1418 = vunpack.c.l.b16 %v1369
      %v1419 = vunpack.c.l.b16 %v1370
      %v1420 = vunpack.c.l.b16 %v1371
      %v1421 = vunpack.c.l.b16 %v1372
      %v1422 = vunpack.c.l.b16 %v1373
      %v1423 = vunpack.c.l.b16 %v1374
      %v1424 = vunpack.c.l.b16 %v1375
      %v1425 = vunpack.c.l.b16 %v1376
      %v1426 = vunpack.c.l.b16 %v1377
      %v1427 = vunpack.c.l.b16 %v1378
      %v1428 = vunpack.c.l.b16 %v1379
      %v1429 = vpack.c.b16 %v1419, %v1418
      %v1430 = vpack.c.b16 %v1421, %v1420
      %v1431 = vpack.c.b16 %v1423, %v1422
      %v1432 = vpack.c.b16 %v1425, %v1424
      %v1433 = vpack.c.b16 %v1427, %v1426
      %v1434 = vpack.c.b16 %v1428, %v1428
      %vm1435 = vcmask 1045504
      %v1436 = vrot.slane %v1429, 2
      %v1437 = vrot.slane %v1430, 2
      %v1438 = vsel %vm1435, %v1436, %v1437
      %v1439 = vrot.slane %v1431, 2
      %v1440 = vsel %vm1435, %v1437, %v1439
      %v1441 = vrot.slane %v1432, 2
      %v1442 = vsel %vm1435, %v1439, %v1441
      %v1443 = vrot.slane %v1433, 2
      %v1444 = vsel %vm1435, %v1441, %v1443
      %v1445 = vrot.slane %v1434, 2
      %v1446 = vsel %vm1435, %v1443, %v1445
      %v1468 = vunpack.c.l.b16 %v1391
      %v1469 = vunpack.c.l.b16 %v1392
      %v1470 = vunpack.c.l.b16 %v1393
      %v1471 = vunpack.c.l.b16 %v1394
      %v1472 = vunpack.c.l.b16 %v1395
      %v1473 = vunpack.c.l.b16 %v1396
      %v1474 = vunpack.c.l.b16 %v1397
      %v1475 = vunpack.c.l.b16 %v1398
      %v1476 = vunpack.c.l.b16 %v1399
      %v1477 = vunpack.c.l.b16 %v1400
      %v1478 = vunpack.c.l.b16 %v1401
      %v1479 = vunpack.c.l.b16 %v1402
      %v1480 = vunpack.c.l.b16 %v1403
      %v1481 = vunpack.c.l.b16 %v1404
      %v1482 = vunpack.c.l.b16 %v1405
      %v1483 = vunpack.c.l.b16 %v1406
      %v1484 = vpack.c.b16 %v1469, %v1468
      %v1485 = vpack.c.b16 %v1471, %v1470
      %v1486 = vpack.c.b16 %v1473, %v1472
      %v1487 = vpack.c.b16 %v1475, %v1474
      %v1488 = vpack.c.b16 %v1477, %v1476
      %v1489 = vpack.c.b16 %v1479, %v1478
      %v1490 = vpack.c.b16 %v1481, %v1480
      %v1491 = vpack.c.b16 %v1483, %v1482
      %1500 = vmatprep.subr.bf16.mxu0 0
      %1501 = vmatpush1.bf16.msra.mxu0 %v1484
      %1502 = vmatprep.subr.bf16.mxu0 0
      %1503 = vmatpush1.bf16.msra.mxu0 %v1485
      %1504 = vmatprep.subr.bf16.mxu0 0
      %1505 = vmatpush1.bf16.msra.mxu0 %v1486
      %1506 = vmatprep.subr.bf16.mxu0 0
      %1507 = vmatpush1.bf16.msra.mxu0 %v1487
      %1508 = vmatprep.subr.bf16.mxu0 0
      %1509 = vmatpush1.bf16.msra.mxu0 %v1488
      %1510 = vmatprep.subr.bf16.mxu0 0
      %1511 = vmatpush1.bf16.msra.mxu0 %v1489
      %1512 = vmatprep.subr.bf16.mxu0 0
      %1513 = vmatpush1.bf16.msra.mxu0 %v1490
      %1514 = vmatprep.subr.bf16.mxu0 0
      %1515 = vmatpush1.bf16.msra.mxu0 %v1491
      %1516 = vmatprep.subr.bf16.mxu0 0
      %1517 = vmatpush1.bf16.msra.mxu0 0
      %1518 = vmatprep.subr.bf16.mxu0 0
      %1519 = vmatpush1.bf16.msra.mxu0 0
      %1520 = vmatprep.subr.bf16.mxu0 0
      %1521 = vmatpush1.bf16.msra.mxu0 0
      %1522 = vmatprep.subr.bf16.mxu0 0
      %1523 = vmatpush1.bf16.msra.mxu0 0
      %1524 = vmatprep.subr.bf16.mxu0 0
      %1525 = vmatpush1.bf16.msra.mxu0 0
      %1526 = vmatprep.subr.bf16.mxu0 0
      %1527 = vmatpush1.bf16.msra.mxu0 0
      %1528 = vmatprep.subr.bf16.mxu0 0
      %1529 = vmatpush1.bf16.msra.mxu0 0
      %1530 = vmatprep.subr.bf16.mxu0 0
      %1531 = vmatpush1.bf16.msra.mxu0 0
      %1532 = vmatprep.mubr.bf16.mxu0 0
      %1533 = vmatmul.mubr.bf16.gmra.mrb[0].mxu0 %v1438
      %v1534 = vpop.f32.mrb[0].mxu0
      %v1535 = vadd.f32 0.0, %v1534
      %v1536 = vpop.f32.mrb[0].mxu0
      %v1537 = vpop.f32.mrb[0].mxu0
      %v1538 = vadd.f32 0.0, %v1537
      %v1539 = vpop.f32.mrb[0].mxu0
      %1540 = vmatprep.mubr.bf16.mxu0 0
      %1541 = vmatmul.mubr.bf16.gmra.mrb[0].mxu0 %v1440
      %v1542 = vpop.f32.mrb[0].mxu0
      %v1543 = vadd.f32 0.0, %v1542
      %v1544 = vpop.f32.mrb[0].mxu0
      %v1545 = vpop.f32.mrb[0].mxu0
      %v1546 = vadd.f32 0.0, %v1545
      %v1547 = vpop.f32.mrb[0].mxu0
      %1548 = vmatprep.mubr.bf16.mxu0 0
      %1549 = vmatmul.mubr.bf16.gmra.mrb[0].mxu0 %v1442
      %v1550 = vpop.f32.mrb[0].mxu0
      %v1551 = vadd.f32 0.0, %v1550
      %v1552 = vpop.f32.mrb[0].mxu0
      %v1553 = vpop.f32.mrb[0].mxu0
      %v1554 = vadd.f32 0.0, %v1553
      %v1555 = vpop.f32.mrb[0].mxu0
      %1556 = vmatprep.mubr.bf16.mxu0 0
      %1557 = vmatmul.mubr.bf16.gmra.mrb[0].mxu0 %v1444
      %v1558 = vpop.f32.mrb[0].mxu0
      %v1559 = vadd.f32 0.0, %v1558
      %v1560 = vpop.f32.mrb[0].mxu0
      %v1561 = vpop.f32.mrb[0].mxu0
      %v1562 = vadd.f32 0.0, %v1561
      %v1563 = vpop.f32.mrb[0].mxu0
      %1564 = vmatprep.mubr.bf16.mxu0 0
      %1565 = vmatmul.mubr.bf16.gmra.mrb[0].mxu0 %v1446
      %v1566 = vpop.f32.mrb[0].mxu0
      %v1567 = vadd.f32 0.0, %v1566
      %v1568 = vpop.f32.mrb[0].mxu0
      %v1569 = vpop.f32.mrb[0].mxu0
      %v1570 = vadd.f32 0.0, %v1569
      %v1571 = vpop.f32.mrb[0].mxu0
      %1572 = vdwg.mxu0
      %v1573 = vadd.f32 %v1380, %v1535
      %v1574 = vadd.f32 %v1381, %v1538
      %v1575 = vadd.f32 %v1382, %v1543
      %v1576 = vadd.f32 %v1383, %v1546
      %v1577 = vadd.f32 %v1384, %v1551
      %v1578 = vadd.f32 %v1385, %v1554
      %v1579 = vadd.f32 %v1386, %v1559
      %v1580 = vadd.f32 %v1387, %v1562
      %v1581 = vadd.f32 %v1388, %v1567
      %v1582 = vadd.f32 %v1389, %v1570
      %1583 = vst [vmem:[#allocation2] sm:$0xff] %v1573
      %1584 = vst [vmem:[#allocation2 + $0x8] sm:$0xff] %v1574
      %1585 = vst [vmem:[#allocation2 + $0x10] sm:$0xff] %v1575
      %1586 = vst [vmem:[#allocation2 + $0x18] sm:$0xff] %v1576
      %1587 = vst [vmem:[#allocation2 + $0x20] sm:$0xff] %v1577
      %1588 = vst [vmem:[#allocation2 + $0x28] sm:$0xff] %v1578
      %1589 = vst [vmem:[#allocation2 + $0x30] sm:$0xff] %v1579
      %1590 = vst [vmem:[#allocation2 + $0x38] sm:$0xff] %v1580
      %1591 = vst [vmem:[#allocation2 + $0x40] sm:$0xff] %v1581
      %1592 = vst [vmem:[#allocation2 + $0x48] sm:$0xff] %v1582
      %v1593 = vld [vmem:[%s168 + $0x8] sm:$0xc]
      %v1594 = vld [vmem:[%s168 + $0xc] sm:$0xf]
      %v1595 = vld [vmem:[%s168 + $0x10] sm:$0xf]
      %v1596 = vld [vmem:[%s168 + $0x14] sm:$0xf]
      %v1597 = vld [vmem:[%s168 + $0x18] sm:$0xf]
      %v1598 = vld [vmem:[%s168 + $0x1c] sm:$0xf]
      %v1599 = vld [vmem:[%s168 + $0x20] sm:$0xf]
      %v1600 = vld [vmem:[%s168 + $0x24] sm:$0xf]
      %v1601 = vld [vmem:[%s168 + $0x28] sm:$0xf]
      %v1602 = vld [vmem:[%s168 + $0x2c] sm:$0xf]
      %v1603 = vld [vmem:[%s168 + $0x30] sm:$0x3]
      %v1604 = vld [vmem:[#allocation2] sm:$0xff]
      %v1605 = vld [vmem:[#allocation2 + $0x8] sm:$0xff]
      %v1606 = vld [vmem:[#allocation2 + $0x10] sm:$0xff]
      %v1607 = vld [vmem:[#allocation2 + $0x18] sm:$0xff]
      %v1608 = vld [vmem:[#allocation2 + $0x20] sm:$0xff]
      %v1609 = vld [vmem:[#allocation2 + $0x28] sm:$0xff]
      %v1610 = vld [vmem:[#allocation2 + $0x30] sm:$0xff]
      %v1611 = vld [vmem:[#allocation2 + $0x38] sm:$0xff]
      %v1612 = vld [vmem:[#allocation2 + $0x40] sm:$0xff]
      %v1613 = vld [vmem:[#allocation2 + $0x48] sm:$0xff]
      %s1614 = scalar_lea.vmem %s172, 384
      %v1615 = vld [vmem:[%s1614] sm:$0xf]
      %v1616 = vld [vmem:[%s1614 + $0x4] sm:$0xf]
      %v1617 = vld [vmem:[%s1614 + $0x8] sm:$0xf]
      %v1618 = vld [vmem:[%s1614 + $0xc] sm:$0xf]
      %v1619 = vld [vmem:[%s1614 + $0x10] sm:$0xf]
      %v1620 = vld [vmem:[%s1614 + $0x14] sm:$0xf]
      %v1621 = vld [vmem:[%s1614 + $0x18] sm:$0xf]
      %v1622 = vld [vmem:[%s1614 + $0x1c] sm:$0xf]
      %v1623 = vld [vmem:[%s1614 + $0x20] sm:$0xf]
      %v1624 = vld [vmem:[%s1614 + $0x24] sm:$0xf]
      %v1625 = vld [vmem:[%s1614 + $0x28] sm:$0xf]
      %v1626 = vld [vmem:[%s1614 + $0x2c] sm:$0xf]
      %v1627 = vld [vmem:[%s1614 + $0x30] sm:$0xf]
      %v1628 = vld [vmem:[%s1614 + $0x34] sm:$0xf]
      %v1629 = vld [vmem:[%s1614 + $0x38] sm:$0xf]
      %v1630 = vld [vmem:[%s1614 + $0x3c] sm:$0xf]
      %v1642 = vunpack.c.l.b16 %v1593
      %v1643 = vunpack.c.l.b16 %v1594
      %v1644 = vunpack.c.l.b16 %v1595
      %v1645 = vunpack.c.l.b16 %v1596
      %v1646 = vunpack.c.l.b16 %v1597
      %v1647 = vunpack.c.l.b16 %v1598
      %v1648 = vunpack.c.l.b16 %v1599
      %v1649 = vunpack.c.l.b16 %v1600
      %v1650 = vunpack.c.l.b16 %v1601
      %v1651 = vunpack.c.l.b16 %v1602
      %v1652 = vunpack.c.l.b16 %v1603
      %v1653 = vpack.c.b16 %v1643, %v1642
      %v1654 = vpack.c.b16 %v1645, %v1644
      %v1655 = vpack.c.b16 %v1647, %v1646
      %v1656 = vpack.c.b16 %v1649, %v1648
      %v1657 = vpack.c.b16 %v1651, %v1650
      %v1658 = vpack.c.b16 %v1652, %v1652
      %v1659 = vrot.slane %v1653, 2
      %v1660 = vrot.slane %v1654, 2
      %v1661 = vsel %vm1435, %v1659, %v1660
      %v1662 = vrot.slane %v1655, 2
      %v1663 = vsel %vm1435, %v1660, %v1662
      %v1664 = vrot.slane %v1656, 2
      %v1665 = vsel %vm1435, %v1662, %v1664
      %v1666 = vrot.slane %v1657, 2
      %v1667 = vsel %vm1435, %v1664, %v1666
      %v1668 = vrot.slane %v1658, 2
      %v1669 = vsel %vm1435, %v1666, %v1668
      %v1691 = vunpack.c.l.b16 %v1615
      %v1692 = vunpack.c.l.b16 %v1616
      %v1693 = vunpack.c.l.b16 %v1617
      %v1694 = vunpack.c.l.b16 %v1618
      %v1695 = vunpack.c.l.b16 %v1619
      %v1696 = vunpack.c.l.b16 %v1620
      %v1697 = vunpack.c.l.b16 %v1621
      %v1698 = vunpack.c.l.b16 %v1622
      %v1699 = vunpack.c.l.b16 %v1623
      %v1700 = vunpack.c.l.b16 %v1624
      %v1701 = vunpack.c.l.b16 %v1625
      %v1702 = vunpack.c.l.b16 %v1626
      %v1703 = vunpack.c.l.b16 %v1627
      %v1704 = vunpack.c.l.b16 %v1628
      %v1705 = vunpack.c.l.b16 %v1629
      %v1706 = vunpack.c.l.b16 %v1630
      %v1707 = vpack.c.b16 %v1692, %v1691
      %v1708 = vpack.c.b16 %v1694, %v1693
      %v1709 = vpack.c.b16 %v1696, %v1695
      %v1710 = vpack.c.b16 %v1698, %v1697
      %v1711 = vpack.c.b16 %v1700, %v1699
      %v1712 = vpack.c.b16 %v1702, %v1701
      %v1713 = vpack.c.b16 %v1704, %v1703
      %v1714 = vpack.c.b16 %v1706, %v1705
      %1723 = vmatprep.subr.bf16.mxu0 0
      %1724 = vmatpush1.bf16.msra.mxu0 %v1707
      %1725 = vmatprep.subr.bf16.mxu0 0
      %1726 = vmatpush1.bf16.msra.mxu0 %v1708
      %1727 = vmatprep.subr.bf16.mxu0 0
      %1728 = vmatpush1.bf16.msra.mxu0 %v1709
      %1729 = vmatprep.subr.bf16.mxu0 0
      %1730 = vmatpush1.bf16.msra.mxu0 %v1710
      %1731 = vmatprep.subr.bf16.mxu0 0
      %1732 = vmatpush1.bf16.msra.mxu0 %v1711
      %1733 = vmatprep.subr.bf16.mxu0 0
      %1734 = vmatpush1.bf16.msra.mxu0 %v1712
      %1735 = vmatprep.subr.bf16.mxu0 0
      %1736 = vmatpush1.bf16.msra.mxu0 %v1713
      %1737 = vmatprep.subr.bf16.mxu0 0
      %1738 = vmatpush1.bf16.msra.mxu0 %v1714
      %1739 = vmatprep.subr.bf16.mxu0 0
      %1740 = vmatpush1.bf16.msra.mxu0 0
      %1741 = vmatprep.subr.bf16.mxu0 0
      %1742 = vmatpush1.bf16.msra.mxu0 0
      %1743 = vmatprep.subr.bf16.mxu0 0
      %1744 = vmatpush1.bf16.msra.mxu0 0
      %1745 = vmatprep.subr.bf16.mxu0 0
      %1746 = vmatpush1.bf16.msra.mxu0 0
      %1747 = vmatprep.subr.bf16.mxu0 0
      %1748 = vmatpush1.bf16.msra.mxu0 0
      %1749 = vmatprep.subr.bf16.mxu0 0
      %1750 = vmatpush1.bf16.msra.mxu0 0
      %1751 = vmatprep.subr.bf16.mxu0 0
      %1752 = vmatpush1.bf16.msra.mxu0 0
      %1753 = vmatprep.subr.bf16.mxu0 0
      %1754 = vmatpush1.bf16.msra.mxu0 0
      %1755 = vmatprep.mubr.bf16.mxu0 0
      %1756 = vmatmul.mubr.bf16.gmra.mrb[0].mxu0 %v1661
      %v1757 = vpop.f32.mrb[0].mxu0
      %v1758 = vadd.f32 0.0, %v1757
      %v1759 = vpop.f32.mrb[0].mxu0
      %v1760 = vpop.f32.mrb[0].mxu0
      %v1761 = vadd.f32 0.0, %v1760
      %v1762 = vpop.f32.mrb[0].mxu0
      %1763 = vmatprep.mubr.bf16.mxu0 0
      %1764 = vmatmul.mubr.bf16.gmra.mrb[0].mxu0 %v1663
      %v1765 = vpop.f32.mrb[0].mxu0
      %v1766 = vadd.f32 0.0, %v1765
      %v1767 = vpop.f32.mrb[0].mxu0
      %v1768 = vpop.f32.mrb[0].mxu0
      %v1769 = vadd.f32 0.0, %v1768
      %v1770 = vpop.f32.mrb[0].mxu0
      %1771 = vmatprep.mubr.bf16.mxu0 0
      %1772 = vmatmul.mubr.bf16.gmra.mrb[0].mxu0 %v1665
      %v1773 = vpop.f32.mrb[0].mxu0
      %v1774 = vadd.f32 0.0, %v1773
      %v1775 = vpop.f32.mrb[0].mxu0
      %v1776 = vpop.f32.mrb[0].mxu0
      %v1777 = vadd.f32 0.0, %v1776
      %v1778 = vpop.f32.mrb[0].mxu0
      %1779 = vmatprep.mubr.bf16.mxu0 0
      %1780 = vmatmul.mubr.bf16.gmra.mrb[0].mxu0 %v1667
      %v1781 = vpop.f32.mrb[0].mxu0
      %v1782 = vadd.f32 0.0, %v1781
      %v1783 = vpop.f32.mrb[0].mxu0
      %v1784 = vpop.f32.mrb[0].mxu0
      %v1785 = vadd.f32 0.0, %v1784
      %v1786 = vpop.f32.mrb[0].mxu0
      %1787 = vmatprep.mubr.bf16.mxu0 0
      %1788 = vmatmul.mubr.bf16.gmra.mrb[0].mxu0 %v1669
      %v1789 = vpop.f32.mrb[0].mxu0
      %v1790 = vadd.f32 0.0, %v1789
      %v1791 = vpop.f32.mrb[0].mxu0
      %v1792 = vpop.f32.mrb[0].mxu0
      %v1793 = vadd.f32 0.0, %v1792
      %v1794 = vpop.f32.mrb[0].mxu0
      %1795 = vdwg.mxu0
      %v1796 = vadd.f32 %v1604, %v1758
      %v1797 = vadd.f32 %v1605, %v1761
      %v1798 = vadd.f32 %v1606, %v1766
      %v1799 = vadd.f32 %v1607, %v1769
      %v1800 = vadd.f32 %v1608, %v1774
      %v1801 = vadd.f32 %v1609, %v1777
      %v1802 = vadd.f32 %v1610, %v1782
      %v1803 = vadd.f32 %v1611, %v1785
      %v1804 = vadd.f32 %v1612, %v1790
      %v1805 = vadd.f32 %v1613, %v1793
      %1806 = vst [vmem:[#allocation2] sm:$0xff] %v1796
      %1807 = vst [vmem:[#allocation2 + $0x8] sm:$0xff] %v1797
      %1808 = vst [vmem:[#allocation2 + $0x10] sm:$0xff] %v1798
      %1809 = vst [vmem:[#allocation2 + $0x18] sm:$0xff] %v1799
      %1810 = vst [vmem:[#allocation2 + $0x20] sm:$0xff] %v1800
      %1811 = vst [vmem:[#allocation2 + $0x28] sm:$0xff] %v1801
      %1812 = vst [vmem:[#allocation2 + $0x30] sm:$0xff] %v1802
      %1813 = vst [vmem:[#allocation2 + $0x38] sm:$0xff] %v1803
      %1814 = vst [vmem:[#allocation2 + $0x40] sm:$0xff] %v1804
      %1815 = vst [vmem:[#allocation2 + $0x48] sm:$0xff] %v1805
      %v1816 = vld [vmem:[%s168 + $0x8] sm:$0xc]
      %v1817 = vld [vmem:[%s168 + $0xc] sm:$0xf]
      %v1818 = vld [vmem:[%s168 + $0x10] sm:$0xf]
      %v1819 = vld [vmem:[%s168 + $0x14] sm:$0xf]
      %v1820 = vld [vmem:[%s168 + $0x18] sm:$0xf]
      %v1821 = vld [vmem:[%s168 + $0x1c] sm:$0xf]
      %v1822 = vld [vmem:[%s168 + $0x20] sm:$0xf]
      %v1823 = vld [vmem:[%s168 + $0x24] sm:$0xf]
      %v1824 = vld [vmem:[%s168 + $0x28] sm:$0xf]
      %v1825 = vld [vmem:[%s168 + $0x2c] sm:$0xf]
      %v1826 = vld [vmem:[%s168 + $0x30] sm:$0x7]
      %v1827 = vld [vmem:[#allocation2] sm:$0xff]
      %v1828 = vld [vmem:[#allocation2 + $0x8] sm:$0xff]
      %v1829 = vld [vmem:[#allocation2 + $0x10] sm:$0xff]
      %v1830 = vld [vmem:[#allocation2 + $0x18] sm:$0xff]
      %v1831 = vld [vmem:[#allocation2 + $0x20] sm:$0xff]
      %v1832 = vld [vmem:[#allocation2 + $0x28] sm:$0xff]
      %v1833 = vld [vmem:[#allocation2 + $0x30] sm:$0xff]
      %v1834 = vld [vmem:[#allocation2 + $0x38] sm:$0xff]
      %v1835 = vld [vmem:[#allocation2 + $0x40] sm:$0xff]
      %v1836 = vld [vmem:[#allocation2 + $0x48] sm:$0xff]
      %s1837 = scalar_lea.vmem %s172, 448
      %v1838 = vld [vmem:[%s1837] sm:$0xf]
      %v1839 = vld [vmem:[%s1837 + $0x4] sm:$0xf]
      %v1840 = vld [vmem:[%s1837 + $0x8] sm:$0xf]
      %v1841 = vld [vmem:[%s1837 + $0xc] sm:$0xf]
      %v1842 = vld [vmem:[%s1837 + $0x10] sm:$0xf]
      %v1843 = vld [vmem:[%s1837 + $0x14] sm:$0xf]
      %v1844 = vld [vmem:[%s1837 + $0x18] sm:$0xf]
      %v1845 = vld [vmem:[%s1837 + $0x1c] sm:$0xf]
      %v1846 = vld [vmem:[%s1837 + $0x20] sm:$0xf]
      %v1847 = vld [vmem:[%s1837 + $0x24] sm:$0xf]
      %v1848 = vld [vmem:[%s1837 + $0x28] sm:$0xf]
      %v1849 = vld [vmem:[%s1837 + $0x2c] sm:$0xf]
      %v1850 = vld [vmem:[%s1837 + $0x30] sm:$0xf]
      %v1851 = vld [vmem:[%s1837 + $0x34] sm:$0xf]
      %v1852 = vld [vmem:[%s1837 + $0x38] sm:$0xf]
      %v1853 = vld [vmem:[%s1837 + $0x3c] sm:$0xf]
      %v1865 = vunpack.c.l.b16 %v1816
      %v1866 = vunpack.c.l.b16 %v1817
      %v1867 = vunpack.c.l.b16 %v1818
      %v1868 = vunpack.c.l.b16 %v1819
      %v1869 = vunpack.c.l.b16 %v1820
      %v1870 = vunpack.c.l.b16 %v1821
      %v1871 = vunpack.c.l.b16 %v1822
      %v1872 = vunpack.c.l.b16 %v1823
      %v1873 = vunpack.c.l.b16 %v1824
      %v1874 = vunpack.c.l.b16 %v1825
      %v1875 = vunpack.c.l.b16 %v1826
      %v1876 = vpack.c.b16 %v1866, %v1865
      %v1877 = vpack.c.b16 %v1868, %v1867
      %v1878 = vpack.c.b16 %v1870, %v1869
      %v1879 = vpack.c.b16 %v1872, %v1871
      %v1880 = vpack.c.b16 %v1874, %v1873
      %v1881 = vpack.c.b16 %v1875, %v1875
      %vm1882 = vsmask.f32 5376
      %v1884 = vshrl.u32 %v1876, 16
      %v1886 = vrot.slane %v1884, 2
      %v1887 = vshll.u32 %v1876, 16
      %v1889 = vrot.slane %v1887, 3
      %v1890 = vor.u32 %v1886, %v1889
      %v1892 = vshrl.u32 %v1877, 16
      %v1894 = vrot.slane %v1892, 2
      %v1895 = vshll.u32 %v1877, 16
      %v1897 = vrot.slane %v1895, 3
      %v1898 = vor.u32 %v1894, %v1897
      %v1899 = vsel %vm1882, %v1890, %v1898
      %v1901 = vshrl.u32 %v1878, 16
      %v1903 = vrot.slane %v1901, 2
      %v1904 = vshll.u32 %v1878, 16
      %v1906 = vrot.slane %v1904, 3
      %v1907 = vor.u32 %v1903, %v1906
      %v1908 = vsel %vm1882, %v1898, %v1907
      %v1910 = vshrl.u32 %v1879, 16
      %v1912 = vrot.slane %v1910, 2
      %v1913 = vshll.u32 %v1879, 16
      %v1915 = vrot.slane %v1913, 3
      %v1916 = vor.u32 %v1912, %v1915
      %v1917 = vsel %vm1882, %v1907, %v1916
      %v1919 = vshrl.u32 %v1880, 16
      %v1921 = vrot.slane %v1919, 2
      %v1922 = vshll.u32 %v1880, 16
      %v1924 = vrot.slane %v1922, 3
      %v1925 = vor.u32 %v1921, %v1924
      %v1926 = vsel %vm1882, %v1916, %v1925
      %v1928 = vshrl.u32 %v1881, 16
      %v1930 = vrot.slane %v1928, 2
      %v1931 = vshll.u32 %v1881, 16
      %v1933 = vrot.slane %v1931, 3
      %v1934 = vor.u32 %v1930, %v1933
      %v1935 = vsel %vm1882, %v1925, %v1934
      %v1957 = vunpack.c.l.b16 %v1838
      %v1958 = vunpack.c.l.b16 %v1839
      %v1959 = vunpack.c.l.b16 %v1840
      %v1960 = vunpack.c.l.b16 %v1841
      %v1961 = vunpack.c.l.b16 %v1842
      %v1962 = vunpack.c.l.b16 %v1843
      %v1963 = vunpack.c.l.b16 %v1844
      %v1964 = vunpack.c.l.b16 %v1845
      %v1965 = vunpack.c.l.b16 %v1846
      %v1966 = vunpack.c.l.b16 %v1847
      %v1967 = vunpack.c.l.b16 %v1848
      %v1968 = vunpack.c.l.b16 %v1849
      %v1969 = vunpack.c.l.b16 %v1850
      %v1970 = vunpack.c.l.b16 %v1851
      %v1971 = vunpack.c.l.b16 %v1852
      %v1972 = vunpack.c.l.b16 %v1853
      %v1973 = vpack.c.b16 %v1958, %v1957
      %v1974 = vpack.c.b16 %v1960, %v1959
      %v1975 = vpack.c.b16 %v1962, %v1961
      %v1976 = vpack.c.b16 %v1964, %v1963
      %v1977 = vpack.c.b16 %v1966, %v1965
      %v1978 = vpack.c.b16 %v1968, %v1967
      %v1979 = vpack.c.b16 %v1970, %v1969
      %v1980 = vpack.c.b16 %v1972, %v1971
      %1989 = vmatprep.subr.bf16.mxu0 0
      %1990 = vmatpush1.bf16.msra.mxu0 %v1973
      %1991 = vmatprep.subr.bf16.mxu0 0
      %1992 = vmatpush1.bf16.msra.mxu0 %v1974
      %1993 = vmatprep.subr.bf16.mxu0 0
      %1994 = vmatpush1.bf16.msra.mxu0 %v1975
      %1995 = vmatprep.subr.bf16.mxu0 0
      %1996 = vmatpush1.bf16.msra.mxu0 %v1976
      %1997 = vmatprep.subr.bf16.mxu0 0
      %1998 = vmatpush1.bf16.msra.mxu0 %v1977
      %1999 = vmatprep.subr.bf16.mxu0 0
      %2000 = vmatpush1.bf16.msra.mxu0 %v1978
      %2001 = vmatprep.subr.bf16.mxu0 0
      %2002 = vmatpush1.bf16.msra.mxu0 %v1979
      %2003 = vmatprep.subr.bf16.mxu0 0
      %2004 = vmatpush1.bf16.msra.mxu0 %v1980
      %2005 = vmatprep.subr.bf16.mxu0 0
      %2006 = vmatpush1.bf16.msra.mxu0 0
      %2007 = vmatprep.subr.bf16.mxu0 0
      %2008 = vmatpush1.bf16.msra.mxu0 0
      %2009 = vmatprep.subr.bf16.mxu0 0
      %2010 = vmatpush1.bf16.msra.mxu0 0
      %2011 = vmatprep.subr.bf16.mxu0 0
      %2012 = vmatpush1.bf16.msra.mxu0 0
      %2013 = vmatprep.subr.bf16.mxu0 0
      %2014 = vmatpush1.bf16.msra.mxu0 0
      %2015 = vmatprep.subr.bf16.mxu0 0
      %2016 = vmatpush1.bf16.msra.mxu0 0
      %2017 = vmatprep.subr.bf16.mxu0 0
      %2018 = vmatpush1.bf16.msra.mxu0 0
      %2019 = vmatprep.subr.bf16.mxu0 0
      %2020 = vmatpush1.bf16.msra.mxu0 0
      %2021 = vmatprep.mubr.bf16.mxu0 0
      %2022 = vmatmul.mubr.bf16.gmra.mrb[0].mxu0 %v1899
      %v2023 = vpop.f32.mrb[0].mxu0
      %v2024 = vadd.f32 0.0, %v2023
      %v2025 = vpop.f32.mrb[0].mxu0
      %v2026 = vpop.f32.mrb[0].mxu0
      %v2027 = vadd.f32 0.0, %v2026
      %v2028 = vpop.f32.mrb[0].mxu0
      %2029 = vmatprep.mubr.bf16.mxu0 0
      %2030 = vmatmul.mubr.bf16.gmra.mrb[0].mxu0 %v1908
      %v2031 = vpop.f32.mrb[0].mxu0
      %v2032 = vadd.f32 0.0, %v2031
      %v2033 = vpop.f32.mrb[0].mxu0
      %v2034 = vpop.f32.mrb[0].mxu0
      %v2035 = vadd.f32 0.0, %v2034
      %v2036 = vpop.f32.mrb[0].mxu0
      %2037 = vmatprep.mubr.bf16.mxu0 0
      %2038 = vmatmul.mubr.bf16.gmra.mrb[0].mxu0 %v1917
      %v2039 = vpop.f32.mrb[0].mxu0
      %v2040 = vadd.f32 0.0, %v2039
      %v2041 = vpop.f32.mrb[0].mxu0
      %v2042 = vpop.f32.mrb[0].mxu0
      %v2043 = vadd.f32 0.0, %v2042
      %v2044 = vpop.f32.mrb[0].mxu0
      %2045 = vmatprep.mubr.bf16.mxu0 0
      %2046 = vmatmul.mubr.bf16.gmra.mrb[0].mxu0 %v1926
      %v2047 = vpop.f32.mrb[0].mxu0
      %v2048 = vadd.f32 0.0, %v2047
      %v2049 = vpop.f32.mrb[0].mxu0
      %v2050 = vpop.f32.mrb[0].mxu0
      %v2051 = vadd.f32 0.0, %v2050
      %v2052 = vpop.f32.mrb[0].mxu0
      %2053 = vmatprep.mubr.bf16.mxu0 0
      %2054 = vmatmul.mubr.bf16.gmra.mrb[0].mxu0 %v1935
      %v2055 = vpop.f32.mrb[0].mxu0
      %v2056 = vadd.f32 0.0, %v2055
      %v2057 = vpop.f32.mrb[0].mxu0
      %v2058 = vpop.f32.mrb[0].mxu0
      %v2059 = vadd.f32 0.0, %v2058
      %v2060 = vpop.f32.mrb[0].mxu0
      %2061 = vdwg.mxu0
      %v2062 = vadd.f32 %v1827, %v2024
      %v2063 = vadd.f32 %v1828, %v2027
      %v2064 = vadd.f32 %v1829, %v2032
      %v2065 = vadd.f32 %v1830, %v2035
      %v2066 = vadd.f32 %v1831, %v2040
      %v2067 = vadd.f32 %v1832, %v2043
      %v2068 = vadd.f32 %v1833, %v2048
      %v2069 = vadd.f32 %v1834, %v2051
      %v2070 = vadd.f32 %v1835, %v2056
      %v2071 = vadd.f32 %v1836, %v2059
      %2072 = vst [vmem:[#allocation2] sm:$0xff] %v2062
      %2073 = vst [vmem:[#allocation2 + $0x8] sm:$0xff] %v2063
      %2074 = vst [vmem:[#allocation2 + $0x10] sm:$0xff] %v2064
      %2075 = vst [vmem:[#allocation2 + $0x18] sm:$0xff] %v2065
      %2076 = vst [vmem:[#allocation2 + $0x20] sm:$0xff] %v2066
      %2077 = vst [vmem:[#allocation2 + $0x28] sm:$0xff] %v2067
      %2078 = vst [vmem:[#allocation2 + $0x30] sm:$0xff] %v2068
      %2079 = vst [vmem:[#allocation2 + $0x38] sm:$0xff] %v2069
      %2080 = vst [vmem:[#allocation2 + $0x40] sm:$0xff] %v2070
      %2081 = vst [vmem:[#allocation2 + $0x48] sm:$0xff] %v2071
      %v2082 = vld [vmem:[%s168 + $0x8] sm:$0x8]
      %v2083 = vld [vmem:[%s168 + $0xc] sm:$0xf]
      %v2084 = vld [vmem:[%s168 + $0x10] sm:$0xf]
      %v2085 = vld [vmem:[%s168 + $0x14] sm:$0xf]
      %v2086 = vld [vmem:[%s168 + $0x18] sm:$0xf]
      %v2087 = vld [vmem:[%s168 + $0x1c] sm:$0xf]
      %v2088 = vld [vmem:[%s168 + $0x20] sm:$0xf]
      %v2089 = vld [vmem:[%s168 + $0x24] sm:$0xf]
      %v2090 = vld [vmem:[%s168 + $0x28] sm:$0xf]
      %v2091 = vld [vmem:[%s168 + $0x2c] sm:$0xf]
      %v2092 = vld [vmem:[%s168 + $0x30] sm:$0x7]
      %v2093 = vld [vmem:[#allocation2] sm:$0xff]
      %v2094 = vld [vmem:[#allocation2 + $0x8] sm:$0xff]
      %v2095 = vld [vmem:[#allocation2 + $0x10] sm:$0xff]
      %v2096 = vld [vmem:[#allocation2 + $0x18] sm:$0xff]
      %v2097 = vld [vmem:[#allocation2 + $0x20] sm:$0xff]
      %v2098 = vld [vmem:[#allocation2 + $0x28] sm:$0xff]
      %v2099 = vld [vmem:[#allocation2 + $0x30] sm:$0xff]
      %v2100 = vld [vmem:[#allocation2 + $0x38] sm:$0xff]
      %v2101 = vld [vmem:[#allocation2 + $0x40] sm:$0xff]
      %v2102 = vld [vmem:[#allocation2 + $0x48] sm:$0xff]
      %s2103 = scalar_lea.vmem %s172, 512
      %v2104 = vld [vmem:[%s2103] sm:$0xf]
      %v2105 = vld [vmem:[%s2103 + $0x4] sm:$0xf]
      %v2106 = vld [vmem:[%s2103 + $0x8] sm:$0xf]
      %v2107 = vld [vmem:[%s2103 + $0xc] sm:$0xf]
      %v2108 = vld [vmem:[%s2103 + $0x10] sm:$0xf]
      %v2109 = vld [vmem:[%s2103 + $0x14] sm:$0xf]
      %v2110 = vld [vmem:[%s2103 + $0x18] sm:$0xf]
      %v2111 = vld [vmem:[%s2103 + $0x1c] sm:$0xf]
      %v2112 = vld [vmem:[%s2103 + $0x20] sm:$0xf]
      %v2113 = vld [vmem:[%s2103 + $0x24] sm:$0xf]
      %v2114 = vld [vmem:[%s2103 + $0x28] sm:$0xf]
      %v2115 = vld [vmem:[%s2103 + $0x2c] sm:$0xf]
      %v2116 = vld [vmem:[%s2103 + $0x30] sm:$0xf]
      %v2117 = vld [vmem:[%s2103 + $0x34] sm:$0xf]
      %v2118 = vld [vmem:[%s2103 + $0x38] sm:$0xf]
      %v2119 = vld [vmem:[%s2103 + $0x3c] sm:$0xf]
      %v2131 = vunpack.c.l.b16 %v2082
      %v2132 = vunpack.c.l.b16 %v2083
      %v2133 = vunpack.c.l.b16 %v2084
      %v2134 = vunpack.c.l.b16 %v2085
      %v2135 = vunpack.c.l.b16 %v2086
      %v2136 = vunpack.c.l.b16 %v2087
      %v2137 = vunpack.c.l.b16 %v2088
      %v2138 = vunpack.c.l.b16 %v2089
      %v2139 = vunpack.c.l.b16 %v2090
      %v2140 = vunpack.c.l.b16 %v2091
      %v2141 = vunpack.c.l.b16 %v2092
      %v2142 = vpack.c.b16 %v2132, %v2131
      %v2143 = vpack.c.b16 %v2134, %v2133
      %v2144 = vpack.c.b16 %v2136, %v2135
      %v2145 = vpack.c.b16 %v2138, %v2137
      %v2146 = vpack.c.b16 %v2140, %v2139
      %v2147 = vpack.c.b16 %v2141, %v2141
      %vm2148 = vcmask 1044480
      %v2149 = vrot.slane %v2142, 3
      %v2150 = vrot.slane %v2143, 3
      %v2151 = vsel %vm2148, %v2149, %v2150
      %v2152 = vrot.slane %v2144, 3
      %v2153 = vsel %vm2148, %v2150, %v2152
      %v2154 = vrot.slane %v2145, 3
      %v2155 = vsel %vm2148, %v2152, %v2154
      %v2156 = vrot.slane %v2146, 3
      %v2157 = vsel %vm2148, %v2154, %v2156
      %v2158 = vrot.slane %v2147, 3
      %v2159 = vsel %vm2148, %v2156, %v2158
      %v2181 = vunpack.c.l.b16 %v2104
      %v2182 = vunpack.c.l.b16 %v2105
      %v2183 = vunpack.c.l.b16 %v2106
      %v2184 = vunpack.c.l.b16 %v2107
      %v2185 = vunpack.c.l.b16 %v2108
      %v2186 = vunpack.c.l.b16 %v2109
      %v2187 = vunpack.c.l.b16 %v2110
      %v2188 = vunpack.c.l.b16 %v2111
      %v2189 = vunpack.c.l.b16 %v2112
      %v2190 = vunpack.c.l.b16 %v2113
      %v2191 = vunpack.c.l.b16 %v2114
      %v2192 = vunpack.c.l.b16 %v2115
      %v2193 = vunpack.c.l.b16 %v2116
      %v2194 = vunpack.c.l.b16 %v2117
      %v2195 = vunpack.c.l.b16 %v2118
      %v2196 = vunpack.c.l.b16 %v2119
      %v2197 = vpack.c.b16 %v2182, %v2181
      %v2198 = vpack.c.b16 %v2184, %v2183
      %v2199 = vpack.c.b16 %v2186, %v2185
      %v2200 = vpack.c.b16 %v2188, %v2187
      %v2201 = vpack.c.b16 %v2190, %v2189
      %v2202 = vpack.c.b16 %v2192, %v2191
      %v2203 = vpack.c.b16 %v2194, %v2193
      %v2204 = vpack.c.b16 %v2196, %v2195
      %2213 = vmatprep.subr.bf16.mxu0 0
      %2214 = vmatpush1.bf16.msra.mxu0 %v2197
      %2215 = vmatprep.subr.bf16.mxu0 0
      %2216 = vmatpush1.bf16.msra.mxu0 %v2198
      %2217 = vmatprep.subr.bf16.mxu0 0
      %2218 = vmatpush1.bf16.msra.mxu0 %v2199
      %2219 = vmatprep.subr.bf16.mxu0 0
      %2220 = vmatpush1.bf16.msra.mxu0 %v2200
      %2221 = vmatprep.subr.bf16.mxu0 0
      %2222 = vmatpush1.bf16.msra.mxu0 %v2201
      %2223 = vmatprep.subr.bf16.mxu0 0
      %2224 = vmatpush1.bf16.msra.mxu0 %v2202
      %2225 = vmatprep.subr.bf16.mxu0 0
      %2226 = vmatpush1.bf16.msra.mxu0 %v2203
      %2227 = vmatprep.subr.bf16.mxu0 0
      %2228 = vmatpush1.bf16.msra.mxu0 %v2204
      %2229 = vmatprep.subr.bf16.mxu0 0
      %2230 = vmatpush1.bf16.msra.mxu0 0
      %2231 = vmatprep.subr.bf16.mxu0 0
      %2232 = vmatpush1.bf16.msra.mxu0 0
      %2233 = vmatprep.subr.bf16.mxu0 0
      %2234 = vmatpush1.bf16.msra.mxu0 0
      %2235 = vmatprep.subr.bf16.mxu0 0
      %2236 = vmatpush1.bf16.msra.mxu0 0
      %2237 = vmatprep.subr.bf16.mxu0 0
      %2238 = vmatpush1.bf16.msra.mxu0 0
      %2239 = vmatprep.subr.bf16.mxu0 0
      %2240 = vmatpush1.bf16.msra.mxu0 0
      %2241 = vmatprep.subr.bf16.mxu0 0
      %2242 = vmatpush1.bf16.msra.mxu0 0
      %2243 = vmatprep.subr.bf16.mxu0 0
      %2244 = vmatpush1.bf16.msra.mxu0 0
      %2245 = vmatprep.mubr.bf16.mxu0 0
      %2246 = vmatmul.mubr.bf16.gmra.mrb[0].mxu0 %v2151
      %v2247 = vpop.f32.mrb[0].mxu0
      %v2248 = vadd.f32 0.0, %v2247
      %v2249 = vpop.f32.mrb[0].mxu0
      %v2250 = vpop.f32.mrb[0].mxu0
      %v2251 = vadd.f32 0.0, %v2250
      %v2252 = vpop.f32.mrb[0].mxu0
      %2253 = vmatprep.mubr.bf16.mxu0 0
      %2254 = vmatmul.mubr.bf16.gmra.mrb[0].mxu0 %v2153
      %v2255 = vpop.f32.mrb[0].mxu0
      %v2256 = vadd.f32 0.0, %v2255
      %v2257 = vpop.f32.mrb[0].mxu0
      %v2258 = vpop.f32.mrb[0].mxu0
      %v2259 = vadd.f32 0.0, %v2258
      %v2260 = vpop.f32.mrb[0].mxu0
      %2261 = vmatprep.mubr.bf16.mxu0 0
      %2262 = vmatmul.mubr.bf16.gmra.mrb[0].mxu0 %v2155
      %v2263 = vpop.f32.mrb[0].mxu0
      %v2264 = vadd.f32 0.0, %v2263
      %v2265 = vpop.f32.mrb[0].mxu0
      %v2266 = vpop.f32.mrb[0].mxu0
      %v2267 = vadd.f32 0.0, %v2266
      %v2268 = vpop.f32.mrb[0].mxu0
      %2269 = vmatprep.mubr.bf16.mxu0 0
      %2270 = vmatmul.mubr.bf16.gmra.mrb[0].mxu0 %v2157
      %v2271 = vpop.f32.mrb[0].mxu0
      %v2272 = vadd.f32 0.0, %v2271
      %v2273 = vpop.f32.mrb[0].mxu0
      %v2274 = vpop.f32.mrb[0].mxu0
      %v2275 = vadd.f32 0.0, %v2274
      %v2276 = vpop.f32.mrb[0].mxu0
      %2277 = vmatprep.mubr.bf16.mxu0 0
      %2278 = vmatmul.mubr.bf16.gmra.mrb[0].mxu0 %v2159
      %v2279 = vpop.f32.mrb[0].mxu0
      %v2280 = vadd.f32 0.0, %v2279
      %v2281 = vpop.f32.mrb[0].mxu0
      %v2282 = vpop.f32.mrb[0].mxu0
      %v2283 = vadd.f32 0.0, %v2282
      %v2284 = vpop.f32.mrb[0].mxu0
      %2285 = vdwg.mxu0
      %v2286 = vadd.f32 %v2093, %v2248
      %v2287 = vadd.f32 %v2094, %v2251
      %v2288 = vadd.f32 %v2095, %v2256
      %v2289 = vadd.f32 %v2096, %v2259
      %v2290 = vadd.f32 %v2097, %v2264
      %v2291 = vadd.f32 %v2098, %v2267
      %v2292 = vadd.f32 %v2099, %v2272
      %v2293 = vadd.f32 %v2100, %v2275
      %v2294 = vadd.f32 %v2101, %v2280
      %v2295 = vadd.f32 %v2102, %v2283
      %2296 = vst [vmem:[#allocation2] sm:$0xff] %v2286
      %2297 = vst [vmem:[#allocation2 + $0x8] sm:$0xff] %v2287
      %2298 = vst [vmem:[#allocation2 + $0x10] sm:$0xff] %v2288
      %2299 = vst [vmem:[#allocation2 + $0x18] sm:$0xff] %v2289
      %2300 = vst [vmem:[#allocation2 + $0x20] sm:$0xff] %v2290
      %2301 = vst [vmem:[#allocation2 + $0x28] sm:$0xff] %v2291
      %2302 = vst [vmem:[#allocation2 + $0x30] sm:$0xff] %v2292
      %2303 = vst [vmem:[#allocation2 + $0x38] sm:$0xff] %v2293
      %2304 = vst [vmem:[#allocation2 + $0x40] sm:$0xff] %v2294
      %2305 = vst [vmem:[#allocation2 + $0x48] sm:$0xff] %v2295
      %v2306 = vld [vmem:[#allocation2] sm:$0xff]
      %v2307 = vld [vmem:[#allocation2 + $0x8] sm:$0xff]
      %v2308 = vld [vmem:[#allocation2 + $0x10] sm:$0xff]
      %v2309 = vld [vmem:[#allocation2 + $0x18] sm:$0xff]
      %v2310 = vld [vmem:[#allocation2 + $0x20] sm:$0xff]
      %v2311 = vld [vmem:[#allocation2 + $0x28] sm:$0xff]
      %v2312 = vld [vmem:[#allocation2 + $0x30] sm:$0xff]
      %v2313 = vld [vmem:[#allocation2 + $0x38] sm:$0xff]
      %v2314 = vld [vmem:[#allocation2 + $0x40] sm:$0xff]
      %v2315 = vld [vmem:[#allocation2 + $0x48] sm:$0xff]
      %v2316 = vpack.c.bf16 %v2307, %v2306
      %v2317 = vpack.c.bf16 %v2309, %v2308
      %v2318 = vpack.c.bf16 %v2311, %v2310
      %v2319 = vpack.c.bf16 %v2313, %v2312
      %v2320 = vpack.c.bf16 %v2315, %v2314
      %v2326 = vunpack.c.l.b16 %v2316
      %v2327 = vunpack.c.h.b16 %v2316
      %v2328 = vunpack.c.l.b16 %v2317
      %v2329 = vunpack.c.h.b16 %v2317
      %v2330 = vunpack.c.l.b16 %v2318
      %v2331 = vunpack.c.h.b16 %v2318
      %v2332 = vunpack.c.l.b16 %v2319
      %v2333 = vunpack.c.h.b16 %v2319
      %v2334 = vunpack.c.l.b16 %v2320
      %v2335 = vunpack.c.h.b16 %v2320
      %v2336 = vpack.c.b16 %v2326, %v2326
      %v2337 = vpack.c.b16 %v2327, %v2327
      %v2338 = vpack.c.b16 %v2328, %v2328
      %v2339 = vpack.c.b16 %v2329, %v2329
      %v2340 = vpack.c.b16 %v2330, %v2330
      %v2341 = vpack.c.b16 %v2331, %v2331
      %v2342 = vpack.c.b16 %v2332, %v2332
      %v2343 = vpack.c.b16 %v2333, %v2333
      %v2344 = vpack.c.b16 %v2334, %v2334
      %v2345 = vpack.c.b16 %v2335, %v2335
      %2356 = vst [vmem:[%s180] sm:$0xf] %v2336
      %2357 = vst [vmem:[%s180 + $0x4] sm:$0xf] %v2337
      %2358 = vst [vmem:[%s180 + $0x8] sm:$0xf] %v2338
      %2359 = vst [vmem:[%s180 + $0xc] sm:$0xf] %v2339
      %2360 = vst [vmem:[%s180 + $0x10] sm:$0xf] %v2340
      %2361 = vst [vmem:[%s180 + $0x14] sm:$0xf] %v2341
      %2362 = vst [vmem:[%s180 + $0x18] sm:$0xf] %v2342
      %2363 = vst [vmem:[%s180 + $0x1c] sm:$0xf] %v2343
      %2364 = vst [vmem:[%s180 + $0x20] sm:$0xf] %v2344
      %2365 = vst [vmem:[%s180 + $0x24] sm:$0xf] %v2345
      %p2366 = scmp.lt.s32.totalorder %s17, 1
      %s2367 = scalar_select %p2366, %s17, 1
      %p2368 = scmp.lt.s32.totalorder %s18, 0
      %s2369 = scalar_select %p2368, %s18, 0
      %s2370 = smul.addr %s2367, 10
      %s2371 = sadd.s32 %s2369, %s2370
      %s2372 = smul.addr %s2371, 4
      %s2373 = scalar_lea.vmem %s2, %s2372
      // Predicated region
      $region29: #{_lambda_.8} parent=27 // pred_check
        %p2374 = pneg %p97
      $region30: #{_lambda_.8} parent=27 // pred_check_branch
        %2376 = sbr.rel (%p2374) target = $region32
      $region31: #{_lambda_.8} parent=27 // pred_region
        _
      $region32: #{_lambda_.8} parent=27 // pred_fallthru
        _
    $region28: #{_lambda_.8} parent=5 // pred_fallthru
      _
    %p2377 = scmp.le.s32.totalorder 2, %s8
    // Predicated region
    $region33: #{_lambda_.8} parent=5 // pred_check
      %p2378 = pneg %p2377
    $region34: #{_lambda_.8} parent=5 // pred_check_branch
      %2380 = sbr.rel (%p2378) target = $region36
    $region35: #{_lambda_.8} parent=5 // pred_region
      %s2381 = ssub.s32 %s8, 2
      // Predicated region
      $region37: #{_lambda_.8} parent=35 // pred_check
        %p2382 = pneg %p103
      $region38: #{_lambda_.8} parent=35 // pred_check_branch
        %2384 = sbr.rel (%p2382) target = $region40
      $region39: #{_lambda_.8} parent=35 // pred_region
        %p2385 = scmp.lt.s32.totalorder %s19, 1
        %s2386 = scalar_select %p2385, %s19, 1
        %p2387 = scmp.lt.s32.totalorder %s20, 0
        %s2388 = scalar_select %p2387, %s20, 0
        %s2389 = smul.addr %s2386, 10
        %s2390 = sadd.s32 %s2388, %s2389
        %s2391 = smul.addr %s2390, 4
        %s2392 = scalar_lea.vmem %s2, %s2391
      $region40: #{_lambda_.8} parent=35 // pred_fallthru
        _
    $region36: #{_lambda_.8} parent=5 // pred_fallthru
      _
  $region6: #{_lambda_.8} parent=0 // loop_footer
    %s12 = sadd.s32 1, %s8
  $region7: #{_lambda_.8} parent=0 // loop_footer_branch
    %7 = sbr.rel target = $region3
  $region8: #{_lambda_.8} parent=0 // loop_exit
    _

</llo_original>
